<compile_context>
chip_gen: v7x
topology: tpu7x:2x2x1
jax: 0.10.0
libtpu: 0.0.40
codegen_flags: <defaults>
</compile_context>

<pallas_src>
import math

import jax
import jax.numpy as jnp
from jax.experimental import pallas as pl
from jax.experimental.pallas import tpu as pltpu

# ----------------------- model hyper-parameters (small) -----------------------
NUM_LAYERS = 2
D_MODEL    = 32
NUM_HEADS  = 4
D_HEAD     = D_MODEL // NUM_HEADS
D_FF       = 64
LN_EPS     = 1e-5

B, LQ, LK = 2, 8, 16   # batch, target length, memory length

# Packed (layer-stacked / fused) parameter ordering for the kernel signature.
PACKED_ORDER = (
    "wqkv_s", "bqkv_s", "wo_s", "bo_s",
    "wq_c", "bq_c", "wkv_c_all", "bkv_c_all", "wo_c", "bo_c",
    "g1", "b1", "g2", "b2", "g3", "b3",
    "w1", "bb1", "w2", "bb2",
)


# --------------------------------- kernel ------------------------------------
def decoder_kernel(tgt_ref, mem_ref,
                   wqkv_s, bqkv_s, wo_s, bo_s,
                   wq_c, bq_c, wkv_c_all, bkv_c_all, wo_c, bo_c,
                   g1, b1, g2, b2, g3, b3,
                   w1, bb1, w2, bb2,
                   out_ref):
    x = tgt_ref[...]    # (B*Lq, D) -- stays resident across all layers
    mem = mem_ref[...]  # (B*Lk, D)

    def layernorm(z, g, b):
        mu = jnp.mean(z, axis=-1, keepdims=True)
        var = jnp.mean((z - mu) ** 2, axis=-1, keepdims=True)
        return (z - mu) * jax.lax.rsqrt(var + LN_EPS) * g + b

    def heads_attention(q3, k3, v3):
        # q3: (B, Lq, D); k3, v3: (B, Lk, D).  Softmax scale already folded into q.
        outs = []
        for h in range(NUM_HEADS):              # static unroll over heads
            sl = slice(h * D_HEAD, (h + 1) * D_HEAD)
            qh, kh, vh = q3[:, :, sl], k3[:, :, sl], v3[:, :, sl]
            s = jnp.einsum("bqd,bkd->bqk", qh, kh,
                           preferred_element_type=jnp.float32)
            s = s - jnp.max(s, axis=-1, keepdims=True)
            p = jnp.exp(s)
            p = p * pl.reciprocal(jnp.sum(p, axis=-1, keepdims=True), approx=True)
            outs.append(jnp.einsum("bqk,bkd->bqd", p, vh,
                                   preferred_element_type=jnp.float32))
        return jnp.concatenate(outs, axis=-1)   # (B, Lq, D)

    # ---- hoisted: cross-attention K/V of memory for ALL layers in one matmul ----
    # (B*Lk, D) @ (D, NUM_LAYERS*2*D) -> (B*Lk, 128)  (lane-dense result)
    kv_all = jnp.dot(mem, wkv_c_all[...],
                     preferred_element_type=jnp.float32) + bkv_c_all[...]

    for l in range(NUM_LAYERS):                 # static unroll over layers
        # ---- self-attention block (fused QKV over all B*Lq rows) ----
        qkv = jnp.dot(x, wqkv_s[l], preferred_element_type=jnp.float32) + bqkv_s[l]
        qkv = qkv.reshape(B, LQ, 3 * D_MODEL)
        ctx = heads_attention(qkv[:, :, :D_MODEL],
                              qkv[:, :, D_MODEL:2 * D_MODEL],
                              qkv[:, :, 2 * D_MODEL:])
        sa = jnp.dot(ctx.reshape(B * LQ, D_MODEL), wo_s[l],
                     preferred_element_type=jnp.float32) + bo_s[l]
        x = layernorm(x + sa, g1[l], b1[l])

        # ---- cross-attention block (K/V already projected above) ----
        q = jnp.dot(x, wq_c[l], preferred_element_type=jnp.float32) + bq_c[l]
        kv = kv_all[:, l * 2 * D_MODEL:(l + 1) * 2 * D_MODEL].reshape(B, LK, 2 * D_MODEL)
        ctx = heads_attention(q.reshape(B, LQ, D_MODEL),
                              kv[:, :, :D_MODEL], kv[:, :, D_MODEL:])
        ca = jnp.dot(ctx.reshape(B * LQ, D_MODEL), wo_c[l],
                     preferred_element_type=jnp.float32) + bo_c[l]
        x = layernorm(x + ca, g2[l], b2[l])

        # ---- feed-forward block ----
        h = jnp.maximum(jnp.dot(x, w1[l], preferred_element_type=jnp.float32) + bb1[l], 0.0)
        ff = jnp.dot(h, w2[l], preferred_element_type=jnp.float32) + bb2[l]
        x = layernorm(x + ff, g3[l], b3[l])

    out_ref[...] = x.astype(out_ref.dtype)


# --------------------------- parameter packing --------------------------------
def pack_params(layer_params):
    """Stack per-layer dicts into layer-stacked / fused arrays for the kernel.

    * Folds the 1/sqrt(d_head) attention scale into the Q projections.
    * Fuses self-attn Q,K,V into one wide weight per layer.
    * Fuses cross-attn K,V of ALL layers into a single (D, L*2*D) weight so the
      layer-invariant `memory` is projected once, lane-dense, inside the kernel."""
    scale = 1.0 / math.sqrt(D_HEAD)

    def stack(fn):
        return jnp.stack([fn(p) for p in layer_params], axis=0)

    wkv_c_all = jnp.concatenate(
        [jnp.concatenate([p["wk_c"], p["wv_c"]], axis=1) for p in layer_params], axis=1)
    bkv_c_all = jnp.concatenate(
        [jnp.concatenate([p["bk_c"], p["bv_c"]], axis=1) for p in layer_params], axis=1)

    return {
        "wqkv_s": stack(lambda p: jnp.concatenate(
            [p["wq_s"] * scale, p["wk_s"], p["wv_s"]], axis=1)),
        "bqkv_s": stack(lambda p: jnp.concatenate(
            [p["bq_s"] * scale, p["bk_s"], p["bv_s"]], axis=1)),
        "wo_s": stack(lambda p: p["wo_s"]), "bo_s": stack(lambda p: p["bo_s"]),
        "wq_c": stack(lambda p: p["wq_c"] * scale),
        "bq_c": stack(lambda p: p["bq_c"] * scale),
        "wkv_c_all": wkv_c_all, "bkv_c_all": bkv_c_all,
        "wo_c": stack(lambda p: p["wo_c"]), "bo_c": stack(lambda p: p["bo_c"]),
        "g1": stack(lambda p: p["g1"]), "b1": stack(lambda p: p["b1"]),
        "g2": stack(lambda p: p["g2"]), "b2": stack(lambda p: p["b2"]),
        "g3": stack(lambda p: p["g3"]), "b3": stack(lambda p: p["b3"]),
        "w1": stack(lambda p: p["w1"]), "bb1": stack(lambda p: p["bb1"]),
        "w2": stack(lambda p: p["w2"]), "bb2": stack(lambda p: p["bb2"]),
    }


# -------------------------------- wrapper ------------------------------------
def transformer_decoder_pallas(tgt, memory, layer_params):
    b, lq, d = tgt.shape
    _, lk, _ = memory.shape
    assert (b, lq, d, lk) == (B, LQ, D_MODEL, LK)

    packed = pack_params(layer_params)
    plist = [packed[name] for name in PACKED_ORDER]

    tgt2 = tgt.reshape(b * lq, d)
    mem2 = memory.reshape(b * lk, d)

    def full_spec(a):
        nd = a.ndim
        return pl.BlockSpec(a.shape, lambda i, _nd=nd: (0,) * _nd)

    in_specs = [full_spec(tgt2), full_spec(mem2)] + [full_spec(a) for a in plist]

    out = pl.pallas_call(
        decoder_kernel,
        out_shape=jax.ShapeDtypeStruct((b * lq, d), jnp.float32),
        grid=(1,),
        in_specs=in_specs,
        out_specs=pl.BlockSpec((b * lq, d), lambda i: (0, 0)),
        compiler_params=pltpu.CompilerParams(dimension_semantics=("arbitrary",)),
    )(tgt2, mem2, *plist)
    return out.reshape(b, lq, d)  # final self.norm is None in this configuration


# --------------------------- pure-JAX reference -------------------------------
def _layernorm_ref(z, g, b):
    mu = jnp.mean(z, axis=-1, keepdims=True)
    var = jnp.mean((z - mu) ** 2, axis=-1, keepdims=True)
    return (z - mu) / jnp.sqrt(var + LN_EPS) * g[0] + b[0]


def _mha_ref(q_in, kv_in, wq, bq, wk, bk, wv, bv, wo, bo):
    bsz, lq, d = q_in.shape
    lk = kv_in.shape[1]
    q = q_in @ wq + bq[0]
    k = kv_in @ wk + bk[0]
    v = kv_in @ wv + bv[0]
    q = q.reshape(bsz, lq, NUM_HEADS, D_HEAD).transpose(0, 2, 1, 3)
    k = k.reshape(bsz, lk, NUM_HEADS, D_HEAD).transpose(0, 2, 1, 3)
    v = v.reshape(bsz, lk, NUM_HEADS, D_HEAD).transpose(0, 2, 1, 3)
    s = jnp.einsum("bhqd,bhkd->bhqk", q, k) / math.sqrt(D_HEAD)
    p = jax.nn.softmax(s, axis=-1)
    ctx = jnp.einsum("bhqk,bhkd->bhqd", p, v).transpose(0, 2, 1, 3).reshape(bsz, lq, d)
    return ctx @ wo + bo[0]


def decoder_ref(tgt, memory, layer_params):
    x = tgt
    for p in layer_params:
        sa = _mha_ref(x, x, p["wq_s"], p["bq_s"], p["wk_s"], p["bk_s"],
                      p["wv_s"], p["bv_s"], p["wo_s"], p["bo_s"])
        x = _layernorm_ref(x + sa, p["g1"], p["b1"])
        ca = _mha_ref(x, memory, p["wq_c"], p["bq_c"], p["wk_c"], p["bk_c"],
                      p["wv_c"], p["bv_c"], p["wo_c"], p["bo_c"])
        x = _layernorm_ref(x + ca, p["g2"], p["b2"])
        h = jnp.maximum(x @ p["w1"] + p["bb1"][0], 0.0)
        ff = h @ p["w2"] + p["bb2"][0]
        x = _layernorm_ref(x + ff, p["g3"], p["b3"])
    return x


# ----------------------------- parameter init ---------------------------------
def init_layer_params(key):
    ks = jax.random.split(key, 12)
    scale = 0.02

    def lin(k, din, dout):
        return scale * jax.random.normal(k, (din, dout), jnp.float32)

    def zero_b(dout):
        return jnp.zeros((1, dout), jnp.float32)

    return {
        "wq_s": lin(ks[0], D_MODEL, D_MODEL), "bq_s": zero_b(D_MODEL),
        "wk_s": lin(ks[1], D_MODEL, D_MODEL), "bk_s": zero_b(D_MODEL),
        "wv_s": lin(ks[2], D_MODEL, D_MODEL), "bv_s": zero_b(D_MODEL),
        "wo_s": lin(ks[3], D_MODEL, D_MODEL), "bo_s": zero_b(D_MODEL),
        "wq_c": lin(ks[4], D_MODEL, D_MODEL), "bq_c": zero_b(D_MODEL),
        "wk_c": lin(ks[5], D_MODEL, D_MODEL), "bk_c": zero_b(D_MODEL),
        "wv_c": lin(ks[6], D_MODEL, D_MODEL), "bv_c": zero_b(D_MODEL),
        "wo_c": lin(ks[7], D_MODEL, D_MODEL), "bo_c": zero_b(D_MODEL),
        "g1": jnp.ones((1, D_MODEL), jnp.float32), "b1": jnp.zeros((1, D_MODEL), jnp.float32),
        "g2": jnp.ones((1, D_MODEL), jnp.float32), "b2": jnp.zeros((1, D_MODEL), jnp.float32),
        "g3": jnp.ones((1, D_MODEL), jnp.float32), "b3": jnp.zeros((1, D_MODEL), jnp.float32),
        "w1": lin(ks[8], D_MODEL, D_FF), "bb1": zero_b(D_FF),
        "w2": lin(ks[9], D_FF, D_MODEL), "bb2": zero_b(D_MODEL),
    }


# ----------------------------------- main --------------------------------------
if __name__ == "__main__":
    root = jax.random.PRNGKey(0)
    k_tgt, k_mem, k_params = jax.random.split(root, 3)

    tgt = jax.random.normal(k_tgt, (B, LQ, D_MODEL), jnp.float32)
    memory = jax.random.normal(k_mem, (B, LK, D_MODEL), jnp.float32)

    layer_keys = jax.random.split(k_params, NUM_LAYERS)
    layer_params = [init_layer_params(k) for k in layer_keys]

    out = transformer_decoder_pallas(tgt, memory, layer_params)
    out = jax.block_until_ready(out)

    ref = decoder_ref(tgt, memory, layer_params)
    assert out.shape == (B, LQ, D_MODEL)
    # Tolerance loosened vs exact math because the softmax denominator uses the
    # EUP approximate reciprocal (pl.reciprocal(approx=True)).
    assert jnp.allclose(out, ref, rtol=1e-2, atol=1e-2), "mismatch vs JAX reference"

    # TODO(synk): incremental decoding cache (step/layer_cache) and boolean
    # key masks are not exercised here (they default to None in the module).
    print("KERNEL_OK")
</pallas_src>

<mosaic_0001>
module attributes {stable_mosaic.version = 11 : i64} {
  func.func @decoder_kernel(%arg0: i32, %arg1: memref<16x32xf32, #tpu.memory_space<vmem>>, %arg2: memref<32x32xf32, #tpu.memory_space<vmem>>, %arg3: memref<2x32x96xf32, #tpu.memory_space<vmem>>, %arg4: memref<2x1x96xf32, #tpu.memory_space<vmem>>, %arg5: memref<2x32x32xf32, #tpu.memory_space<vmem>>, %arg6: memref<2x1x32xf32, #tpu.memory_space<vmem>>, %arg7: memref<2x32x32xf32, #tpu.memory_space<vmem>>, %arg8: memref<2x1x32xf32, #tpu.memory_space<vmem>>, %arg9: memref<32x128xf32, #tpu.memory_space<vmem>>, %arg10: memref<1x128xf32, #tpu.memory_space<vmem>>, %arg11: memref<2x32x32xf32, #tpu.memory_space<vmem>>, %arg12: memref<2x1x32xf32, #tpu.memory_space<vmem>>, %arg13: memref<2x1x32xf32, #tpu.memory_space<vmem>>, %arg14: memref<2x1x32xf32, #tpu.memory_space<vmem>>, %arg15: memref<2x1x32xf32, #tpu.memory_space<vmem>>, %arg16: memref<2x1x32xf32, #tpu.memory_space<vmem>>, %arg17: memref<2x1x32xf32, #tpu.memory_space<vmem>>, %arg18: memref<2x1x32xf32, #tpu.memory_space<vmem>>, %arg19: memref<2x32x64xf32, #tpu.memory_space<vmem>>, %arg20: memref<2x1x64xf32, #tpu.memory_space<vmem>>, %arg21: memref<2x64x32xf32, #tpu.memory_space<vmem>>, %arg22: memref<2x1x32xf32, #tpu.memory_space<vmem>>, %arg23: memref<16x32xf32, #tpu.memory_space<vmem>>) attributes {dimension_semantics = [#tpu.dimension_semantics<arbitrary>], iteration_bounds = array<i64: 1>, scalar_prefetch = 0 : i64, scratch_operands = 0 : i64, tpu.core_type = #tpu.core_type<tc>, window_params = [{pipeline_mode = #tpu.pipeline_mode<synchronous>, transform_indices = @transform_0, window_bounds = array<i64: 16, 32>}, {pipeline_mode = #tpu.pipeline_mode<synchronous>, transform_indices = @transform_1, window_bounds = array<i64: 32, 32>}, {pipeline_mode = #tpu.pipeline_mode<synchronous>, transform_indices = @transform_2, window_bounds = array<i64: 2, 32, 96>}, {pipeline_mode = #tpu.pipeline_mode<synchronous>, transform_indices = @transform_3, window_bounds = array<i64: 2, 1, 96>}, {pipeline_mode = #tpu.pipeline_mode<synchronous>, transform_indices = @transform_4, window_bounds = array<i64: 2, 32, 32>}, {pipeline_mode = #tpu.pipeline_mode<synchronous>, transform_indices = @transform_5, window_bounds = array<i64: 2, 1, 32>}, {pipeline_mode = #tpu.pipeline_mode<synchronous>, transform_indices = @transform_6, window_bounds = array<i64: 2, 32, 32>}, {pipeline_mode = #tpu.pipeline_mode<synchronous>, transform_indices = @transform_7, window_bounds = array<i64: 2, 1, 32>}, {pipeline_mode = #tpu.pipeline_mode<synchronous>, transform_indices = @transform_8, window_bounds = array<i64: 32, 128>}, {pipeline_mode = #tpu.pipeline_mode<synchronous>, transform_indices = @transform_9, window_bounds = array<i64: 1, 128>}, {pipeline_mode = #tpu.pipeline_mode<synchronous>, transform_indices = @transform_10, window_bounds = array<i64: 2, 32, 32>}, {pipeline_mode = #tpu.pipeline_mode<synchronous>, transform_indices = @transform_11, window_bounds = array<i64: 2, 1, 32>}, {pipeline_mode = #tpu.pipeline_mode<synchronous>, transform_indices = @transform_12, window_bounds = array<i64: 2, 1, 32>}, {pipeline_mode = #tpu.pipeline_mode<synchronous>, transform_indices = @transform_13, window_bounds = array<i64: 2, 1, 32>}, {pipeline_mode = #tpu.pipeline_mode<synchronous>, transform_indices = @transform_14, window_bounds = array<i64: 2, 1, 32>}, {pipeline_mode = #tpu.pipeline_mode<synchronous>, transform_indices = @transform_15, window_bounds = array<i64: 2, 1, 32>}, {pipeline_mode = #tpu.pipeline_mode<synchronous>, transform_indices = @transform_16, window_bounds = array<i64: 2, 1, 32>}, {pipeline_mode = #tpu.pipeline_mode<synchronous>, transform_indices = @transform_17, window_bounds = array<i64: 2, 1, 32>}, {pipeline_mode = #tpu.pipeline_mode<synchronous>, transform_indices = @transform_18, window_bounds = array<i64: 2, 32, 64>}, {pipeline_mode = #tpu.pipeline_mode<synchronous>, transform_indices = @transform_19, window_bounds = array<i64: 2, 1, 64>}, {pipeline_mode = #tpu.pipeline_mode<synchronous>, transform_indices = @transform_20, window_bounds = array<i64: 2, 64, 32>}, {pipeline_mode = #tpu.pipeline_mode<synchronous>, transform_indices = @transform_21, window_bounds = array<i64: 2, 1, 32>}, {pipeline_mode = #tpu.pipeline_mode<synchronous>, transform_indices = @transform_22, window_bounds = array<i64: 16, 32>}]} {
    %c0 = arith.constant 0 : index
    %c0_0 = arith.constant 0 : index
    %0 = vector.load %arg1[%c0, %c0_0] : memref<16x32xf32, #tpu.memory_space<vmem>>, vector<16x32xf32>
    %c0_1 = arith.constant 0 : index
    %c0_2 = arith.constant 0 : index
    %1 = vector.load %arg2[%c0_1, %c0_2] : memref<32x32xf32, #tpu.memory_space<vmem>>, vector<32x32xf32>
    %c0_3 = arith.constant 0 : index
    %c0_4 = arith.constant 0 : index
    %2 = vector.load %arg9[%c0_3, %c0_4] : memref<32x128xf32, #tpu.memory_space<vmem>>, vector<32x128xf32>
    %cst = arith.constant dense<0.000000e+00> : vector<32x128xf32>
    %3 = tpu.matmul %1, %2, %cst {dimension_numbers = #tpu.dot_dimension_numbers<[1], [0], [0], [1], [0, 0, 1, 1], [], []>} : vector<32x32xf32>, vector<32x128xf32>, vector<32x128xf32> -> vector<32x128xf32>
    %c0_5 = arith.constant 0 : index
    %c0_6 = arith.constant 0 : index
    %4 = vector.load %arg10[%c0_5, %c0_6] : memref<1x128xf32, #tpu.memory_space<vmem>>, vector<1x128xf32>
    %5 = vector.broadcast %4 : vector<1x128xf32> to vector<32x128xf32>
    %6 = arith.addf %3, %5 : vector<32x128xf32>
    %c0_7 = arith.constant 0 : index
    %c0_8 = arith.constant 0 : index
    %c0_9 = arith.constant 0 : index
    %7 = vector.load %arg3[%c0_7, %c0_8, %c0_9] : memref<2x32x96xf32, #tpu.memory_space<vmem>>, vector<1x32x96xf32>
    %8 = vector.shape_cast %7 : vector<1x32x96xf32> to vector<32x96xf32>
    %cst_10 = arith.constant dense<0.000000e+00> : vector<16x96xf32>
    %9 = tpu.matmul %0, %8, %cst_10 {dimension_numbers = #tpu.dot_dimension_numbers<[1], [0], [0], [1], [0, 0, 1, 1], [], []>} : vector<16x32xf32>, vector<32x96xf32>, vector<16x96xf32> -> vector<16x96xf32>
    %c0_11 = arith.constant 0 : index
    %c0_12 = arith.constant 0 : index
    %c0_13 = arith.constant 0 : index
    %10 = vector.load %arg4[%c0_11, %c0_12, %c0_13] : memref<2x1x96xf32, #tpu.memory_space<vmem>>, vector<1x1x96xf32>
    %11 = vector.shape_cast %10 : vector<1x1x96xf32> to vector<1x96xf32>
    %12 = vector.broadcast %11 : vector<1x96xf32> to vector<16x96xf32>
    %13 = arith.addf %9, %12 : vector<16x96xf32>
    %14 = vector.shape_cast %13 : vector<16x96xf32> to vector<2x8x96xf32>
    %15 = vector.extract_strided_slice %14 {offsets = [0, 0, 0], sizes = [2, 8, 32], strides = [1, 1, 1]} : vector<2x8x96xf32> to vector<2x8x32xf32>
    %16 = vector.extract_strided_slice %14 {offsets = [0, 0, 32], sizes = [2, 8, 32], strides = [1, 1, 1]} : vector<2x8x96xf32> to vector<2x8x32xf32>
    %17 = vector.extract_strided_slice %14 {offsets = [0, 0, 64], sizes = [2, 8, 32], strides = [1, 1, 1]} : vector<2x8x96xf32> to vector<2x8x32xf32>
    %18 = vector.extract_strided_slice %15 {offsets = [0, 0, 0], sizes = [2, 8, 8], strides = [1, 1, 1]} : vector<2x8x32xf32> to vector<2x8x8xf32>
    %19 = vector.extract_strided_slice %16 {offsets = [0, 0, 0], sizes = [2, 8, 8], strides = [1, 1, 1]} : vector<2x8x32xf32> to vector<2x8x8xf32>
    %20 = vector.extract_strided_slice %17 {offsets = [0, 0, 0], sizes = [2, 8, 8], strides = [1, 1, 1]} : vector<2x8x32xf32> to vector<2x8x8xf32>
    "tpu.trace_start"() <{level = 10 : i32, message = "bqd,bkd->bqk"}> : () -> ()
    %cst_14 = arith.constant dense<0.000000e+00> : vector<2x8x8xf32>
    %21 = tpu.matmul %18, %19, %cst_14 {dimension_numbers = #tpu.dot_dimension_numbers<[2], [2], [1], [1], [0, 0, 0, 1, 1, 1], [0], [0]>} : vector<2x8x8xf32>, vector<2x8x8xf32>, vector<2x8x8xf32> -> vector<2x8x8xf32>
    "tpu.trace_stop"() : () -> ()
    %cst_15 = arith.constant dense<0xFF800000> : vector<2x8xf32>
    %22 = vector.multi_reduction <maximumf>, %21, %cst_15 [2] : vector<2x8x8xf32> to vector<2x8xf32>
    %23 = vector.shape_cast %22 : vector<2x8xf32> to vector<2x8x1xf32>
    %24 = vector.broadcast %23 : vector<2x8x1xf32> to vector<2x8x8xf32>
    %25 = arith.subf %21, %24 : vector<2x8x8xf32>
    %26 = math.exp %25 : vector<2x8x8xf32>
    %cst_16 = arith.constant dense<0.000000e+00> : vector<2x8xf32>
    %27 = vector.multi_reduction <add>, %26, %cst_16 [2] : vector<2x8x8xf32> to vector<2x8xf32>
    %28 = vector.shape_cast %27 : vector<2x8xf32> to vector<2x8x1xf32>
    %29 = tpu.reciprocal %28 {approx = true} : vector<2x8x1xf32> -> vector<2x8x1xf32>
    %30 = vector.broadcast %29 : vector<2x8x1xf32> to vector<2x8x8xf32>
    %31 = arith.mulf %26, %30 : vector<2x8x8xf32>
    "tpu.trace_start"() <{level = 10 : i32, message = "bqk,bkd->bqd"}> : () -> ()
    %cst_17 = arith.constant dense<0.000000e+00> : vector<2x8x8xf32>
    %32 = tpu.matmul %31, %20, %cst_17 {dimension_numbers = #tpu.dot_dimension_numbers<[2], [1], [1], [2], [0, 0, 0, 1, 1, 2], [0], [0]>} : vector<2x8x8xf32>, vector<2x8x8xf32>, vector<2x8x8xf32> -> vector<2x8x8xf32>
    "tpu.trace_stop"() : () -> ()
    %33 = vector.extract_strided_slice %15 {offsets = [0, 0, 8], sizes = [2, 8, 8], strides = [1, 1, 1]} : vector<2x8x32xf32> to vector<2x8x8xf32>
    %34 = vector.extract_strided_slice %16 {offsets = [0, 0, 8], sizes = [2, 8, 8], strides = [1, 1, 1]} : vector<2x8x32xf32> to vector<2x8x8xf32>
    %35 = vector.extract_strided_slice %17 {offsets = [0, 0, 8], sizes = [2, 8, 8], strides = [1, 1, 1]} : vector<2x8x32xf32> to vector<2x8x8xf32>
    "tpu.trace_start"() <{level = 10 : i32, message = "bqd,bkd->bqk"}> : () -> ()
    %cst_18 = arith.constant dense<0.000000e+00> : vector<2x8x8xf32>
    %36 = tpu.matmul %33, %34, %cst_18 {dimension_numbers = #tpu.dot_dimension_numbers<[2], [2], [1], [1], [0, 0, 0, 1, 1, 1], [0], [0]>} : vector<2x8x8xf32>, vector<2x8x8xf32>, vector<2x8x8xf32> -> vector<2x8x8xf32>
    "tpu.trace_stop"() : () -> ()
    %cst_19 = arith.constant dense<0xFF800000> : vector<2x8xf32>
    %37 = vector.multi_reduction <maximumf>, %36, %cst_19 [2] : vector<2x8x8xf32> to vector<2x8xf32>
    %38 = vector.shape_cast %37 : vector<2x8xf32> to vector<2x8x1xf32>
    %39 = vector.broadcast %38 : vector<2x8x1xf32> to vector<2x8x8xf32>
    %40 = arith.subf %36, %39 : vector<2x8x8xf32>
    %41 = math.exp %40 : vector<2x8x8xf32>
    %cst_20 = arith.constant dense<0.000000e+00> : vector<2x8xf32>
    %42 = vector.multi_reduction <add>, %41, %cst_20 [2] : vector<2x8x8xf32> to vector<2x8xf32>
    %43 = vector.shape_cast %42 : vector<2x8xf32> to vector<2x8x1xf32>
    %44 = tpu.reciprocal %43 {approx = true} : vector<2x8x1xf32> -> vector<2x8x1xf32>
    %45 = vector.broadcast %44 : vector<2x8x1xf32> to vector<2x8x8xf32>
    %46 = arith.mulf %41, %45 : vector<2x8x8xf32>
    "tpu.trace_start"() <{level = 10 : i32, message = "bqk,bkd->bqd"}> : () -> ()
    %cst_21 = arith.constant dense<0.000000e+00> : vector<2x8x8xf32>
    %47 = tpu.matmul %46, %35, %cst_21 {dimension_numbers = #tpu.dot_dimension_numbers<[2], [1], [1], [2], [0, 0, 0, 1, 1, 2], [0], [0]>} : vector<2x8x8xf32>, vector<2x8x8xf32>, vector<2x8x8xf32> -> vector<2x8x8xf32>
    "tpu.trace_stop"() : () -> ()
    %48 = vector.extract_strided_slice %15 {offsets = [0, 0, 16], sizes = [2, 8, 8], strides = [1, 1, 1]} : vector<2x8x32xf32> to vector<2x8x8xf32>
    %49 = vector.extract_strided_slice %16 {offsets = [0, 0, 16], sizes = [2, 8, 8], strides = [1, 1, 1]} : vector<2x8x32xf32> to vector<2x8x8xf32>
    %50 = vector.extract_strided_slice %17 {offsets = [0, 0, 16], sizes = [2, 8, 8], strides = [1, 1, 1]} : vector<2x8x32xf32> to vector<2x8x8xf32>
    "tpu.trace_start"() <{level = 10 : i32, message = "bqd,bkd->bqk"}> : () -> ()
    %cst_22 = arith.constant dense<0.000000e+00> : vector<2x8x8xf32>
    %51 = tpu.matmul %48, %49, %cst_22 {dimension_numbers = #tpu.dot_dimension_numbers<[2], [2], [1], [1], [0, 0, 0, 1, 1, 1], [0], [0]>} : vector<2x8x8xf32>, vector<2x8x8xf32>, vector<2x8x8xf32> -> vector<2x8x8xf32>
    "tpu.trace_stop"() : () -> ()
    %cst_23 = arith.constant dense<0xFF800000> : vector<2x8xf32>
    %52 = vector.multi_reduction <maximumf>, %51, %cst_23 [2] : vector<2x8x8xf32> to vector<2x8xf32>
    %53 = vector.shape_cast %52 : vector<2x8xf32> to vector<2x8x1xf32>
    %54 = vector.broadcast %53 : vector<2x8x1xf32> to vector<2x8x8xf32>
    %55 = arith.subf %51, %54 : vector<2x8x8xf32>
    %56 = math.exp %55 : vector<2x8x8xf32>
    %cst_24 = arith.constant dense<0.000000e+00> : vector<2x8xf32>
    %57 = vector.multi_reduction <add>, %56, %cst_24 [2] : vector<2x8x8xf32> to vector<2x8xf32>
    %58 = vector.shape_cast %57 : vector<2x8xf32> to vector<2x8x1xf32>
    %59 = tpu.reciprocal %58 {approx = true} : vector<2x8x1xf32> -> vector<2x8x1xf32>
    %60 = vector.broadcast %59 : vector<2x8x1xf32> to vector<2x8x8xf32>
    %61 = arith.mulf %56, %60 : vector<2x8x8xf32>
    "tpu.trace_start"() <{level = 10 : i32, message = "bqk,bkd->bqd"}> : () -> ()
    %cst_25 = arith.constant dense<0.000000e+00> : vector<2x8x8xf32>
    %62 = tpu.matmul %61, %50, %cst_25 {dimension_numbers = #tpu.dot_dimension_numbers<[2], [1], [1], [2], [0, 0, 0, 1, 1, 2], [0], [0]>} : vector<2x8x8xf32>, vector<2x8x8xf32>, vector<2x8x8xf32> -> vector<2x8x8xf32>
    "tpu.trace_stop"() : () -> ()
    %63 = vector.extract_strided_slice %15 {offsets = [0, 0, 24], sizes = [2, 8, 8], strides = [1, 1, 1]} : vector<2x8x32xf32> to vector<2x8x8xf32>
    %64 = vector.extract_strided_slice %16 {offsets = [0, 0, 24], sizes = [2, 8, 8], strides = [1, 1, 1]} : vector<2x8x32xf32> to vector<2x8x8xf32>
    %65 = vector.extract_strided_slice %17 {offsets = [0, 0, 24], sizes = [2, 8, 8], strides = [1, 1, 1]} : vector<2x8x32xf32> to vector<2x8x8xf32>
    "tpu.trace_start"() <{level = 10 : i32, message = "bqd,bkd->bqk"}> : () -> ()
    %cst_26 = arith.constant dense<0.000000e+00> : vector<2x8x8xf32>
    %66 = tpu.matmul %63, %64, %cst_26 {dimension_numbers = #tpu.dot_dimension_numbers<[2], [2], [1], [1], [0, 0, 0, 1, 1, 1], [0], [0]>} : vector<2x8x8xf32>, vector<2x8x8xf32>, vector<2x8x8xf32> -> vector<2x8x8xf32>
    "tpu.trace_stop"() : () -> ()
    %cst_27 = arith.constant dense<0xFF800000> : vector<2x8xf32>
    %67 = vector.multi_reduction <maximumf>, %66, %cst_27 [2] : vector<2x8x8xf32> to vector<2x8xf32>
    %68 = vector.shape_cast %67 : vector<2x8xf32> to vector<2x8x1xf32>
    %69 = vector.broadcast %68 : vector<2x8x1xf32> to vector<2x8x8xf32>
    %70 = arith.subf %66, %69 : vector<2x8x8xf32>
    %71 = math.exp %70 : vector<2x8x8xf32>
    %cst_28 = arith.constant dense<0.000000e+00> : vector<2x8xf32>
    %72 = vector.multi_reduction <add>, %71, %cst_28 [2] : vector<2x8x8xf32> to vector<2x8xf32>
    %73 = vector.shape_cast %72 : vector<2x8xf32> to vector<2x8x1xf32>
    %74 = tpu.reciprocal %73 {approx = true} : vector<2x8x1xf32> -> vector<2x8x1xf32>
    %75 = vector.broadcast %74 : vector<2x8x1xf32> to vector<2x8x8xf32>
    %76 = arith.mulf %71, %75 : vector<2x8x8xf32>
    "tpu.trace_start"() <{level = 10 : i32, message = "bqk,bkd->bqd"}> : () -> ()
    %cst_29 = arith.constant dense<0.000000e+00> : vector<2x8x8xf32>
    %77 = tpu.matmul %76, %65, %cst_29 {dimension_numbers = #tpu.dot_dimension_numbers<[2], [1], [1], [2], [0, 0, 0, 1, 1, 2], [0], [0]>} : vector<2x8x8xf32>, vector<2x8x8xf32>, vector<2x8x8xf32> -> vector<2x8x8xf32>
    "tpu.trace_stop"() : () -> ()
    %78 = tpu.concatenate %32, %47, %62, %77 in 2 : vector<2x8x8xf32>, vector<2x8x8xf32>, vector<2x8x8xf32>, vector<2x8x8xf32> -> vector<2x8x32xf32>
    %79 = vector.shape_cast %78 : vector<2x8x32xf32> to vector<16x32xf32>
    %c0_30 = arith.constant 0 : index
    %c0_31 = arith.constant 0 : index
    %c0_32 = arith.constant 0 : index
    %80 = vector.load %arg5[%c0_30, %c0_31, %c0_32] : memref<2x32x32xf32, #tpu.memory_space<vmem>>, vector<1x32x32xf32>
    %81 = vector.shape_cast %80 : vector<1x32x32xf32> to vector<32x32xf32>
    %cst_33 = arith.constant dense<0.000000e+00> : vector<16x32xf32>
    %82 = tpu.matmul %79, %81, %cst_33 {dimension_numbers = #tpu.dot_dimension_numbers<[1], [0], [0], [1], [0, 0, 1, 1], [], []>} : vector<16x32xf32>, vector<32x32xf32>, vector<16x32xf32> -> vector<16x32xf32>
    %c0_34 = arith.constant 0 : index
    %c0_35 = arith.constant 0 : index
    %c0_36 = arith.constant 0 : index
    %83 = vector.load %arg6[%c0_34, %c0_35, %c0_36] : memref<2x1x32xf32, #tpu.memory_space<vmem>>, vector<1x1x32xf32>
    %84 = vector.shape_cast %83 : vector<1x1x32xf32> to vector<1x32xf32>
    %85 = vector.broadcast %84 : vector<1x32xf32> to vector<16x32xf32>
    %86 = arith.addf %82, %85 : vector<16x32xf32>
    %87 = arith.addf %0, %86 : vector<16x32xf32>
    %c0_37 = arith.constant 0 : index
    %c0_38 = arith.constant 0 : index
    %c0_39 = arith.constant 0 : index
    %88 = vector.load %arg13[%c0_37, %c0_38, %c0_39] : memref<2x1x32xf32, #tpu.memory_space<vmem>>, vector<1x1x32xf32>
    %89 = vector.shape_cast %88 : vector<1x1x32xf32> to vector<1x32xf32>
    %c0_40 = arith.constant 0 : index
    %c0_41 = arith.constant 0 : index
    %c0_42 = arith.constant 0 : index
    %90 = vector.load %arg14[%c0_40, %c0_41, %c0_42] : memref<2x1x32xf32, #tpu.memory_space<vmem>>, vector<1x1x32xf32>
    %91 = vector.shape_cast %90 : vector<1x1x32xf32> to vector<1x32xf32>
    %cst_43 = arith.constant dense<0.000000e+00> : vector<16xf32>
    %92 = vector.multi_reduction <add>, %87, %cst_43 [1] : vector<16x32xf32> to vector<16xf32>
    %93 = vector.shape_cast %92 : vector<16xf32> to vector<16x1xf32>
    %cst_44 = arith.constant 3.200000e+01 : f32
    %94 = vector.broadcast %cst_44 : f32 to vector<16x1xf32>
    %95 = arith.divf %93, %94 : vector<16x1xf32>
    %96 = vector.broadcast %95 : vector<16x1xf32> to vector<16x32xf32>
    %97 = arith.subf %87, %96 : vector<16x32xf32>
    %98 = arith.mulf %97, %97 : vector<16x32xf32>
    %cst_45 = arith.constant dense<0.000000e+00> : vector<16xf32>
    %99 = vector.multi_reduction <add>, %98, %cst_45 [1] : vector<16x32xf32> to vector<16xf32>
    %100 = vector.shape_cast %99 : vector<16xf32> to vector<16x1xf32>
    %cst_46 = arith.constant 3.200000e+01 : f32
    %101 = vector.broadcast %cst_46 : f32 to vector<16x1xf32>
    %102 = arith.divf %100, %101 : vector<16x1xf32>
    %103 = vector.broadcast %95 : vector<16x1xf32> to vector<16x32xf32>
    %104 = arith.subf %87, %103 : vector<16x32xf32>
    %cst_47 = arith.constant 9.99999974E-6 : f32
    %105 = vector.broadcast %cst_47 : f32 to vector<16x1xf32>
    %106 = arith.addf %102, %105 : vector<16x1xf32>
    %107 = math.rsqrt %106 : vector<16x1xf32>
    %108 = vector.broadcast %107 : vector<16x1xf32> to vector<16x32xf32>
    %109 = arith.mulf %104, %108 : vector<16x32xf32>
    %110 = vector.broadcast %89 : vector<1x32xf32> to vector<16x32xf32>
    %111 = arith.mulf %109, %110 : vector<16x32xf32>
    %112 = vector.broadcast %91 : vector<1x32xf32> to vector<16x32xf32>
    %113 = arith.addf %111, %112 : vector<16x32xf32>
    %c0_48 = arith.constant 0 : index
    %c0_49 = arith.constant 0 : index
    %c0_50 = arith.constant 0 : index
    %114 = vector.load %arg7[%c0_48, %c0_49, %c0_50] : memref<2x32x32xf32, #tpu.memory_space<vmem>>, vector<1x32x32xf32>
    %115 = vector.shape_cast %114 : vector<1x32x32xf32> to vector<32x32xf32>
    %cst_51 = arith.constant dense<0.000000e+00> : vector<16x32xf32>
    %116 = tpu.matmul %113, %115, %cst_51 {dimension_numbers = #tpu.dot_dimension_numbers<[1], [0], [0], [1], [0, 0, 1, 1], [], []>} : vector<16x32xf32>, vector<32x32xf32>, vector<16x32xf32> -> vector<16x32xf32>
    %c0_52 = arith.constant 0 : index
    %c0_53 = arith.constant 0 : index
    %c0_54 = arith.constant 0 : index
    %117 = vector.load %arg8[%c0_52, %c0_53, %c0_54] : memref<2x1x32xf32, #tpu.memory_space<vmem>>, vector<1x1x32xf32>
    %118 = vector.shape_cast %117 : vector<1x1x32xf32> to vector<1x32xf32>
    %119 = vector.broadcast %118 : vector<1x32xf32> to vector<16x32xf32>
    %120 = arith.addf %116, %119 : vector<16x32xf32>
    %121 = vector.extract_strided_slice %6 {offsets = [0, 0], sizes = [32, 64], strides = [1, 1]} : vector<32x128xf32> to vector<32x64xf32>
    %122 = vector.shape_cast %121 : vector<32x64xf32> to vector<2x16x64xf32>
    %123 = vector.shape_cast %120 : vector<16x32xf32> to vector<2x8x32xf32>
    %124 = vector.extract_strided_slice %122 {offsets = [0, 0, 0], sizes = [2, 16, 32], strides = [1, 1, 1]} : vector<2x16x64xf32> to vector<2x16x32xf32>
    %125 = vector.extract_strided_slice %122 {offsets = [0, 0, 32], sizes = [2, 16, 32], strides = [1, 1, 1]} : vector<2x16x64xf32> to vector<2x16x32xf32>
    %126 = vector.extract_strided_slice %123 {offsets = [0, 0, 0], sizes = [2, 8, 8], strides = [1, 1, 1]} : vector<2x8x32xf32> to vector<2x8x8xf32>
    %127 = vector.extract_strided_slice %124 {offsets = [0, 0, 0], sizes = [2, 16, 8], strides = [1, 1, 1]} : vector<2x16x32xf32> to vector<2x16x8xf32>
    %128 = vector.extract_strided_slice %125 {offsets = [0, 0, 0], sizes = [2, 16, 8], strides = [1, 1, 1]} : vector<2x16x32xf32> to vector<2x16x8xf32>
    "tpu.trace_start"() <{level = 10 : i32, message = "bqd,bkd->bqk"}> : () -> ()
    %cst_55 = arith.constant dense<0.000000e+00> : vector<2x8x16xf32>
    %129 = tpu.matmul %126, %127, %cst_55 {dimension_numbers = #tpu.dot_dimension_numbers<[2], [2], [1], [1], [0, 0, 0, 1, 1, 1], [0], [0]>} : vector<2x8x8xf32>, vector<2x16x8xf32>, vector<2x8x16xf32> -> vector<2x8x16xf32>
    "tpu.trace_stop"() : () -> ()
    %cst_56 = arith.constant dense<0xFF800000> : vector<2x8xf32>
    %130 = vector.multi_reduction <maximumf>, %129, %cst_56 [2] : vector<2x8x16xf32> to vector<2x8xf32>
    %131 = vector.shape_cast %130 : vector<2x8xf32> to vector<2x8x1xf32>
    %132 = vector.broadcast %131 : vector<2x8x1xf32> to vector<2x8x16xf32>
    %133 = arith.subf %129, %132 : vector<2x8x16xf32>
    %134 = math.exp %133 : vector<2x8x16xf32>
    %cst_57 = arith.constant dense<0.000000e+00> : vector<2x8xf32>
    %135 = vector.multi_reduction <add>, %134, %cst_57 [2] : vector<2x8x16xf32> to vector<2x8xf32>
    %136 = vector.shape_cast %135 : vector<2x8xf32> to vector<2x8x1xf32>
    %137 = tpu.reciprocal %136 {approx = true} : vector<2x8x1xf32> -> vector<2x8x1xf32>
    %138 = vector.broadcast %137 : vector<2x8x1xf32> to vector<2x8x16xf32>
    %139 = arith.mulf %134, %138 : vector<2x8x16xf32>
    "tpu.trace_start"() <{level = 10 : i32, message = "bqk,bkd->bqd"}> : () -> ()
    %cst_58 = arith.constant dense<0.000000e+00> : vector<2x8x8xf32>
    %140 = tpu.matmul %139, %128, %cst_58 {dimension_numbers = #tpu.dot_dimension_numbers<[2], [1], [1], [2], [0, 0, 0, 1, 1, 2], [0], [0]>} : vector<2x8x16xf32>, vector<2x16x8xf32>, vector<2x8x8xf32> -> vector<2x8x8xf32>
    "tpu.trace_stop"() : () -> ()
    %141 = vector.extract_strided_slice %123 {offsets = [0, 0, 8], sizes = [2, 8, 8], strides = [1, 1, 1]} : vector<2x8x32xf32> to vector<2x8x8xf32>
    %142 = vector.extract_strided_slice %124 {offsets = [0, 0, 8], sizes = [2, 16, 8], strides = [1, 1, 1]} : vector<2x16x32xf32> to vector<2x16x8xf32>
    %143 = vector.extract_strided_slice %125 {offsets = [0, 0, 8], sizes = [2, 16, 8], strides = [1, 1, 1]} : vector<2x16x32xf32> to vector<2x16x8xf32>
    "tpu.trace_start"() <{level = 10 : i32, message = "bqd,bkd->bqk"}> : () -> ()
    %cst_59 = arith.constant dense<0.000000e+00> : vector<2x8x16xf32>
    %144 = tpu.matmul %141, %142, %cst_59 {dimension_numbers = #tpu.dot_dimension_numbers<[2], [2], [1], [1], [0, 0, 0, 1, 1, 1], [0], [0]>} : vector<2x8x8xf32>, vector<2x16x8xf32>, vector<2x8x16xf32> -> vector<2x8x16xf32>
    "tpu.trace_stop"() : () -> ()
    %cst_60 = arith.constant dense<0xFF800000> : vector<2x8xf32>
    %145 = vector.multi_reduction <maximumf>, %144, %cst_60 [2] : vector<2x8x16xf32> to vector<2x8xf32>
    %146 = vector.shape_cast %145 : vector<2x8xf32> to vector<2x8x1xf32>
    %147 = vector.broadcast %146 : vector<2x8x1xf32> to vector<2x8x16xf32>
    %148 = arith.subf %144, %147 : vector<2x8x16xf32>
    %149 = math.exp %148 : vector<2x8x16xf32>
    %cst_61 = arith.constant dense<0.000000e+00> : vector<2x8xf32>
    %150 = vector.multi_reduction <add>, %149, %cst_61 [2] : vector<2x8x16xf32> to vector<2x8xf32>
    %151 = vector.shape_cast %150 : vector<2x8xf32> to vector<2x8x1xf32>
    %152 = tpu.reciprocal %151 {approx = true} : vector<2x8x1xf32> -> vector<2x8x1xf32>
    %153 = vector.broadcast %152 : vector<2x8x1xf32> to vector<2x8x16xf32>
    %154 = arith.mulf %149, %153 : vector<2x8x16xf32>
    "tpu.trace_start"() <{level = 10 : i32, message = "bqk,bkd->bqd"}> : () -> ()
    %cst_62 = arith.constant dense<0.000000e+00> : vector<2x8x8xf32>
    %155 = tpu.matmul %154, %143, %cst_62 {dimension_numbers = #tpu.dot_dimension_numbers<[2], [1], [1], [2], [0, 0, 0, 1, 1, 2], [0], [0]>} : vector<2x8x16xf32>, vector<2x16x8xf32>, vector<2x8x8xf32> -> vector<2x8x8xf32>
    "tpu.trace_stop"() : () -> ()
    %156 = vector.extract_strided_slice %123 {offsets = [0, 0, 16], sizes = [2, 8, 8], strides = [1, 1, 1]} : vector<2x8x32xf32> to vector<2x8x8xf32>
    %157 = vector.extract_strided_slice %124 {offsets = [0, 0, 16], sizes = [2, 16, 8], strides = [1, 1, 1]} : vector<2x16x32xf32> to vector<2x16x8xf32>
    %158 = vector.extract_strided_slice %125 {offsets = [0, 0, 16], sizes = [2, 16, 8], strides = [1, 1, 1]} : vector<2x16x32xf32> to vector<2x16x8xf32>
    "tpu.trace_start"() <{level = 10 : i32, message = "bqd,bkd->bqk"}> : () -> ()
    %cst_63 = arith.constant dense<0.000000e+00> : vector<2x8x16xf32>
    %159 = tpu.matmul %156, %157, %cst_63 {dimension_numbers = #tpu.dot_dimension_numbers<[2], [2], [1], [1], [0, 0, 0, 1, 1, 1], [0], [0]>} : vector<2x8x8xf32>, vector<2x16x8xf32>, vector<2x8x16xf32> -> vector<2x8x16xf32>
    "tpu.trace_stop"() : () -> ()
    %cst_64 = arith.constant dense<0xFF800000> : vector<2x8xf32>
    %160 = vector.multi_reduction <maximumf>, %159, %cst_64 [2] : vector<2x8x16xf32> to vector<2x8xf32>
    %161 = vector.shape_cast %160 : vector<2x8xf32> to vector<2x8x1xf32>
    %162 = vector.broadcast %161 : vector<2x8x1xf32> to vector<2x8x16xf32>
    %163 = arith.subf %159, %162 : vector<2x8x16xf32>
    %164 = math.exp %163 : vector<2x8x16xf32>
    %cst_65 = arith.constant dense<0.000000e+00> : vector<2x8xf32>
    %165 = vector.multi_reduction <add>, %164, %cst_65 [2] : vector<2x8x16xf32> to vector<2x8xf32>
    %166 = vector.shape_cast %165 : vector<2x8xf32> to vector<2x8x1xf32>
    %167 = tpu.reciprocal %166 {approx = true} : vector<2x8x1xf32> -> vector<2x8x1xf32>
    %168 = vector.broadcast %167 : vector<2x8x1xf32> to vector<2x8x16xf32>
    %169 = arith.mulf %164, %168 : vector<2x8x16xf32>
    "tpu.trace_start"() <{level = 10 : i32, message = "bqk,bkd->bqd"}> : () -> ()
    %cst_66 = arith.constant dense<0.000000e+00> : vector<2x8x8xf32>
    %170 = tpu.matmul %169, %158, %cst_66 {dimension_numbers = #tpu.dot_dimension_numbers<[2], [1], [1], [2], [0, 0, 0, 1, 1, 2], [0], [0]>} : vector<2x8x16xf32>, vector<2x16x8xf32>, vector<2x8x8xf32> -> vector<2x8x8xf32>
    "tpu.trace_stop"() : () -> ()
    %171 = vector.extract_strided_slice %123 {offsets = [0, 0, 24], sizes = [2, 8, 8], strides = [1, 1, 1]} : vector<2x8x32xf32> to vector<2x8x8xf32>
    %172 = vector.extract_strided_slice %124 {offsets = [0, 0, 24], sizes = [2, 16, 8], strides = [1, 1, 1]} : vector<2x16x32xf32> to vector<2x16x8xf32>
    %173 = vector.extract_strided_slice %125 {offsets = [0, 0, 24], sizes = [2, 16, 8], strides = [1, 1, 1]} : vector<2x16x32xf32> to vector<2x16x8xf32>
    "tpu.trace_start"() <{level = 10 : i32, message = "bqd,bkd->bqk"}> : () -> ()
    %cst_67 = arith.constant dense<0.000000e+00> : vector<2x8x16xf32>
    %174 = tpu.matmul %171, %172, %cst_67 {dimension_numbers = #tpu.dot_dimension_numbers<[2], [2], [1], [1], [0, 0, 0, 1, 1, 1], [0], [0]>} : vector<2x8x8xf32>, vector<2x16x8xf32>, vector<2x8x16xf32> -> vector<2x8x16xf32>
    "tpu.trace_stop"() : () -> ()
    %cst_68 = arith.constant dense<0xFF800000> : vector<2x8xf32>
    %175 = vector.multi_reduction <maximumf>, %174, %cst_68 [2] : vector<2x8x16xf32> to vector<2x8xf32>
    %176 = vector.shape_cast %175 : vector<2x8xf32> to vector<2x8x1xf32>
    %177 = vector.broadcast %176 : vector<2x8x1xf32> to vector<2x8x16xf32>
    %178 = arith.subf %174, %177 : vector<2x8x16xf32>
    %179 = math.exp %178 : vector<2x8x16xf32>
    %cst_69 = arith.constant dense<0.000000e+00> : vector<2x8xf32>
    %180 = vector.multi_reduction <add>, %179, %cst_69 [2] : vector<2x8x16xf32> to vector<2x8xf32>
    %181 = vector.shape_cast %180 : vector<2x8xf32> to vector<2x8x1xf32>
    %182 = tpu.reciprocal %181 {approx = true} : vector<2x8x1xf32> -> vector<2x8x1xf32>
    %183 = vector.broadcast %182 : vector<2x8x1xf32> to vector<2x8x16xf32>
    %184 = arith.mulf %179, %183 : vector<2x8x16xf32>
    "tpu.trace_start"() <{level = 10 : i32, message = "bqk,bkd->bqd"}> : () -> ()
    %cst_70 = arith.constant dense<0.000000e+00> : vector<2x8x8xf32>
    %185 = tpu.matmul %184, %173, %cst_70 {dimension_numbers = #tpu.dot_dimension_numbers<[2], [1], [1], [2], [0, 0, 0, 1, 1, 2], [0], [0]>} : vector<2x8x16xf32>, vector<2x16x8xf32>, vector<2x8x8xf32> -> vector<2x8x8xf32>
    "tpu.trace_stop"() : () -> ()
    %186 = tpu.concatenate %140, %155, %170, %185 in 2 : vector<2x8x8xf32>, vector<2x8x8xf32>, vector<2x8x8xf32>, vector<2x8x8xf32> -> vector<2x8x32xf32>
    %187 = vector.shape_cast %186 : vector<2x8x32xf32> to vector<16x32xf32>
    %c0_71 = arith.constant 0 : index
    %c0_72 = arith.constant 0 : index
    %c0_73 = arith.constant 0 : index
    %188 = vector.load %arg11[%c0_71, %c0_72, %c0_73] : memref<2x32x32xf32, #tpu.memory_space<vmem>>, vector<1x32x32xf32>
    %189 = vector.shape_cast %188 : vector<1x32x32xf32> to vector<32x32xf32>
    %cst_74 = arith.constant dense<0.000000e+00> : vector<16x32xf32>
    %190 = tpu.matmul %187, %189, %cst_74 {dimension_numbers = #tpu.dot_dimension_numbers<[1], [0], [0], [1], [0, 0, 1, 1], [], []>} : vector<16x32xf32>, vector<32x32xf32>, vector<16x32xf32> -> vector<16x32xf32>
    %c0_75 = arith.constant 0 : index
    %c0_76 = arith.constant 0 : index
    %c0_77 = arith.constant 0 : index
    %191 = vector.load %arg12[%c0_75, %c0_76, %c0_77] : memref<2x1x32xf32, #tpu.memory_space<vmem>>, vector<1x1x32xf32>
    %192 = vector.shape_cast %191 : vector<1x1x32xf32> to vector<1x32xf32>
    %193 = vector.broadcast %192 : vector<1x32xf32> to vector<16x32xf32>
    %194 = arith.addf %190, %193 : vector<16x32xf32>
    %195 = arith.addf %113, %194 : vector<16x32xf32>
    %c0_78 = arith.constant 0 : index
    %c0_79 = arith.constant 0 : index
    %c0_80 = arith.constant 0 : index
    %196 = vector.load %arg15[%c0_78, %c0_79, %c0_80] : memref<2x1x32xf32, #tpu.memory_space<vmem>>, vector<1x1x32xf32>
    %197 = vector.shape_cast %196 : vector<1x1x32xf32> to vector<1x32xf32>
    %c0_81 = arith.constant 0 : index
    %c0_82 = arith.constant 0 : index
    %c0_83 = arith.constant 0 : index
    %198 = vector.load %arg16[%c0_81, %c0_82, %c0_83] : memref<2x1x32xf32, #tpu.memory_space<vmem>>, vector<1x1x32xf32>
    %199 = vector.shape_cast %198 : vector<1x1x32xf32> to vector<1x32xf32>
    %cst_84 = arith.constant dense<0.000000e+00> : vector<16xf32>
    %200 = vector.multi_reduction <add>, %195, %cst_84 [1] : vector<16x32xf32> to vector<16xf32>
    %201 = vector.shape_cast %200 : vector<16xf32> to vector<16x1xf32>
    %cst_85 = arith.constant 3.200000e+01 : f32
    %202 = vector.broadcast %cst_85 : f32 to vector<16x1xf32>
    %203 = arith.divf %201, %202 : vector<16x1xf32>
    %204 = vector.broadcast %203 : vector<16x1xf32> to vector<16x32xf32>
    %205 = arith.subf %195, %204 : vector<16x32xf32>
    %206 = arith.mulf %205, %205 : vector<16x32xf32>
    %cst_86 = arith.constant dense<0.000000e+00> : vector<16xf32>
    %207 = vector.multi_reduction <add>, %206, %cst_86 [1] : vector<16x32xf32> to vector<16xf32>
    %208 = vector.shape_cast %207 : vector<16xf32> to vector<16x1xf32>
    %cst_87 = arith.constant 3.200000e+01 : f32
    %209 = vector.broadcast %cst_87 : f32 to vector<16x1xf32>
    %210 = arith.divf %208, %209 : vector<16x1xf32>
    %211 = vector.broadcast %203 : vector<16x1xf32> to vector<16x32xf32>
    %212 = arith.subf %195, %211 : vector<16x32xf32>
    %cst_88 = arith.constant 9.99999974E-6 : f32
    %213 = vector.broadcast %cst_88 : f32 to vector<16x1xf32>
    %214 = arith.addf %210, %213 : vector<16x1xf32>
    %215 = math.rsqrt %214 : vector<16x1xf32>
    %216 = vector.broadcast %215 : vector<16x1xf32> to vector<16x32xf32>
    %217 = arith.mulf %212, %216 : vector<16x32xf32>
    %218 = vector.broadcast %197 : vector<1x32xf32> to vector<16x32xf32>
    %219 = arith.mulf %217, %218 : vector<16x32xf32>
    %220 = vector.broadcast %199 : vector<1x32xf32> to vector<16x32xf32>
    %221 = arith.addf %219, %220 : vector<16x32xf32>
    %c0_89 = arith.constant 0 : index
    %c0_90 = arith.constant 0 : index
    %c0_91 = arith.constant 0 : index
    %222 = vector.load %arg19[%c0_89, %c0_90, %c0_91] : memref<2x32x64xf32, #tpu.memory_space<vmem>>, vector<1x32x64xf32>
    %223 = vector.shape_cast %222 : vector<1x32x64xf32> to vector<32x64xf32>
    %cst_92 = arith.constant dense<0.000000e+00> : vector<16x64xf32>
    %224 = tpu.matmul %221, %223, %cst_92 {dimension_numbers = #tpu.dot_dimension_numbers<[1], [0], [0], [1], [0, 0, 1, 1], [], []>} : vector<16x32xf32>, vector<32x64xf32>, vector<16x64xf32> -> vector<16x64xf32>
    %c0_93 = arith.constant 0 : index
    %c0_94 = arith.constant 0 : index
    %c0_95 = arith.constant 0 : index
    %225 = vector.load %arg20[%c0_93, %c0_94, %c0_95] : memref<2x1x64xf32, #tpu.memory_space<vmem>>, vector<1x1x64xf32>
    %226 = vector.shape_cast %225 : vector<1x1x64xf32> to vector<1x64xf32>
    %227 = vector.broadcast %226 : vector<1x64xf32> to vector<16x64xf32>
    %228 = arith.addf %224, %227 : vector<16x64xf32>
    %cst_96 = arith.constant 0.000000e+00 : f32
    %229 = vector.broadcast %cst_96 : f32 to vector<16x64xf32>
    %230 = arith.maximumf %228, %229 : vector<16x64xf32>
    %c0_97 = arith.constant 0 : index
    %c0_98 = arith.constant 0 : index
    %c0_99 = arith.constant 0 : index
    %231 = vector.load %arg21[%c0_97, %c0_98, %c0_99] : memref<2x64x32xf32, #tpu.memory_space<vmem>>, vector<1x64x32xf32>
    %232 = vector.shape_cast %231 : vector<1x64x32xf32> to vector<64x32xf32>
    %cst_100 = arith.constant dense<0.000000e+00> : vector<16x32xf32>
    %233 = tpu.matmul %230, %232, %cst_100 {dimension_numbers = #tpu.dot_dimension_numbers<[1], [0], [0], [1], [0, 0, 1, 1], [], []>} : vector<16x64xf32>, vector<64x32xf32>, vector<16x32xf32> -> vector<16x32xf32>
    %c0_101 = arith.constant 0 : index
    %c0_102 = arith.constant 0 : index
    %c0_103 = arith.constant 0 : index
    %234 = vector.load %arg22[%c0_101, %c0_102, %c0_103] : memref<2x1x32xf32, #tpu.memory_space<vmem>>, vector<1x1x32xf32>
    %235 = vector.shape_cast %234 : vector<1x1x32xf32> to vector<1x32xf32>
    %236 = vector.broadcast %235 : vector<1x32xf32> to vector<16x32xf32>
    %237 = arith.addf %233, %236 : vector<16x32xf32>
    %238 = arith.addf %221, %237 : vector<16x32xf32>
    %c0_104 = arith.constant 0 : index
    %c0_105 = arith.constant 0 : index
    %c0_106 = arith.constant 0 : index
    %239 = vector.load %arg17[%c0_104, %c0_105, %c0_106] : memref<2x1x32xf32, #tpu.memory_space<vmem>>, vector<1x1x32xf32>
    %240 = vector.shape_cast %239 : vector<1x1x32xf32> to vector<1x32xf32>
    %c0_107 = arith.constant 0 : index
    %c0_108 = arith.constant 0 : index
    %c0_109 = arith.constant 0 : index
    %241 = vector.load %arg18[%c0_107, %c0_108, %c0_109] : memref<2x1x32xf32, #tpu.memory_space<vmem>>, vector<1x1x32xf32>
    %242 = vector.shape_cast %241 : vector<1x1x32xf32> to vector<1x32xf32>
    %cst_110 = arith.constant dense<0.000000e+00> : vector<16xf32>
    %243 = vector.multi_reduction <add>, %238, %cst_110 [1] : vector<16x32xf32> to vector<16xf32>
    %244 = vector.shape_cast %243 : vector<16xf32> to vector<16x1xf32>
    %cst_111 = arith.constant 3.200000e+01 : f32
    %245 = vector.broadcast %cst_111 : f32 to vector<16x1xf32>
    %246 = arith.divf %244, %245 : vector<16x1xf32>
    %247 = vector.broadcast %246 : vector<16x1xf32> to vector<16x32xf32>
    %248 = arith.subf %238, %247 : vector<16x32xf32>
    %249 = arith.mulf %248, %248 : vector<16x32xf32>
    %cst_112 = arith.constant dense<0.000000e+00> : vector<16xf32>
    %250 = vector.multi_reduction <add>, %249, %cst_112 [1] : vector<16x32xf32> to vector<16xf32>
    %251 = vector.shape_cast %250 : vector<16xf32> to vector<16x1xf32>
    %cst_113 = arith.constant 3.200000e+01 : f32
    %252 = vector.broadcast %cst_113 : f32 to vector<16x1xf32>
    %253 = arith.divf %251, %252 : vector<16x1xf32>
    %254 = vector.broadcast %246 : vector<16x1xf32> to vector<16x32xf32>
    %255 = arith.subf %238, %254 : vector<16x32xf32>
    %cst_114 = arith.constant 9.99999974E-6 : f32
    %256 = vector.broadcast %cst_114 : f32 to vector<16x1xf32>
    %257 = arith.addf %253, %256 : vector<16x1xf32>
    %258 = math.rsqrt %257 : vector<16x1xf32>
    %259 = vector.broadcast %258 : vector<16x1xf32> to vector<16x32xf32>
    %260 = arith.mulf %255, %259 : vector<16x32xf32>
    %261 = vector.broadcast %240 : vector<1x32xf32> to vector<16x32xf32>
    %262 = arith.mulf %260, %261 : vector<16x32xf32>
    %263 = vector.broadcast %242 : vector<1x32xf32> to vector<16x32xf32>
    %264 = arith.addf %262, %263 : vector<16x32xf32>
    %c1 = arith.constant 1 : index
    %c0_115 = arith.constant 0 : index
    %c0_116 = arith.constant 0 : index
    %265 = vector.load %arg3[%c1, %c0_115, %c0_116] : memref<2x32x96xf32, #tpu.memory_space<vmem>>, vector<1x32x96xf32>
    %266 = vector.shape_cast %265 : vector<1x32x96xf32> to vector<32x96xf32>
    %cst_117 = arith.constant dense<0.000000e+00> : vector<16x96xf32>
    %267 = tpu.matmul %264, %266, %cst_117 {dimension_numbers = #tpu.dot_dimension_numbers<[1], [0], [0], [1], [0, 0, 1, 1], [], []>} : vector<16x32xf32>, vector<32x96xf32>, vector<16x96xf32> -> vector<16x96xf32>
    %c1_118 = arith.constant 1 : index
    %c0_119 = arith.constant 0 : index
    %c0_120 = arith.constant 0 : index
    %268 = vector.load %arg4[%c1_118, %c0_119, %c0_120] : memref<2x1x96xf32, #tpu.memory_space<vmem>>, vector<1x1x96xf32>
    %269 = vector.shape_cast %268 : vector<1x1x96xf32> to vector<1x96xf32>
    %270 = vector.broadcast %269 : vector<1x96xf32> to vector<16x96xf32>
    %271 = arith.addf %267, %270 : vector<16x96xf32>
    %272 = vector.shape_cast %271 : vector<16x96xf32> to vector<2x8x96xf32>
    %273 = vector.extract_strided_slice %272 {offsets = [0, 0, 0], sizes = [2, 8, 32], strides = [1, 1, 1]} : vector<2x8x96xf32> to vector<2x8x32xf32>
    %274 = vector.extract_strided_slice %272 {offsets = [0, 0, 32], sizes = [2, 8, 32], strides = [1, 1, 1]} : vector<2x8x96xf32> to vector<2x8x32xf32>
    %275 = vector.extract_strided_slice %272 {offsets = [0, 0, 64], sizes = [2, 8, 32], strides = [1, 1, 1]} : vector<2x8x96xf32> to vector<2x8x32xf32>
    %276 = vector.extract_strided_slice %273 {offsets = [0, 0, 0], sizes = [2, 8, 8], strides = [1, 1, 1]} : vector<2x8x32xf32> to vector<2x8x8xf32>
    %277 = vector.extract_strided_slice %274 {offsets = [0, 0, 0], sizes = [2, 8, 8], strides = [1, 1, 1]} : vector<2x8x32xf32> to vector<2x8x8xf32>
    %278 = vector.extract_strided_slice %275 {offsets = [0, 0, 0], sizes = [2, 8, 8], strides = [1, 1, 1]} : vector<2x8x32xf32> to vector<2x8x8xf32>
    "tpu.trace_start"() <{level = 10 : i32, message = "bqd,bkd->bqk"}> : () -> ()
    %cst_121 = arith.constant dense<0.000000e+00> : vector<2x8x8xf32>
    %279 = tpu.matmul %276, %277, %cst_121 {dimension_numbers = #tpu.dot_dimension_numbers<[2], [2], [1], [1], [0, 0, 0, 1, 1, 1], [0], [0]>} : vector<2x8x8xf32>, vector<2x8x8xf32>, vector<2x8x8xf32> -> vector<2x8x8xf32>
    "tpu.trace_stop"() : () -> ()
    %cst_122 = arith.constant dense<0xFF800000> : vector<2x8xf32>
    %280 = vector.multi_reduction <maximumf>, %279, %cst_122 [2] : vector<2x8x8xf32> to vector<2x8xf32>
    %281 = vector.shape_cast %280 : vector<2x8xf32> to vector<2x8x1xf32>
    %282 = vector.broadcast %281 : vector<2x8x1xf32> to vector<2x8x8xf32>
    %283 = arith.subf %279, %282 : vector<2x8x8xf32>
    %284 = math.exp %283 : vector<2x8x8xf32>
    %cst_123 = arith.constant dense<0.000000e+00> : vector<2x8xf32>
    %285 = vector.multi_reduction <add>, %284, %cst_123 [2] : vector<2x8x8xf32> to vector<2x8xf32>
    %286 = vector.shape_cast %285 : vector<2x8xf32> to vector<2x8x1xf32>
    %287 = tpu.reciprocal %286 {approx = true} : vector<2x8x1xf32> -> vector<2x8x1xf32>
    %288 = vector.broadcast %287 : vector<2x8x1xf32> to vector<2x8x8xf32>
    %289 = arith.mulf %284, %288 : vector<2x8x8xf32>
    "tpu.trace_start"() <{level = 10 : i32, message = "bqk,bkd->bqd"}> : () -> ()
    %cst_124 = arith.constant dense<0.000000e+00> : vector<2x8x8xf32>
    %290 = tpu.matmul %289, %278, %cst_124 {dimension_numbers = #tpu.dot_dimension_numbers<[2], [1], [1], [2], [0, 0, 0, 1, 1, 2], [0], [0]>} : vector<2x8x8xf32>, vector<2x8x8xf32>, vector<2x8x8xf32> -> vector<2x8x8xf32>
    "tpu.trace_stop"() : () -> ()
    %291 = vector.extract_strided_slice %273 {offsets = [0, 0, 8], sizes = [2, 8, 8], strides = [1, 1, 1]} : vector<2x8x32xf32> to vector<2x8x8xf32>
    %292 = vector.extract_strided_slice %274 {offsets = [0, 0, 8], sizes = [2, 8, 8], strides = [1, 1, 1]} : vector<2x8x32xf32> to vector<2x8x8xf32>
    %293 = vector.extract_strided_slice %275 {offsets = [0, 0, 8], sizes = [2, 8, 8], strides = [1, 1, 1]} : vector<2x8x32xf32> to vector<2x8x8xf32>
    "tpu.trace_start"() <{level = 10 : i32, message = "bqd,bkd->bqk"}> : () -> ()
    %cst_125 = arith.constant dense<0.000000e+00> : vector<2x8x8xf32>
    %294 = tpu.matmul %291, %292, %cst_125 {dimension_numbers = #tpu.dot_dimension_numbers<[2], [2], [1], [1], [0, 0, 0, 1, 1, 1], [0], [0]>} : vector<2x8x8xf32>, vector<2x8x8xf32>, vector<2x8x8xf32> -> vector<2x8x8xf32>
    "tpu.trace_stop"() : () -> ()
    %cst_126 = arith.constant dense<0xFF800000> : vector<2x8xf32>
    %295 = vector.multi_reduction <maximumf>, %294, %cst_126 [2] : vector<2x8x8xf32> to vector<2x8xf32>
    %296 = vector.shape_cast %295 : vector<2x8xf32> to vector<2x8x1xf32>
    %297 = vector.broadcast %296 : vector<2x8x1xf32> to vector<2x8x8xf32>
    %298 = arith.subf %294, %297 : vector<2x8x8xf32>
    %299 = math.exp %298 : vector<2x8x8xf32>
    %cst_127 = arith.constant dense<0.000000e+00> : vector<2x8xf32>
    %300 = vector.multi_reduction <add>, %299, %cst_127 [2] : vector<2x8x8xf32> to vector<2x8xf32>
    %301 = vector.shape_cast %300 : vector<2x8xf32> to vector<2x8x1xf32>
    %302 = tpu.reciprocal %301 {approx = true} : vector<2x8x1xf32> -> vector<2x8x1xf32>
    %303 = vector.broadcast %302 : vector<2x8x1xf32> to vector<2x8x8xf32>
    %304 = arith.mulf %299, %303 : vector<2x8x8xf32>
    "tpu.trace_start"() <{level = 10 : i32, message = "bqk,bkd->bqd"}> : () -> ()
    %cst_128 = arith.constant dense<0.000000e+00> : vector<2x8x8xf32>
    %305 = tpu.matmul %304, %293, %cst_128 {dimension_numbers = #tpu.dot_dimension_numbers<[2], [1], [1], [2], [0, 0, 0, 1, 1, 2], [0], [0]>} : vector<2x8x8xf32>, vector<2x8x8xf32>, vector<2x8x8xf32> -> vector<2x8x8xf32>
    "tpu.trace_stop"() : () -> ()
    %306 = vector.extract_strided_slice %273 {offsets = [0, 0, 16], sizes = [2, 8, 8], strides = [1, 1, 1]} : vector<2x8x32xf32> to vector<2x8x8xf32>
    %307 = vector.extract_strided_slice %274 {offsets = [0, 0, 16], sizes = [2, 8, 8], strides = [1, 1, 1]} : vector<2x8x32xf32> to vector<2x8x8xf32>
    %308 = vector.extract_strided_slice %275 {offsets = [0, 0, 16], sizes = [2, 8, 8], strides = [1, 1, 1]} : vector<2x8x32xf32> to vector<2x8x8xf32>
    "tpu.trace_start"() <{level = 10 : i32, message = "bqd,bkd->bqk"}> : () -> ()
    %cst_129 = arith.constant dense<0.000000e+00> : vector<2x8x8xf32>
    %309 = tpu.matmul %306, %307, %cst_129 {dimension_numbers = #tpu.dot_dimension_numbers<[2], [2], [1], [1], [0, 0, 0, 1, 1, 1], [0], [0]>} : vector<2x8x8xf32>, vector<2x8x8xf32>, vector<2x8x8xf32> -> vector<2x8x8xf32>
    "tpu.trace_stop"() : () -> ()
    %cst_130 = arith.constant dense<0xFF800000> : vector<2x8xf32>
    %310 = vector.multi_reduction <maximumf>, %309, %cst_130 [2] : vector<2x8x8xf32> to vector<2x8xf32>
    %311 = vector.shape_cast %310 : vector<2x8xf32> to vector<2x8x1xf32>
    %312 = vector.broadcast %311 : vector<2x8x1xf32> to vector<2x8x8xf32>
    %313 = arith.subf %309, %312 : vector<2x8x8xf32>
    %314 = math.exp %313 : vector<2x8x8xf32>
    %cst_131 = arith.constant dense<0.000000e+00> : vector<2x8xf32>
    %315 = vector.multi_reduction <add>, %314, %cst_131 [2] : vector<2x8x8xf32> to vector<2x8xf32>
    %316 = vector.shape_cast %315 : vector<2x8xf32> to vector<2x8x1xf32>
    %317 = tpu.reciprocal %316 {approx = true} : vector<2x8x1xf32> -> vector<2x8x1xf32>
    %318 = vector.broadcast %317 : vector<2x8x1xf32> to vector<2x8x8xf32>
    %319 = arith.mulf %314, %318 : vector<2x8x8xf32>
    "tpu.trace_start"() <{level = 10 : i32, message = "bqk,bkd->bqd"}> : () -> ()
    %cst_132 = arith.constant dense<0.000000e+00> : vector<2x8x8xf32>
    %320 = tpu.matmul %319, %308, %cst_132 {dimension_numbers = #tpu.dot_dimension_numbers<[2], [1], [1], [2], [0, 0, 0, 1, 1, 2], [0], [0]>} : vector<2x8x8xf32>, vector<2x8x8xf32>, vector<2x8x8xf32> -> vector<2x8x8xf32>
    "tpu.trace_stop"() : () -> ()
    %321 = vector.extract_strided_slice %273 {offsets = [0, 0, 24], sizes = [2, 8, 8], strides = [1, 1, 1]} : vector<2x8x32xf32> to vector<2x8x8xf32>
    %322 = vector.extract_strided_slice %274 {offsets = [0, 0, 24], sizes = [2, 8, 8], strides = [1, 1, 1]} : vector<2x8x32xf32> to vector<2x8x8xf32>
    %323 = vector.extract_strided_slice %275 {offsets = [0, 0, 24], sizes = [2, 8, 8], strides = [1, 1, 1]} : vector<2x8x32xf32> to vector<2x8x8xf32>
    "tpu.trace_start"() <{level = 10 : i32, message = "bqd,bkd->bqk"}> : () -> ()
    %cst_133 = arith.constant dense<0.000000e+00> : vector<2x8x8xf32>
    %324 = tpu.matmul %321, %322, %cst_133 {dimension_numbers = #tpu.dot_dimension_numbers<[2], [2], [1], [1], [0, 0, 0, 1, 1, 1], [0], [0]>} : vector<2x8x8xf32>, vector<2x8x8xf32>, vector<2x8x8xf32> -> vector<2x8x8xf32>
    "tpu.trace_stop"() : () -> ()
    %cst_134 = arith.constant dense<0xFF800000> : vector<2x8xf32>
    %325 = vector.multi_reduction <maximumf>, %324, %cst_134 [2] : vector<2x8x8xf32> to vector<2x8xf32>
    %326 = vector.shape_cast %325 : vector<2x8xf32> to vector<2x8x1xf32>
    %327 = vector.broadcast %326 : vector<2x8x1xf32> to vector<2x8x8xf32>
    %328 = arith.subf %324, %327 : vector<2x8x8xf32>
    %329 = math.exp %328 : vector<2x8x8xf32>
    %cst_135 = arith.constant dense<0.000000e+00> : vector<2x8xf32>
    %330 = vector.multi_reduction <add>, %329, %cst_135 [2] : vector<2x8x8xf32> to vector<2x8xf32>
    %331 = vector.shape_cast %330 : vector<2x8xf32> to vector<2x8x1xf32>
    %332 = tpu.reciprocal %331 {approx = true} : vector<2x8x1xf32> -> vector<2x8x1xf32>
    %333 = vector.broadcast %332 : vector<2x8x1xf32> to vector<2x8x8xf32>
    %334 = arith.mulf %329, %333 : vector<2x8x8xf32>
    "tpu.trace_start"() <{level = 10 : i32, message = "bqk,bkd->bqd"}> : () -> ()
    %cst_136 = arith.constant dense<0.000000e+00> : vector<2x8x8xf32>
    %335 = tpu.matmul %334, %323, %cst_136 {dimension_numbers = #tpu.dot_dimension_numbers<[2], [1], [1], [2], [0, 0, 0, 1, 1, 2], [0], [0]>} : vector<2x8x8xf32>, vector<2x8x8xf32>, vector<2x8x8xf32> -> vector<2x8x8xf32>
    "tpu.trace_stop"() : () -> ()
    %336 = tpu.concatenate %290, %305, %320, %335 in 2 : vector<2x8x8xf32>, vector<2x8x8xf32>, vector<2x8x8xf32>, vector<2x8x8xf32> -> vector<2x8x32xf32>
    %337 = vector.shape_cast %336 : vector<2x8x32xf32> to vector<16x32xf32>
    %c1_137 = arith.constant 1 : index
    %c0_138 = arith.constant 0 : index
    %c0_139 = arith.constant 0 : index
    %338 = vector.load %arg5[%c1_137, %c0_138, %c0_139] : memref<2x32x32xf32, #tpu.memory_space<vmem>>, vector<1x32x32xf32>
    %339 = vector.shape_cast %338 : vector<1x32x32xf32> to vector<32x32xf32>
    %cst_140 = arith.constant dense<0.000000e+00> : vector<16x32xf32>
    %340 = tpu.matmul %337, %339, %cst_140 {dimension_numbers = #tpu.dot_dimension_numbers<[1], [0], [0], [1], [0, 0, 1, 1], [], []>} : vector<16x32xf32>, vector<32x32xf32>, vector<16x32xf32> -> vector<16x32xf32>
    %c1_141 = arith.constant 1 : index
    %c0_142 = arith.constant 0 : index
    %c0_143 = arith.constant 0 : index
    %341 = vector.load %arg6[%c1_141, %c0_142, %c0_143] : memref<2x1x32xf32, #tpu.memory_space<vmem>>, vector<1x1x32xf32>
    %342 = vector.shape_cast %341 : vector<1x1x32xf32> to vector<1x32xf32>
    %343 = vector.broadcast %342 : vector<1x32xf32> to vector<16x32xf32>
    %344 = arith.addf %340, %343 : vector<16x32xf32>
    %345 = arith.addf %264, %344 : vector<16x32xf32>
    %c1_144 = arith.constant 1 : index
    %c0_145 = arith.constant 0 : index
    %c0_146 = arith.constant 0 : index
    %346 = vector.load %arg13[%c1_144, %c0_145, %c0_146] : memref<2x1x32xf32, #tpu.memory_space<vmem>>, vector<1x1x32xf32>
    %347 = vector.shape_cast %346 : vector<1x1x32xf32> to vector<1x32xf32>
    %c1_147 = arith.constant 1 : index
    %c0_148 = arith.constant 0 : index
    %c0_149 = arith.constant 0 : index
    %348 = vector.load %arg14[%c1_147, %c0_148, %c0_149] : memref<2x1x32xf32, #tpu.memory_space<vmem>>, vector<1x1x32xf32>
    %349 = vector.shape_cast %348 : vector<1x1x32xf32> to vector<1x32xf32>
    %cst_150 = arith.constant dense<0.000000e+00> : vector<16xf32>
    %350 = vector.multi_reduction <add>, %345, %cst_150 [1] : vector<16x32xf32> to vector<16xf32>
    %351 = vector.shape_cast %350 : vector<16xf32> to vector<16x1xf32>
    %cst_151 = arith.constant 3.200000e+01 : f32
    %352 = vector.broadcast %cst_151 : f32 to vector<16x1xf32>
    %353 = arith.divf %351, %352 : vector<16x1xf32>
    %354 = vector.broadcast %353 : vector<16x1xf32> to vector<16x32xf32>
    %355 = arith.subf %345, %354 : vector<16x32xf32>
    %356 = arith.mulf %355, %355 : vector<16x32xf32>
    %cst_152 = arith.constant dense<0.000000e+00> : vector<16xf32>
    %357 = vector.multi_reduction <add>, %356, %cst_152 [1] : vector<16x32xf32> to vector<16xf32>
    %358 = vector.shape_cast %357 : vector<16xf32> to vector<16x1xf32>
    %cst_153 = arith.constant 3.200000e+01 : f32
    %359 = vector.broadcast %cst_153 : f32 to vector<16x1xf32>
    %360 = arith.divf %358, %359 : vector<16x1xf32>
    %361 = vector.broadcast %353 : vector<16x1xf32> to vector<16x32xf32>
    %362 = arith.subf %345, %361 : vector<16x32xf32>
    %cst_154 = arith.constant 9.99999974E-6 : f32
    %363 = vector.broadcast %cst_154 : f32 to vector<16x1xf32>
    %364 = arith.addf %360, %363 : vector<16x1xf32>
    %365 = math.rsqrt %364 : vector<16x1xf32>
    %366 = vector.broadcast %365 : vector<16x1xf32> to vector<16x32xf32>
    %367 = arith.mulf %362, %366 : vector<16x32xf32>
    %368 = vector.broadcast %347 : vector<1x32xf32> to vector<16x32xf32>
    %369 = arith.mulf %367, %368 : vector<16x32xf32>
    %370 = vector.broadcast %349 : vector<1x32xf32> to vector<16x32xf32>
    %371 = arith.addf %369, %370 : vector<16x32xf32>
    %c1_155 = arith.constant 1 : index
    %c0_156 = arith.constant 0 : index
    %c0_157 = arith.constant 0 : index
    %372 = vector.load %arg7[%c1_155, %c0_156, %c0_157] : memref<2x32x32xf32, #tpu.memory_space<vmem>>, vector<1x32x32xf32>
    %373 = vector.shape_cast %372 : vector<1x32x32xf32> to vector<32x32xf32>
    %cst_158 = arith.constant dense<0.000000e+00> : vector<16x32xf32>
    %374 = tpu.matmul %371, %373, %cst_158 {dimension_numbers = #tpu.dot_dimension_numbers<[1], [0], [0], [1], [0, 0, 1, 1], [], []>} : vector<16x32xf32>, vector<32x32xf32>, vector<16x32xf32> -> vector<16x32xf32>
    %c1_159 = arith.constant 1 : index
    %c0_160 = arith.constant 0 : index
    %c0_161 = arith.constant 0 : index
    %375 = vector.load %arg8[%c1_159, %c0_160, %c0_161] : memref<2x1x32xf32, #tpu.memory_space<vmem>>, vector<1x1x32xf32>
    %376 = vector.shape_cast %375 : vector<1x1x32xf32> to vector<1x32xf32>
    %377 = vector.broadcast %376 : vector<1x32xf32> to vector<16x32xf32>
    %378 = arith.addf %374, %377 : vector<16x32xf32>
    %379 = vector.extract_strided_slice %6 {offsets = [0, 64], sizes = [32, 64], strides = [1, 1]} : vector<32x128xf32> to vector<32x64xf32>
    %380 = vector.shape_cast %379 : vector<32x64xf32> to vector<2x16x64xf32>
    %381 = vector.shape_cast %378 : vector<16x32xf32> to vector<2x8x32xf32>
    %382 = vector.extract_strided_slice %380 {offsets = [0, 0, 0], sizes = [2, 16, 32], strides = [1, 1, 1]} : vector<2x16x64xf32> to vector<2x16x32xf32>
    %383 = vector.extract_strided_slice %380 {offsets = [0, 0, 32], sizes = [2, 16, 32], strides = [1, 1, 1]} : vector<2x16x64xf32> to vector<2x16x32xf32>
    %384 = vector.extract_strided_slice %381 {offsets = [0, 0, 0], sizes = [2, 8, 8], strides = [1, 1, 1]} : vector<2x8x32xf32> to vector<2x8x8xf32>
    %385 = vector.extract_strided_slice %382 {offsets = [0, 0, 0], sizes = [2, 16, 8], strides = [1, 1, 1]} : vector<2x16x32xf32> to vector<2x16x8xf32>
    %386 = vector.extract_strided_slice %383 {offsets = [0, 0, 0], sizes = [2, 16, 8], strides = [1, 1, 1]} : vector<2x16x32xf32> to vector<2x16x8xf32>
    "tpu.trace_start"() <{level = 10 : i32, message = "bqd,bkd->bqk"}> : () -> ()
    %cst_162 = arith.constant dense<0.000000e+00> : vector<2x8x16xf32>
    %387 = tpu.matmul %384, %385, %cst_162 {dimension_numbers = #tpu.dot_dimension_numbers<[2], [2], [1], [1], [0, 0, 0, 1, 1, 1], [0], [0]>} : vector<2x8x8xf32>, vector<2x16x8xf32>, vector<2x8x16xf32> -> vector<2x8x16xf32>
    "tpu.trace_stop"() : () -> ()
    %cst_163 = arith.constant dense<0xFF800000> : vector<2x8xf32>
    %388 = vector.multi_reduction <maximumf>, %387, %cst_163 [2] : vector<2x8x16xf32> to vector<2x8xf32>
    %389 = vector.shape_cast %388 : vector<2x8xf32> to vector<2x8x1xf32>
    %390 = vector.broadcast %389 : vector<2x8x1xf32> to vector<2x8x16xf32>
    %391 = arith.subf %387, %390 : vector<2x8x16xf32>
    %392 = math.exp %391 : vector<2x8x16xf32>
    %cst_164 = arith.constant dense<0.000000e+00> : vector<2x8xf32>
    %393 = vector.multi_reduction <add>, %392, %cst_164 [2] : vector<2x8x16xf32> to vector<2x8xf32>
    %394 = vector.shape_cast %393 : vector<2x8xf32> to vector<2x8x1xf32>
    %395 = tpu.reciprocal %394 {approx = true} : vector<2x8x1xf32> -> vector<2x8x1xf32>
    %396 = vector.broadcast %395 : vector<2x8x1xf32> to vector<2x8x16xf32>
    %397 = arith.mulf %392, %396 : vector<2x8x16xf32>
    "tpu.trace_start"() <{level = 10 : i32, message = "bqk,bkd->bqd"}> : () -> ()
    %cst_165 = arith.constant dense<0.000000e+00> : vector<2x8x8xf32>
    %398 = tpu.matmul %397, %386, %cst_165 {dimension_numbers = #tpu.dot_dimension_numbers<[2], [1], [1], [2], [0, 0, 0, 1, 1, 2], [0], [0]>} : vector<2x8x16xf32>, vector<2x16x8xf32>, vector<2x8x8xf32> -> vector<2x8x8xf32>
    "tpu.trace_stop"() : () -> ()
    %399 = vector.extract_strided_slice %381 {offsets = [0, 0, 8], sizes = [2, 8, 8], strides = [1, 1, 1]} : vector<2x8x32xf32> to vector<2x8x8xf32>
    %400 = vector.extract_strided_slice %382 {offsets = [0, 0, 8], sizes = [2, 16, 8], strides = [1, 1, 1]} : vector<2x16x32xf32> to vector<2x16x8xf32>
    %401 = vector.extract_strided_slice %383 {offsets = [0, 0, 8], sizes = [2, 16, 8], strides = [1, 1, 1]} : vector<2x16x32xf32> to vector<2x16x8xf32>
    "tpu.trace_start"() <{level = 10 : i32, message = "bqd,bkd->bqk"}> : () -> ()
    %cst_166 = arith.constant dense<0.000000e+00> : vector<2x8x16xf32>
    %402 = tpu.matmul %399, %400, %cst_166 {dimension_numbers = #tpu.dot_dimension_numbers<[2], [2], [1], [1], [0, 0, 0, 1, 1, 1], [0], [0]>} : vector<2x8x8xf32>, vector<2x16x8xf32>, vector<2x8x16xf32> -> vector<2x8x16xf32>
    "tpu.trace_stop"() : () -> ()
    %cst_167 = arith.constant dense<0xFF800000> : vector<2x8xf32>
    %403 = vector.multi_reduction <maximumf>, %402, %cst_167 [2] : vector<2x8x16xf32> to vector<2x8xf32>
    %404 = vector.shape_cast %403 : vector<2x8xf32> to vector<2x8x1xf32>
    %405 = vector.broadcast %404 : vector<2x8x1xf32> to vector<2x8x16xf32>
    %406 = arith.subf %402, %405 : vector<2x8x16xf32>
    %407 = math.exp %406 : vector<2x8x16xf32>
    %cst_168 = arith.constant dense<0.000000e+00> : vector<2x8xf32>
    %408 = vector.multi_reduction <add>, %407, %cst_168 [2] : vector<2x8x16xf32> to vector<2x8xf32>
    %409 = vector.shape_cast %408 : vector<2x8xf32> to vector<2x8x1xf32>
    %410 = tpu.reciprocal %409 {approx = true} : vector<2x8x1xf32> -> vector<2x8x1xf32>
    %411 = vector.broadcast %410 : vector<2x8x1xf32> to vector<2x8x16xf32>
    %412 = arith.mulf %407, %411 : vector<2x8x16xf32>
    "tpu.trace_start"() <{level = 10 : i32, message = "bqk,bkd->bqd"}> : () -> ()
    %cst_169 = arith.constant dense<0.000000e+00> : vector<2x8x8xf32>
    %413 = tpu.matmul %412, %401, %cst_169 {dimension_numbers = #tpu.dot_dimension_numbers<[2], [1], [1], [2], [0, 0, 0, 1, 1, 2], [0], [0]>} : vector<2x8x16xf32>, vector<2x16x8xf32>, vector<2x8x8xf32> -> vector<2x8x8xf32>
    "tpu.trace_stop"() : () -> ()
    %414 = vector.extract_strided_slice %381 {offsets = [0, 0, 16], sizes = [2, 8, 8], strides = [1, 1, 1]} : vector<2x8x32xf32> to vector<2x8x8xf32>
    %415 = vector.extract_strided_slice %382 {offsets = [0, 0, 16], sizes = [2, 16, 8], strides = [1, 1, 1]} : vector<2x16x32xf32> to vector<2x16x8xf32>
    %416 = vector.extract_strided_slice %383 {offsets = [0, 0, 16], sizes = [2, 16, 8], strides = [1, 1, 1]} : vector<2x16x32xf32> to vector<2x16x8xf32>
    "tpu.trace_start"() <{level = 10 : i32, message = "bqd,bkd->bqk"}> : () -> ()
    %cst_170 = arith.constant dense<0.000000e+00> : vector<2x8x16xf32>
    %417 = tpu.matmul %414, %415, %cst_170 {dimension_numbers = #tpu.dot_dimension_numbers<[2], [2], [1], [1], [0, 0, 0, 1, 1, 1], [0], [0]>} : vector<2x8x8xf32>, vector<2x16x8xf32>, vector<2x8x16xf32> -> vector<2x8x16xf32>
    "tpu.trace_stop"() : () -> ()
    %cst_171 = arith.constant dense<0xFF800000> : vector<2x8xf32>
    %418 = vector.multi_reduction <maximumf>, %417, %cst_171 [2] : vector<2x8x16xf32> to vector<2x8xf32>
    %419 = vector.shape_cast %418 : vector<2x8xf32> to vector<2x8x1xf32>
    %420 = vector.broadcast %419 : vector<2x8x1xf32> to vector<2x8x16xf32>
    %421 = arith.subf %417, %420 : vector<2x8x16xf32>
    %422 = math.exp %421 : vector<2x8x16xf32>
    %cst_172 = arith.constant dense<0.000000e+00> : vector<2x8xf32>
    %423 = vector.multi_reduction <add>, %422, %cst_172 [2] : vector<2x8x16xf32> to vector<2x8xf32>
    %424 = vector.shape_cast %423 : vector<2x8xf32> to vector<2x8x1xf32>
    %425 = tpu.reciprocal %424 {approx = true} : vector<2x8x1xf32> -> vector<2x8x1xf32>
    %426 = vector.broadcast %425 : vector<2x8x1xf32> to vector<2x8x16xf32>
    %427 = arith.mulf %422, %426 : vector<2x8x16xf32>
    "tpu.trace_start"() <{level = 10 : i32, message = "bqk,bkd->bqd"}> : () -> ()
    %cst_173 = arith.constant dense<0.000000e+00> : vector<2x8x8xf32>
    %428 = tpu.matmul %427, %416, %cst_173 {dimension_numbers = #tpu.dot_dimension_numbers<[2], [1], [1], [2], [0, 0, 0, 1, 1, 2], [0], [0]>} : vector<2x8x16xf32>, vector<2x16x8xf32>, vector<2x8x8xf32> -> vector<2x8x8xf32>
    "tpu.trace_stop"() : () -> ()
    %429 = vector.extract_strided_slice %381 {offsets = [0, 0, 24], sizes = [2, 8, 8], strides = [1, 1, 1]} : vector<2x8x32xf32> to vector<2x8x8xf32>
    %430 = vector.extract_strided_slice %382 {offsets = [0, 0, 24], sizes = [2, 16, 8], strides = [1, 1, 1]} : vector<2x16x32xf32> to vector<2x16x8xf32>
    %431 = vector.extract_strided_slice %383 {offsets = [0, 0, 24], sizes = [2, 16, 8], strides = [1, 1, 1]} : vector<2x16x32xf32> to vector<2x16x8xf32>
    "tpu.trace_start"() <{level = 10 : i32, message = "bqd,bkd->bqk"}> : () -> ()
    %cst_174 = arith.constant dense<0.000000e+00> : vector<2x8x16xf32>
    %432 = tpu.matmul %429, %430, %cst_174 {dimension_numbers = #tpu.dot_dimension_numbers<[2], [2], [1], [1], [0, 0, 0, 1, 1, 1], [0], [0]>} : vector<2x8x8xf32>, vector<2x16x8xf32>, vector<2x8x16xf32> -> vector<2x8x16xf32>
    "tpu.trace_stop"() : () -> ()
    %cst_175 = arith.constant dense<0xFF800000> : vector<2x8xf32>
    %433 = vector.multi_reduction <maximumf>, %432, %cst_175 [2] : vector<2x8x16xf32> to vector<2x8xf32>
    %434 = vector.shape_cast %433 : vector<2x8xf32> to vector<2x8x1xf32>
    %435 = vector.broadcast %434 : vector<2x8x1xf32> to vector<2x8x16xf32>
    %436 = arith.subf %432, %435 : vector<2x8x16xf32>
    %437 = math.exp %436 : vector<2x8x16xf32>
    %cst_176 = arith.constant dense<0.000000e+00> : vector<2x8xf32>
    %438 = vector.multi_reduction <add>, %437, %cst_176 [2] : vector<2x8x16xf32> to vector<2x8xf32>
    %439 = vector.shape_cast %438 : vector<2x8xf32> to vector<2x8x1xf32>
    %440 = tpu.reciprocal %439 {approx = true} : vector<2x8x1xf32> -> vector<2x8x1xf32>
    %441 = vector.broadcast %440 : vector<2x8x1xf32> to vector<2x8x16xf32>
    %442 = arith.mulf %437, %441 : vector<2x8x16xf32>
    "tpu.trace_start"() <{level = 10 : i32, message = "bqk,bkd->bqd"}> : () -> ()
    %cst_177 = arith.constant dense<0.000000e+00> : vector<2x8x8xf32>
    %443 = tpu.matmul %442, %431, %cst_177 {dimension_numbers = #tpu.dot_dimension_numbers<[2], [1], [1], [2], [0, 0, 0, 1, 1, 2], [0], [0]>} : vector<2x8x16xf32>, vector<2x16x8xf32>, vector<2x8x8xf32> -> vector<2x8x8xf32>
    "tpu.trace_stop"() : () -> ()
    %444 = tpu.concatenate %398, %413, %428, %443 in 2 : vector<2x8x8xf32>, vector<2x8x8xf32>, vector<2x8x8xf32>, vector<2x8x8xf32> -> vector<2x8x32xf32>
    %445 = vector.shape_cast %444 : vector<2x8x32xf32> to vector<16x32xf32>
    %c1_178 = arith.constant 1 : index
    %c0_179 = arith.constant 0 : index
    %c0_180 = arith.constant 0 : index
    %446 = vector.load %arg11[%c1_178, %c0_179, %c0_180] : memref<2x32x32xf32, #tpu.memory_space<vmem>>, vector<1x32x32xf32>
    %447 = vector.shape_cast %446 : vector<1x32x32xf32> to vector<32x32xf32>
    %cst_181 = arith.constant dense<0.000000e+00> : vector<16x32xf32>
    %448 = tpu.matmul %445, %447, %cst_181 {dimension_numbers = #tpu.dot_dimension_numbers<[1], [0], [0], [1], [0, 0, 1, 1], [], []>} : vector<16x32xf32>, vector<32x32xf32>, vector<16x32xf32> -> vector<16x32xf32>
    %c1_182 = arith.constant 1 : index
    %c0_183 = arith.constant 0 : index
    %c0_184 = arith.constant 0 : index
    %449 = vector.load %arg12[%c1_182, %c0_183, %c0_184] : memref<2x1x32xf32, #tpu.memory_space<vmem>>, vector<1x1x32xf32>
    %450 = vector.shape_cast %449 : vector<1x1x32xf32> to vector<1x32xf32>
    %451 = vector.broadcast %450 : vector<1x32xf32> to vector<16x32xf32>
    %452 = arith.addf %448, %451 : vector<16x32xf32>
    %453 = arith.addf %371, %452 : vector<16x32xf32>
    %c1_185 = arith.constant 1 : index
    %c0_186 = arith.constant 0 : index
    %c0_187 = arith.constant 0 : index
    %454 = vector.load %arg15[%c1_185, %c0_186, %c0_187] : memref<2x1x32xf32, #tpu.memory_space<vmem>>, vector<1x1x32xf32>
    %455 = vector.shape_cast %454 : vector<1x1x32xf32> to vector<1x32xf32>
    %c1_188 = arith.constant 1 : index
    %c0_189 = arith.constant 0 : index
    %c0_190 = arith.constant 0 : index
    %456 = vector.load %arg16[%c1_188, %c0_189, %c0_190] : memref<2x1x32xf32, #tpu.memory_space<vmem>>, vector<1x1x32xf32>
    %457 = vector.shape_cast %456 : vector<1x1x32xf32> to vector<1x32xf32>
    %cst_191 = arith.constant dense<0.000000e+00> : vector<16xf32>
    %458 = vector.multi_reduction <add>, %453, %cst_191 [1] : vector<16x32xf32> to vector<16xf32>
    %459 = vector.shape_cast %458 : vector<16xf32> to vector<16x1xf32>
    %cst_192 = arith.constant 3.200000e+01 : f32
    %460 = vector.broadcast %cst_192 : f32 to vector<16x1xf32>
    %461 = arith.divf %459, %460 : vector<16x1xf32>
    %462 = vector.broadcast %461 : vector<16x1xf32> to vector<16x32xf32>
    %463 = arith.subf %453, %462 : vector<16x32xf32>
    %464 = arith.mulf %463, %463 : vector<16x32xf32>
    %cst_193 = arith.constant dense<0.000000e+00> : vector<16xf32>
    %465 = vector.multi_reduction <add>, %464, %cst_193 [1] : vector<16x32xf32> to vector<16xf32>
    %466 = vector.shape_cast %465 : vector<16xf32> to vector<16x1xf32>
    %cst_194 = arith.constant 3.200000e+01 : f32
    %467 = vector.broadcast %cst_194 : f32 to vector<16x1xf32>
    %468 = arith.divf %466, %467 : vector<16x1xf32>
    %469 = vector.broadcast %461 : vector<16x1xf32> to vector<16x32xf32>
    %470 = arith.subf %453, %469 : vector<16x32xf32>
    %cst_195 = arith.constant 9.99999974E-6 : f32
    %471 = vector.broadcast %cst_195 : f32 to vector<16x1xf32>
    %472 = arith.addf %468, %471 : vector<16x1xf32>
    %473 = math.rsqrt %472 : vector<16x1xf32>
    %474 = vector.broadcast %473 : vector<16x1xf32> to vector<16x32xf32>
    %475 = arith.mulf %470, %474 : vector<16x32xf32>
    %476 = vector.broadcast %455 : vector<1x32xf32> to vector<16x32xf32>
    %477 = arith.mulf %475, %476 : vector<16x32xf32>
    %478 = vector.broadcast %457 : vector<1x32xf32> to vector<16x32xf32>
    %479 = arith.addf %477, %478 : vector<16x32xf32>
    %c1_196 = arith.constant 1 : index
    %c0_197 = arith.constant 0 : index
    %c0_198 = arith.constant 0 : index
    %480 = vector.load %arg19[%c1_196, %c0_197, %c0_198] : memref<2x32x64xf32, #tpu.memory_space<vmem>>, vector<1x32x64xf32>
    %481 = vector.shape_cast %480 : vector<1x32x64xf32> to vector<32x64xf32>
    %cst_199 = arith.constant dense<0.000000e+00> : vector<16x64xf32>
    %482 = tpu.matmul %479, %481, %cst_199 {dimension_numbers = #tpu.dot_dimension_numbers<[1], [0], [0], [1], [0, 0, 1, 1], [], []>} : vector<16x32xf32>, vector<32x64xf32>, vector<16x64xf32> -> vector<16x64xf32>
    %c1_200 = arith.constant 1 : index
    %c0_201 = arith.constant 0 : index
    %c0_202 = arith.constant 0 : index
    %483 = vector.load %arg20[%c1_200, %c0_201, %c0_202] : memref<2x1x64xf32, #tpu.memory_space<vmem>>, vector<1x1x64xf32>
    %484 = vector.shape_cast %483 : vector<1x1x64xf32> to vector<1x64xf32>
    %485 = vector.broadcast %484 : vector<1x64xf32> to vector<16x64xf32>
    %486 = arith.addf %482, %485 : vector<16x64xf32>
    %cst_203 = arith.constant 0.000000e+00 : f32
    %487 = vector.broadcast %cst_203 : f32 to vector<16x64xf32>
    %488 = arith.maximumf %486, %487 : vector<16x64xf32>
    %c1_204 = arith.constant 1 : index
    %c0_205 = arith.constant 0 : index
    %c0_206 = arith.constant 0 : index
    %489 = vector.load %arg21[%c1_204, %c0_205, %c0_206] : memref<2x64x32xf32, #tpu.memory_space<vmem>>, vector<1x64x32xf32>
    %490 = vector.shape_cast %489 : vector<1x64x32xf32> to vector<64x32xf32>
    %cst_207 = arith.constant dense<0.000000e+00> : vector<16x32xf32>
    %491 = tpu.matmul %488, %490, %cst_207 {dimension_numbers = #tpu.dot_dimension_numbers<[1], [0], [0], [1], [0, 0, 1, 1], [], []>} : vector<16x64xf32>, vector<64x32xf32>, vector<16x32xf32> -> vector<16x32xf32>
    %c1_208 = arith.constant 1 : index
    %c0_209 = arith.constant 0 : index
    %c0_210 = arith.constant 0 : index
    %492 = vector.load %arg22[%c1_208, %c0_209, %c0_210] : memref<2x1x32xf32, #tpu.memory_space<vmem>>, vector<1x1x32xf32>
    %493 = vector.shape_cast %492 : vector<1x1x32xf32> to vector<1x32xf32>
    %494 = vector.broadcast %493 : vector<1x32xf32> to vector<16x32xf32>
    %495 = arith.addf %491, %494 : vector<16x32xf32>
    %496 = arith.addf %479, %495 : vector<16x32xf32>
    %c1_211 = arith.constant 1 : index
    %c0_212 = arith.constant 0 : index
    %c0_213 = arith.constant 0 : index
    %497 = vector.load %arg17[%c1_211, %c0_212, %c0_213] : memref<2x1x32xf32, #tpu.memory_space<vmem>>, vector<1x1x32xf32>
    %498 = vector.shape_cast %497 : vector<1x1x32xf32> to vector<1x32xf32>
    %c1_214 = arith.constant 1 : index
    %c0_215 = arith.constant 0 : index
    %c0_216 = arith.constant 0 : index
    %499 = vector.load %arg18[%c1_214, %c0_215, %c0_216] : memref<2x1x32xf32, #tpu.memory_space<vmem>>, vector<1x1x32xf32>
    %500 = vector.shape_cast %499 : vector<1x1x32xf32> to vector<1x32xf32>
    %cst_217 = arith.constant dense<0.000000e+00> : vector<16xf32>
    %501 = vector.multi_reduction <add>, %496, %cst_217 [1] : vector<16x32xf32> to vector<16xf32>
    %502 = vector.shape_cast %501 : vector<16xf32> to vector<16x1xf32>
    %cst_218 = arith.constant 3.200000e+01 : f32
    %503 = vector.broadcast %cst_218 : f32 to vector<16x1xf32>
    %504 = arith.divf %502, %503 : vector<16x1xf32>
    %505 = vector.broadcast %504 : vector<16x1xf32> to vector<16x32xf32>
    %506 = arith.subf %496, %505 : vector<16x32xf32>
    %507 = arith.mulf %506, %506 : vector<16x32xf32>
    %cst_219 = arith.constant dense<0.000000e+00> : vector<16xf32>
    %508 = vector.multi_reduction <add>, %507, %cst_219 [1] : vector<16x32xf32> to vector<16xf32>
    %509 = vector.shape_cast %508 : vector<16xf32> to vector<16x1xf32>
    %cst_220 = arith.constant 3.200000e+01 : f32
    %510 = vector.broadcast %cst_220 : f32 to vector<16x1xf32>
    %511 = arith.divf %509, %510 : vector<16x1xf32>
    %512 = vector.broadcast %504 : vector<16x1xf32> to vector<16x32xf32>
    %513 = arith.subf %496, %512 : vector<16x32xf32>
    %cst_221 = arith.constant 9.99999974E-6 : f32
    %514 = vector.broadcast %cst_221 : f32 to vector<16x1xf32>
    %515 = arith.addf %511, %514 : vector<16x1xf32>
    %516 = math.rsqrt %515 : vector<16x1xf32>
    %517 = vector.broadcast %516 : vector<16x1xf32> to vector<16x32xf32>
    %518 = arith.mulf %513, %517 : vector<16x32xf32>
    %519 = vector.broadcast %498 : vector<1x32xf32> to vector<16x32xf32>
    %520 = arith.mulf %518, %519 : vector<16x32xf32>
    %521 = vector.broadcast %500 : vector<1x32xf32> to vector<16x32xf32>
    %522 = arith.addf %520, %521 : vector<16x32xf32>
    %c0_222 = arith.constant 0 : index
    %c0_223 = arith.constant 0 : index
    %523 = vector.load %arg23[%c0_222, %c0_223] : memref<16x32xf32, #tpu.memory_space<vmem>>, vector<16x32xf32>
    tpu.vector_store %arg23[%c0_222, %c0_223], %522 {strides = array<i32>} : memref<16x32xf32, #tpu.memory_space<vmem>>, vector<16x32xf32>,
    return
  }
  func.func @transform_0(%arg0: i32) -> (i32, i32) {
    %c0_i32 = arith.constant 0 : i32
    %c0_i32_0 = arith.constant 0 : i32
    %c0_i32_1 = arith.constant 0 : i32
    return %c0_i32, %c0_i32_0 : i32, i32
  }
  func.func @transform_1(%arg0: i32) -> (i32, i32) {
    %c0_i32 = arith.constant 0 : i32
    %c0_i32_0 = arith.constant 0 : i32
    %c0_i32_1 = arith.constant 0 : i32
    return %c0_i32, %c0_i32_0 : i32, i32
  }
  func.func @transform_2(%arg0: i32) -> (i32, i32, i32) {
    %c0_i32 = arith.constant 0 : i32
    %c0_i32_0 = arith.constant 0 : i32
    %c0_i32_1 = arith.constant 0 : i32
    %c0_i32_2 = arith.constant 0 : i32
    return %c0_i32, %c0_i32_0, %c0_i32_1 : i32, i32, i32
  }
  func.func @transform_3(%arg0: i32) -> (i32, i32, i32) {
    %c0_i32 = arith.constant 0 : i32
    %c0_i32_0 = arith.constant 0 : i32
    %c0_i32_1 = arith.constant 0 : i32
    %c0_i32_2 = arith.constant 0 : i32
    return %c0_i32, %c0_i32_0, %c0_i32_1 : i32, i32, i32
  }
  func.func @transform_4(%arg0: i32) -> (i32, i32, i32) {
    %c0_i32 = arith.constant 0 : i32
    %c0_i32_0 = arith.constant 0 : i32
    %c0_i32_1 = arith.constant 0 : i32
    %c0_i32_2 = arith.constant 0 : i32
    return %c0_i32, %c0_i32_0, %c0_i32_1 : i32, i32, i32
  }
  func.func @transform_5(%arg0: i32) -> (i32, i32, i32) {
    %c0_i32 = arith.constant 0 : i32
    %c0_i32_0 = arith.constant 0 : i32
    %c0_i32_1 = arith.constant 0 : i32
    %c0_i32_2 = arith.constant 0 : i32
    return %c0_i32, %c0_i32_0, %c0_i32_1 : i32, i32, i32
  }
  func.func @transform_6(%arg0: i32) -> (i32, i32, i32) {
    %c0_i32 = arith.constant 0 : i32
    %c0_i32_0 = arith.constant 0 : i32
    %c0_i32_1 = arith.constant 0 : i32
    %c0_i32_2 = arith.constant 0 : i32
    return %c0_i32, %c0_i32_0, %c0_i32_1 : i32, i32, i32
  }
  func.func @transform_7(%arg0: i32) -> (i32, i32, i32) {
    %c0_i32 = arith.constant 0 : i32
    %c0_i32_0 = arith.constant 0 : i32
    %c0_i32_1 = arith.constant 0 : i32
    %c0_i32_2 = arith.constant 0 : i32
    return %c0_i32, %c0_i32_0, %c0_i32_1 : i32, i32, i32
  }
  func.func @transform_8(%arg0: i32) -> (i32, i32) {
    %c0_i32 = arith.constant 0 : i32
    %c0_i32_0 = arith.constant 0 : i32
    %c0_i32_1 = arith.constant 0 : i32
    return %c0_i32, %c0_i32_0 : i32, i32
  }
  func.func @transform_9(%arg0: i32) -> (i32, i32) {
    %c0_i32 = arith.constant 0 : i32
    %c0_i32_0 = arith.constant 0 : i32
    %c0_i32_1 = arith.constant 0 : i32
    return %c0_i32, %c0_i32_0 : i32, i32
  }
  func.func @transform_10(%arg0: i32) -> (i32, i32, i32) {
    %c0_i32 = arith.constant 0 : i32
    %c0_i32_0 = arith.constant 0 : i32
    %c0_i32_1 = arith.constant 0 : i32
    %c0_i32_2 = arith.constant 0 : i32
    return %c0_i32, %c0_i32_0, %c0_i32_1 : i32, i32, i32
  }
  func.func @transform_11(%arg0: i32) -> (i32, i32, i32) {
    %c0_i32 = arith.constant 0 : i32
    %c0_i32_0 = arith.constant 0 : i32
    %c0_i32_1 = arith.constant 0 : i32
    %c0_i32_2 = arith.constant 0 : i32
    return %c0_i32, %c0_i32_0, %c0_i32_1 : i32, i32, i32
  }
  func.func @transform_12(%arg0: i32) -> (i32, i32, i32) {
    %c0_i32 = arith.constant 0 : i32
    %c0_i32_0 = arith.constant 0 : i32
    %c0_i32_1 = arith.constant 0 : i32
    %c0_i32_2 = arith.constant 0 : i32
    return %c0_i32, %c0_i32_0, %c0_i32_1 : i32, i32, i32
  }
  func.func @transform_13(%arg0: i32) -> (i32, i32, i32) {
    %c0_i32 = arith.constant 0 : i32
    %c0_i32_0 = arith.constant 0 : i32
    %c0_i32_1 = arith.constant 0 : i32
    %c0_i32_2 = arith.constant 0 : i32
    return %c0_i32, %c0_i32_0, %c0_i32_1 : i32, i32, i32
  }
  func.func @transform_14(%arg0: i32) -> (i32, i32, i32) {
    %c0_i32 = arith.constant 0 : i32
    %c0_i32_0 = arith.constant 0 : i32
    %c0_i32_1 = arith.constant 0 : i32
    %c0_i32_2 = arith.constant 0 : i32
    return %c0_i32, %c0_i32_0, %c0_i32_1 : i32, i32, i32
  }
  func.func @transform_15(%arg0: i32) -> (i32, i32, i32) {
    %c0_i32 = arith.constant 0 : i32
    %c0_i32_0 = arith.constant 0 : i32
    %c0_i32_1 = arith.constant 0 : i32
    %c0_i32_2 = arith.constant 0 : i32
    return %c0_i32, %c0_i32_0, %c0_i32_1 : i32, i32, i32
  }
  func.func @transform_16(%arg0: i32) -> (i32, i32, i32) {
    %c0_i32 = arith.constant 0 : i32
    %c0_i32_0 = arith.constant 0 : i32
    %c0_i32_1 = arith.constant 0 : i32
    %c0_i32_2 = arith.constant 0 : i32
    return %c0_i32, %c0_i32_0, %c0_i32_1 : i32, i32, i32
  }
  func.func @transform_17(%arg0: i32) -> (i32, i32, i32) {
    %c0_i32 = arith.constant 0 : i32
    %c0_i32_0 = arith.constant 0 : i32
    %c0_i32_1 = arith.constant 0 : i32
    %c0_i32_2 = arith.constant 0 : i32
    return %c0_i32, %c0_i32_0, %c0_i32_1 : i32, i32, i32
  }
  func.func @transform_18(%arg0: i32) -> (i32, i32, i32) {
    %c0_i32 = arith.constant 0 : i32
    %c0_i32_0 = arith.constant 0 : i32
    %c0_i32_1 = arith.constant 0 : i32
    %c0_i32_2 = arith.constant 0 : i32
    return %c0_i32, %c0_i32_0, %c0_i32_1 : i32, i32, i32
  }
  func.func @transform_19(%arg0: i32) -> (i32, i32, i32) {
    %c0_i32 = arith.constant 0 : i32
    %c0_i32_0 = arith.constant 0 : i32
    %c0_i32_1 = arith.constant 0 : i32
    %c0_i32_2 = arith.constant 0 : i32
    return %c0_i32, %c0_i32_0, %c0_i32_1 : i32, i32, i32
  }
  func.func @transform_20(%arg0: i32) -> (i32, i32, i32) {
    %c0_i32 = arith.constant 0 : i32
    %c0_i32_0 = arith.constant 0 : i32
    %c0_i32_1 = arith.constant 0 : i32
    %c0_i32_2 = arith.constant 0 : i32
    return %c0_i32, %c0_i32_0, %c0_i32_1 : i32, i32, i32
  }
  func.func @transform_21(%arg0: i32) -> (i32, i32, i32) {
    %c0_i32 = arith.constant 0 : i32
    %c0_i32_0 = arith.constant 0 : i32
    %c0_i32_1 = arith.constant 0 : i32
    %c0_i32_2 = arith.constant 0 : i32
    return %c0_i32, %c0_i32_0, %c0_i32_1 : i32, i32, i32
  }
  func.func @transform_22(%arg0: i32) -> (i32, i32) {
    %c0_i32 = arith.constant 0 : i32
    %c0_i32_0 = arith.constant 0 : i32
    %c0_i32_1 = arith.constant 0 : i32
    return %c0_i32, %c0_i32_0 : i32, i32
  }
}

</mosaic_0001>

<llo_original>
// kernel: tpu_custom_call.1
$region0: #{tpu_custom_call.1}
  #allocation0 [shape = 'u32[]', space=smem, size = 0x4, offset = 0x4, fixed_abs, tag = 'smem constant byte address 0x4 - core index']
  #allocation1 [shape = 'u32[144,128]{1,0:T(1,128)}', space=vmem, size = 0x12000, scoped, tag = 'internal scratch']
  %s0 = inlined_call_operand.hbm [shape: f32[16,32], index: 0, kind: input, shape index: {}]
  %s1 = inlined_call_operand.hbm [shape: f32[32,32], index: 1, kind: input, shape index: {}]
  %s2 = inlined_call_operand.vmem [shape: f32[2,32,96], index: 2, kind: input, shape index: {}]
  %s3 = inlined_call_operand.vmem [shape: f32[2,1,96], index: 3, kind: input, shape index: {}]
  %s4 = inlined_call_operand.vmem [shape: f32[2,32,32], index: 4, kind: input, shape index: {}]
  %s5 = inlined_call_operand.vmem [shape: f32[2,1,32], index: 5, kind: input, shape index: {}]
  %s6 = inlined_call_operand.vmem [shape: f32[2,32,32], index: 6, kind: input, shape index: {}]
  %s7 = inlined_call_operand.vmem [shape: f32[2,1,32], index: 7, kind: input, shape index: {}]
  %s8 = inlined_call_operand.hbm [shape: f32[32,128], index: 8, kind: input, shape index: {}]
  %s9 = inlined_call_operand.vmem [shape: f32[1,128], index: 9, kind: input, shape index: {}]
  %s10 = inlined_call_operand.hbm [shape: f32[2,32,32], index: 10, kind: input, shape index: {}]
  %s11 = inlined_call_operand.vmem [shape: f32[2,1,32], index: 11, kind: input, shape index: {}]
  %s12 = inlined_call_operand.vmem [shape: f32[2,1,32], index: 12, kind: input, shape index: {}]
  %s13 = inlined_call_operand.hbm [shape: f32[2,1,32], index: 13, kind: input, shape index: {}]
  %s14 = inlined_call_operand.hbm [shape: f32[2,1,32], index: 14, kind: input, shape index: {}]
  %s15 = inlined_call_operand.hbm [shape: f32[2,1,32], index: 15, kind: input, shape index: {}]
  %s16 = inlined_call_operand.hbm [shape: f32[2,1,32], index: 16, kind: input, shape index: {}]
  %s17 = inlined_call_operand.hbm [shape: f32[2,1,32], index: 17, kind: input, shape index: {}]
  %s18 = inlined_call_operand.hbm [shape: f32[2,32,64], index: 18, kind: input, shape index: {}]
  %s19 = inlined_call_operand.hbm [shape: f32[2,1,64], index: 19, kind: input, shape index: {}]
  %s20 = inlined_call_operand.vmem [shape: f32[2,64,32], index: 20, kind: input, shape index: {}]
  %s21 = inlined_call_operand.vmem [shape: f32[2,1,32], index: 21, kind: input, shape index: {}]
  %s22 = inlined_call_operand.hbm [shape: f32[16,32], index: 22, kind: output, shape index: {}]
  %s23 = sld [smem:[#allocation0]]
  $region142: #{tpu_custom_call.1} parent=0
    _
  %s25 = ssub.s32 1, %s23
  %s26 = scalar_select 0, %s25, %s23
  $region1: #{tpu_custom_call.1} parent=0
    #allocation2 [shape = 'u8[8192]{0}', space=vmem, size = 0x2000, scoped, tag = 'input window, operand 0, single buffered']
    #allocation3 [shape = 's32[1]{0}', space=sflag, size = 0x4, scoped, tag = 'scoped memory for tpu_custom_call.1']
    #allocation4 [shape = 's32[1]{0}', space=sflag, size = 0x4, scoped, tag = 'scoped memory for tpu_custom_call.1']
    #allocation5 [shape = 'u8[16384]{0}', space=vmem, size = 0x4000, scoped, tag = 'input window, operand 1, single buffered']
    #allocation6 [shape = 's32[1]{0}', space=sflag, size = 0x4, scoped, tag = 'scoped memory for tpu_custom_call.1']
    #allocation7 [shape = 'u8[16384]{0}', space=vmem, size = 0x4000, scoped, tag = 'input window, operand 8, single buffered']
    #allocation8 [shape = 'u8[32768]{0}', space=vmem, size = 0x8000, scoped, tag = 'input window, operand 10, single buffered']
    #allocation9 [shape = 's32[1]{0}', space=sflag, size = 0x4, scoped, tag = 'scoped memory for tpu_custom_call.1']
    #allocation10 [shape = 'u8[1024]{0}', space=vmem, size = 0x400, scoped, tag = 'input window, operand 13, single buffered']
    #allocation11 [shape = 'u8[1024]{0}', space=vmem, size = 0x400, scoped, tag = 'input window, operand 14, single buffered']
    #allocation12 [shape = 's32[1]{0}', space=sflag, size = 0x4, scoped, tag = 'scoped memory for tpu_custom_call.1']
    #allocation13 [shape = 'u8[1024]{0}', space=vmem, size = 0x400, scoped, tag = 'input window, operand 15, single buffered']
    #allocation14 [shape = 'u8[1024]{0}', space=vmem, size = 0x400, scoped, tag = 'input window, operand 16, single buffered']
    #allocation15 [shape = 's32[1]{0}', space=sflag, size = 0x4, scoped, tag = 'scoped memory for tpu_custom_call.1']
    #allocation16 [shape = 'u8[1024]{0}', space=vmem, size = 0x400, scoped, tag = 'input window, operand 17, single buffered']
    #allocation17 [shape = 'u8[32768]{0}', space=vmem, size = 0x8000, scoped, tag = 'input window, operand 18, single buffered']
    #allocation18 [shape = 's32[1]{0}', space=sflag, size = 0x4, scoped, tag = 'scoped memory for tpu_custom_call.1']
    #allocation19 [shape = 'u8[1024]{0}', space=vmem, size = 0x400, scoped, tag = 'input window, operand 19, single buffered']
    #allocation20 [shape = 'u8[8192]{0}', space=vmem, size = 0x2000, scoped, tag = 'output window, operand 0, single buffered']
    %27 = vsyncpa [#allocation3], 0
    %28 = vsyncpa [#allocation6], 0
    %29 = vsyncpa [#allocation9], 0
    %30 = vsyncpa [#allocation12], 0
    %31 = vsyncpa [#allocation15], 0
    %32 = vsyncpa [#allocation18], 0
    %33 = vsyncpa [#allocation4], 0
    // Predicated region
    $region2: #{tpu_custom_call.1} parent=1 // pred_check
      _
    $region3: #{tpu_custom_call.1} parent=1 // pred_check_branch
      %35 = sbr.rel (0) target = $region5
    $region4: #{tpu_custom_call.1} parent=1 // pred_region
      %s37 = ssub.s32 256, 256
      %38 = vsyncadd [#allocation3], %s37
      %s39 = sshll.u32 [#allocation2], 4
      %s40 = int_to_ptr.vmem [resolvable:$true] %s39
      %45 = dma.hbm_to_vmem [thread:$0]  %s0, 256, %s40, [#allocation3], 128, 128, 8
    $region5: #{tpu_custom_call.1} parent=1 // pred_fallthru
      _
    // Predicated region
    $region6: #{tpu_custom_call.1} parent=1 // pred_check
      _
    $region7: #{tpu_custom_call.1} parent=1 // pred_check_branch
      %47 = sbr.rel (0) target = $region9
    $region8: #{tpu_custom_call.1} parent=1 // pred_region
      %s49 = ssub.s32 512, 512
      %50 = vsyncadd [#allocation6], %s49
      %s51 = sshll.u32 [#allocation5], 4
      %s52 = int_to_ptr.vmem [resolvable:$true] %s51
      %57 = dma.hbm_to_vmem [thread:$0]  %s1, 512, %s52, [#allocation6], 128, 128, 8
    $region9: #{tpu_custom_call.1} parent=1 // pred_fallthru
      _
    // Predicated region
    $region10: #{tpu_custom_call.1} parent=1 // pred_check
      _
    $region11: #{tpu_custom_call.1} parent=1 // pred_check_branch
      %59 = sbr.rel (0) target = $region13
    $region12: #{tpu_custom_call.1} parent=1 // pred_region
      _
    $region13: #{tpu_custom_call.1} parent=1 // pred_fallthru
      _
    // Predicated region
    $region14: #{tpu_custom_call.1} parent=1 // pred_check
      _
    $region15: #{tpu_custom_call.1} parent=1 // pred_check_branch
      %61 = sbr.rel (0) target = $region17
    $region16: #{tpu_custom_call.1} parent=1 // pred_region
      _
    $region17: #{tpu_custom_call.1} parent=1 // pred_fallthru
      _
    // Predicated region
    $region18: #{tpu_custom_call.1} parent=1 // pred_check
      _
    $region19: #{tpu_custom_call.1} parent=1 // pred_check_branch
      %63 = sbr.rel (0) target = $region21
    $region20: #{tpu_custom_call.1} parent=1 // pred_region
      _
    $region21: #{tpu_custom_call.1} parent=1 // pred_fallthru
      _
    // Predicated region
    $region22: #{tpu_custom_call.1} parent=1 // pred_check
      _
    $region23: #{tpu_custom_call.1} parent=1 // pred_check_branch
      %65 = sbr.rel (0) target = $region25
    $region24: #{tpu_custom_call.1} parent=1 // pred_region
      _
    $region25: #{tpu_custom_call.1} parent=1 // pred_fallthru
      _
    // Predicated region
    $region26: #{tpu_custom_call.1} parent=1 // pred_check
      _
    $region27: #{tpu_custom_call.1} parent=1 // pred_check_branch
      %67 = sbr.rel (0) target = $region29
    $region28: #{tpu_custom_call.1} parent=1 // pred_region
      _
    $region29: #{tpu_custom_call.1} parent=1 // pred_fallthru
      _
    // Predicated region
    $region30: #{tpu_custom_call.1} parent=1 // pred_check
      _
    $region31: #{tpu_custom_call.1} parent=1 // pred_check_branch
      %69 = sbr.rel (0) target = $region33
    $region32: #{tpu_custom_call.1} parent=1 // pred_region
      _
    $region33: #{tpu_custom_call.1} parent=1 // pred_fallthru
      _
    // Predicated region
    $region34: #{tpu_custom_call.1} parent=1 // pred_check
      _
    $region35: #{tpu_custom_call.1} parent=1 // pred_check_branch
      %71 = sbr.rel (0) target = $region37
    $region36: #{tpu_custom_call.1} parent=1 // pred_region
      %s73 = ssub.s32 512, 512
      %74 = vsyncadd [#allocation6], %s73
      %s75 = sshll.u32 [#allocation7], 4
      %s76 = int_to_ptr.vmem [resolvable:$true] %s75
      %81 = dma.hbm_to_vmem [thread:$0]  %s8, 512, %s76, [#allocation6], 128, 128, 8
    $region37: #{tpu_custom_call.1} parent=1 // pred_fallthru
      _
    // Predicated region
    $region38: #{tpu_custom_call.1} parent=1 // pred_check
      _
    $region39: #{tpu_custom_call.1} parent=1 // pred_check_branch
      %83 = sbr.rel (0) target = $region41
    $region40: #{tpu_custom_call.1} parent=1 // pred_region
      _
    $region41: #{tpu_custom_call.1} parent=1 // pred_fallthru
      _
    // Predicated region
    $region42: #{tpu_custom_call.1} parent=1 // pred_check
      _
    $region43: #{tpu_custom_call.1} parent=1 // pred_check_branch
      %85 = sbr.rel (0) target = $region45
    $region44: #{tpu_custom_call.1} parent=1 // pred_region
      %s87 = ssub.s32 1024, 1024
      %88 = vsyncadd [#allocation9], %s87
      %s89 = sshll.u32 [#allocation8], 4
      %s90 = int_to_ptr.vmem [resolvable:$true] %s89
      %95 = dma.hbm_to_vmem [thread:$0]  %s10, 1024, %s90, [#allocation9], 128, 128, 8
    $region45: #{tpu_custom_call.1} parent=1 // pred_fallthru
      _
    // Predicated region
    $region46: #{tpu_custom_call.1} parent=1 // pred_check
      _
    $region47: #{tpu_custom_call.1} parent=1 // pred_check_branch
      %97 = sbr.rel (0) target = $region49
    $region48: #{tpu_custom_call.1} parent=1 // pred_region
      _
    $region49: #{tpu_custom_call.1} parent=1 // pred_fallthru
      _
    // Predicated region
    $region50: #{tpu_custom_call.1} parent=1 // pred_check
      _
    $region51: #{tpu_custom_call.1} parent=1 // pred_check_branch
      %99 = sbr.rel (0) target = $region53
    $region52: #{tpu_custom_call.1} parent=1 // pred_region
      _
    $region53: #{tpu_custom_call.1} parent=1 // pred_fallthru
      _
    // Predicated region
    $region54: #{tpu_custom_call.1} parent=1 // pred_check
      _
    $region55: #{tpu_custom_call.1} parent=1 // pred_check_branch
      %101 = sbr.rel (0) target = $region57
    $region56: #{tpu_custom_call.1} parent=1 // pred_region
      %s103 = ssub.s32 32, 32
      %104 = vsyncadd [#allocation9], %s103
      %s105 = sshll.u32 [#allocation10], 4
      %s106 = int_to_ptr.vmem [resolvable:$true] %s105
      %111 = dma.hbm_to_vmem [thread:$0]  %s13, 32, %s106, [#allocation9], 16, 16, 1
    $region57: #{tpu_custom_call.1} parent=1 // pred_fallthru
      _
    // Predicated region
    $region58: #{tpu_custom_call.1} parent=1 // pred_check
      _
    $region59: #{tpu_custom_call.1} parent=1 // pred_check_branch
      %113 = sbr.rel (0) target = $region61
    $region60: #{tpu_custom_call.1} parent=1 // pred_region
      %s115 = ssub.s32 32, 32
      %116 = vsyncadd [#allocation12], %s115
      %s117 = sshll.u32 [#allocation11], 4
      %s118 = int_to_ptr.vmem [resolvable:$true] %s117
      %123 = dma.hbm_to_vmem [thread:$0]  %s14, 32, %s118, [#allocation12], 16, 16, 1
    $region61: #{tpu_custom_call.1} parent=1 // pred_fallthru
      _
    // Predicated region
    $region62: #{tpu_custom_call.1} parent=1 // pred_check
      _
    $region63: #{tpu_custom_call.1} parent=1 // pred_check_branch
      %125 = sbr.rel (0) target = $region65
    $region64: #{tpu_custom_call.1} parent=1 // pred_region
      %s127 = ssub.s32 32, 32
      %128 = vsyncadd [#allocation12], %s127
      %s129 = sshll.u32 [#allocation13], 4
      %s130 = int_to_ptr.vmem [resolvable:$true] %s129
      %135 = dma.hbm_to_vmem [thread:$0]  %s15, 32, %s130, [#allocation12], 16, 16, 1
    $region65: #{tpu_custom_call.1} parent=1 // pred_fallthru
      _
    // Predicated region
    $region66: #{tpu_custom_call.1} parent=1 // pred_check
      _
    $region67: #{tpu_custom_call.1} parent=1 // pred_check_branch
      %137 = sbr.rel (0) target = $region69
    $region68: #{tpu_custom_call.1} parent=1 // pred_region
      %s139 = ssub.s32 32, 32
      %140 = vsyncadd [#allocation15], %s139
      %s141 = sshll.u32 [#allocation14], 4
      %s142 = int_to_ptr.vmem [resolvable:$true] %s141
      %147 = dma.hbm_to_vmem [thread:$0]  %s16, 32, %s142, [#allocation15], 16, 16, 1
    $region69: #{tpu_custom_call.1} parent=1 // pred_fallthru
      _
    // Predicated region
    $region70: #{tpu_custom_call.1} parent=1 // pred_check
      _
    $region71: #{tpu_custom_call.1} parent=1 // pred_check_branch
      %149 = sbr.rel (0) target = $region73
    $region72: #{tpu_custom_call.1} parent=1 // pred_region
      %s151 = ssub.s32 32, 32
      %152 = vsyncadd [#allocation15], %s151
      %s153 = sshll.u32 [#allocation16], 4
      %s154 = int_to_ptr.vmem [resolvable:$true] %s153
      %159 = dma.hbm_to_vmem [thread:$0]  %s17, 32, %s154, [#allocation15], 16, 16, 1
    $region73: #{tpu_custom_call.1} parent=1 // pred_fallthru
      _
    // Predicated region
    $region74: #{tpu_custom_call.1} parent=1 // pred_check
      _
    $region75: #{tpu_custom_call.1} parent=1 // pred_check_branch
      %161 = sbr.rel (0) target = $region77
    $region76: #{tpu_custom_call.1} parent=1 // pred_region
      %s163 = ssub.s32 1024, 1024
      %164 = vsyncadd [#allocation18], %s163
      %s165 = sshll.u32 [#allocation17], 4
      %s166 = int_to_ptr.vmem [resolvable:$true] %s165
      %171 = dma.hbm_to_vmem [thread:$0]  %s18, 1024, %s166, [#allocation18], 128, 128, 8
    $region77: #{tpu_custom_call.1} parent=1 // pred_fallthru
      _
    // Predicated region
    $region78: #{tpu_custom_call.1} parent=1 // pred_check
      _
    $region79: #{tpu_custom_call.1} parent=1 // pred_check_branch
      %173 = sbr.rel (0) target = $region81
    $region80: #{tpu_custom_call.1} parent=1 // pred_region
      %s175 = ssub.s32 32, 32
      %176 = vsyncadd [#allocation18], %s175
      %s177 = sshll.u32 [#allocation19], 4
      %s178 = int_to_ptr.vmem [resolvable:$true] %s177
      %183 = dma.hbm_to_vmem [thread:$0]  %s19, 32, %s178, [#allocation18], 16, 16, 1
    $region81: #{tpu_custom_call.1} parent=1 // pred_fallthru
      _
    // Predicated region
    $region82: #{tpu_custom_call.1} parent=1 // pred_check
      _
    $region83: #{tpu_custom_call.1} parent=1 // pred_check_branch
      %185 = sbr.rel (0) target = $region85
    $region84: #{tpu_custom_call.1} parent=1 // pred_region
      _
    $region85: #{tpu_custom_call.1} parent=1 // pred_fallthru
      _
    // Predicated region
    $region86: #{tpu_custom_call.1} parent=1 // pred_check
      _
    $region87: #{tpu_custom_call.1} parent=1 // pred_check_branch
      %187 = sbr.rel (0) target = $region89
    $region88: #{tpu_custom_call.1} parent=1 // pred_region
      _
    $region89: #{tpu_custom_call.1} parent=1 // pred_fallthru
      _
    // Predicated region
    $region90: #{tpu_custom_call.1} parent=1 // pred_check
      _
    $region91: #{tpu_custom_call.1} parent=1 // pred_check_branch
      %189 = sbr.rel (0) target = $region93
    $region92: #{tpu_custom_call.1} parent=1 // pred_region
      %190 = dma.done [#allocation3], 256
    $region93: #{tpu_custom_call.1} parent=1 // pred_fallthru
      _
    // Predicated region
    $region94: #{tpu_custom_call.1} parent=1 // pred_check
      _
    $region95: #{tpu_custom_call.1} parent=1 // pred_check_branch
      %192 = sbr.rel (0) target = $region97
    $region96: #{tpu_custom_call.1} parent=1 // pred_region
      %193 = dma.done [#allocation6], 512
    $region97: #{tpu_custom_call.1} parent=1 // pred_fallthru
      _
    // Predicated region
    $region98: #{tpu_custom_call.1} parent=1 // pred_check
      _
    $region99: #{tpu_custom_call.1} parent=1 // pred_check_branch
      %195 = sbr.rel (0) target = $region101
    $region100: #{tpu_custom_call.1} parent=1 // pred_region
      %196 = dma.done [#allocation6], 512
    $region101: #{tpu_custom_call.1} parent=1 // pred_fallthru
      _
    // Predicated region
    $region102: #{tpu_custom_call.1} parent=1 // pred_check
      _
    $region103: #{tpu_custom_call.1} parent=1 // pred_check_branch
      %198 = sbr.rel (0) target = $region105
    $region104: #{tpu_custom_call.1} parent=1 // pred_region
      %199 = dma.done [#allocation9], 1024
    $region105: #{tpu_custom_call.1} parent=1 // pred_fallthru
      _
    // Predicated region
    $region106: #{tpu_custom_call.1} parent=1 // pred_check
      _
    $region107: #{tpu_custom_call.1} parent=1 // pred_check_branch
      %201 = sbr.rel (0) target = $region109
    $region108: #{tpu_custom_call.1} parent=1 // pred_region
      %202 = dma.done [#allocation9], 32
    $region109: #{tpu_custom_call.1} parent=1 // pred_fallthru
      _
    // Predicated region
    $region110: #{tpu_custom_call.1} parent=1 // pred_check
      _
    $region111: #{tpu_custom_call.1} parent=1 // pred_check_branch
      %204 = sbr.rel (0) target = $region113
    $region112: #{tpu_custom_call.1} parent=1 // pred_region
      %205 = dma.done [#allocation12], 32
    $region113: #{tpu_custom_call.1} parent=1 // pred_fallthru
      _
    // Predicated region
    $region114: #{tpu_custom_call.1} parent=1 // pred_check
      _
    $region115: #{tpu_custom_call.1} parent=1 // pred_check_branch
      %207 = sbr.rel (0) target = $region117
    $region116: #{tpu_custom_call.1} parent=1 // pred_region
      %208 = dma.done [#allocation12], 32
    $region117: #{tpu_custom_call.1} parent=1 // pred_fallthru
      _
    // Predicated region
    $region118: #{tpu_custom_call.1} parent=1 // pred_check
      _
    $region119: #{tpu_custom_call.1} parent=1 // pred_check_branch
      %210 = sbr.rel (0) target = $region121
    $region120: #{tpu_custom_call.1} parent=1 // pred_region
      %211 = dma.done [#allocation15], 32
    $region121: #{tpu_custom_call.1} parent=1 // pred_fallthru
      _
    // Predicated region
    $region122: #{tpu_custom_call.1} parent=1 // pred_check
      _
    $region123: #{tpu_custom_call.1} parent=1 // pred_check_branch
      %213 = sbr.rel (0) target = $region125
    $region124: #{tpu_custom_call.1} parent=1 // pred_region
      %214 = dma.done [#allocation15], 32
    $region125: #{tpu_custom_call.1} parent=1 // pred_fallthru
      _
    // Predicated region
    $region126: #{tpu_custom_call.1} parent=1 // pred_check
      _
    $region127: #{tpu_custom_call.1} parent=1 // pred_check_branch
      %216 = sbr.rel (0) target = $region129
    $region128: #{tpu_custom_call.1} parent=1 // pred_region
      %217 = dma.done [#allocation18], 1024
    $region129: #{tpu_custom_call.1} parent=1 // pred_fallthru
      _
    // Predicated region
    $region130: #{tpu_custom_call.1} parent=1 // pred_check
      _
    $region131: #{tpu_custom_call.1} parent=1 // pred_check_branch
      %219 = sbr.rel (0) target = $region133
    $region132: #{tpu_custom_call.1} parent=1 // pred_region
      %220 = dma.done [#allocation18], 32
    $region133: #{tpu_custom_call.1} parent=1 // pred_fallthru
      _
    %v221 = vld [vmem:[#allocation2] sm:$0xff]
    %v222 = vld [vmem:[#allocation2 + $0x8] sm:$0xff]
    %v223 = vld [vmem:[#allocation5] sm:$0xff]
    %v224 = vld [vmem:[#allocation5 + $0x8] sm:$0xff]
    %v225 = vld [vmem:[#allocation5 + $0x10] sm:$0xff]
    %v226 = vld [vmem:[#allocation5 + $0x18] sm:$0xff]
    %v227 = vld [vmem:[#allocation7] sm:$0xff]
    %v228 = vld [vmem:[#allocation7 + $0x8] sm:$0xff]
    %v229 = vld [vmem:[#allocation7 + $0x10] sm:$0xff]
    %v230 = vld [vmem:[#allocation7 + $0x18] sm:$0xff]
    %v231 = vld [vmem:[%s9] sm:$0x1]
    %v233 = vlaneseq
    %v234 = vshrl.u32 %v233, 7
    %v235 = vsub.s32 0, %v234
    %v236 = vrot.slane %v231, %v235
    %vm238 = vcmask 261120
    %v240 = vsel %vm238, %v223, 0
    %v243 = vsel %vm238, %v224, 0
    %v246 = vsel %vm238, %v225, 0
    %v249 = vsel %vm238, %v226, 0
    %251 = vmatprep.subr.mxu0 0.0
    %252 = vmatpush1.msra.mxu0 %v227
    %253 = vmatprep.subr.mxu0 0.0
    %254 = vmatpush1.msra.mxu0 %v228
    %255 = vmatprep.subr.mxu0 0.0
    %256 = vmatpush1.msra.mxu0 %v229
    %257 = vmatprep.subr.mxu0 0.0
    %258 = vmatpush1.msra.mxu0 %v230
    %259 = vmatprep.subr.mxu0 0.0
    %260 = vmatpush1.msra.mxu0 0.0
    %261 = vmatprep.subr.mxu0 0.0
    %262 = vmatpush1.msra.mxu0 0.0
    %263 = vmatprep.subr.mxu0 0.0
    %264 = vmatpush1.msra.mxu0 0.0
    %265 = vmatprep.subr.mxu0 0.0
    %266 = vmatpush1.msra.mxu0 0.0
    %267 = vmatprep.subr.mxu0 0.0
    %268 = vmatpush1.msra.mxu0 0.0
    %269 = vmatprep.subr.mxu0 0.0
    %270 = vmatpush1.msra.mxu0 0.0
    %271 = vmatprep.subr.mxu0 0.0
    %272 = vmatpush1.msra.mxu0 0.0
    %273 = vmatprep.subr.mxu0 0.0
    %274 = vmatpush1.msra.mxu0 0.0
    %275 = vmatprep.subr.mxu0 0.0
    %276 = vmatpush1.msra.mxu0 0.0
    %277 = vmatprep.subr.mxu0 0.0
    %278 = vmatpush1.msra.mxu0 0.0
    %279 = vmatprep.subr.mxu0 0.0
    %280 = vmatpush1.msra.mxu0 0.0
    %281 = vmatprep.subr.mxu0 0.0
    %282 = vmatpush1.msra.mxu0 0.0
    %283 = vmatprep.subr.mxu0 0.0
    %284 = vmatpush1.msra.mxu0 0.0
    %285 = vmatprep.subr.mxu0 0.0
    %286 = vmatpush1.msra.mxu0 0.0
    %287 = vmatprep.subr.mxu0 0.0
    %288 = vmatpush1.msra.mxu0 0.0
    %289 = vmatprep.subr.mxu0 0.0
    %290 = vmatpush1.msra.mxu0 0.0
    %291 = vmatprep.subr.mxu0 0.0
    %292 = vmatpush1.msra.mxu0 0.0
    %293 = vmatprep.subr.mxu0 0.0
    %294 = vmatpush1.msra.mxu0 0.0
    %295 = vmatprep.subr.mxu0 0.0
    %296 = vmatpush1.msra.mxu0 0.0
    %297 = vmatprep.subr.mxu0 0.0
    %298 = vmatpush1.msra.mxu0 0.0
    %299 = vmatprep.subr.mxu0 0.0
    %300 = vmatpush1.msra.mxu0 0.0
    %301 = vmatprep.subr.mxu0 0.0
    %302 = vmatpush1.msra.mxu0 0.0
    %303 = vmatprep.subr.mxu0 0.0
    %304 = vmatpush1.msra.mxu0 0.0
    %305 = vmatprep.subr.mxu0 0.0
    %306 = vmatpush1.msra.mxu0 0.0
    %307 = vmatprep.subr.mxu0 0.0
    %308 = vmatpush1.msra.mxu0 0.0
    %309 = vmatprep.subr.mxu0 0.0
    %310 = vmatpush1.msra.mxu0 0.0
    %311 = vmatprep.subr.mxu0 0.0
    %312 = vmatpush1.msra.mxu0 0.0
    %313 = vmatprep.subr.mxu0 0.0
    %314 = vmatpush1.msra.mxu0 0.0
    %315 = vmatprep.mubr.f32.mxu0 0.0
    %316 = vmatmul.mubr.f32.gmra.mrb[0].mxu0 %v240
    %v317 = vpop.f32.mrb[0].mxu0
    %v318 = vadd.f32 %v236, %v317
    %v319 = vpop.f32.mrb[0].mxu0
    %320 = vmatprep.mubr.f32.mxu0 0.0
    %321 = vmatmul.mubr.f32.gmra.mrb[0].mxu0 %v243
    %v322 = vpop.f32.mrb[0].mxu0
    %v323 = vadd.f32 %v236, %v322
    %v324 = vpop.f32.mrb[0].mxu0
    %325 = vmatprep.mubr.f32.mxu0 0.0
    %326 = vmatmul.mubr.f32.gmra.mrb[0].mxu0 %v246
    %v327 = vpop.f32.mrb[0].mxu0
    %v328 = vadd.f32 %v236, %v327
    %v329 = vpop.f32.mrb[0].mxu0
    %330 = vmatprep.mubr.f32.mxu0 0.0
    %331 = vmatmul.mubr.f32.gmra.mrb[0].mxu0 %v249
    %v332 = vpop.f32.mrb[0].mxu0
    %v333 = vadd.f32 %v236, %v332
    %v334 = vpop.f32.mrb[0].mxu0
    %335 = vdwg.mxu0
    %v336 = vld [vmem:[%s2] sm:$0xff]
    %v337 = vld [vmem:[%s2 + $0x8] sm:$0xff]
    %v338 = vld [vmem:[%s2 + $0x10] sm:$0xff]
    %v339 = vld [vmem:[%s2 + $0x18] sm:$0xff]
    %v340 = vld [vmem:[%s3] sm:$0x1]
    %v342 = vlaneseq
    %v343 = vshrl.u32 %v342, 7
    %v344 = vsub.s32 0, %v343
    %v345 = vrot.slane %v340, %v344
    %v348 = vsel %vm238, %v221, 0
    %v351 = vsel %vm238, %v222, 0
    %353 = vmatprep.subr.mxu0 0.0
    %354 = vmatpush1.msra.mxu0 %v336
    %355 = vmatprep.subr.mxu0 0.0
    %356 = vmatpush1.msra.mxu0 %v337
    %357 = vmatprep.subr.mxu0 0.0
    %358 = vmatpush1.msra.mxu0 %v338
    %359 = vmatprep.subr.mxu0 0.0
    %360 = vmatpush1.msra.mxu0 %v339
    %361 = vmatprep.subr.mxu0 0.0
    %362 = vmatpush1.msra.mxu0 0.0
    %363 = vmatprep.subr.mxu0 0.0
    %364 = vmatpush1.msra.mxu0 0.0
    %365 = vmatprep.subr.mxu0 0.0
    %366 = vmatpush1.msra.mxu0 0.0
    %367 = vmatprep.subr.mxu0 0.0
    %368 = vmatpush1.msra.mxu0 0.0
    %369 = vmatprep.subr.mxu0 0.0
    %370 = vmatpush1.msra.mxu0 0.0
    %371 = vmatprep.subr.mxu0 0.0
    %372 = vmatpush1.msra.mxu0 0.0
    %373 = vmatprep.subr.mxu0 0.0
    %374 = vmatpush1.msra.mxu0 0.0
    %375 = vmatprep.subr.mxu0 0.0
    %376 = vmatpush1.msra.mxu0 0.0
    %377 = vmatprep.subr.mxu0 0.0
    %378 = vmatpush1.msra.mxu0 0.0
    %379 = vmatprep.subr.mxu0 0.0
    %380 = vmatpush1.msra.mxu0 0.0
    %381 = vmatprep.subr.mxu0 0.0
    %382 = vmatpush1.msra.mxu0 0.0
    %383 = vmatprep.subr.mxu0 0.0
    %384 = vmatpush1.msra.mxu0 0.0
    %385 = vmatprep.subr.mxu0 0.0
    %386 = vmatpush1.msra.mxu0 0.0
    %387 = vmatprep.subr.mxu0 0.0
    %388 = vmatpush1.msra.mxu0 0.0
    %389 = vmatprep.subr.mxu0 0.0
    %390 = vmatpush1.msra.mxu0 0.0
    %391 = vmatprep.subr.mxu0 0.0
    %392 = vmatpush1.msra.mxu0 0.0
    %393 = vmatprep.subr.mxu0 0.0
    %394 = vmatpush1.msra.mxu0 0.0
    %395 = vmatprep.subr.mxu0 0.0
    %396 = vmatpush1.msra.mxu0 0.0
    %397 = vmatprep.subr.mxu0 0.0
    %398 = vmatpush1.msra.mxu0 0.0
    %399 = vmatprep.subr.mxu0 0.0
    %400 = vmatpush1.msra.mxu0 0.0
    %401 = vmatprep.subr.mxu0 0.0
    %402 = vmatpush1.msra.mxu0 0.0
    %403 = vmatprep.subr.mxu0 0.0
    %404 = vmatpush1.msra.mxu0 0.0
    %405 = vmatprep.subr.mxu0 0.0
    %406 = vmatpush1.msra.mxu0 0.0
    %407 = vmatprep.subr.mxu0 0.0
    %408 = vmatpush1.msra.mxu0 0.0
    %409 = vmatprep.subr.mxu0 0.0
    %410 = vmatpush1.msra.mxu0 0.0
    %411 = vmatprep.subr.mxu0 0.0
    %412 = vmatpush1.msra.mxu0 0.0
    %413 = vmatprep.subr.mxu0 0.0
    %414 = vmatpush1.msra.mxu0 0.0
    %415 = vmatprep.subr.mxu0 0.0
    %416 = vmatpush1.msra.mxu0 0.0
    %417 = vmatprep.mubr.f32.mxu0 0.0
    %418 = vmatmul.mubr.f32.gmra.mrb[0].mxu0 %v348
    %v419 = vpop.f32.mrb[0].mxu0
    %v420 = vadd.f32 %v345, %v419
    %v421 = vpop.f32.mrb[0].mxu0
    %422 = vmatprep.mubr.f32.mxu0 0.0
    %423 = vmatmul.mubr.f32.gmra.mrb[0].mxu0 %v351
    %v424 = vpop.f32.mrb[0].mxu0
    %v425 = vadd.f32 %v345, %v424
    %v426 = vpop.f32.mrb[0].mxu0
    %427 = vdwg.mxu0
    %429 = vrot.lane.b32.xlu0 %v420, 96
    %v430 = vpop.permute.xlu0 %429
    %vm431 = vcmask 64512
    %v432 = vsel %vm431, %v420, 0
    %v434 = vsel %vm431, %v430, 0
    %436 = vmatprep.subr.mxu0 0.0
    %437 = vmatpush1.xpose.msra.mxu0 %v434
    %438 = vmatprep.subr.mxu0 0.0
    %439 = vmatpush1.xpose.msra.mxu0 0.0
    %440 = vmatprep.subr.mxu0 0.0
    %441 = vmatpush1.xpose.msra.mxu0 0.0
    %442 = vmatprep.subr.mxu0 0.0
    %443 = vmatpush1.xpose.msra.mxu0 0.0
    %444 = vmatprep.subr.mxu0 0.0
    %445 = vmatpush1.xpose.msra.mxu0 0.0
    %446 = vmatprep.subr.mxu0 0.0
    %447 = vmatpush1.xpose.msra.mxu0 0.0
    %448 = vmatprep.subr.mxu0 0.0
    %449 = vmatpush1.xpose.msra.mxu0 0.0
    %450 = vmatprep.subr.mxu0 0.0
    %451 = vmatpush1.xpose.msra.mxu0 0.0
    %452 = vmatprep.subr.mxu0 0.0
    %453 = vmatpush1.xpose.msra.mxu0 0.0
    %454 = vmatprep.subr.mxu0 0.0
    %455 = vmatpush1.xpose.msra.mxu0 0.0
    %456 = vmatprep.subr.mxu0 0.0
    %457 = vmatpush1.xpose.msra.mxu0 0.0
    %458 = vmatprep.subr.mxu0 0.0
    %459 = vmatpush1.xpose.msra.mxu0 0.0
    %460 = vmatprep.subr.mxu0 0.0
    %461 = vmatpush1.xpose.msra.mxu0 0.0
    %462 = vmatprep.subr.mxu0 0.0
    %463 = vmatpush1.xpose.msra.mxu0 0.0
    %464 = vmatprep.subr.mxu0 0.0
    %465 = vmatpush1.xpose.msra.mxu0 0.0
    %466 = vmatprep.subr.mxu0 0.0
    %467 = vmatpush1.xpose.msra.mxu0 0.0
    %468 = vmatprep.subr.mxu0 0.0
    %469 = vmatpush1.xpose.msra.mxu0 0.0
    %470 = vmatprep.subr.mxu0 0.0
    %471 = vmatpush1.xpose.msra.mxu0 0.0
    %472 = vmatprep.subr.mxu0 0.0
    %473 = vmatpush1.xpose.msra.mxu0 0.0
    %474 = vmatprep.subr.mxu0 0.0
    %475 = vmatpush1.xpose.msra.mxu0 0.0
    %476 = vmatprep.subr.mxu0 0.0
    %477 = vmatpush1.xpose.msra.mxu0 0.0
    %478 = vmatprep.subr.mxu0 0.0
    %479 = vmatpush1.xpose.msra.mxu0 0.0
    %480 = vmatprep.subr.mxu0 0.0
    %481 = vmatpush1.xpose.msra.mxu0 0.0
    %482 = vmatprep.subr.mxu0 0.0
    %483 = vmatpush1.xpose.msra.mxu0 0.0
    %484 = vmatprep.subr.mxu0 0.0
    %485 = vmatpush1.xpose.msra.mxu0 0.0
    %486 = vmatprep.subr.mxu0 0.0
    %487 = vmatpush1.xpose.msra.mxu0 0.0
    %488 = vmatprep.subr.mxu0 0.0
    %489 = vmatpush1.xpose.msra.mxu0 0.0
    %490 = vmatprep.subr.mxu0 0.0
    %491 = vmatpush1.xpose.msra.mxu0 0.0
    %492 = vmatprep.subr.mxu0 0.0
    %493 = vmatpush1.xpose.msra.mxu0 0.0
    %494 = vmatprep.subr.mxu0 0.0
    %495 = vmatpush1.xpose.msra.mxu0 0.0
    %496 = vmatprep.subr.mxu0 0.0
    %497 = vmatpush1.xpose.msra.mxu0 0.0
    %498 = vmatprep.subr.mxu0 0.0
    %499 = vmatpush1.xpose.msra.mxu0 0.0
    %500 = vmatprep.mubr.f32.mxu0 0.0
    %501 = vmatmul.mubr.f32.gmra.mrb[0].mxu0 %v432
    %v502 = vpop.f32.mrb[0].mxu0
    %v503 = vadd.f32 0.0, %v502
    %v504 = vpop.f32.mrb[0].mxu0
    %505 = vdwg.mxu0
    %507 = vrot.lane.b32.xlu0 %v425, 96
    %v508 = vpop.permute.xlu0 %507
    %v509 = vsel %vm431, %v425, 0
    %v511 = vsel %vm431, %v508, 0
    %513 = vmatprep.subr.mxu0 0.0
    %514 = vmatpush1.xpose.msra.mxu0 %v511
    %515 = vmatprep.subr.mxu0 0.0
    %516 = vmatpush1.xpose.msra.mxu0 0.0
    %517 = vmatprep.subr.mxu0 0.0
    %518 = vmatpush1.xpose.msra.mxu0 0.0
    %519 = vmatprep.subr.mxu0 0.0
    %520 = vmatpush1.xpose.msra.mxu0 0.0
    %521 = vmatprep.subr.mxu0 0.0
    %522 = vmatpush1.xpose.msra.mxu0 0.0
    %523 = vmatprep.subr.mxu0 0.0
    %524 = vmatpush1.xpose.msra.mxu0 0.0
    %525 = vmatprep.subr.mxu0 0.0
    %526 = vmatpush1.xpose.msra.mxu0 0.0
    %527 = vmatprep.subr.mxu0 0.0
    %528 = vmatpush1.xpose.msra.mxu0 0.0
    %529 = vmatprep.subr.mxu0 0.0
    %530 = vmatpush1.xpose.msra.mxu0 0.0
    %531 = vmatprep.subr.mxu0 0.0
    %532 = vmatpush1.xpose.msra.mxu0 0.0
    %533 = vmatprep.subr.mxu0 0.0
    %534 = vmatpush1.xpose.msra.mxu0 0.0
    %535 = vmatprep.subr.mxu0 0.0
    %536 = vmatpush1.xpose.msra.mxu0 0.0
    %537 = vmatprep.subr.mxu0 0.0
    %538 = vmatpush1.xpose.msra.mxu0 0.0
    %539 = vmatprep.subr.mxu0 0.0
    %540 = vmatpush1.xpose.msra.mxu0 0.0
    %541 = vmatprep.subr.mxu0 0.0
    %542 = vmatpush1.xpose.msra.mxu0 0.0
    %543 = vmatprep.subr.mxu0 0.0
    %544 = vmatpush1.xpose.msra.mxu0 0.0
    %545 = vmatprep.subr.mxu0 0.0
    %546 = vmatpush1.xpose.msra.mxu0 0.0
    %547 = vmatprep.subr.mxu0 0.0
    %548 = vmatpush1.xpose.msra.mxu0 0.0
    %549 = vmatprep.subr.mxu0 0.0
    %550 = vmatpush1.xpose.msra.mxu0 0.0
    %551 = vmatprep.subr.mxu0 0.0
    %552 = vmatpush1.xpose.msra.mxu0 0.0
    %553 = vmatprep.subr.mxu0 0.0
    %554 = vmatpush1.xpose.msra.mxu0 0.0
    %555 = vmatprep.subr.mxu0 0.0
    %556 = vmatpush1.xpose.msra.mxu0 0.0
    %557 = vmatprep.subr.mxu0 0.0
    %558 = vmatpush1.xpose.msra.mxu0 0.0
    %559 = vmatprep.subr.mxu0 0.0
    %560 = vmatpush1.xpose.msra.mxu0 0.0
    %561 = vmatprep.subr.mxu0 0.0
    %562 = vmatpush1.xpose.msra.mxu0 0.0
    %563 = vmatprep.subr.mxu0 0.0
    %564 = vmatpush1.xpose.msra.mxu0 0.0
    %565 = vmatprep.subr.mxu0 0.0
    %566 = vmatpush1.xpose.msra.mxu0 0.0
    %567 = vmatprep.subr.mxu0 0.0
    %568 = vmatpush1.xpose.msra.mxu0 0.0
    %569 = vmatprep.subr.mxu0 0.0
    %570 = vmatpush1.xpose.msra.mxu0 0.0
    %571 = vmatprep.subr.mxu0 0.0
    %572 = vmatpush1.xpose.msra.mxu0 0.0
    %573 = vmatprep.subr.mxu0 0.0
    %574 = vmatpush1.xpose.msra.mxu0 0.0
    %575 = vmatprep.subr.mxu0 0.0
    %576 = vmatpush1.xpose.msra.mxu0 0.0
    %577 = vmatprep.mubr.f32.mxu0 0.0
    %578 = vmatmul.mubr.f32.gmra.mrb[0].mxu0 %v509
    %v579 = vpop.f32.mrb[0].mxu0
    %v580 = vadd.f32 0.0, %v579
    %v581 = vpop.f32.mrb[0].mxu0
    %582 = vdwg.mxu0
    %v583 = vsel %vm431, %v503, -inf
    %584 = vmax.xlane.f32.xlu0 %v583
    %v585 = vpop.xlane.xlu0 %584
    %v586 = vsel %vm431, %v580, -inf
    %587 = vmax.xlane.f32.xlu0 %v586
    %v588 = vpop.xlane.xlu0 %587
    %v589 = vsub.f32 %v503, %v585
    %v590 = vsub.f32 %v580, %v588
    %v591 = vmul.f32 %v589, 1.442695
    %v592 = vpow.pop %v591
    %v593 = vmul.f32 %v590, 1.442695
    %v594 = vpow.pop %v593
    %v595 = vsel %vm431, %v592, 0.0
    %596 = vadd.xlane.f32.xlu0 %v595
    %v597 = vpop.xlane.xlu0 %596
    %v598 = vsel %vm431, %v594, 0.0
    %599 = vadd.xlane.f32.xlu0 %v598
    %v600 = vpop.xlane.xlu0 %599
    %v601 = vrcp.pop %v597
    %v602 = vrcp.pop %v600
    %v603 = vmul.f32 %v592, %v601
    %v604 = vmul.f32 %v594, %v602
    %605 = vrot.lane.b32.xlu0 %v420, 64
    %v606 = vpop.permute.xlu0 %605
    %v609 = vsel %vm431, %v603, 0
    %611 = vmatprep.subr.mxu0 0.0
    %612 = vmatpush1.msra.mxu0 %v606
    %613 = vmatprep.subr.mxu0 0.0
    %614 = vmatpush1.msra.mxu0 0.0
    %615 = vmatprep.subr.mxu0 0.0
    %616 = vmatpush1.msra.mxu0 0.0
    %617 = vmatprep.subr.mxu0 0.0
    %618 = vmatpush1.msra.mxu0 0.0
    %619 = vmatprep.subr.mxu0 0.0
    %620 = vmatpush1.msra.mxu0 0.0
    %621 = vmatprep.subr.mxu0 0.0
    %622 = vmatpush1.msra.mxu0 0.0
    %623 = vmatprep.subr.mxu0 0.0
    %624 = vmatpush1.msra.mxu0 0.0
    %625 = vmatprep.subr.mxu0 0.0
    %626 = vmatpush1.msra.mxu0 0.0
    %627 = vmatprep.subr.mxu0 0.0
    %628 = vmatpush1.msra.mxu0 0.0
    %629 = vmatprep.subr.mxu0 0.0
    %630 = vmatpush1.msra.mxu0 0.0
    %631 = vmatprep.subr.mxu0 0.0
    %632 = vmatpush1.msra.mxu0 0.0
    %633 = vmatprep.subr.mxu0 0.0
    %634 = vmatpush1.msra.mxu0 0.0
    %635 = vmatprep.subr.mxu0 0.0
    %636 = vmatpush1.msra.mxu0 0.0
    %637 = vmatprep.subr.mxu0 0.0
    %638 = vmatpush1.msra.mxu0 0.0
    %639 = vmatprep.subr.mxu0 0.0
    %640 = vmatpush1.msra.mxu0 0.0
    %641 = vmatprep.subr.mxu0 0.0
    %642 = vmatpush1.msra.mxu0 0.0
    %643 = vmatprep.subr.mxu0 0.0
    %644 = vmatpush1.msra.mxu0 0.0
    %645 = vmatprep.subr.mxu0 0.0
    %646 = vmatpush1.msra.mxu0 0.0
    %647 = vmatprep.subr.mxu0 0.0
    %648 = vmatpush1.msra.mxu0 0.0
    %649 = vmatprep.subr.mxu0 0.0
    %650 = vmatpush1.msra.mxu0 0.0
    %651 = vmatprep.subr.mxu0 0.0
    %652 = vmatpush1.msra.mxu0 0.0
    %653 = vmatprep.subr.mxu0 0.0
    %654 = vmatpush1.msra.mxu0 0.0
    %655 = vmatprep.subr.mxu0 0.0
    %656 = vmatpush1.msra.mxu0 0.0
    %657 = vmatprep.subr.mxu0 0.0
    %658 = vmatpush1.msra.mxu0 0.0
    %659 = vmatprep.subr.mxu0 0.0
    %660 = vmatpush1.msra.mxu0 0.0
    %661 = vmatprep.subr.mxu0 0.0
    %662 = vmatpush1.msra.mxu0 0.0
    %663 = vmatprep.subr.mxu0 0.0
    %664 = vmatpush1.msra.mxu0 0.0
    %665 = vmatprep.subr.mxu0 0.0
    %666 = vmatpush1.msra.mxu0 0.0
    %667 = vmatprep.subr.mxu0 0.0
    %668 = vmatpush1.msra.mxu0 0.0
    %669 = vmatprep.subr.mxu0 0.0
    %670 = vmatpush1.msra.mxu0 0.0
    %671 = vmatprep.subr.mxu0 0.0
    %672 = vmatpush1.msra.mxu0 0.0
    %673 = vmatprep.subr.mxu0 0.0
    %674 = vmatpush1.msra.mxu0 0.0
    %675 = vmatprep.mubr.f32.mxu0 0.0
    %676 = vmatmul.mubr.f32.gmra.mrb[0].mxu0 %v609
    %v677 = vpop.f32.mrb[0].mxu0
    %v678 = vadd.f32 0.0, %v677
    %v679 = vpop.f32.mrb[0].mxu0
    %680 = vdwg.mxu0
    %681 = vrot.lane.b32.xlu0 %v425, 64
    %v682 = vpop.permute.xlu0 %681
    %v685 = vsel %vm431, %v604, 0
    %687 = vmatprep.subr.mxu0 0.0
    %688 = vmatpush1.msra.mxu0 %v682
    %689 = vmatprep.subr.mxu0 0.0
    %690 = vmatpush1.msra.mxu0 0.0
    %691 = vmatprep.subr.mxu0 0.0
    %692 = vmatpush1.msra.mxu0 0.0
    %693 = vmatprep.subr.mxu0 0.0
    %694 = vmatpush1.msra.mxu0 0.0
    %695 = vmatprep.subr.mxu0 0.0
    %696 = vmatpush1.msra.mxu0 0.0
    %697 = vmatprep.subr.mxu0 0.0
    %698 = vmatpush1.msra.mxu0 0.0
    %699 = vmatprep.subr.mxu0 0.0
    %700 = vmatpush1.msra.mxu0 0.0
    %701 = vmatprep.subr.mxu0 0.0
    %702 = vmatpush1.msra.mxu0 0.0
    %703 = vmatprep.subr.mxu0 0.0
    %704 = vmatpush1.msra.mxu0 0.0
    %705 = vmatprep.subr.mxu0 0.0
    %706 = vmatpush1.msra.mxu0 0.0
    %707 = vmatprep.subr.mxu0 0.0
    %708 = vmatpush1.msra.mxu0 0.0
    %709 = vmatprep.subr.mxu0 0.0
    %710 = vmatpush1.msra.mxu0 0.0
    %711 = vmatprep.subr.mxu0 0.0
    %712 = vmatpush1.msra.mxu0 0.0
    %713 = vmatprep.subr.mxu0 0.0
    %714 = vmatpush1.msra.mxu0 0.0
    %715 = vmatprep.subr.mxu0 0.0
    %716 = vmatpush1.msra.mxu0 0.0
    %717 = vmatprep.subr.mxu0 0.0
    %718 = vmatpush1.msra.mxu0 0.0
    %719 = vmatprep.subr.mxu0 0.0
    %720 = vmatpush1.msra.mxu0 0.0
    %721 = vmatprep.subr.mxu0 0.0
    %722 = vmatpush1.msra.mxu0 0.0
    %723 = vmatprep.subr.mxu0 0.0
    %724 = vmatpush1.msra.mxu0 0.0
    %725 = vmatprep.subr.mxu0 0.0
    %726 = vmatpush1.msra.mxu0 0.0
    %727 = vmatprep.subr.mxu0 0.0
    %728 = vmatpush1.msra.mxu0 0.0
    %729 = vmatprep.subr.mxu0 0.0
    %730 = vmatpush1.msra.mxu0 0.0
    %731 = vmatprep.subr.mxu0 0.0
    %732 = vmatpush1.msra.mxu0 0.0
    %733 = vmatprep.subr.mxu0 0.0
    %734 = vmatpush1.msra.mxu0 0.0
    %735 = vmatprep.subr.mxu0 0.0
    %736 = vmatpush1.msra.mxu0 0.0
    %737 = vmatprep.subr.mxu0 0.0
    %738 = vmatpush1.msra.mxu0 0.0
    %739 = vmatprep.subr.mxu0 0.0
    %740 = vmatpush1.msra.mxu0 0.0
    %741 = vmatprep.subr.mxu0 0.0
    %742 = vmatpush1.msra.mxu0 0.0
    %743 = vmatprep.subr.mxu0 0.0
    %744 = vmatpush1.msra.mxu0 0.0
    %745 = vmatprep.subr.mxu0 0.0
    %746 = vmatpush1.msra.mxu0 0.0
    %747 = vmatprep.subr.mxu0 0.0
    %748 = vmatpush1.msra.mxu0 0.0
    %749 = vmatprep.subr.mxu0 0.0
    %750 = vmatpush1.msra.mxu0 0.0
    %751 = vmatprep.mubr.f32.mxu0 0.0
    %752 = vmatmul.mubr.f32.gmra.mrb[0].mxu0 %v685
    %v753 = vpop.f32.mrb[0].mxu0
    %v754 = vadd.f32 0.0, %v753
    %v755 = vpop.f32.mrb[0].mxu0
    %756 = vdwg.mxu0
    %757 = vrot.lane.b32.xlu0 %v420, 120
    %v758 = vpop.permute.xlu0 %757
    %759 = vrot.lane.b32.xlu0 %v420, 88
    %v760 = vpop.permute.xlu0 %759
    %v761 = vsel %vm431, %v758, 0
    %v763 = vsel %vm431, %v760, 0
    %765 = vmatprep.subr.mxu0 0.0
    %766 = vmatpush1.xpose.msra.mxu0 %v763
    %767 = vmatprep.subr.mxu0 0.0
    %768 = vmatpush1.xpose.msra.mxu0 0.0
    %769 = vmatprep.subr.mxu0 0.0
    %770 = vmatpush1.xpose.msra.mxu0 0.0
    %771 = vmatprep.subr.mxu0 0.0
    %772 = vmatpush1.xpose.msra.mxu0 0.0
    %773 = vmatprep.subr.mxu0 0.0
    %774 = vmatpush1.xpose.msra.mxu0 0.0
    %775 = vmatprep.subr.mxu0 0.0
    %776 = vmatpush1.xpose.msra.mxu0 0.0
    %777 = vmatprep.subr.mxu0 0.0
    %778 = vmatpush1.xpose.msra.mxu0 0.0
    %779 = vmatprep.subr.mxu0 0.0
    %780 = vmatpush1.xpose.msra.mxu0 0.0
    %781 = vmatprep.subr.mxu0 0.0
    %782 = vmatpush1.xpose.msra.mxu0 0.0
    %783 = vmatprep.subr.mxu0 0.0
    %784 = vmatpush1.xpose.msra.mxu0 0.0
    %785 = vmatprep.subr.mxu0 0.0
    %786 = vmatpush1.xpose.msra.mxu0 0.0
    %787 = vmatprep.subr.mxu0 0.0
    %788 = vmatpush1.xpose.msra.mxu0 0.0
    %789 = vmatprep.subr.mxu0 0.0
    %790 = vmatpush1.xpose.msra.mxu0 0.0
    %791 = vmatprep.subr.mxu0 0.0
    %792 = vmatpush1.xpose.msra.mxu0 0.0
    %793 = vmatprep.subr.mxu0 0.0
    %794 = vmatpush1.xpose.msra.mxu0 0.0
    %795 = vmatprep.subr.mxu0 0.0
    %796 = vmatpush1.xpose.msra.mxu0 0.0
    %797 = vmatprep.subr.mxu0 0.0
    %798 = vmatpush1.xpose.msra.mxu0 0.0
    %799 = vmatprep.subr.mxu0 0.0
    %800 = vmatpush1.xpose.msra.mxu0 0.0
    %801 = vmatprep.subr.mxu0 0.0
    %802 = vmatpush1.xpose.msra.mxu0 0.0
    %803 = vmatprep.subr.mxu0 0.0
    %804 = vmatpush1.xpose.msra.mxu0 0.0
    %805 = vmatprep.subr.mxu0 0.0
    %806 = vmatpush1.xpose.msra.mxu0 0.0
    %807 = vmatprep.subr.mxu0 0.0
    %808 = vmatpush1.xpose.msra.mxu0 0.0
    %809 = vmatprep.subr.mxu0 0.0
    %810 = vmatpush1.xpose.msra.mxu0 0.0
    %811 = vmatprep.subr.mxu0 0.0
    %812 = vmatpush1.xpose.msra.mxu0 0.0
    %813 = vmatprep.subr.mxu0 0.0
    %814 = vmatpush1.xpose.msra.mxu0 0.0
    %815 = vmatprep.subr.mxu0 0.0
    %816 = vmatpush1.xpose.msra.mxu0 0.0
    %817 = vmatprep.subr.mxu0 0.0
    %818 = vmatpush1.xpose.msra.mxu0 0.0
    %819 = vmatprep.subr.mxu0 0.0
    %820 = vmatpush1.xpose.msra.mxu0 0.0
    %821 = vmatprep.subr.mxu0 0.0
    %822 = vmatpush1.xpose.msra.mxu0 0.0
    %823 = vmatprep.subr.mxu0 0.0
    %824 = vmatpush1.xpose.msra.mxu0 0.0
    %825 = vmatprep.subr.mxu0 0.0
    %826 = vmatpush1.xpose.msra.mxu0 0.0
    %827 = vmatprep.subr.mxu0 0.0
    %828 = vmatpush1.xpose.msra.mxu0 0.0
    %829 = vmatprep.mubr.f32.mxu0 0.0
    %830 = vmatmul.mubr.f32.gmra.mrb[0].mxu0 %v761
    %v831 = vpop.f32.mrb[0].mxu0
    %v832 = vadd.f32 0.0, %v831
    %v833 = vpop.f32.mrb[0].mxu0
    %834 = vdwg.mxu0
    %835 = vrot.lane.b32.xlu0 %v425, 120
    %v836 = vpop.permute.xlu0 %835
    %837 = vrot.lane.b32.xlu0 %v425, 88
    %v838 = vpop.permute.xlu0 %837
    %v839 = vsel %vm431, %v836, 0
    %v841 = vsel %vm431, %v838, 0
    %843 = vmatprep.subr.mxu0 0.0
    %844 = vmatpush1.xpose.msra.mxu0 %v841
    %845 = vmatprep.subr.mxu0 0.0
    %846 = vmatpush1.xpose.msra.mxu0 0.0
    %847 = vmatprep.subr.mxu0 0.0
    %848 = vmatpush1.xpose.msra.mxu0 0.0
    %849 = vmatprep.subr.mxu0 0.0
    %850 = vmatpush1.xpose.msra.mxu0 0.0
    %851 = vmatprep.subr.mxu0 0.0
    %852 = vmatpush1.xpose.msra.mxu0 0.0
    %853 = vmatprep.subr.mxu0 0.0
    %854 = vmatpush1.xpose.msra.mxu0 0.0
    %855 = vmatprep.subr.mxu0 0.0
    %856 = vmatpush1.xpose.msra.mxu0 0.0
    %857 = vmatprep.subr.mxu0 0.0
    %858 = vmatpush1.xpose.msra.mxu0 0.0
    %859 = vmatprep.subr.mxu0 0.0
    %860 = vmatpush1.xpose.msra.mxu0 0.0
    %861 = vmatprep.subr.mxu0 0.0
    %862 = vmatpush1.xpose.msra.mxu0 0.0
    %863 = vmatprep.subr.mxu0 0.0
    %864 = vmatpush1.xpose.msra.mxu0 0.0
    %865 = vmatprep.subr.mxu0 0.0
    %866 = vmatpush1.xpose.msra.mxu0 0.0
    %867 = vmatprep.subr.mxu0 0.0
    %868 = vmatpush1.xpose.msra.mxu0 0.0
    %869 = vmatprep.subr.mxu0 0.0
    %870 = vmatpush1.xpose.msra.mxu0 0.0
    %871 = vmatprep.subr.mxu0 0.0
    %872 = vmatpush1.xpose.msra.mxu0 0.0
    %873 = vmatprep.subr.mxu0 0.0
    %874 = vmatpush1.xpose.msra.mxu0 0.0
    %875 = vmatprep.subr.mxu0 0.0
    %876 = vmatpush1.xpose.msra.mxu0 0.0
    %877 = vmatprep.subr.mxu0 0.0
    %878 = vmatpush1.xpose.msra.mxu0 0.0
    %879 = vmatprep.subr.mxu0 0.0
    %880 = vmatpush1.xpose.msra.mxu0 0.0
    %881 = vmatprep.subr.mxu0 0.0
    %882 = vmatpush1.xpose.msra.mxu0 0.0
    %883 = vmatprep.subr.mxu0 0.0
    %884 = vmatpush1.xpose.msra.mxu0 0.0
    %885 = vmatprep.subr.mxu0 0.0
    %886 = vmatpush1.xpose.msra.mxu0 0.0
    %887 = vmatprep.subr.mxu0 0.0
    %888 = vmatpush1.xpose.msra.mxu0 0.0
    %889 = vmatprep.subr.mxu0 0.0
    %890 = vmatpush1.xpose.msra.mxu0 0.0
    %891 = vmatprep.subr.mxu0 0.0
    %892 = vmatpush1.xpose.msra.mxu0 0.0
    %893 = vmatprep.subr.mxu0 0.0
    %894 = vmatpush1.xpose.msra.mxu0 0.0
    %895 = vmatprep.subr.mxu0 0.0
    %896 = vmatpush1.xpose.msra.mxu0 0.0
    %897 = vmatprep.subr.mxu0 0.0
    %898 = vmatpush1.xpose.msra.mxu0 0.0
    %899 = vmatprep.subr.mxu0 0.0
    %900 = vmatpush1.xpose.msra.mxu0 0.0
    %901 = vmatprep.subr.mxu0 0.0
    %902 = vmatpush1.xpose.msra.mxu0 0.0
    %903 = vmatprep.subr.mxu0 0.0
    %904 = vmatpush1.xpose.msra.mxu0 0.0
    %905 = vmatprep.subr.mxu0 0.0
    %906 = vmatpush1.xpose.msra.mxu0 0.0
    %907 = vmatprep.mubr.f32.mxu0 0.0
    %908 = vmatmul.mubr.f32.gmra.mrb[0].mxu0 %v839
    %v909 = vpop.f32.mrb[0].mxu0
    %v910 = vadd.f32 0.0, %v909
    %v911 = vpop.f32.mrb[0].mxu0
    %912 = vdwg.mxu0
    %v913 = vsel %vm431, %v832, -inf
    %914 = vmax.xlane.f32.xlu0 %v913
    %v915 = vpop.xlane.xlu0 %914
    %v916 = vsel %vm431, %v910, -inf
    %917 = vmax.xlane.f32.xlu0 %v916
    %v918 = vpop.xlane.xlu0 %917
    %v919 = vsub.f32 %v832, %v915
    %v920 = vsub.f32 %v910, %v918
    %v921 = vmul.f32 %v919, 1.442695
    %v922 = vpow.pop %v921
    %v923 = vmul.f32 %v920, 1.442695
    %v924 = vpow.pop %v923
    %v925 = vsel %vm431, %v922, 0.0
    %926 = vadd.xlane.f32.xlu0 %v925
    %v927 = vpop.xlane.xlu0 %926
    %v928 = vsel %vm431, %v924, 0.0
    %929 = vadd.xlane.f32.xlu0 %v928
    %v930 = vpop.xlane.xlu0 %929
    %v931 = vrcp.pop %v927
    %v932 = vrcp.pop %v930
    %v933 = vmul.f32 %v922, %v931
    %v934 = vmul.f32 %v924, %v932
    %935 = vrot.lane.b32.xlu0 %v420, 56
    %v936 = vpop.permute.xlu0 %935
    %v939 = vsel %vm431, %v933, 0
    %941 = vmatprep.subr.mxu0 0.0
    %942 = vmatpush1.msra.mxu0 %v936
    %943 = vmatprep.subr.mxu0 0.0
    %944 = vmatpush1.msra.mxu0 0.0
    %945 = vmatprep.subr.mxu0 0.0
    %946 = vmatpush1.msra.mxu0 0.0
    %947 = vmatprep.subr.mxu0 0.0
    %948 = vmatpush1.msra.mxu0 0.0
    %949 = vmatprep.subr.mxu0 0.0
    %950 = vmatpush1.msra.mxu0 0.0
    %951 = vmatprep.subr.mxu0 0.0
    %952 = vmatpush1.msra.mxu0 0.0
    %953 = vmatprep.subr.mxu0 0.0
    %954 = vmatpush1.msra.mxu0 0.0
    %955 = vmatprep.subr.mxu0 0.0
    %956 = vmatpush1.msra.mxu0 0.0
    %957 = vmatprep.subr.mxu0 0.0
    %958 = vmatpush1.msra.mxu0 0.0
    %959 = vmatprep.subr.mxu0 0.0
    %960 = vmatpush1.msra.mxu0 0.0
    %961 = vmatprep.subr.mxu0 0.0
    %962 = vmatpush1.msra.mxu0 0.0
    %963 = vmatprep.subr.mxu0 0.0
    %964 = vmatpush1.msra.mxu0 0.0
    %965 = vmatprep.subr.mxu0 0.0
    %966 = vmatpush1.msra.mxu0 0.0
    %967 = vmatprep.subr.mxu0 0.0
    %968 = vmatpush1.msra.mxu0 0.0
    %969 = vmatprep.subr.mxu0 0.0
    %970 = vmatpush1.msra.mxu0 0.0
    %971 = vmatprep.subr.mxu0 0.0
    %972 = vmatpush1.msra.mxu0 0.0
    %973 = vmatprep.subr.mxu0 0.0
    %974 = vmatpush1.msra.mxu0 0.0
    %975 = vmatprep.subr.mxu0 0.0
    %976 = vmatpush1.msra.mxu0 0.0
    %977 = vmatprep.subr.mxu0 0.0
    %978 = vmatpush1.msra.mxu0 0.0
    %979 = vmatprep.subr.mxu0 0.0
    %980 = vmatpush1.msra.mxu0 0.0
    %981 = vmatprep.subr.mxu0 0.0
    %982 = vmatpush1.msra.mxu0 0.0
    %983 = vmatprep.subr.mxu0 0.0
    %984 = vmatpush1.msra.mxu0 0.0
    %985 = vmatprep.subr.mxu0 0.0
    %986 = vmatpush1.msra.mxu0 0.0
    %987 = vmatprep.subr.mxu0 0.0
    %988 = vmatpush1.msra.mxu0 0.0
    %989 = vmatprep.subr.mxu0 0.0
    %990 = vmatpush1.msra.mxu0 0.0
    %991 = vmatprep.subr.mxu0 0.0
    %992 = vmatpush1.msra.mxu0 0.0
    %993 = vmatprep.subr.mxu0 0.0
    %994 = vmatpush1.msra.mxu0 0.0
    %995 = vmatprep.subr.mxu0 0.0
    %996 = vmatpush1.msra.mxu0 0.0
    %997 = vmatprep.subr.mxu0 0.0
    %998 = vmatpush1.msra.mxu0 0.0
    %999 = vmatprep.subr.mxu0 0.0
    %1000 = vmatpush1.msra.mxu0 0.0
    %1001 = vmatprep.subr.mxu0 0.0
    %1002 = vmatpush1.msra.mxu0 0.0
    %1003 = vmatprep.subr.mxu0 0.0
    %1004 = vmatpush1.msra.mxu0 0.0
    %1005 = vmatprep.mubr.f32.mxu0 0.0
    %1006 = vmatmul.mubr.f32.gmra.mrb[0].mxu0 %v939
    %v1007 = vpop.f32.mrb[0].mxu0
    %v1008 = vadd.f32 0.0, %v1007
    %v1009 = vpop.f32.mrb[0].mxu0
    %1010 = vdwg.mxu0
    %1011 = vrot.lane.b32.xlu0 %v425, 56
    %v1012 = vpop.permute.xlu0 %1011
    %v1015 = vsel %vm431, %v934, 0
    %1017 = vmatprep.subr.mxu0 0.0
    %1018 = vmatpush1.msra.mxu0 %v1012
    %1019 = vmatprep.subr.mxu0 0.0
    %1020 = vmatpush1.msra.mxu0 0.0
    %1021 = vmatprep.subr.mxu0 0.0
    %1022 = vmatpush1.msra.mxu0 0.0
    %1023 = vmatprep.subr.mxu0 0.0
    %1024 = vmatpush1.msra.mxu0 0.0
    %1025 = vmatprep.subr.mxu0 0.0
    %1026 = vmatpush1.msra.mxu0 0.0
    %1027 = vmatprep.subr.mxu0 0.0
    %1028 = vmatpush1.msra.mxu0 0.0
    %1029 = vmatprep.subr.mxu0 0.0
    %1030 = vmatpush1.msra.mxu0 0.0
    %1031 = vmatprep.subr.mxu0 0.0
    %1032 = vmatpush1.msra.mxu0 0.0
    %1033 = vmatprep.subr.mxu0 0.0
    %1034 = vmatpush1.msra.mxu0 0.0
    %1035 = vmatprep.subr.mxu0 0.0
    %1036 = vmatpush1.msra.mxu0 0.0
    %1037 = vmatprep.subr.mxu0 0.0
    %1038 = vmatpush1.msra.mxu0 0.0
    %1039 = vmatprep.subr.mxu0 0.0
    %1040 = vmatpush1.msra.mxu0 0.0
    %1041 = vmatprep.subr.mxu0 0.0
    %1042 = vmatpush1.msra.mxu0 0.0
    %1043 = vmatprep.subr.mxu0 0.0
    %1044 = vmatpush1.msra.mxu0 0.0
    %1045 = vmatprep.subr.mxu0 0.0
    %1046 = vmatpush1.msra.mxu0 0.0
    %1047 = vmatprep.subr.mxu0 0.0
    %1048 = vmatpush1.msra.mxu0 0.0
    %1049 = vmatprep.subr.mxu0 0.0
    %1050 = vmatpush1.msra.mxu0 0.0
    %1051 = vmatprep.subr.mxu0 0.0
    %1052 = vmatpush1.msra.mxu0 0.0
    %1053 = vmatprep.subr.mxu0 0.0
    %1054 = vmatpush1.msra.mxu0 0.0
    %1055 = vmatprep.subr.mxu0 0.0
    %1056 = vmatpush1.msra.mxu0 0.0
    %1057 = vmatprep.subr.mxu0 0.0
    %1058 = vmatpush1.msra.mxu0 0.0
    %1059 = vmatprep.subr.mxu0 0.0
    %1060 = vmatpush1.msra.mxu0 0.0
    %1061 = vmatprep.subr.mxu0 0.0
    %1062 = vmatpush1.msra.mxu0 0.0
    %1063 = vmatprep.subr.mxu0 0.0
    %1064 = vmatpush1.msra.mxu0 0.0
    %1065 = vmatprep.subr.mxu0 0.0
    %1066 = vmatpush1.msra.mxu0 0.0
    %1067 = vmatprep.subr.mxu0 0.0
    %1068 = vmatpush1.msra.mxu0 0.0
    %1069 = vmatprep.subr.mxu0 0.0
    %1070 = vmatpush1.msra.mxu0 0.0
    %1071 = vmatprep.subr.mxu0 0.0
    %1072 = vmatpush1.msra.mxu0 0.0
    %1073 = vmatprep.subr.mxu0 0.0
    %1074 = vmatpush1.msra.mxu0 0.0
    %1075 = vmatprep.subr.mxu0 0.0
    %1076 = vmatpush1.msra.mxu0 0.0
    %1077 = vmatprep.subr.mxu0 0.0
    %1078 = vmatpush1.msra.mxu0 0.0
    %1079 = vmatprep.subr.mxu0 0.0
    %1080 = vmatpush1.msra.mxu0 0.0
    %1081 = vmatprep.mubr.f32.mxu0 0.0
    %1082 = vmatmul.mubr.f32.gmra.mrb[0].mxu0 %v1015
    %v1083 = vpop.f32.mrb[0].mxu0
    %v1084 = vadd.f32 0.0, %v1083
    %v1085 = vpop.f32.mrb[0].mxu0
    %1086 = vdwg.mxu0
    %1087 = vrot.lane.b32.xlu0 %v420, 112
    %v1088 = vpop.permute.xlu0 %1087
    %1089 = vrot.lane.b32.xlu0 %v420, 80
    %v1090 = vpop.permute.xlu0 %1089
    %v1091 = vsel %vm431, %v1088, 0
    %v1093 = vsel %vm431, %v1090, 0
    %1095 = vmatprep.subr.mxu0 0.0
    %1096 = vmatpush1.xpose.msra.mxu0 %v1093
    %1097 = vmatprep.subr.mxu0 0.0
    %1098 = vmatpush1.xpose.msra.mxu0 0.0
    %1099 = vmatprep.subr.mxu0 0.0
    %1100 = vmatpush1.xpose.msra.mxu0 0.0
    %1101 = vmatprep.subr.mxu0 0.0
    %1102 = vmatpush1.xpose.msra.mxu0 0.0
    %1103 = vmatprep.subr.mxu0 0.0
    %1104 = vmatpush1.xpose.msra.mxu0 0.0
    %1105 = vmatprep.subr.mxu0 0.0
    %1106 = vmatpush1.xpose.msra.mxu0 0.0
    %1107 = vmatprep.subr.mxu0 0.0
    %1108 = vmatpush1.xpose.msra.mxu0 0.0
    %1109 = vmatprep.subr.mxu0 0.0
    %1110 = vmatpush1.xpose.msra.mxu0 0.0
    %1111 = vmatprep.subr.mxu0 0.0
    %1112 = vmatpush1.xpose.msra.mxu0 0.0
    %1113 = vmatprep.subr.mxu0 0.0
    %1114 = vmatpush1.xpose.msra.mxu0 0.0
    %1115 = vmatprep.subr.mxu0 0.0
    %1116 = vmatpush1.xpose.msra.mxu0 0.0
    %1117 = vmatprep.subr.mxu0 0.0
    %1118 = vmatpush1.xpose.msra.mxu0 0.0
    %1119 = vmatprep.subr.mxu0 0.0
    %1120 = vmatpush1.xpose.msra.mxu0 0.0
    %1121 = vmatprep.subr.mxu0 0.0
    %1122 = vmatpush1.xpose.msra.mxu0 0.0
    %1123 = vmatprep.subr.mxu0 0.0
    %1124 = vmatpush1.xpose.msra.mxu0 0.0
    %1125 = vmatprep.subr.mxu0 0.0
    %1126 = vmatpush1.xpose.msra.mxu0 0.0
    %1127 = vmatprep.subr.mxu0 0.0
    %1128 = vmatpush1.xpose.msra.mxu0 0.0
    %1129 = vmatprep.subr.mxu0 0.0
    %1130 = vmatpush1.xpose.msra.mxu0 0.0
    %1131 = vmatprep.subr.mxu0 0.0
    %1132 = vmatpush1.xpose.msra.mxu0 0.0
    %1133 = vmatprep.subr.mxu0 0.0
    %1134 = vmatpush1.xpose.msra.mxu0 0.0
    %1135 = vmatprep.subr.mxu0 0.0
    %1136 = vmatpush1.xpose.msra.mxu0 0.0
    %1137 = vmatprep.subr.mxu0 0.0
    %1138 = vmatpush1.xpose.msra.mxu0 0.0
    %1139 = vmatprep.subr.mxu0 0.0
    %1140 = vmatpush1.xpose.msra.mxu0 0.0
    %1141 = vmatprep.subr.mxu0 0.0
    %1142 = vmatpush1.xpose.msra.mxu0 0.0
    %1143 = vmatprep.subr.mxu0 0.0
    %1144 = vmatpush1.xpose.msra.mxu0 0.0
    %1145 = vmatprep.subr.mxu0 0.0
    %1146 = vmatpush1.xpose.msra.mxu0 0.0
    %1147 = vmatprep.subr.mxu0 0.0
    %1148 = vmatpush1.xpose.msra.mxu0 0.0
    %1149 = vmatprep.subr.mxu0 0.0
    %1150 = vmatpush1.xpose.msra.mxu0 0.0
    %1151 = vmatprep.subr.mxu0 0.0
    %1152 = vmatpush1.xpose.msra.mxu0 0.0
    %1153 = vmatprep.subr.mxu0 0.0
    %1154 = vmatpush1.xpose.msra.mxu0 0.0
    %1155 = vmatprep.subr.mxu0 0.0
    %1156 = vmatpush1.xpose.msra.mxu0 0.0
    %1157 = vmatprep.subr.mxu0 0.0
    %1158 = vmatpush1.xpose.msra.mxu0 0.0
    %1159 = vmatprep.mubr.f32.mxu0 0.0
    %1160 = vmatmul.mubr.f32.gmra.mrb[0].mxu0 %v1091
    %v1161 = vpop.f32.mrb[0].mxu0
    %v1162 = vadd.f32 0.0, %v1161
    %v1163 = vpop.f32.mrb[0].mxu0
    %1164 = vdwg.mxu0
    %1165 = vrot.lane.b32.xlu0 %v425, 112
    %v1166 = vpop.permute.xlu0 %1165
    %1167 = vrot.lane.b32.xlu0 %v425, 80
    %v1168 = vpop.permute.xlu0 %1167
    %v1169 = vsel %vm431, %v1166, 0
    %v1171 = vsel %vm431, %v1168, 0
    %1173 = vmatprep.subr.mxu0 0.0
    %1174 = vmatpush1.xpose.msra.mxu0 %v1171
    %1175 = vmatprep.subr.mxu0 0.0
    %1176 = vmatpush1.xpose.msra.mxu0 0.0
    %1177 = vmatprep.subr.mxu0 0.0
    %1178 = vmatpush1.xpose.msra.mxu0 0.0
    %1179 = vmatprep.subr.mxu0 0.0
    %1180 = vmatpush1.xpose.msra.mxu0 0.0
    %1181 = vmatprep.subr.mxu0 0.0
    %1182 = vmatpush1.xpose.msra.mxu0 0.0
    %1183 = vmatprep.subr.mxu0 0.0
    %1184 = vmatpush1.xpose.msra.mxu0 0.0
    %1185 = vmatprep.subr.mxu0 0.0
    %1186 = vmatpush1.xpose.msra.mxu0 0.0
    %1187 = vmatprep.subr.mxu0 0.0
    %1188 = vmatpush1.xpose.msra.mxu0 0.0
    %1189 = vmatprep.subr.mxu0 0.0
    %1190 = vmatpush1.xpose.msra.mxu0 0.0
    %1191 = vmatprep.subr.mxu0 0.0
    %1192 = vmatpush1.xpose.msra.mxu0 0.0
    %1193 = vmatprep.subr.mxu0 0.0
    %1194 = vmatpush1.xpose.msra.mxu0 0.0
    %1195 = vmatprep.subr.mxu0 0.0
    %1196 = vmatpush1.xpose.msra.mxu0 0.0
    %1197 = vmatprep.subr.mxu0 0.0
    %1198 = vmatpush1.xpose.msra.mxu0 0.0
    %1199 = vmatprep.subr.mxu0 0.0
    %1200 = vmatpush1.xpose.msra.mxu0 0.0
    %1201 = vmatprep.subr.mxu0 0.0
    %1202 = vmatpush1.xpose.msra.mxu0 0.0
    %1203 = vmatprep.subr.mxu0 0.0
    %1204 = vmatpush1.xpose.msra.mxu0 0.0
    %1205 = vmatprep.subr.mxu0 0.0
    %1206 = vmatpush1.xpose.msra.mxu0 0.0
    %1207 = vmatprep.subr.mxu0 0.0
    %1208 = vmatpush1.xpose.msra.mxu0 0.0
    %1209 = vmatprep.subr.mxu0 0.0
    %1210 = vmatpush1.xpose.msra.mxu0 0.0
    %1211 = vmatprep.subr.mxu0 0.0
    %1212 = vmatpush1.xpose.msra.mxu0 0.0
    %1213 = vmatprep.subr.mxu0 0.0
    %1214 = vmatpush1.xpose.msra.mxu0 0.0
    %1215 = vmatprep.subr.mxu0 0.0
    %1216 = vmatpush1.xpose.msra.mxu0 0.0
    %1217 = vmatprep.subr.mxu0 0.0
    %1218 = vmatpush1.xpose.msra.mxu0 0.0
    %1219 = vmatprep.subr.mxu0 0.0
    %1220 = vmatpush1.xpose.msra.mxu0 0.0
    %1221 = vmatprep.subr.mxu0 0.0
    %1222 = vmatpush1.xpose.msra.mxu0 0.0
    %1223 = vmatprep.subr.mxu0 0.0
    %1224 = vmatpush1.xpose.msra.mxu0 0.0
    %1225 = vmatprep.subr.mxu0 0.0
    %1226 = vmatpush1.xpose.msra.mxu0 0.0
    %1227 = vmatprep.subr.mxu0 0.0
    %1228 = vmatpush1.xpose.msra.mxu0 0.0
    %1229 = vmatprep.subr.mxu0 0.0
    %1230 = vmatpush1.xpose.msra.mxu0 0.0
    %1231 = vmatprep.subr.mxu0 0.0
    %1232 = vmatpush1.xpose.msra.mxu0 0.0
    %1233 = vmatprep.subr.mxu0 0.0
    %1234 = vmatpush1.xpose.msra.mxu0 0.0
    %1235 = vmatprep.subr.mxu0 0.0
    %1236 = vmatpush1.xpose.msra.mxu0 0.0
    %1237 = vmatprep.mubr.f32.mxu0 0.0
    %1238 = vmatmul.mubr.f32.gmra.mrb[0].mxu0 %v1169
    %v1239 = vpop.f32.mrb[0].mxu0
    %v1240 = vadd.f32 0.0, %v1239
    %v1241 = vpop.f32.mrb[0].mxu0
    %1242 = vdwg.mxu0
    %v1243 = vsel %vm431, %v1162, -inf
    %1244 = vmax.xlane.f32.xlu0 %v1243
    %v1245 = vpop.xlane.xlu0 %1244
    %v1246 = vsel %vm431, %v1240, -inf
    %1247 = vmax.xlane.f32.xlu0 %v1246
    %v1248 = vpop.xlane.xlu0 %1247
    %v1249 = vsub.f32 %v1162, %v1245
    %v1250 = vsub.f32 %v1240, %v1248
    %v1251 = vmul.f32 %v1249, 1.442695
    %v1252 = vpow.pop %v1251
    %v1253 = vmul.f32 %v1250, 1.442695
    %v1254 = vpow.pop %v1253
    %v1255 = vsel %vm431, %v1252, 0.0
    %1256 = vadd.xlane.f32.xlu0 %v1255
    %v1257 = vpop.xlane.xlu0 %1256
    %v1258 = vsel %vm431, %v1254, 0.0
    %1259 = vadd.xlane.f32.xlu0 %v1258
    %v1260 = vpop.xlane.xlu0 %1259
    %v1261 = vrcp.pop %v1257
    %v1262 = vrcp.pop %v1260
    %v1263 = vmul.f32 %v1252, %v1261
    %v1264 = vmul.f32 %v1254, %v1262
    %1265 = vrot.lane.b32.xlu0 %v420, 48
    %v1266 = vpop.permute.xlu0 %1265
    %v1269 = vsel %vm431, %v1263, 0
    %1271 = vmatprep.subr.mxu0 0.0
    %1272 = vmatpush1.msra.mxu0 %v1266
    %1273 = vmatprep.subr.mxu0 0.0
    %1274 = vmatpush1.msra.mxu0 0.0
    %1275 = vmatprep.subr.mxu0 0.0
    %1276 = vmatpush1.msra.mxu0 0.0
    %1277 = vmatprep.subr.mxu0 0.0
    %1278 = vmatpush1.msra.mxu0 0.0
    %1279 = vmatprep.subr.mxu0 0.0
    %1280 = vmatpush1.msra.mxu0 0.0
    %1281 = vmatprep.subr.mxu0 0.0
    %1282 = vmatpush1.msra.mxu0 0.0
    %1283 = vmatprep.subr.mxu0 0.0
    %1284 = vmatpush1.msra.mxu0 0.0
    %1285 = vmatprep.subr.mxu0 0.0
    %1286 = vmatpush1.msra.mxu0 0.0
    %1287 = vmatprep.subr.mxu0 0.0
    %1288 = vmatpush1.msra.mxu0 0.0
    %1289 = vmatprep.subr.mxu0 0.0
    %1290 = vmatpush1.msra.mxu0 0.0
    %1291 = vmatprep.subr.mxu0 0.0
    %1292 = vmatpush1.msra.mxu0 0.0
    %1293 = vmatprep.subr.mxu0 0.0
    %1294 = vmatpush1.msra.mxu0 0.0
    %1295 = vmatprep.subr.mxu0 0.0
    %1296 = vmatpush1.msra.mxu0 0.0
    %1297 = vmatprep.subr.mxu0 0.0
    %1298 = vmatpush1.msra.mxu0 0.0
    %1299 = vmatprep.subr.mxu0 0.0
    %1300 = vmatpush1.msra.mxu0 0.0
    %1301 = vmatprep.subr.mxu0 0.0
    %1302 = vmatpush1.msra.mxu0 0.0
    %1303 = vmatprep.subr.mxu0 0.0
    %1304 = vmatpush1.msra.mxu0 0.0
    %1305 = vmatprep.subr.mxu0 0.0
    %1306 = vmatpush1.msra.mxu0 0.0
    %1307 = vmatprep.subr.mxu0 0.0
    %1308 = vmatpush1.msra.mxu0 0.0
    %1309 = vmatprep.subr.mxu0 0.0
    %1310 = vmatpush1.msra.mxu0 0.0
    %1311 = vmatprep.subr.mxu0 0.0
    %1312 = vmatpush1.msra.mxu0 0.0
    %1313 = vmatprep.subr.mxu0 0.0
    %1314 = vmatpush1.msra.mxu0 0.0
    %1315 = vmatprep.subr.mxu0 0.0
    %1316 = vmatpush1.msra.mxu0 0.0
    %1317 = vmatprep.subr.mxu0 0.0
    %1318 = vmatpush1.msra.mxu0 0.0
    %1319 = vmatprep.subr.mxu0 0.0
    %1320 = vmatpush1.msra.mxu0 0.0
    %1321 = vmatprep.subr.mxu0 0.0
    %1322 = vmatpush1.msra.mxu0 0.0
    %1323 = vmatprep.subr.mxu0 0.0
    %1324 = vmatpush1.msra.mxu0 0.0
    %1325 = vmatprep.subr.mxu0 0.0
    %1326 = vmatpush1.msra.mxu0 0.0
    %1327 = vmatprep.subr.mxu0 0.0
    %1328 = vmatpush1.msra.mxu0 0.0
    %1329 = vmatprep.subr.mxu0 0.0
    %1330 = vmatpush1.msra.mxu0 0.0
    %1331 = vmatprep.subr.mxu0 0.0
    %1332 = vmatpush1.msra.mxu0 0.0
    %1333 = vmatprep.subr.mxu0 0.0
    %1334 = vmatpush1.msra.mxu0 0.0
    %1335 = vmatprep.mubr.f32.mxu0 0.0
    %1336 = vmatmul.mubr.f32.gmra.mrb[0].mxu0 %v1269
    %v1337 = vpop.f32.mrb[0].mxu0
    %v1338 = vadd.f32 0.0, %v1337
    %v1339 = vpop.f32.mrb[0].mxu0
    %1340 = vdwg.mxu0
    %1341 = vrot.lane.b32.xlu0 %v425, 48
    %v1342 = vpop.permute.xlu0 %1341
    %v1345 = vsel %vm431, %v1264, 0
    %1347 = vmatprep.subr.mxu0 0.0
    %1348 = vmatpush1.msra.mxu0 %v1342
    %1349 = vmatprep.subr.mxu0 0.0
    %1350 = vmatpush1.msra.mxu0 0.0
    %1351 = vmatprep.subr.mxu0 0.0
    %1352 = vmatpush1.msra.mxu0 0.0
    %1353 = vmatprep.subr.mxu0 0.0
    %1354 = vmatpush1.msra.mxu0 0.0
    %1355 = vmatprep.subr.mxu0 0.0
    %1356 = vmatpush1.msra.mxu0 0.0
    %1357 = vmatprep.subr.mxu0 0.0
    %1358 = vmatpush1.msra.mxu0 0.0
    %1359 = vmatprep.subr.mxu0 0.0
    %1360 = vmatpush1.msra.mxu0 0.0
    %1361 = vmatprep.subr.mxu0 0.0
    %1362 = vmatpush1.msra.mxu0 0.0
    %1363 = vmatprep.subr.mxu0 0.0
    %1364 = vmatpush1.msra.mxu0 0.0
    %1365 = vmatprep.subr.mxu0 0.0
    %1366 = vmatpush1.msra.mxu0 0.0
    %1367 = vmatprep.subr.mxu0 0.0
    %1368 = vmatpush1.msra.mxu0 0.0
    %1369 = vmatprep.subr.mxu0 0.0
    %1370 = vmatpush1.msra.mxu0 0.0
    %1371 = vmatprep.subr.mxu0 0.0
    %1372 = vmatpush1.msra.mxu0 0.0
    %1373 = vmatprep.subr.mxu0 0.0
    %1374 = vmatpush1.msra.mxu0 0.0
    %1375 = vmatprep.subr.mxu0 0.0
    %1376 = vmatpush1.msra.mxu0 0.0
    %1377 = vmatprep.subr.mxu0 0.0
    %1378 = vmatpush1.msra.mxu0 0.0
    %1379 = vmatprep.subr.mxu0 0.0
    %1380 = vmatpush1.msra.mxu0 0.0
    %1381 = vmatprep.subr.mxu0 0.0
    %1382 = vmatpush1.msra.mxu0 0.0
    %1383 = vmatprep.subr.mxu0 0.0
    %1384 = vmatpush1.msra.mxu0 0.0
    %1385 = vmatprep.subr.mxu0 0.0
    %1386 = vmatpush1.msra.mxu0 0.0
    %1387 = vmatprep.subr.mxu0 0.0
    %1388 = vmatpush1.msra.mxu0 0.0
    %1389 = vmatprep.subr.mxu0 0.0
    %1390 = vmatpush1.msra.mxu0 0.0
    %1391 = vmatprep.subr.mxu0 0.0
    %1392 = vmatpush1.msra.mxu0 0.0
    %1393 = vmatprep.subr.mxu0 0.0
    %1394 = vmatpush1.msra.mxu0 0.0
    %1395 = vmatprep.subr.mxu0 0.0
    %1396 = vmatpush1.msra.mxu0 0.0
    %1397 = vmatprep.subr.mxu0 0.0
    %1398 = vmatpush1.msra.mxu0 0.0
    %1399 = vmatprep.subr.mxu0 0.0
    %1400 = vmatpush1.msra.mxu0 0.0
    %1401 = vmatprep.subr.mxu0 0.0
    %1402 = vmatpush1.msra.mxu0 0.0
    %1403 = vmatprep.subr.mxu0 0.0
    %1404 = vmatpush1.msra.mxu0 0.0
    %1405 = vmatprep.subr.mxu0 0.0
    %1406 = vmatpush1.msra.mxu0 0.0
    %1407 = vmatprep.subr.mxu0 0.0
    %1408 = vmatpush1.msra.mxu0 0.0
    %1409 = vmatprep.subr.mxu0 0.0
    %1410 = vmatpush1.msra.mxu0 0.0
    %1411 = vmatprep.mubr.f32.mxu0 0.0
    %1412 = vmatmul.mubr.f32.gmra.mrb[0].mxu0 %v1345
    %v1413 = vpop.f32.mrb[0].mxu0
    %v1414 = vadd.f32 0.0, %v1413
    %v1415 = vpop.f32.mrb[0].mxu0
    %1416 = vdwg.mxu0
    %1417 = vrot.lane.b32.xlu0 %v420, 104
    %v1418 = vpop.permute.xlu0 %1417
    %1419 = vrot.lane.b32.xlu0 %v420, 72
    %v1420 = vpop.permute.xlu0 %1419
    %v1421 = vsel %vm431, %v1418, 0
    %v1423 = vsel %vm431, %v1420, 0
    %1425 = vmatprep.subr.mxu0 0.0
    %1426 = vmatpush1.xpose.msra.mxu0 %v1423
    %1427 = vmatprep.subr.mxu0 0.0
    %1428 = vmatpush1.xpose.msra.mxu0 0.0
    %1429 = vmatprep.subr.mxu0 0.0
    %1430 = vmatpush1.xpose.msra.mxu0 0.0
    %1431 = vmatprep.subr.mxu0 0.0
    %1432 = vmatpush1.xpose.msra.mxu0 0.0
    %1433 = vmatprep.subr.mxu0 0.0
    %1434 = vmatpush1.xpose.msra.mxu0 0.0
    %1435 = vmatprep.subr.mxu0 0.0
    %1436 = vmatpush1.xpose.msra.mxu0 0.0
    %1437 = vmatprep.subr.mxu0 0.0
    %1438 = vmatpush1.xpose.msra.mxu0 0.0
    %1439 = vmatprep.subr.mxu0 0.0
    %1440 = vmatpush1.xpose.msra.mxu0 0.0
    %1441 = vmatprep.subr.mxu0 0.0
    %1442 = vmatpush1.xpose.msra.mxu0 0.0
    %1443 = vmatprep.subr.mxu0 0.0
    %1444 = vmatpush1.xpose.msra.mxu0 0.0
    %1445 = vmatprep.subr.mxu0 0.0
    %1446 = vmatpush1.xpose.msra.mxu0 0.0
    %1447 = vmatprep.subr.mxu0 0.0
    %1448 = vmatpush1.xpose.msra.mxu0 0.0
    %1449 = vmatprep.subr.mxu0 0.0
    %1450 = vmatpush1.xpose.msra.mxu0 0.0
    %1451 = vmatprep.subr.mxu0 0.0
    %1452 = vmatpush1.xpose.msra.mxu0 0.0
    %1453 = vmatprep.subr.mxu0 0.0
    %1454 = vmatpush1.xpose.msra.mxu0 0.0
    %1455 = vmatprep.subr.mxu0 0.0
    %1456 = vmatpush1.xpose.msra.mxu0 0.0
    %1457 = vmatprep.subr.mxu0 0.0
    %1458 = vmatpush1.xpose.msra.mxu0 0.0
    %1459 = vmatprep.subr.mxu0 0.0
    %1460 = vmatpush1.xpose.msra.mxu0 0.0
    %1461 = vmatprep.subr.mxu0 0.0
    %1462 = vmatpush1.xpose.msra.mxu0 0.0
    %1463 = vmatprep.subr.mxu0 0.0
    %1464 = vmatpush1.xpose.msra.mxu0 0.0
    %1465 = vmatprep.subr.mxu0 0.0
    %1466 = vmatpush1.xpose.msra.mxu0 0.0
    %1467 = vmatprep.subr.mxu0 0.0
    %1468 = vmatpush1.xpose.msra.mxu0 0.0
    %1469 = vmatprep.subr.mxu0 0.0
    %1470 = vmatpush1.xpose.msra.mxu0 0.0
    %1471 = vmatprep.subr.mxu0 0.0
    %1472 = vmatpush1.xpose.msra.mxu0 0.0
    %1473 = vmatprep.subr.mxu0 0.0
    %1474 = vmatpush1.xpose.msra.mxu0 0.0
    %1475 = vmatprep.subr.mxu0 0.0
    %1476 = vmatpush1.xpose.msra.mxu0 0.0
    %1477 = vmatprep.subr.mxu0 0.0
    %1478 = vmatpush1.xpose.msra.mxu0 0.0
    %1479 = vmatprep.subr.mxu0 0.0
    %1480 = vmatpush1.xpose.msra.mxu0 0.0
    %1481 = vmatprep.subr.mxu0 0.0
    %1482 = vmatpush1.xpose.msra.mxu0 0.0
    %1483 = vmatprep.subr.mxu0 0.0
    %1484 = vmatpush1.xpose.msra.mxu0 0.0
    %1485 = vmatprep.subr.mxu0 0.0
    %1486 = vmatpush1.xpose.msra.mxu0 0.0
    %1487 = vmatprep.subr.mxu0 0.0
    %1488 = vmatpush1.xpose.msra.mxu0 0.0
    %1489 = vmatprep.mubr.f32.mxu0 0.0
    %1490 = vmatmul.mubr.f32.gmra.mrb[0].mxu0 %v1421
    %v1491 = vpop.f32.mrb[0].mxu0
    %v1492 = vadd.f32 0.0, %v1491
    %v1493 = vpop.f32.mrb[0].mxu0
    %1494 = vdwg.mxu0
    %1495 = vrot.lane.b32.xlu0 %v425, 104
    %v1496 = vpop.permute.xlu0 %1495
    %1497 = vrot.lane.b32.xlu0 %v425, 72
    %v1498 = vpop.permute.xlu0 %1497
    %v1499 = vsel %vm431, %v1496, 0
    %v1501 = vsel %vm431, %v1498, 0
    %1503 = vmatprep.subr.mxu0 0.0
    %1504 = vmatpush1.xpose.msra.mxu0 %v1501
    %1505 = vmatprep.subr.mxu0 0.0
    %1506 = vmatpush1.xpose.msra.mxu0 0.0
    %1507 = vmatprep.subr.mxu0 0.0
    %1508 = vmatpush1.xpose.msra.mxu0 0.0
    %1509 = vmatprep.subr.mxu0 0.0
    %1510 = vmatpush1.xpose.msra.mxu0 0.0
    %1511 = vmatprep.subr.mxu0 0.0
    %1512 = vmatpush1.xpose.msra.mxu0 0.0
    %1513 = vmatprep.subr.mxu0 0.0
    %1514 = vmatpush1.xpose.msra.mxu0 0.0
    %1515 = vmatprep.subr.mxu0 0.0
    %1516 = vmatpush1.xpose.msra.mxu0 0.0
    %1517 = vmatprep.subr.mxu0 0.0
    %1518 = vmatpush1.xpose.msra.mxu0 0.0
    %1519 = vmatprep.subr.mxu0 0.0
    %1520 = vmatpush1.xpose.msra.mxu0 0.0
    %1521 = vmatprep.subr.mxu0 0.0
    %1522 = vmatpush1.xpose.msra.mxu0 0.0
    %1523 = vmatprep.subr.mxu0 0.0
    %1524 = vmatpush1.xpose.msra.mxu0 0.0
    %1525 = vmatprep.subr.mxu0 0.0
    %1526 = vmatpush1.xpose.msra.mxu0 0.0
    %1527 = vmatprep.subr.mxu0 0.0
    %1528 = vmatpush1.xpose.msra.mxu0 0.0
    %1529 = vmatprep.subr.mxu0 0.0
    %1530 = vmatpush1.xpose.msra.mxu0 0.0
    %1531 = vmatprep.subr.mxu0 0.0
    %1532 = vmatpush1.xpose.msra.mxu0 0.0
    %1533 = vmatprep.subr.mxu0 0.0
    %1534 = vmatpush1.xpose.msra.mxu0 0.0
    %1535 = vmatprep.subr.mxu0 0.0
    %1536 = vmatpush1.xpose.msra.mxu0 0.0
    %1537 = vmatprep.subr.mxu0 0.0
    %1538 = vmatpush1.xpose.msra.mxu0 0.0
    %1539 = vmatprep.subr.mxu0 0.0
    %1540 = vmatpush1.xpose.msra.mxu0 0.0
    %1541 = vmatprep.subr.mxu0 0.0
    %1542 = vmatpush1.xpose.msra.mxu0 0.0
    %1543 = vmatprep.subr.mxu0 0.0
    %1544 = vmatpush1.xpose.msra.mxu0 0.0
    %1545 = vmatprep.subr.mxu0 0.0
    %1546 = vmatpush1.xpose.msra.mxu0 0.0
    %1547 = vmatprep.subr.mxu0 0.0
    %1548 = vmatpush1.xpose.msra.mxu0 0.0
    %1549 = vmatprep.subr.mxu0 0.0
    %1550 = vmatpush1.xpose.msra.mxu0 0.0
    %1551 = vmatprep.subr.mxu0 0.0
    %1552 = vmatpush1.xpose.msra.mxu0 0.0
    %1553 = vmatprep.subr.mxu0 0.0
    %1554 = vmatpush1.xpose.msra.mxu0 0.0
    %1555 = vmatprep.subr.mxu0 0.0
    %1556 = vmatpush1.xpose.msra.mxu0 0.0
    %1557 = vmatprep.subr.mxu0 0.0
    %1558 = vmatpush1.xpose.msra.mxu0 0.0
    %1559 = vmatprep.subr.mxu0 0.0
    %1560 = vmatpush1.xpose.msra.mxu0 0.0
    %1561 = vmatprep.subr.mxu0 0.0
    %1562 = vmatpush1.xpose.msra.mxu0 0.0
    %1563 = vmatprep.subr.mxu0 0.0
    %1564 = vmatpush1.xpose.msra.mxu0 0.0
    %1565 = vmatprep.subr.mxu0 0.0
    %1566 = vmatpush1.xpose.msra.mxu0 0.0
    %1567 = vmatprep.mubr.f32.mxu0 0.0
    %1568 = vmatmul.mubr.f32.gmra.mrb[0].mxu0 %v1499
    %v1569 = vpop.f32.mrb[0].mxu0
    %v1570 = vadd.f32 0.0, %v1569
    %v1571 = vpop.f32.mrb[0].mxu0
    %1572 = vdwg.mxu0
    %v1573 = vsel %vm431, %v1492, -inf
    %1574 = vmax.xlane.f32.xlu0 %v1573
    %v1575 = vpop.xlane.xlu0 %1574
    %v1576 = vsel %vm431, %v1570, -inf
    %1577 = vmax.xlane.f32.xlu0 %v1576
    %v1578 = vpop.xlane.xlu0 %1577
    %v1579 = vsub.f32 %v1492, %v1575
    %v1580 = vsub.f32 %v1570, %v1578
    %v1581 = vmul.f32 %v1579, 1.442695
    %v1582 = vpow.pop %v1581
    %v1583 = vmul.f32 %v1580, 1.442695
    %v1584 = vpow.pop %v1583
    %v1585 = vsel %vm431, %v1582, 0.0
    %1586 = vadd.xlane.f32.xlu0 %v1585
    %v1587 = vpop.xlane.xlu0 %1586
    %v1588 = vsel %vm431, %v1584, 0.0
    %1589 = vadd.xlane.f32.xlu0 %v1588
    %v1590 = vpop.xlane.xlu0 %1589
    %v1591 = vrcp.pop %v1587
    %v1592 = vrcp.pop %v1590
    %v1593 = vmul.f32 %v1582, %v1591
    %v1594 = vmul.f32 %v1584, %v1592
    %1595 = vrot.lane.b32.xlu0 %v420, 40
    %v1596 = vpop.permute.xlu0 %1595
    %v1599 = vsel %vm431, %v1593, 0
    %1601 = vmatprep.subr.mxu0 0.0
    %1602 = vmatpush1.msra.mxu0 %v1596
    %1603 = vmatprep.subr.mxu0 0.0
    %1604 = vmatpush1.msra.mxu0 0.0
    %1605 = vmatprep.subr.mxu0 0.0
    %1606 = vmatpush1.msra.mxu0 0.0
    %1607 = vmatprep.subr.mxu0 0.0
    %1608 = vmatpush1.msra.mxu0 0.0
    %1609 = vmatprep.subr.mxu0 0.0
    %1610 = vmatpush1.msra.mxu0 0.0
    %1611 = vmatprep.subr.mxu0 0.0
    %1612 = vmatpush1.msra.mxu0 0.0
    %1613 = vmatprep.subr.mxu0 0.0
    %1614 = vmatpush1.msra.mxu0 0.0
    %1615 = vmatprep.subr.mxu0 0.0
    %1616 = vmatpush1.msra.mxu0 0.0
    %1617 = vmatprep.subr.mxu0 0.0
    %1618 = vmatpush1.msra.mxu0 0.0
    %1619 = vmatprep.subr.mxu0 0.0
    %1620 = vmatpush1.msra.mxu0 0.0
    %1621 = vmatprep.subr.mxu0 0.0
    %1622 = vmatpush1.msra.mxu0 0.0
    %1623 = vmatprep.subr.mxu0 0.0
    %1624 = vmatpush1.msra.mxu0 0.0
    %1625 = vmatprep.subr.mxu0 0.0
    %1626 = vmatpush1.msra.mxu0 0.0
    %1627 = vmatprep.subr.mxu0 0.0
    %1628 = vmatpush1.msra.mxu0 0.0
    %1629 = vmatprep.subr.mxu0 0.0
    %1630 = vmatpush1.msra.mxu0 0.0
    %1631 = vmatprep.subr.mxu0 0.0
    %1632 = vmatpush1.msra.mxu0 0.0
    %1633 = vmatprep.subr.mxu0 0.0
    %1634 = vmatpush1.msra.mxu0 0.0
    %1635 = vmatprep.subr.mxu0 0.0
    %1636 = vmatpush1.msra.mxu0 0.0
    %1637 = vmatprep.subr.mxu0 0.0
    %1638 = vmatpush1.msra.mxu0 0.0
    %1639 = vmatprep.subr.mxu0 0.0
    %1640 = vmatpush1.msra.mxu0 0.0
    %1641 = vmatprep.subr.mxu0 0.0
    %1642 = vmatpush1.msra.mxu0 0.0
    %1643 = vmatprep.subr.mxu0 0.0
    %1644 = vmatpush1.msra.mxu0 0.0
    %1645 = vmatprep.subr.mxu0 0.0
    %1646 = vmatpush1.msra.mxu0 0.0
    %1647 = vmatprep.subr.mxu0 0.0
    %1648 = vmatpush1.msra.mxu0 0.0
    %1649 = vmatprep.subr.mxu0 0.0
    %1650 = vmatpush1.msra.mxu0 0.0
    %1651 = vmatprep.subr.mxu0 0.0
    %1652 = vmatpush1.msra.mxu0 0.0
    %1653 = vmatprep.subr.mxu0 0.0
    %1654 = vmatpush1.msra.mxu0 0.0
    %1655 = vmatprep.subr.mxu0 0.0
    %1656 = vmatpush1.msra.mxu0 0.0
    %1657 = vmatprep.subr.mxu0 0.0
    %1658 = vmatpush1.msra.mxu0 0.0
    %1659 = vmatprep.subr.mxu0 0.0
    %1660 = vmatpush1.msra.mxu0 0.0
    %1661 = vmatprep.subr.mxu0 0.0
    %1662 = vmatpush1.msra.mxu0 0.0
    %1663 = vmatprep.subr.mxu0 0.0
    %1664 = vmatpush1.msra.mxu0 0.0
    %1665 = vmatprep.mubr.f32.mxu0 0.0
    %1666 = vmatmul.mubr.f32.gmra.mrb[0].mxu0 %v1599
    %v1667 = vpop.f32.mrb[0].mxu0
    %v1668 = vadd.f32 0.0, %v1667
    %v1669 = vpop.f32.mrb[0].mxu0
    %1670 = vdwg.mxu0
    %1671 = vrot.lane.b32.xlu0 %v425, 40
    %v1672 = vpop.permute.xlu0 %1671
    %v1675 = vsel %vm431, %v1594, 0
    %1677 = vmatprep.subr.mxu0 0.0
    %1678 = vmatpush1.msra.mxu0 %v1672
    %1679 = vmatprep.subr.mxu0 0.0
    %1680 = vmatpush1.msra.mxu0 0.0
    %1681 = vmatprep.subr.mxu0 0.0
    %1682 = vmatpush1.msra.mxu0 0.0
    %1683 = vmatprep.subr.mxu0 0.0
    %1684 = vmatpush1.msra.mxu0 0.0
    %1685 = vmatprep.subr.mxu0 0.0
    %1686 = vmatpush1.msra.mxu0 0.0
    %1687 = vmatprep.subr.mxu0 0.0
    %1688 = vmatpush1.msra.mxu0 0.0
    %1689 = vmatprep.subr.mxu0 0.0
    %1690 = vmatpush1.msra.mxu0 0.0
    %1691 = vmatprep.subr.mxu0 0.0
    %1692 = vmatpush1.msra.mxu0 0.0
    %1693 = vmatprep.subr.mxu0 0.0
    %1694 = vmatpush1.msra.mxu0 0.0
    %1695 = vmatprep.subr.mxu0 0.0
    %1696 = vmatpush1.msra.mxu0 0.0
    %1697 = vmatprep.subr.mxu0 0.0
    %1698 = vmatpush1.msra.mxu0 0.0
    %1699 = vmatprep.subr.mxu0 0.0
    %1700 = vmatpush1.msra.mxu0 0.0
    %1701 = vmatprep.subr.mxu0 0.0
    %1702 = vmatpush1.msra.mxu0 0.0
    %1703 = vmatprep.subr.mxu0 0.0
    %1704 = vmatpush1.msra.mxu0 0.0
    %1705 = vmatprep.subr.mxu0 0.0
    %1706 = vmatpush1.msra.mxu0 0.0
    %1707 = vmatprep.subr.mxu0 0.0
    %1708 = vmatpush1.msra.mxu0 0.0
    %1709 = vmatprep.subr.mxu0 0.0
    %1710 = vmatpush1.msra.mxu0 0.0
    %1711 = vmatprep.subr.mxu0 0.0
    %1712 = vmatpush1.msra.mxu0 0.0
    %1713 = vmatprep.subr.mxu0 0.0
    %1714 = vmatpush1.msra.mxu0 0.0
    %1715 = vmatprep.subr.mxu0 0.0
    %1716 = vmatpush1.msra.mxu0 0.0
    %1717 = vmatprep.subr.mxu0 0.0
    %1718 = vmatpush1.msra.mxu0 0.0
    %1719 = vmatprep.subr.mxu0 0.0
    %1720 = vmatpush1.msra.mxu0 0.0
    %1721 = vmatprep.subr.mxu0 0.0
    %1722 = vmatpush1.msra.mxu0 0.0
    %1723 = vmatprep.subr.mxu0 0.0
    %1724 = vmatpush1.msra.mxu0 0.0
    %1725 = vmatprep.subr.mxu0 0.0
    %1726 = vmatpush1.msra.mxu0 0.0
    %1727 = vmatprep.subr.mxu0 0.0
    %1728 = vmatpush1.msra.mxu0 0.0
    %1729 = vmatprep.subr.mxu0 0.0
    %1730 = vmatpush1.msra.mxu0 0.0
    %1731 = vmatprep.subr.mxu0 0.0
    %1732 = vmatpush1.msra.mxu0 0.0
    %1733 = vmatprep.subr.mxu0 0.0
    %1734 = vmatpush1.msra.mxu0 0.0
    %1735 = vmatprep.subr.mxu0 0.0
    %1736 = vmatpush1.msra.mxu0 0.0
    %1737 = vmatprep.subr.mxu0 0.0
    %1738 = vmatpush1.msra.mxu0 0.0
    %1739 = vmatprep.subr.mxu0 0.0
    %1740 = vmatpush1.msra.mxu0 0.0
    %1741 = vmatprep.mubr.f32.mxu0 0.0
    %1742 = vmatmul.mubr.f32.gmra.mrb[0].mxu0 %v1675
    %v1743 = vpop.f32.mrb[0].mxu0
    %v1744 = vadd.f32 0.0, %v1743
    %v1745 = vpop.f32.mrb[0].mxu0
    %1746 = vdwg.mxu0
    %1749 = vrot.lane.b32.xlu0 %v1008, 8
    %v1750 = vpop.permute.xlu0 %1749
    %1751 = vrot.lane.b32.xlu0 %v1084, 8
    %v1752 = vpop.permute.xlu0 %1751
    %1757 = vrot.lane.b32.xlu0 %v1338, 16
    %v1758 = vpop.permute.xlu0 %1757
    %1759 = vrot.lane.b32.xlu0 %v1414, 16
    %v1760 = vpop.permute.xlu0 %1759
    %1765 = vrot.lane.b32.xlu0 %v1668, 24
    %v1766 = vpop.permute.xlu0 %1765
    %1767 = vrot.lane.b32.xlu0 %v1744, 24
    %v1768 = vpop.permute.xlu0 %1767
    %v1771 = vsel %vm431, %v678, %v1750
    %v1772 = vsel %vm431, %v754, %v1752
    %vm1773 = vcmask 130048
    %v1774 = vsel %vm1773, %v1771, %v1758
    %v1775 = vsel %vm1773, %v1772, %v1760
    %vm1776 = vcmask 195584
    %v1777 = vsel %vm1776, %v1774, %v1766
    %v1778 = vsel %vm1776, %v1775, %v1768
    %v1779 = vld [vmem:[%s4] sm:$0xff]
    %v1780 = vld [vmem:[%s4 + $0x8] sm:$0xff]
    %v1781 = vld [vmem:[%s4 + $0x10] sm:$0xff]
    %v1782 = vld [vmem:[%s4 + $0x18] sm:$0xff]
    %v1783 = vld [vmem:[%s5] sm:$0x1]
    %v1785 = vlaneseq
    %v1786 = vshrl.u32 %v1785, 7
    %v1787 = vsub.s32 0, %v1786
    %v1788 = vrot.slane %v1783, %v1787
    %v1791 = vsel %vm238, %v1777, 0
    %v1794 = vsel %vm238, %v1778, 0
    %1796 = vmatprep.subr.mxu0 0.0
    %1797 = vmatpush1.msra.mxu0 %v1779
    %1798 = vmatprep.subr.mxu0 0.0
    %1799 = vmatpush1.msra.mxu0 %v1780
    %1800 = vmatprep.subr.mxu0 0.0
    %1801 = vmatpush1.msra.mxu0 %v1781
    %1802 = vmatprep.subr.mxu0 0.0
    %1803 = vmatpush1.msra.mxu0 %v1782
    %1804 = vmatprep.subr.mxu0 0.0
    %1805 = vmatpush1.msra.mxu0 0.0
    %1806 = vmatprep.subr.mxu0 0.0
    %1807 = vmatpush1.msra.mxu0 0.0
    %1808 = vmatprep.subr.mxu0 0.0
    %1809 = vmatpush1.msra.mxu0 0.0
    %1810 = vmatprep.subr.mxu0 0.0
    %1811 = vmatpush1.msra.mxu0 0.0
    %1812 = vmatprep.subr.mxu0 0.0
    %1813 = vmatpush1.msra.mxu0 0.0
    %1814 = vmatprep.subr.mxu0 0.0
    %1815 = vmatpush1.msra.mxu0 0.0
    %1816 = vmatprep.subr.mxu0 0.0
    %1817 = vmatpush1.msra.mxu0 0.0
    %1818 = vmatprep.subr.mxu0 0.0
    %1819 = vmatpush1.msra.mxu0 0.0
    %1820 = vmatprep.subr.mxu0 0.0
    %1821 = vmatpush1.msra.mxu0 0.0
    %1822 = vmatprep.subr.mxu0 0.0
    %1823 = vmatpush1.msra.mxu0 0.0
    %1824 = vmatprep.subr.mxu0 0.0
    %1825 = vmatpush1.msra.mxu0 0.0
    %1826 = vmatprep.subr.mxu0 0.0
    %1827 = vmatpush1.msra.mxu0 0.0
    %1828 = vmatprep.subr.mxu0 0.0
    %1829 = vmatpush1.msra.mxu0 0.0
    %1830 = vmatprep.subr.mxu0 0.0
    %1831 = vmatpush1.msra.mxu0 0.0
    %1832 = vmatprep.subr.mxu0 0.0
    %1833 = vmatpush1.msra.mxu0 0.0
    %1834 = vmatprep.subr.mxu0 0.0
    %1835 = vmatpush1.msra.mxu0 0.0
    %1836 = vmatprep.subr.mxu0 0.0
    %1837 = vmatpush1.msra.mxu0 0.0
    %1838 = vmatprep.subr.mxu0 0.0
    %1839 = vmatpush1.msra.mxu0 0.0
    %1840 = vmatprep.subr.mxu0 0.0
    %1841 = vmatpush1.msra.mxu0 0.0
    %1842 = vmatprep.subr.mxu0 0.0
    %1843 = vmatpush1.msra.mxu0 0.0
    %1844 = vmatprep.subr.mxu0 0.0
    %1845 = vmatpush1.msra.mxu0 0.0
    %1846 = vmatprep.subr.mxu0 0.0
    %1847 = vmatpush1.msra.mxu0 0.0
    %1848 = vmatprep.subr.mxu0 0.0
    %1849 = vmatpush1.msra.mxu0 0.0
    %1850 = vmatprep.subr.mxu0 0.0
    %1851 = vmatpush1.msra.mxu0 0.0
    %1852 = vmatprep.subr.mxu0 0.0
    %1853 = vmatpush1.msra.mxu0 0.0
    %1854 = vmatprep.subr.mxu0 0.0
    %1855 = vmatpush1.msra.mxu0 0.0
    %1856 = vmatprep.subr.mxu0 0.0
    %1857 = vmatpush1.msra.mxu0 0.0
    %1858 = vmatprep.subr.mxu0 0.0
    %1859 = vmatpush1.msra.mxu0 0.0
    %1860 = vmatprep.mubr.f32.mxu0 0.0
    %1861 = vmatmul.mubr.f32.gmra.mrb[0].mxu0 %v1791
    %v1862 = vpop.f32.mrb[0].mxu0
    %v1863 = vadd.f32 %v1788, %v1862
    %v1864 = vpop.f32.mrb[0].mxu0
    %1865 = vmatprep.mubr.f32.mxu0 0.0
    %1866 = vmatmul.mubr.f32.gmra.mrb[0].mxu0 %v1794
    %v1867 = vpop.f32.mrb[0].mxu0
    %v1868 = vadd.f32 %v1788, %v1867
    %v1869 = vpop.f32.mrb[0].mxu0
    %1870 = vdwg.mxu0
    %v1871 = vadd.f32 %v221, %v1863
    %v1872 = vadd.f32 %v222, %v1868
    %v1873 = vld [vmem:[%s12] sm:$0x1]
    %v1874 = vld [vmem:[#allocation10] sm:$0x1]
    %v1875 = vsel %vm238, %v1871, 0.0
    %1876 = vadd.xlane.f32.xlu0 %v1875
    %v1877 = vpop.xlane.xlu0 %1876
    %v1878 = vsel %vm238, %v1872, 0.0
    %1879 = vadd.xlane.f32.xlu0 %v1878
    %v1880 = vpop.xlane.xlu0 %1879
    %v1881 = vrcp.pop 32.0
    %v1882 = vmul.f32 %v1877, %v1881
    %v1883 = vmul.f32 %v1880, %v1881
    %v1884 = vsub.f32 %v1871, %v1882
    %v1885 = vsub.f32 %v1872, %v1883
    %v1886 = vmul.f32 %v1884, %v1884
    %v1887 = vmul.f32 %v1885, %v1885
    %v1888 = vsel %vm238, %v1886, 0.0
    %1889 = vadd.xlane.f32.xlu0 %v1888
    %v1890 = vpop.xlane.xlu0 %1889
    %v1891 = vsel %vm238, %v1887, 0.0
    %1892 = vadd.xlane.f32.xlu0 %v1891
    %v1893 = vpop.xlane.xlu0 %1892
    %v1894 = vmul.f32 %v1890, %v1881
    %v1895 = vmul.f32 %v1893, %v1881
    %v1896 = vadd.f32 %v1894, 1e-05
    %v1897 = vadd.f32 %v1895, 1e-05
    %v1898 = vrsqrt.pop %v1896
    %v1899 = vrsqrt.pop %v1897
    %v1900 = vmul.f32 %v1884, %v1898
    %v1901 = vmul.f32 %v1885, %v1899
    %v1903 = vlaneseq
    %v1904 = vshrl.u32 %v1903, 7
    %v1905 = vsub.s32 0, %v1904
    %v1906 = vrot.slane %v1873, %v1905
    %v1908 = vmul.f32 %v1900, %v1906
    %v1909 = vmul.f32 %v1901, %v1906
    %v1911 = vlaneseq
    %v1912 = vshrl.u32 %v1911, 7
    %v1913 = vsub.s32 0, %v1912
    %v1914 = vrot.slane %v1874, %v1913
    %v1916 = vadd.f32 %v1908, %v1914
    %v1917 = vadd.f32 %v1909, %v1914
    %v1918 = vld [vmem:[%s6] sm:$0xff]
    %v1919 = vld [vmem:[%s6 + $0x8] sm:$0xff]
    %v1920 = vld [vmem:[%s6 + $0x10] sm:$0xff]
    %v1921 = vld [vmem:[%s6 + $0x18] sm:$0xff]
    %v1922 = vld [vmem:[%s7] sm:$0x1]
    %v1924 = vlaneseq
    %v1925 = vshrl.u32 %v1924, 7
    %v1926 = vsub.s32 0, %v1925
    %v1927 = vrot.slane %v1922, %v1926
    %v1930 = vsel %vm238, %v1916, 0
    %v1933 = vsel %vm238, %v1917, 0
    %1935 = vmatprep.subr.mxu0 0.0
    %1936 = vmatpush1.msra.mxu0 %v1918
    %1937 = vmatprep.subr.mxu0 0.0
    %1938 = vmatpush1.msra.mxu0 %v1919
    %1939 = vmatprep.subr.mxu0 0.0
    %1940 = vmatpush1.msra.mxu0 %v1920
    %1941 = vmatprep.subr.mxu0 0.0
    %1942 = vmatpush1.msra.mxu0 %v1921
    %1943 = vmatprep.subr.mxu0 0.0
    %1944 = vmatpush1.msra.mxu0 0.0
    %1945 = vmatprep.subr.mxu0 0.0
    %1946 = vmatpush1.msra.mxu0 0.0
    %1947 = vmatprep.subr.mxu0 0.0
    %1948 = vmatpush1.msra.mxu0 0.0
    %1949 = vmatprep.subr.mxu0 0.0
    %1950 = vmatpush1.msra.mxu0 0.0
    %1951 = vmatprep.subr.mxu0 0.0
    %1952 = vmatpush1.msra.mxu0 0.0
    %1953 = vmatprep.subr.mxu0 0.0
    %1954 = vmatpush1.msra.mxu0 0.0
    %1955 = vmatprep.subr.mxu0 0.0
    %1956 = vmatpush1.msra.mxu0 0.0
    %1957 = vmatprep.subr.mxu0 0.0
    %1958 = vmatpush1.msra.mxu0 0.0
    %1959 = vmatprep.subr.mxu0 0.0
    %1960 = vmatpush1.msra.mxu0 0.0
    %1961 = vmatprep.subr.mxu0 0.0
    %1962 = vmatpush1.msra.mxu0 0.0
    %1963 = vmatprep.subr.mxu0 0.0
    %1964 = vmatpush1.msra.mxu0 0.0
    %1965 = vmatprep.subr.mxu0 0.0
    %1966 = vmatpush1.msra.mxu0 0.0
    %1967 = vmatprep.subr.mxu0 0.0
    %1968 = vmatpush1.msra.mxu0 0.0
    %1969 = vmatprep.subr.mxu0 0.0
    %1970 = vmatpush1.msra.mxu0 0.0
    %1971 = vmatprep.subr.mxu0 0.0
    %1972 = vmatpush1.msra.mxu0 0.0
    %1973 = vmatprep.subr.mxu0 0.0
    %1974 = vmatpush1.msra.mxu0 0.0
    %1975 = vmatprep.subr.mxu0 0.0
    %1976 = vmatpush1.msra.mxu0 0.0
    %1977 = vmatprep.subr.mxu0 0.0
    %1978 = vmatpush1.msra.mxu0 0.0
    %1979 = vmatprep.subr.mxu0 0.0
    %1980 = vmatpush1.msra.mxu0 0.0
    %1981 = vmatprep.subr.mxu0 0.0
    %1982 = vmatpush1.msra.mxu0 0.0
    %1983 = vmatprep.subr.mxu0 0.0
    %1984 = vmatpush1.msra.mxu0 0.0
    %1985 = vmatprep.subr.mxu0 0.0
    %1986 = vmatpush1.msra.mxu0 0.0
    %1987 = vmatprep.subr.mxu0 0.0
    %1988 = vmatpush1.msra.mxu0 0.0
    %1989 = vmatprep.subr.mxu0 0.0
    %1990 = vmatpush1.msra.mxu0 0.0
    %1991 = vmatprep.subr.mxu0 0.0
    %1992 = vmatpush1.msra.mxu0 0.0
    %1993 = vmatprep.subr.mxu0 0.0
    %1994 = vmatpush1.msra.mxu0 0.0
    %1995 = vmatprep.subr.mxu0 0.0
    %1996 = vmatpush1.msra.mxu0 0.0
    %1997 = vmatprep.subr.mxu0 0.0
    %1998 = vmatpush1.msra.mxu0 0.0
    %1999 = vmatprep.mubr.f32.mxu0 0.0
    %2000 = vmatmul.mubr.f32.gmra.mrb[0].mxu0 %v1930
    %v2001 = vpop.f32.mrb[0].mxu0
    %v2002 = vadd.f32 %v1927, %v2001
    %v2003 = vpop.f32.mrb[0].mxu0
    %2004 = vmatprep.mubr.f32.mxu0 0.0
    %2005 = vmatmul.mubr.f32.gmra.mrb[0].mxu0 %v1933
    %v2006 = vpop.f32.mrb[0].mxu0
    %v2007 = vadd.f32 %v1927, %v2006
    %v2008 = vpop.f32.mrb[0].mxu0
    %2009 = vdwg.mxu0
    %v2011 = vsel %vm431, %v2002, 0
    %v2014 = vsel %vm431, %v318, 0
    %v2017 = vsel %vm431, %v323, 0
    %2019 = vmatprep.subr.mxu0 0.0
    %2020 = vmatpush1.xpose.msra.mxu0 %v2014
    %2021 = vmatprep.subr.mxu0 0.0
    %2022 = vmatpush1.xpose.msra.mxu0 %v2017
    %2023 = vmatprep.subr.mxu0 0.0
    %2024 = vmatpush1.xpose.msra.mxu0 0.0
    %2025 = vmatprep.subr.mxu0 0.0
    %2026 = vmatpush1.xpose.msra.mxu0 0.0
    %2027 = vmatprep.subr.mxu0 0.0
    %2028 = vmatpush1.xpose.msra.mxu0 0.0
    %2029 = vmatprep.subr.mxu0 0.0
    %2030 = vmatpush1.xpose.msra.mxu0 0.0
    %2031 = vmatprep.subr.mxu0 0.0
    %2032 = vmatpush1.xpose.msra.mxu0 0.0
    %2033 = vmatprep.subr.mxu0 0.0
    %2034 = vmatpush1.xpose.msra.mxu0 0.0
    %2035 = vmatprep.subr.mxu0 0.0
    %2036 = vmatpush1.xpose.msra.mxu0 0.0
    %2037 = vmatprep.subr.mxu0 0.0
    %2038 = vmatpush1.xpose.msra.mxu0 0.0
    %2039 = vmatprep.subr.mxu0 0.0
    %2040 = vmatpush1.xpose.msra.mxu0 0.0
    %2041 = vmatprep.subr.mxu0 0.0
    %2042 = vmatpush1.xpose.msra.mxu0 0.0
    %2043 = vmatprep.subr.mxu0 0.0
    %2044 = vmatpush1.xpose.msra.mxu0 0.0
    %2045 = vmatprep.subr.mxu0 0.0
    %2046 = vmatpush1.xpose.msra.mxu0 0.0
    %2047 = vmatprep.subr.mxu0 0.0
    %2048 = vmatpush1.xpose.msra.mxu0 0.0
    %2049 = vmatprep.subr.mxu0 0.0
    %2050 = vmatpush1.xpose.msra.mxu0 0.0
    %2051 = vmatprep.subr.mxu0 0.0
    %2052 = vmatpush1.xpose.msra.mxu0 0.0
    %2053 = vmatprep.subr.mxu0 0.0
    %2054 = vmatpush1.xpose.msra.mxu0 0.0
    %2055 = vmatprep.subr.mxu0 0.0
    %2056 = vmatpush1.xpose.msra.mxu0 0.0
    %2057 = vmatprep.subr.mxu0 0.0
    %2058 = vmatpush1.xpose.msra.mxu0 0.0
    %2059 = vmatprep.subr.mxu0 0.0
    %2060 = vmatpush1.xpose.msra.mxu0 0.0
    %2061 = vmatprep.subr.mxu0 0.0
    %2062 = vmatpush1.xpose.msra.mxu0 0.0
    %2063 = vmatprep.subr.mxu0 0.0
    %2064 = vmatpush1.xpose.msra.mxu0 0.0
    %2065 = vmatprep.subr.mxu0 0.0
    %2066 = vmatpush1.xpose.msra.mxu0 0.0
    %2067 = vmatprep.subr.mxu0 0.0
    %2068 = vmatpush1.xpose.msra.mxu0 0.0
    %2069 = vmatprep.subr.mxu0 0.0
    %2070 = vmatpush1.xpose.msra.mxu0 0.0
    %2071 = vmatprep.subr.mxu0 0.0
    %2072 = vmatpush1.xpose.msra.mxu0 0.0
    %2073 = vmatprep.subr.mxu0 0.0
    %2074 = vmatpush1.xpose.msra.mxu0 0.0
    %2075 = vmatprep.subr.mxu0 0.0
    %2076 = vmatpush1.xpose.msra.mxu0 0.0
    %2077 = vmatprep.subr.mxu0 0.0
    %2078 = vmatpush1.xpose.msra.mxu0 0.0
    %2079 = vmatprep.subr.mxu0 0.0
    %2080 = vmatpush1.xpose.msra.mxu0 0.0
    %2081 = vmatprep.subr.mxu0 0.0
    %2082 = vmatpush1.xpose.msra.mxu0 0.0
    %2083 = vmatprep.mubr.f32.mxu0 0.0
    %2084 = vmatmul.mubr.f32.gmra.mrb[0].mxu0 %v2011
    %v2085 = vpop.f32.mrb[0].mxu0
    %v2086 = vadd.f32 0.0, %v2085
    %v2087 = vpop.f32.mrb[0].mxu0
    %2088 = vdwg.mxu0
    %v2090 = vsel %vm431, %v2007, 0
    %v2093 = vsel %vm431, %v328, 0
    %v2096 = vsel %vm431, %v333, 0
    %2098 = vmatprep.subr.mxu0 0.0
    %2099 = vmatpush1.xpose.msra.mxu0 %v2093
    %2100 = vmatprep.subr.mxu0 0.0
    %2101 = vmatpush1.xpose.msra.mxu0 %v2096
    %2102 = vmatprep.subr.mxu0 0.0
    %2103 = vmatpush1.xpose.msra.mxu0 0.0
    %2104 = vmatprep.subr.mxu0 0.0
    %2105 = vmatpush1.xpose.msra.mxu0 0.0
    %2106 = vmatprep.subr.mxu0 0.0
    %2107 = vmatpush1.xpose.msra.mxu0 0.0
    %2108 = vmatprep.subr.mxu0 0.0
    %2109 = vmatpush1.xpose.msra.mxu0 0.0
    %2110 = vmatprep.subr.mxu0 0.0
    %2111 = vmatpush1.xpose.msra.mxu0 0.0
    %2112 = vmatprep.subr.mxu0 0.0
    %2113 = vmatpush1.xpose.msra.mxu0 0.0
    %2114 = vmatprep.subr.mxu0 0.0
    %2115 = vmatpush1.xpose.msra.mxu0 0.0
    %2116 = vmatprep.subr.mxu0 0.0
    %2117 = vmatpush1.xpose.msra.mxu0 0.0
    %2118 = vmatprep.subr.mxu0 0.0
    %2119 = vmatpush1.xpose.msra.mxu0 0.0
    %2120 = vmatprep.subr.mxu0 0.0
    %2121 = vmatpush1.xpose.msra.mxu0 0.0
    %2122 = vmatprep.subr.mxu0 0.0
    %2123 = vmatpush1.xpose.msra.mxu0 0.0
    %2124 = vmatprep.subr.mxu0 0.0
    %2125 = vmatpush1.xpose.msra.mxu0 0.0
    %2126 = vmatprep.subr.mxu0 0.0
    %2127 = vmatpush1.xpose.msra.mxu0 0.0
    %2128 = vmatprep.subr.mxu0 0.0
    %2129 = vmatpush1.xpose.msra.mxu0 0.0
    %2130 = vmatprep.subr.mxu0 0.0
    %2131 = vmatpush1.xpose.msra.mxu0 0.0
    %2132 = vmatprep.subr.mxu0 0.0
    %2133 = vmatpush1.xpose.msra.mxu0 0.0
    %2134 = vmatprep.subr.mxu0 0.0
    %2135 = vmatpush1.xpose.msra.mxu0 0.0
    %2136 = vmatprep.subr.mxu0 0.0
    %2137 = vmatpush1.xpose.msra.mxu0 0.0
    %2138 = vmatprep.subr.mxu0 0.0
    %2139 = vmatpush1.xpose.msra.mxu0 0.0
    %2140 = vmatprep.subr.mxu0 0.0
    %2141 = vmatpush1.xpose.msra.mxu0 0.0
    %2142 = vmatprep.subr.mxu0 0.0
    %2143 = vmatpush1.xpose.msra.mxu0 0.0
    %2144 = vmatprep.subr.mxu0 0.0
    %2145 = vmatpush1.xpose.msra.mxu0 0.0
    %2146 = vmatprep.subr.mxu0 0.0
    %2147 = vmatpush1.xpose.msra.mxu0 0.0
    %2148 = vmatprep.subr.mxu0 0.0
    %2149 = vmatpush1.xpose.msra.mxu0 0.0
    %2150 = vmatprep.subr.mxu0 0.0
    %2151 = vmatpush1.xpose.msra.mxu0 0.0
    %2152 = vmatprep.subr.mxu0 0.0
    %2153 = vmatpush1.xpose.msra.mxu0 0.0
    %2154 = vmatprep.subr.mxu0 0.0
    %2155 = vmatpush1.xpose.msra.mxu0 0.0
    %2156 = vmatprep.subr.mxu0 0.0
    %2157 = vmatpush1.xpose.msra.mxu0 0.0
    %2158 = vmatprep.subr.mxu0 0.0
    %2159 = vmatpush1.xpose.msra.mxu0 0.0
    %2160 = vmatprep.subr.mxu0 0.0
    %2161 = vmatpush1.xpose.msra.mxu0 0.0
    %2162 = vmatprep.mubr.f32.mxu0 0.0
    %2163 = vmatmul.mubr.f32.gmra.mrb[0].mxu0 %v2090
    %v2164 = vpop.f32.mrb[0].mxu0
    %v2165 = vadd.f32 0.0, %v2164
    %v2166 = vpop.f32.mrb[0].mxu0
    %2167 = vdwg.mxu0
    %v2168 = vsel %vm1773, %v2086, -inf
    %2169 = vmax.xlane.f32.xlu0 %v2168
    %v2170 = vpop.xlane.xlu0 %2169
    %v2171 = vsel %vm1773, %v2165, -inf
    %2172 = vmax.xlane.f32.xlu0 %v2171
    %v2173 = vpop.xlane.xlu0 %2172
    %v2174 = vsub.f32 %v2086, %v2170
    %v2175 = vsub.f32 %v2165, %v2173
    %v2176 = vmul.f32 %v2174, 1.442695
    %v2177 = vpow.pop %v2176
    %v2178 = vmul.f32 %v2175, 1.442695
    %v2179 = vpow.pop %v2178
    %v2180 = vsel %vm1773, %v2177, 0.0
    %2181 = vadd.xlane.f32.xlu0 %v2180
    %v2182 = vpop.xlane.xlu0 %2181
    %v2183 = vsel %vm1773, %v2179, 0.0
    %2184 = vadd.xlane.f32.xlu0 %v2183
    %v2185 = vpop.xlane.xlu0 %2184
    %v2186 = vrcp.pop %v2182
    %v2187 = vrcp.pop %v2185
    %v2188 = vmul.f32 %v2177, %v2186
    %v2189 = vmul.f32 %v2179, %v2187
    %2190 = vrot.lane.b32.xlu0 %v318, 96
    %v2191 = vpop.permute.xlu0 %2190
    %2192 = vrot.lane.b32.xlu0 %v323, 96
    %v2193 = vpop.permute.xlu0 %2192
    %v2197 = vsel %vm1773, %v2188, 0
    %2199 = vmatprep.subr.mxu0 0.0
    %2200 = vmatpush1.msra.mxu0 %v2191
    %2201 = vmatprep.subr.mxu0 0.0
    %2202 = vmatpush1.msra.mxu0 %v2193
    %2203 = vmatprep.subr.mxu0 0.0
    %2204 = vmatpush1.msra.mxu0 0.0
    %2205 = vmatprep.subr.mxu0 0.0
    %2206 = vmatpush1.msra.mxu0 0.0
    %2207 = vmatprep.subr.mxu0 0.0
    %2208 = vmatpush1.msra.mxu0 0.0
    %2209 = vmatprep.subr.mxu0 0.0
    %2210 = vmatpush1.msra.mxu0 0.0
    %2211 = vmatprep.subr.mxu0 0.0
    %2212 = vmatpush1.msra.mxu0 0.0
    %2213 = vmatprep.subr.mxu0 0.0
    %2214 = vmatpush1.msra.mxu0 0.0
    %2215 = vmatprep.subr.mxu0 0.0
    %2216 = vmatpush1.msra.mxu0 0.0
    %2217 = vmatprep.subr.mxu0 0.0
    %2218 = vmatpush1.msra.mxu0 0.0
    %2219 = vmatprep.subr.mxu0 0.0
    %2220 = vmatpush1.msra.mxu0 0.0
    %2221 = vmatprep.subr.mxu0 0.0
    %2222 = vmatpush1.msra.mxu0 0.0
    %2223 = vmatprep.subr.mxu0 0.0
    %2224 = vmatpush1.msra.mxu0 0.0
    %2225 = vmatprep.subr.mxu0 0.0
    %2226 = vmatpush1.msra.mxu0 0.0
    %2227 = vmatprep.subr.mxu0 0.0
    %2228 = vmatpush1.msra.mxu0 0.0
    %2229 = vmatprep.subr.mxu0 0.0
    %2230 = vmatpush1.msra.mxu0 0.0
    %2231 = vmatprep.subr.mxu0 0.0
    %2232 = vmatpush1.msra.mxu0 0.0
    %2233 = vmatprep.subr.mxu0 0.0
    %2234 = vmatpush1.msra.mxu0 0.0
    %2235 = vmatprep.subr.mxu0 0.0
    %2236 = vmatpush1.msra.mxu0 0.0
    %2237 = vmatprep.subr.mxu0 0.0
    %2238 = vmatpush1.msra.mxu0 0.0
    %2239 = vmatprep.subr.mxu0 0.0
    %2240 = vmatpush1.msra.mxu0 0.0
    %2241 = vmatprep.subr.mxu0 0.0
    %2242 = vmatpush1.msra.mxu0 0.0
    %2243 = vmatprep.subr.mxu0 0.0
    %2244 = vmatpush1.msra.mxu0 0.0
    %2245 = vmatprep.subr.mxu0 0.0
    %2246 = vmatpush1.msra.mxu0 0.0
    %2247 = vmatprep.subr.mxu0 0.0
    %2248 = vmatpush1.msra.mxu0 0.0
    %2249 = vmatprep.subr.mxu0 0.0
    %2250 = vmatpush1.msra.mxu0 0.0
    %2251 = vmatprep.subr.mxu0 0.0
    %2252 = vmatpush1.msra.mxu0 0.0
    %2253 = vmatprep.subr.mxu0 0.0
    %2254 = vmatpush1.msra.mxu0 0.0
    %2255 = vmatprep.subr.mxu0 0.0
    %2256 = vmatpush1.msra.mxu0 0.0
    %2257 = vmatprep.subr.mxu0 0.0
    %2258 = vmatpush1.msra.mxu0 0.0
    %2259 = vmatprep.subr.mxu0 0.0
    %2260 = vmatpush1.msra.mxu0 0.0
    %2261 = vmatprep.subr.mxu0 0.0
    %2262 = vmatpush1.msra.mxu0 0.0
    %2263 = vmatprep.mubr.f32.mxu0 0.0
    %2264 = vmatmul.mubr.f32.gmra.mrb[0].mxu0 %v2197
    %v2265 = vpop.f32.mrb[0].mxu0
    %v2266 = vadd.f32 0.0, %v2265
    %v2267 = vpop.f32.mrb[0].mxu0
    %2268 = vdwg.mxu0
    %2269 = vrot.lane.b32.xlu0 %v328, 96
    %v2270 = vpop.permute.xlu0 %2269
    %2271 = vrot.lane.b32.xlu0 %v333, 96
    %v2272 = vpop.permute.xlu0 %2271
    %v2276 = vsel %vm1773, %v2189, 0
    %2278 = vmatprep.subr.mxu0 0.0
    %2279 = vmatpush1.msra.mxu0 %v2270
    %2280 = vmatprep.subr.mxu0 0.0
    %2281 = vmatpush1.msra.mxu0 %v2272
    %2282 = vmatprep.subr.mxu0 0.0
    %2283 = vmatpush1.msra.mxu0 0.0
    %2284 = vmatprep.subr.mxu0 0.0
    %2285 = vmatpush1.msra.mxu0 0.0
    %2286 = vmatprep.subr.mxu0 0.0
    %2287 = vmatpush1.msra.mxu0 0.0
    %2288 = vmatprep.subr.mxu0 0.0
    %2289 = vmatpush1.msra.mxu0 0.0
    %2290 = vmatprep.subr.mxu0 0.0
    %2291 = vmatpush1.msra.mxu0 0.0
    %2292 = vmatprep.subr.mxu0 0.0
    %2293 = vmatpush1.msra.mxu0 0.0
    %2294 = vmatprep.subr.mxu0 0.0
    %2295 = vmatpush1.msra.mxu0 0.0
    %2296 = vmatprep.subr.mxu0 0.0
    %2297 = vmatpush1.msra.mxu0 0.0
    %2298 = vmatprep.subr.mxu0 0.0
    %2299 = vmatpush1.msra.mxu0 0.0
    %2300 = vmatprep.subr.mxu0 0.0
    %2301 = vmatpush1.msra.mxu0 0.0
    %2302 = vmatprep.subr.mxu0 0.0
    %2303 = vmatpush1.msra.mxu0 0.0
    %2304 = vmatprep.subr.mxu0 0.0
    %2305 = vmatpush1.msra.mxu0 0.0
    %2306 = vmatprep.subr.mxu0 0.0
    %2307 = vmatpush1.msra.mxu0 0.0
    %2308 = vmatprep.subr.mxu0 0.0
    %2309 = vmatpush1.msra.mxu0 0.0
    %2310 = vmatprep.subr.mxu0 0.0
    %2311 = vmatpush1.msra.mxu0 0.0
    %2312 = vmatprep.subr.mxu0 0.0
    %2313 = vmatpush1.msra.mxu0 0.0
    %2314 = vmatprep.subr.mxu0 0.0
    %2315 = vmatpush1.msra.mxu0 0.0
    %2316 = vmatprep.subr.mxu0 0.0
    %2317 = vmatpush1.msra.mxu0 0.0
    %2318 = vmatprep.subr.mxu0 0.0
    %2319 = vmatpush1.msra.mxu0 0.0
    %2320 = vmatprep.subr.mxu0 0.0
    %2321 = vmatpush1.msra.mxu0 0.0
    %2322 = vmatprep.subr.mxu0 0.0
    %2323 = vmatpush1.msra.mxu0 0.0
    %2324 = vmatprep.subr.mxu0 0.0
    %2325 = vmatpush1.msra.mxu0 0.0
    %2326 = vmatprep.subr.mxu0 0.0
    %2327 = vmatpush1.msra.mxu0 0.0
    %2328 = vmatprep.subr.mxu0 0.0
    %2329 = vmatpush1.msra.mxu0 0.0
    %2330 = vmatprep.subr.mxu0 0.0
    %2331 = vmatpush1.msra.mxu0 0.0
    %2332 = vmatprep.subr.mxu0 0.0
    %2333 = vmatpush1.msra.mxu0 0.0
    %2334 = vmatprep.subr.mxu0 0.0
    %2335 = vmatpush1.msra.mxu0 0.0
    %2336 = vmatprep.subr.mxu0 0.0
    %2337 = vmatpush1.msra.mxu0 0.0
    %2338 = vmatprep.subr.mxu0 0.0
    %2339 = vmatpush1.msra.mxu0 0.0
    %2340 = vmatprep.subr.mxu0 0.0
    %2341 = vmatpush1.msra.mxu0 0.0
    %2342 = vmatprep.mubr.f32.mxu0 0.0
    %2343 = vmatmul.mubr.f32.gmra.mrb[0].mxu0 %v2276
    %v2344 = vpop.f32.mrb[0].mxu0
    %v2345 = vadd.f32 0.0, %v2344
    %v2346 = vpop.f32.mrb[0].mxu0
    %2347 = vdwg.mxu0
    %2348 = vrot.lane.b32.xlu0 %v2002, 120
    %v2349 = vpop.permute.xlu0 %2348
    %2350 = vrot.lane.b32.xlu0 %v318, 120
    %v2351 = vpop.permute.xlu0 %2350
    %2352 = vrot.lane.b32.xlu0 %v323, 120
    %v2353 = vpop.permute.xlu0 %2352
    %v2354 = vsel %vm431, %v2349, 0
    %v2356 = vsel %vm431, %v2351, 0
    %v2358 = vsel %vm431, %v2353, 0
    %2360 = vmatprep.subr.mxu0 0.0
    %2361 = vmatpush1.xpose.msra.mxu0 %v2356
    %2362 = vmatprep.subr.mxu0 0.0
    %2363 = vmatpush1.xpose.msra.mxu0 %v2358
    %2364 = vmatprep.subr.mxu0 0.0
    %2365 = vmatpush1.xpose.msra.mxu0 0.0
    %2366 = vmatprep.subr.mxu0 0.0
    %2367 = vmatpush1.xpose.msra.mxu0 0.0
    %2368 = vmatprep.subr.mxu0 0.0
    %2369 = vmatpush1.xpose.msra.mxu0 0.0
    %2370 = vmatprep.subr.mxu0 0.0
    %2371 = vmatpush1.xpose.msra.mxu0 0.0
    %2372 = vmatprep.subr.mxu0 0.0
    %2373 = vmatpush1.xpose.msra.mxu0 0.0
    %2374 = vmatprep.subr.mxu0 0.0
    %2375 = vmatpush1.xpose.msra.mxu0 0.0
    %2376 = vmatprep.subr.mxu0 0.0
    %2377 = vmatpush1.xpose.msra.mxu0 0.0
    %2378 = vmatprep.subr.mxu0 0.0
    %2379 = vmatpush1.xpose.msra.mxu0 0.0
    %2380 = vmatprep.subr.mxu0 0.0
    %2381 = vmatpush1.xpose.msra.mxu0 0.0
    %2382 = vmatprep.subr.mxu0 0.0
    %2383 = vmatpush1.xpose.msra.mxu0 0.0
    %2384 = vmatprep.subr.mxu0 0.0
    %2385 = vmatpush1.xpose.msra.mxu0 0.0
    %2386 = vmatprep.subr.mxu0 0.0
    %2387 = vmatpush1.xpose.msra.mxu0 0.0
    %2388 = vmatprep.subr.mxu0 0.0
    %2389 = vmatpush1.xpose.msra.mxu0 0.0
    %2390 = vmatprep.subr.mxu0 0.0
    %2391 = vmatpush1.xpose.msra.mxu0 0.0
    %2392 = vmatprep.subr.mxu0 0.0
    %2393 = vmatpush1.xpose.msra.mxu0 0.0
    %2394 = vmatprep.subr.mxu0 0.0
    %2395 = vmatpush1.xpose.msra.mxu0 0.0
    %2396 = vmatprep.subr.mxu0 0.0
    %2397 = vmatpush1.xpose.msra.mxu0 0.0
    %2398 = vmatprep.subr.mxu0 0.0
    %2399 = vmatpush1.xpose.msra.mxu0 0.0
    %2400 = vmatprep.subr.mxu0 0.0
    %2401 = vmatpush1.xpose.msra.mxu0 0.0
    %2402 = vmatprep.subr.mxu0 0.0
    %2403 = vmatpush1.xpose.msra.mxu0 0.0
    %2404 = vmatprep.subr.mxu0 0.0
    %2405 = vmatpush1.xpose.msra.mxu0 0.0
    %2406 = vmatprep.subr.mxu0 0.0
    %2407 = vmatpush1.xpose.msra.mxu0 0.0
    %2408 = vmatprep.subr.mxu0 0.0
    %2409 = vmatpush1.xpose.msra.mxu0 0.0
    %2410 = vmatprep.subr.mxu0 0.0
    %2411 = vmatpush1.xpose.msra.mxu0 0.0
    %2412 = vmatprep.subr.mxu0 0.0
    %2413 = vmatpush1.xpose.msra.mxu0 0.0
    %2414 = vmatprep.subr.mxu0 0.0
    %2415 = vmatpush1.xpose.msra.mxu0 0.0
    %2416 = vmatprep.subr.mxu0 0.0
    %2417 = vmatpush1.xpose.msra.mxu0 0.0
    %2418 = vmatprep.subr.mxu0 0.0
    %2419 = vmatpush1.xpose.msra.mxu0 0.0
    %2420 = vmatprep.subr.mxu0 0.0
    %2421 = vmatpush1.xpose.msra.mxu0 0.0
    %2422 = vmatprep.subr.mxu0 0.0
    %2423 = vmatpush1.xpose.msra.mxu0 0.0
    %2424 = vmatprep.mubr.f32.mxu0 0.0
    %2425 = vmatmul.mubr.f32.gmra.mrb[0].mxu0 %v2354
    %v2426 = vpop.f32.mrb[0].mxu0
    %v2427 = vadd.f32 0.0, %v2426
    %v2428 = vpop.f32.mrb[0].mxu0
    %2429 = vdwg.mxu0
    %2430 = vrot.lane.b32.xlu0 %v2007, 120
    %v2431 = vpop.permute.xlu0 %2430
    %2432 = vrot.lane.b32.xlu0 %v328, 120
    %v2433 = vpop.permute.xlu0 %2432
    %2434 = vrot.lane.b32.xlu0 %v333, 120
    %v2435 = vpop.permute.xlu0 %2434
    %v2436 = vsel %vm431, %v2431, 0
    %v2438 = vsel %vm431, %v2433, 0
    %v2440 = vsel %vm431, %v2435, 0
    %2442 = vmatprep.subr.mxu0 0.0
    %2443 = vmatpush1.xpose.msra.mxu0 %v2438
    %2444 = vmatprep.subr.mxu0 0.0
    %2445 = vmatpush1.xpose.msra.mxu0 %v2440
    %2446 = vmatprep.subr.mxu0 0.0
    %2447 = vmatpush1.xpose.msra.mxu0 0.0
    %2448 = vmatprep.subr.mxu0 0.0
    %2449 = vmatpush1.xpose.msra.mxu0 0.0
    %2450 = vmatprep.subr.mxu0 0.0
    %2451 = vmatpush1.xpose.msra.mxu0 0.0
    %2452 = vmatprep.subr.mxu0 0.0
    %2453 = vmatpush1.xpose.msra.mxu0 0.0
    %2454 = vmatprep.subr.mxu0 0.0
    %2455 = vmatpush1.xpose.msra.mxu0 0.0
    %2456 = vmatprep.subr.mxu0 0.0
    %2457 = vmatpush1.xpose.msra.mxu0 0.0
    %2458 = vmatprep.subr.mxu0 0.0
    %2459 = vmatpush1.xpose.msra.mxu0 0.0
    %2460 = vmatprep.subr.mxu0 0.0
    %2461 = vmatpush1.xpose.msra.mxu0 0.0
    %2462 = vmatprep.subr.mxu0 0.0
    %2463 = vmatpush1.xpose.msra.mxu0 0.0
    %2464 = vmatprep.subr.mxu0 0.0
    %2465 = vmatpush1.xpose.msra.mxu0 0.0
    %2466 = vmatprep.subr.mxu0 0.0
    %2467 = vmatpush1.xpose.msra.mxu0 0.0
    %2468 = vmatprep.subr.mxu0 0.0
    %2469 = vmatpush1.xpose.msra.mxu0 0.0
    %2470 = vmatprep.subr.mxu0 0.0
    %2471 = vmatpush1.xpose.msra.mxu0 0.0
    %2472 = vmatprep.subr.mxu0 0.0
    %2473 = vmatpush1.xpose.msra.mxu0 0.0
    %2474 = vmatprep.subr.mxu0 0.0
    %2475 = vmatpush1.xpose.msra.mxu0 0.0
    %2476 = vmatprep.subr.mxu0 0.0
    %2477 = vmatpush1.xpose.msra.mxu0 0.0
    %2478 = vmatprep.subr.mxu0 0.0
    %2479 = vmatpush1.xpose.msra.mxu0 0.0
    %2480 = vmatprep.subr.mxu0 0.0
    %2481 = vmatpush1.xpose.msra.mxu0 0.0
    %2482 = vmatprep.subr.mxu0 0.0
    %2483 = vmatpush1.xpose.msra.mxu0 0.0
    %2484 = vmatprep.subr.mxu0 0.0
    %2485 = vmatpush1.xpose.msra.mxu0 0.0
    %2486 = vmatprep.subr.mxu0 0.0
    %2487 = vmatpush1.xpose.msra.mxu0 0.0
    %2488 = vmatprep.subr.mxu0 0.0
    %2489 = vmatpush1.xpose.msra.mxu0 0.0
    %2490 = vmatprep.subr.mxu0 0.0
    %2491 = vmatpush1.xpose.msra.mxu0 0.0
    %2492 = vmatprep.subr.mxu0 0.0
    %2493 = vmatpush1.xpose.msra.mxu0 0.0
    %2494 = vmatprep.subr.mxu0 0.0
    %2495 = vmatpush1.xpose.msra.mxu0 0.0
    %2496 = vmatprep.subr.mxu0 0.0
    %2497 = vmatpush1.xpose.msra.mxu0 0.0
    %2498 = vmatprep.subr.mxu0 0.0
    %2499 = vmatpush1.xpose.msra.mxu0 0.0
    %2500 = vmatprep.subr.mxu0 0.0
    %2501 = vmatpush1.xpose.msra.mxu0 0.0
    %2502 = vmatprep.subr.mxu0 0.0
    %2503 = vmatpush1.xpose.msra.mxu0 0.0
    %2504 = vmatprep.subr.mxu0 0.0
    %2505 = vmatpush1.xpose.msra.mxu0 0.0
    %2506 = vmatprep.mubr.f32.mxu0 0.0
    %2507 = vmatmul.mubr.f32.gmra.mrb[0].mxu0 %v2436
    %v2508 = vpop.f32.mrb[0].mxu0
    %v2509 = vadd.f32 0.0, %v2508
    %v2510 = vpop.f32.mrb[0].mxu0
    %2511 = vdwg.mxu0
    %v2512 = vsel %vm1773, %v2427, -inf
    %2513 = vmax.xlane.f32.xlu0 %v2512
    %v2514 = vpop.xlane.xlu0 %2513
    %v2515 = vsel %vm1773, %v2509, -inf
    %2516 = vmax.xlane.f32.xlu0 %v2515
    %v2517 = vpop.xlane.xlu0 %2516
    %v2518 = vsub.f32 %v2427, %v2514
    %v2519 = vsub.f32 %v2509, %v2517
    %v2520 = vmul.f32 %v2518, 1.442695
    %v2521 = vpow.pop %v2520
    %v2522 = vmul.f32 %v2519, 1.442695
    %v2523 = vpow.pop %v2522
    %v2524 = vsel %vm1773, %v2521, 0.0
    %2525 = vadd.xlane.f32.xlu0 %v2524
    %v2526 = vpop.xlane.xlu0 %2525
    %v2527 = vsel %vm1773, %v2523, 0.0
    %2528 = vadd.xlane.f32.xlu0 %v2527
    %v2529 = vpop.xlane.xlu0 %2528
    %v2530 = vrcp.pop %v2526
    %v2531 = vrcp.pop %v2529
    %v2532 = vmul.f32 %v2521, %v2530
    %v2533 = vmul.f32 %v2523, %v2531
    %2534 = vrot.lane.b32.xlu0 %v318, 88
    %v2535 = vpop.permute.xlu0 %2534
    %2536 = vrot.lane.b32.xlu0 %v323, 88
    %v2537 = vpop.permute.xlu0 %2536
    %v2541 = vsel %vm1773, %v2532, 0
    %2543 = vmatprep.subr.mxu0 0.0
    %2544 = vmatpush1.msra.mxu0 %v2535
    %2545 = vmatprep.subr.mxu0 0.0
    %2546 = vmatpush1.msra.mxu0 %v2537
    %2547 = vmatprep.subr.mxu0 0.0
    %2548 = vmatpush1.msra.mxu0 0.0
    %2549 = vmatprep.subr.mxu0 0.0
    %2550 = vmatpush1.msra.mxu0 0.0
    %2551 = vmatprep.subr.mxu0 0.0
    %2552 = vmatpush1.msra.mxu0 0.0
    %2553 = vmatprep.subr.mxu0 0.0
    %2554 = vmatpush1.msra.mxu0 0.0
    %2555 = vmatprep.subr.mxu0 0.0
    %2556 = vmatpush1.msra.mxu0 0.0
    %2557 = vmatprep.subr.mxu0 0.0
    %2558 = vmatpush1.msra.mxu0 0.0
    %2559 = vmatprep.subr.mxu0 0.0
    %2560 = vmatpush1.msra.mxu0 0.0
    %2561 = vmatprep.subr.mxu0 0.0
    %2562 = vmatpush1.msra.mxu0 0.0
    %2563 = vmatprep.subr.mxu0 0.0
    %2564 = vmatpush1.msra.mxu0 0.0
    %2565 = vmatprep.subr.mxu0 0.0
    %2566 = vmatpush1.msra.mxu0 0.0
    %2567 = vmatprep.subr.mxu0 0.0
    %2568 = vmatpush1.msra.mxu0 0.0
    %2569 = vmatprep.subr.mxu0 0.0
    %2570 = vmatpush1.msra.mxu0 0.0
    %2571 = vmatprep.subr.mxu0 0.0
    %2572 = vmatpush1.msra.mxu0 0.0
    %2573 = vmatprep.subr.mxu0 0.0
    %2574 = vmatpush1.msra.mxu0 0.0
    %2575 = vmatprep.subr.mxu0 0.0
    %2576 = vmatpush1.msra.mxu0 0.0
    %2577 = vmatprep.subr.mxu0 0.0
    %2578 = vmatpush1.msra.mxu0 0.0
    %2579 = vmatprep.subr.mxu0 0.0
    %2580 = vmatpush1.msra.mxu0 0.0
    %2581 = vmatprep.subr.mxu0 0.0
    %2582 = vmatpush1.msra.mxu0 0.0
    %2583 = vmatprep.subr.mxu0 0.0
    %2584 = vmatpush1.msra.mxu0 0.0
    %2585 = vmatprep.subr.mxu0 0.0
    %2586 = vmatpush1.msra.mxu0 0.0
    %2587 = vmatprep.subr.mxu0 0.0
    %2588 = vmatpush1.msra.mxu0 0.0
    %2589 = vmatprep.subr.mxu0 0.0
    %2590 = vmatpush1.msra.mxu0 0.0
    %2591 = vmatprep.subr.mxu0 0.0
    %2592 = vmatpush1.msra.mxu0 0.0
    %2593 = vmatprep.subr.mxu0 0.0
    %2594 = vmatpush1.msra.mxu0 0.0
    %2595 = vmatprep.subr.mxu0 0.0
    %2596 = vmatpush1.msra.mxu0 0.0
    %2597 = vmatprep.subr.mxu0 0.0
    %2598 = vmatpush1.msra.mxu0 0.0
    %2599 = vmatprep.subr.mxu0 0.0
    %2600 = vmatpush1.msra.mxu0 0.0
    %2601 = vmatprep.subr.mxu0 0.0
    %2602 = vmatpush1.msra.mxu0 0.0
    %2603 = vmatprep.subr.mxu0 0.0
    %2604 = vmatpush1.msra.mxu0 0.0
    %2605 = vmatprep.subr.mxu0 0.0
    %2606 = vmatpush1.msra.mxu0 0.0
    %2607 = vmatprep.mubr.f32.mxu0 0.0
    %2608 = vmatmul.mubr.f32.gmra.mrb[0].mxu0 %v2541
    %v2609 = vpop.f32.mrb[0].mxu0
    %v2610 = vadd.f32 0.0, %v2609
    %v2611 = vpop.f32.mrb[0].mxu0
    %2612 = vdwg.mxu0
    %2613 = vrot.lane.b32.xlu0 %v328, 88
    %v2614 = vpop.permute.xlu0 %2613
    %2615 = vrot.lane.b32.xlu0 %v333, 88
    %v2616 = vpop.permute.xlu0 %2615
    %v2620 = vsel %vm1773, %v2533, 0
    %2622 = vmatprep.subr.mxu0 0.0
    %2623 = vmatpush1.msra.mxu0 %v2614
    %2624 = vmatprep.subr.mxu0 0.0
    %2625 = vmatpush1.msra.mxu0 %v2616
    %2626 = vmatprep.subr.mxu0 0.0
    %2627 = vmatpush1.msra.mxu0 0.0
    %2628 = vmatprep.subr.mxu0 0.0
    %2629 = vmatpush1.msra.mxu0 0.0
    %2630 = vmatprep.subr.mxu0 0.0
    %2631 = vmatpush1.msra.mxu0 0.0
    %2632 = vmatprep.subr.mxu0 0.0
    %2633 = vmatpush1.msra.mxu0 0.0
    %2634 = vmatprep.subr.mxu0 0.0
    %2635 = vmatpush1.msra.mxu0 0.0
    %2636 = vmatprep.subr.mxu0 0.0
    %2637 = vmatpush1.msra.mxu0 0.0
    %2638 = vmatprep.subr.mxu0 0.0
    %2639 = vmatpush1.msra.mxu0 0.0
    %2640 = vmatprep.subr.mxu0 0.0
    %2641 = vmatpush1.msra.mxu0 0.0
    %2642 = vmatprep.subr.mxu0 0.0
    %2643 = vmatpush1.msra.mxu0 0.0
    %2644 = vmatprep.subr.mxu0 0.0
    %2645 = vmatpush1.msra.mxu0 0.0
    %2646 = vmatprep.subr.mxu0 0.0
    %2647 = vmatpush1.msra.mxu0 0.0
    %2648 = vmatprep.subr.mxu0 0.0
    %2649 = vmatpush1.msra.mxu0 0.0
    %2650 = vmatprep.subr.mxu0 0.0
    %2651 = vmatpush1.msra.mxu0 0.0
    %2652 = vmatprep.subr.mxu0 0.0
    %2653 = vmatpush1.msra.mxu0 0.0
    %2654 = vmatprep.subr.mxu0 0.0
    %2655 = vmatpush1.msra.mxu0 0.0
    %2656 = vmatprep.subr.mxu0 0.0
    %2657 = vmatpush1.msra.mxu0 0.0
    %2658 = vmatprep.subr.mxu0 0.0
    %2659 = vmatpush1.msra.mxu0 0.0
    %2660 = vmatprep.subr.mxu0 0.0
    %2661 = vmatpush1.msra.mxu0 0.0
    %2662 = vmatprep.subr.mxu0 0.0
    %2663 = vmatpush1.msra.mxu0 0.0
    %2664 = vmatprep.subr.mxu0 0.0
    %2665 = vmatpush1.msra.mxu0 0.0
    %2666 = vmatprep.subr.mxu0 0.0
    %2667 = vmatpush1.msra.mxu0 0.0
    %2668 = vmatprep.subr.mxu0 0.0
    %2669 = vmatpush1.msra.mxu0 0.0
    %2670 = vmatprep.subr.mxu0 0.0
    %2671 = vmatpush1.msra.mxu0 0.0
    %2672 = vmatprep.subr.mxu0 0.0
    %2673 = vmatpush1.msra.mxu0 0.0
    %2674 = vmatprep.subr.mxu0 0.0
    %2675 = vmatpush1.msra.mxu0 0.0
    %2676 = vmatprep.subr.mxu0 0.0
    %2677 = vmatpush1.msra.mxu0 0.0
    %2678 = vmatprep.subr.mxu0 0.0
    %2679 = vmatpush1.msra.mxu0 0.0
    %2680 = vmatprep.subr.mxu0 0.0
    %2681 = vmatpush1.msra.mxu0 0.0
    %2682 = vmatprep.subr.mxu0 0.0
    %2683 = vmatpush1.msra.mxu0 0.0
    %2684 = vmatprep.subr.mxu0 0.0
    %2685 = vmatpush1.msra.mxu0 0.0
    %2686 = vmatprep.mubr.f32.mxu0 0.0
    %2687 = vmatmul.mubr.f32.gmra.mrb[0].mxu0 %v2620
    %v2688 = vpop.f32.mrb[0].mxu0
    %v2689 = vadd.f32 0.0, %v2688
    %v2690 = vpop.f32.mrb[0].mxu0
    %2691 = vdwg.mxu0
    %2692 = vrot.lane.b32.xlu0 %v2002, 112
    %v2693 = vpop.permute.xlu0 %2692
    %2694 = vrot.lane.b32.xlu0 %v318, 112
    %v2695 = vpop.permute.xlu0 %2694
    %2696 = vrot.lane.b32.xlu0 %v323, 112
    %v2697 = vpop.permute.xlu0 %2696
    %v2698 = vsel %vm431, %v2693, 0
    %v2700 = vsel %vm431, %v2695, 0
    %v2702 = vsel %vm431, %v2697, 0
    %2704 = vmatprep.subr.mxu0 0.0
    %2705 = vmatpush1.xpose.msra.mxu0 %v2700
    %2706 = vmatprep.subr.mxu0 0.0
    %2707 = vmatpush1.xpose.msra.mxu0 %v2702
    %2708 = vmatprep.subr.mxu0 0.0
    %2709 = vmatpush1.xpose.msra.mxu0 0.0
    %2710 = vmatprep.subr.mxu0 0.0
    %2711 = vmatpush1.xpose.msra.mxu0 0.0
    %2712 = vmatprep.subr.mxu0 0.0
    %2713 = vmatpush1.xpose.msra.mxu0 0.0
    %2714 = vmatprep.subr.mxu0 0.0
    %2715 = vmatpush1.xpose.msra.mxu0 0.0
    %2716 = vmatprep.subr.mxu0 0.0
    %2717 = vmatpush1.xpose.msra.mxu0 0.0
    %2718 = vmatprep.subr.mxu0 0.0
    %2719 = vmatpush1.xpose.msra.mxu0 0.0
    %2720 = vmatprep.subr.mxu0 0.0
    %2721 = vmatpush1.xpose.msra.mxu0 0.0
    %2722 = vmatprep.subr.mxu0 0.0
    %2723 = vmatpush1.xpose.msra.mxu0 0.0
    %2724 = vmatprep.subr.mxu0 0.0
    %2725 = vmatpush1.xpose.msra.mxu0 0.0
    %2726 = vmatprep.subr.mxu0 0.0
    %2727 = vmatpush1.xpose.msra.mxu0 0.0
    %2728 = vmatprep.subr.mxu0 0.0
    %2729 = vmatpush1.xpose.msra.mxu0 0.0
    %2730 = vmatprep.subr.mxu0 0.0
    %2731 = vmatpush1.xpose.msra.mxu0 0.0
    %2732 = vmatprep.subr.mxu0 0.0
    %2733 = vmatpush1.xpose.msra.mxu0 0.0
    %2734 = vmatprep.subr.mxu0 0.0
    %2735 = vmatpush1.xpose.msra.mxu0 0.0
    %2736 = vmatprep.subr.mxu0 0.0
    %2737 = vmatpush1.xpose.msra.mxu0 0.0
    %2738 = vmatprep.subr.mxu0 0.0
    %2739 = vmatpush1.xpose.msra.mxu0 0.0
    %2740 = vmatprep.subr.mxu0 0.0
    %2741 = vmatpush1.xpose.msra.mxu0 0.0
    %2742 = vmatprep.subr.mxu0 0.0
    %2743 = vmatpush1.xpose.msra.mxu0 0.0
    %2744 = vmatprep.subr.mxu0 0.0
    %2745 = vmatpush1.xpose.msra.mxu0 0.0
    %2746 = vmatprep.subr.mxu0 0.0
    %2747 = vmatpush1.xpose.msra.mxu0 0.0
    %2748 = vmatprep.subr.mxu0 0.0
    %2749 = vmatpush1.xpose.msra.mxu0 0.0
    %2750 = vmatprep.subr.mxu0 0.0
    %2751 = vmatpush1.xpose.msra.mxu0 0.0
    %2752 = vmatprep.subr.mxu0 0.0
    %2753 = vmatpush1.xpose.msra.mxu0 0.0
    %2754 = vmatprep.subr.mxu0 0.0
    %2755 = vmatpush1.xpose.msra.mxu0 0.0
    %2756 = vmatprep.subr.mxu0 0.0
    %2757 = vmatpush1.xpose.msra.mxu0 0.0
    %2758 = vmatprep.subr.mxu0 0.0
    %2759 = vmatpush1.xpose.msra.mxu0 0.0
    %2760 = vmatprep.subr.mxu0 0.0
    %2761 = vmatpush1.xpose.msra.mxu0 0.0
    %2762 = vmatprep.subr.mxu0 0.0
    %2763 = vmatpush1.xpose.msra.mxu0 0.0
    %2764 = vmatprep.subr.mxu0 0.0
    %2765 = vmatpush1.xpose.msra.mxu0 0.0
    %2766 = vmatprep.subr.mxu0 0.0
    %2767 = vmatpush1.xpose.msra.mxu0 0.0
    %2768 = vmatprep.mubr.f32.mxu0 0.0
    %2769 = vmatmul.mubr.f32.gmra.mrb[0].mxu0 %v2698
    %v2770 = vpop.f32.mrb[0].mxu0
    %v2771 = vadd.f32 0.0, %v2770
    %v2772 = vpop.f32.mrb[0].mxu0
    %2773 = vdwg.mxu0
    %2774 = vrot.lane.b32.xlu0 %v2007, 112
    %v2775 = vpop.permute.xlu0 %2774
    %2776 = vrot.lane.b32.xlu0 %v328, 112
    %v2777 = vpop.permute.xlu0 %2776
    %2778 = vrot.lane.b32.xlu0 %v333, 112
    %v2779 = vpop.permute.xlu0 %2778
    %v2780 = vsel %vm431, %v2775, 0
    %v2782 = vsel %vm431, %v2777, 0
    %v2784 = vsel %vm431, %v2779, 0
    %2786 = vmatprep.subr.mxu0 0.0
    %2787 = vmatpush1.xpose.msra.mxu0 %v2782
    %2788 = vmatprep.subr.mxu0 0.0
    %2789 = vmatpush1.xpose.msra.mxu0 %v2784
    %2790 = vmatprep.subr.mxu0 0.0
    %2791 = vmatpush1.xpose.msra.mxu0 0.0
    %2792 = vmatprep.subr.mxu0 0.0
    %2793 = vmatpush1.xpose.msra.mxu0 0.0
    %2794 = vmatprep.subr.mxu0 0.0
    %2795 = vmatpush1.xpose.msra.mxu0 0.0
    %2796 = vmatprep.subr.mxu0 0.0
    %2797 = vmatpush1.xpose.msra.mxu0 0.0
    %2798 = vmatprep.subr.mxu0 0.0
    %2799 = vmatpush1.xpose.msra.mxu0 0.0
    %2800 = vmatprep.subr.mxu0 0.0
    %2801 = vmatpush1.xpose.msra.mxu0 0.0
    %2802 = vmatprep.subr.mxu0 0.0
    %2803 = vmatpush1.xpose.msra.mxu0 0.0
    %2804 = vmatprep.subr.mxu0 0.0
    %2805 = vmatpush1.xpose.msra.mxu0 0.0
    %2806 = vmatprep.subr.mxu0 0.0
    %2807 = vmatpush1.xpose.msra.mxu0 0.0
    %2808 = vmatprep.subr.mxu0 0.0
    %2809 = vmatpush1.xpose.msra.mxu0 0.0
    %2810 = vmatprep.subr.mxu0 0.0
    %2811 = vmatpush1.xpose.msra.mxu0 0.0
    %2812 = vmatprep.subr.mxu0 0.0
    %2813 = vmatpush1.xpose.msra.mxu0 0.0
    %2814 = vmatprep.subr.mxu0 0.0
    %2815 = vmatpush1.xpose.msra.mxu0 0.0
    %2816 = vmatprep.subr.mxu0 0.0
    %2817 = vmatpush1.xpose.msra.mxu0 0.0
    %2818 = vmatprep.subr.mxu0 0.0
    %2819 = vmatpush1.xpose.msra.mxu0 0.0
    %2820 = vmatprep.subr.mxu0 0.0
    %2821 = vmatpush1.xpose.msra.mxu0 0.0
    %2822 = vmatprep.subr.mxu0 0.0
    %2823 = vmatpush1.xpose.msra.mxu0 0.0
    %2824 = vmatprep.subr.mxu0 0.0
    %2825 = vmatpush1.xpose.msra.mxu0 0.0
    %2826 = vmatprep.subr.mxu0 0.0
    %2827 = vmatpush1.xpose.msra.mxu0 0.0
    %2828 = vmatprep.subr.mxu0 0.0
    %2829 = vmatpush1.xpose.msra.mxu0 0.0
    %2830 = vmatprep.subr.mxu0 0.0
    %2831 = vmatpush1.xpose.msra.mxu0 0.0
    %2832 = vmatprep.subr.mxu0 0.0
    %2833 = vmatpush1.xpose.msra.mxu0 0.0
    %2834 = vmatprep.subr.mxu0 0.0
    %2835 = vmatpush1.xpose.msra.mxu0 0.0
    %2836 = vmatprep.subr.mxu0 0.0
    %2837 = vmatpush1.xpose.msra.mxu0 0.0
    %2838 = vmatprep.subr.mxu0 0.0
    %2839 = vmatpush1.xpose.msra.mxu0 0.0
    %2840 = vmatprep.subr.mxu0 0.0
    %2841 = vmatpush1.xpose.msra.mxu0 0.0
    %2842 = vmatprep.subr.mxu0 0.0
    %2843 = vmatpush1.xpose.msra.mxu0 0.0
    %2844 = vmatprep.subr.mxu0 0.0
    %2845 = vmatpush1.xpose.msra.mxu0 0.0
    %2846 = vmatprep.subr.mxu0 0.0
    %2847 = vmatpush1.xpose.msra.mxu0 0.0
    %2848 = vmatprep.subr.mxu0 0.0
    %2849 = vmatpush1.xpose.msra.mxu0 0.0
    %2850 = vmatprep.mubr.f32.mxu0 0.0
    %2851 = vmatmul.mubr.f32.gmra.mrb[0].mxu0 %v2780
    %v2852 = vpop.f32.mrb[0].mxu0
    %v2853 = vadd.f32 0.0, %v2852
    %v2854 = vpop.f32.mrb[0].mxu0
    %2855 = vdwg.mxu0
    %v2856 = vsel %vm1773, %v2771, -inf
    %2857 = vmax.xlane.f32.xlu0 %v2856
    %v2858 = vpop.xlane.xlu0 %2857
    %v2859 = vsel %vm1773, %v2853, -inf
    %2860 = vmax.xlane.f32.xlu0 %v2859
    %v2861 = vpop.xlane.xlu0 %2860
    %v2862 = vsub.f32 %v2771, %v2858
    %v2863 = vsub.f32 %v2853, %v2861
    %v2864 = vmul.f32 %v2862, 1.442695
    %v2865 = vpow.pop %v2864
    %v2866 = vmul.f32 %v2863, 1.442695
    %v2867 = vpow.pop %v2866
    %v2868 = vsel %vm1773, %v2865, 0.0
    %2869 = vadd.xlane.f32.xlu0 %v2868
    %v2870 = vpop.xlane.xlu0 %2869
    %v2871 = vsel %vm1773, %v2867, 0.0
    %2872 = vadd.xlane.f32.xlu0 %v2871
    %v2873 = vpop.xlane.xlu0 %2872
    %v2874 = vrcp.pop %v2870
    %v2875 = vrcp.pop %v2873
    %v2876 = vmul.f32 %v2865, %v2874
    %v2877 = vmul.f32 %v2867, %v2875
    %2878 = vrot.lane.b32.xlu0 %v318, 80
    %v2879 = vpop.permute.xlu0 %2878
    %2880 = vrot.lane.b32.xlu0 %v323, 80
    %v2881 = vpop.permute.xlu0 %2880
    %v2885 = vsel %vm1773, %v2876, 0
    %2887 = vmatprep.subr.mxu0 0.0
    %2888 = vmatpush1.msra.mxu0 %v2879
    %2889 = vmatprep.subr.mxu0 0.0
    %2890 = vmatpush1.msra.mxu0 %v2881
    %2891 = vmatprep.subr.mxu0 0.0
    %2892 = vmatpush1.msra.mxu0 0.0
    %2893 = vmatprep.subr.mxu0 0.0
    %2894 = vmatpush1.msra.mxu0 0.0
    %2895 = vmatprep.subr.mxu0 0.0
    %2896 = vmatpush1.msra.mxu0 0.0
    %2897 = vmatprep.subr.mxu0 0.0
    %2898 = vmatpush1.msra.mxu0 0.0
    %2899 = vmatprep.subr.mxu0 0.0
    %2900 = vmatpush1.msra.mxu0 0.0
    %2901 = vmatprep.subr.mxu0 0.0
    %2902 = vmatpush1.msra.mxu0 0.0
    %2903 = vmatprep.subr.mxu0 0.0
    %2904 = vmatpush1.msra.mxu0 0.0
    %2905 = vmatprep.subr.mxu0 0.0
    %2906 = vmatpush1.msra.mxu0 0.0
    %2907 = vmatprep.subr.mxu0 0.0
    %2908 = vmatpush1.msra.mxu0 0.0
    %2909 = vmatprep.subr.mxu0 0.0
    %2910 = vmatpush1.msra.mxu0 0.0
    %2911 = vmatprep.subr.mxu0 0.0
    %2912 = vmatpush1.msra.mxu0 0.0
    %2913 = vmatprep.subr.mxu0 0.0
    %2914 = vmatpush1.msra.mxu0 0.0
    %2915 = vmatprep.subr.mxu0 0.0
    %2916 = vmatpush1.msra.mxu0 0.0
    %2917 = vmatprep.subr.mxu0 0.0
    %2918 = vmatpush1.msra.mxu0 0.0
    %2919 = vmatprep.subr.mxu0 0.0
    %2920 = vmatpush1.msra.mxu0 0.0
    %2921 = vmatprep.subr.mxu0 0.0
    %2922 = vmatpush1.msra.mxu0 0.0
    %2923 = vmatprep.subr.mxu0 0.0
    %2924 = vmatpush1.msra.mxu0 0.0
    %2925 = vmatprep.subr.mxu0 0.0
    %2926 = vmatpush1.msra.mxu0 0.0
    %2927 = vmatprep.subr.mxu0 0.0
    %2928 = vmatpush1.msra.mxu0 0.0
    %2929 = vmatprep.subr.mxu0 0.0
    %2930 = vmatpush1.msra.mxu0 0.0
    %2931 = vmatprep.subr.mxu0 0.0
    %2932 = vmatpush1.msra.mxu0 0.0
    %2933 = vmatprep.subr.mxu0 0.0
    %2934 = vmatpush1.msra.mxu0 0.0
    %2935 = vmatprep.subr.mxu0 0.0
    %2936 = vmatpush1.msra.mxu0 0.0
    %2937 = vmatprep.subr.mxu0 0.0
    %2938 = vmatpush1.msra.mxu0 0.0
    %2939 = vmatprep.subr.mxu0 0.0
    %2940 = vmatpush1.msra.mxu0 0.0
    %2941 = vmatprep.subr.mxu0 0.0
    %2942 = vmatpush1.msra.mxu0 0.0
    %2943 = vmatprep.subr.mxu0 0.0
    %2944 = vmatpush1.msra.mxu0 0.0
    %2945 = vmatprep.subr.mxu0 0.0
    %2946 = vmatpush1.msra.mxu0 0.0
    %2947 = vmatprep.subr.mxu0 0.0
    %2948 = vmatpush1.msra.mxu0 0.0
    %2949 = vmatprep.subr.mxu0 0.0
    %2950 = vmatpush1.msra.mxu0 0.0
    %2951 = vmatprep.mubr.f32.mxu0 0.0
    %2952 = vmatmul.mubr.f32.gmra.mrb[0].mxu0 %v2885
    %v2953 = vpop.f32.mrb[0].mxu0
    %v2954 = vadd.f32 0.0, %v2953
    %v2955 = vpop.f32.mrb[0].mxu0
    %2956 = vdwg.mxu0
    %2957 = vrot.lane.b32.xlu0 %v328, 80
    %v2958 = vpop.permute.xlu0 %2957
    %2959 = vrot.lane.b32.xlu0 %v333, 80
    %v2960 = vpop.permute.xlu0 %2959
    %v2964 = vsel %vm1773, %v2877, 0
    %2966 = vmatprep.subr.mxu0 0.0
    %2967 = vmatpush1.msra.mxu0 %v2958
    %2968 = vmatprep.subr.mxu0 0.0
    %2969 = vmatpush1.msra.mxu0 %v2960
    %2970 = vmatprep.subr.mxu0 0.0
    %2971 = vmatpush1.msra.mxu0 0.0
    %2972 = vmatprep.subr.mxu0 0.0
    %2973 = vmatpush1.msra.mxu0 0.0
    %2974 = vmatprep.subr.mxu0 0.0
    %2975 = vmatpush1.msra.mxu0 0.0
    %2976 = vmatprep.subr.mxu0 0.0
    %2977 = vmatpush1.msra.mxu0 0.0
    %2978 = vmatprep.subr.mxu0 0.0
    %2979 = vmatpush1.msra.mxu0 0.0
    %2980 = vmatprep.subr.mxu0 0.0
    %2981 = vmatpush1.msra.mxu0 0.0
    %2982 = vmatprep.subr.mxu0 0.0
    %2983 = vmatpush1.msra.mxu0 0.0
    %2984 = vmatprep.subr.mxu0 0.0
    %2985 = vmatpush1.msra.mxu0 0.0
    %2986 = vmatprep.subr.mxu0 0.0
    %2987 = vmatpush1.msra.mxu0 0.0
    %2988 = vmatprep.subr.mxu0 0.0
    %2989 = vmatpush1.msra.mxu0 0.0
    %2990 = vmatprep.subr.mxu0 0.0
    %2991 = vmatpush1.msra.mxu0 0.0
    %2992 = vmatprep.subr.mxu0 0.0
    %2993 = vmatpush1.msra.mxu0 0.0
    %2994 = vmatprep.subr.mxu0 0.0
    %2995 = vmatpush1.msra.mxu0 0.0
    %2996 = vmatprep.subr.mxu0 0.0
    %2997 = vmatpush1.msra.mxu0 0.0
    %2998 = vmatprep.subr.mxu0 0.0
    %2999 = vmatpush1.msra.mxu0 0.0
    %3000 = vmatprep.subr.mxu0 0.0
    %3001 = vmatpush1.msra.mxu0 0.0
    %3002 = vmatprep.subr.mxu0 0.0
    %3003 = vmatpush1.msra.mxu0 0.0
    %3004 = vmatprep.subr.mxu0 0.0
    %3005 = vmatpush1.msra.mxu0 0.0
    %3006 = vmatprep.subr.mxu0 0.0
    %3007 = vmatpush1.msra.mxu0 0.0
    %3008 = vmatprep.subr.mxu0 0.0
    %3009 = vmatpush1.msra.mxu0 0.0
    %3010 = vmatprep.subr.mxu0 0.0
    %3011 = vmatpush1.msra.mxu0 0.0
    %3012 = vmatprep.subr.mxu0 0.0
    %3013 = vmatpush1.msra.mxu0 0.0
    %3014 = vmatprep.subr.mxu0 0.0
    %3015 = vmatpush1.msra.mxu0 0.0
    %3016 = vmatprep.subr.mxu0 0.0
    %3017 = vmatpush1.msra.mxu0 0.0
    %3018 = vmatprep.subr.mxu0 0.0
    %3019 = vmatpush1.msra.mxu0 0.0
    %3020 = vmatprep.subr.mxu0 0.0
    %3021 = vmatpush1.msra.mxu0 0.0
    %3022 = vmatprep.subr.mxu0 0.0
    %3023 = vmatpush1.msra.mxu0 0.0
    %3024 = vmatprep.subr.mxu0 0.0
    %3025 = vmatpush1.msra.mxu0 0.0
    %3026 = vmatprep.subr.mxu0 0.0
    %3027 = vmatpush1.msra.mxu0 0.0
    %3028 = vmatprep.subr.mxu0 0.0
    %3029 = vmatpush1.msra.mxu0 0.0
    %3030 = vmatprep.mubr.f32.mxu0 0.0
    %3031 = vmatmul.mubr.f32.gmra.mrb[0].mxu0 %v2964
    %v3032 = vpop.f32.mrb[0].mxu0
    %v3033 = vadd.f32 0.0, %v3032
    %v3034 = vpop.f32.mrb[0].mxu0
    %3035 = vdwg.mxu0
    %3036 = vrot.lane.b32.xlu0 %v2002, 104
    %v3037 = vpop.permute.xlu0 %3036
    %3038 = vrot.lane.b32.xlu0 %v318, 104
    %v3039 = vpop.permute.xlu0 %3038
    %3040 = vrot.lane.b32.xlu0 %v323, 104
    %v3041 = vpop.permute.xlu0 %3040
    %v3042 = vsel %vm431, %v3037, 0
    %v3044 = vsel %vm431, %v3039, 0
    %v3046 = vsel %vm431, %v3041, 0
    %3048 = vmatprep.subr.mxu0 0.0
    %3049 = vmatpush1.xpose.msra.mxu0 %v3044
    %3050 = vmatprep.subr.mxu0 0.0
    %3051 = vmatpush1.xpose.msra.mxu0 %v3046
    %3052 = vmatprep.subr.mxu0 0.0
    %3053 = vmatpush1.xpose.msra.mxu0 0.0
    %3054 = vmatprep.subr.mxu0 0.0
    %3055 = vmatpush1.xpose.msra.mxu0 0.0
    %3056 = vmatprep.subr.mxu0 0.0
    %3057 = vmatpush1.xpose.msra.mxu0 0.0
    %3058 = vmatprep.subr.mxu0 0.0
    %3059 = vmatpush1.xpose.msra.mxu0 0.0
    %3060 = vmatprep.subr.mxu0 0.0
    %3061 = vmatpush1.xpose.msra.mxu0 0.0
    %3062 = vmatprep.subr.mxu0 0.0
    %3063 = vmatpush1.xpose.msra.mxu0 0.0
    %3064 = vmatprep.subr.mxu0 0.0
    %3065 = vmatpush1.xpose.msra.mxu0 0.0
    %3066 = vmatprep.subr.mxu0 0.0
    %3067 = vmatpush1.xpose.msra.mxu0 0.0
    %3068 = vmatprep.subr.mxu0 0.0
    %3069 = vmatpush1.xpose.msra.mxu0 0.0
    %3070 = vmatprep.subr.mxu0 0.0
    %3071 = vmatpush1.xpose.msra.mxu0 0.0
    %3072 = vmatprep.subr.mxu0 0.0
    %3073 = vmatpush1.xpose.msra.mxu0 0.0
    %3074 = vmatprep.subr.mxu0 0.0
    %3075 = vmatpush1.xpose.msra.mxu0 0.0
    %3076 = vmatprep.subr.mxu0 0.0
    %3077 = vmatpush1.xpose.msra.mxu0 0.0
    %3078 = vmatprep.subr.mxu0 0.0
    %3079 = vmatpush1.xpose.msra.mxu0 0.0
    %3080 = vmatprep.subr.mxu0 0.0
    %3081 = vmatpush1.xpose.msra.mxu0 0.0
    %3082 = vmatprep.subr.mxu0 0.0
    %3083 = vmatpush1.xpose.msra.mxu0 0.0
    %3084 = vmatprep.subr.mxu0 0.0
    %3085 = vmatpush1.xpose.msra.mxu0 0.0
    %3086 = vmatprep.subr.mxu0 0.0
    %3087 = vmatpush1.xpose.msra.mxu0 0.0
    %3088 = vmatprep.subr.mxu0 0.0
    %3089 = vmatpush1.xpose.msra.mxu0 0.0
    %3090 = vmatprep.subr.mxu0 0.0
    %3091 = vmatpush1.xpose.msra.mxu0 0.0
    %3092 = vmatprep.subr.mxu0 0.0
    %3093 = vmatpush1.xpose.msra.mxu0 0.0
    %3094 = vmatprep.subr.mxu0 0.0
    %3095 = vmatpush1.xpose.msra.mxu0 0.0
    %3096 = vmatprep.subr.mxu0 0.0
    %3097 = vmatpush1.xpose.msra.mxu0 0.0
    %3098 = vmatprep.subr.mxu0 0.0
    %3099 = vmatpush1.xpose.msra.mxu0 0.0
    %3100 = vmatprep.subr.mxu0 0.0
    %3101 = vmatpush1.xpose.msra.mxu0 0.0
    %3102 = vmatprep.subr.mxu0 0.0
    %3103 = vmatpush1.xpose.msra.mxu0 0.0
    %3104 = vmatprep.subr.mxu0 0.0
    %3105 = vmatpush1.xpose.msra.mxu0 0.0
    %3106 = vmatprep.subr.mxu0 0.0
    %3107 = vmatpush1.xpose.msra.mxu0 0.0
    %3108 = vmatprep.subr.mxu0 0.0
    %3109 = vmatpush1.xpose.msra.mxu0 0.0
    %3110 = vmatprep.subr.mxu0 0.0
    %3111 = vmatpush1.xpose.msra.mxu0 0.0
    %3112 = vmatprep.mubr.f32.mxu0 0.0
    %3113 = vmatmul.mubr.f32.gmra.mrb[0].mxu0 %v3042
    %v3114 = vpop.f32.mrb[0].mxu0
    %v3115 = vadd.f32 0.0, %v3114
    %v3116 = vpop.f32.mrb[0].mxu0
    %3117 = vdwg.mxu0
    %3118 = vrot.lane.b32.xlu0 %v2007, 104
    %v3119 = vpop.permute.xlu0 %3118
    %3120 = vrot.lane.b32.xlu0 %v328, 104
    %v3121 = vpop.permute.xlu0 %3120
    %3122 = vrot.lane.b32.xlu0 %v333, 104
    %v3123 = vpop.permute.xlu0 %3122
    %v3124 = vsel %vm431, %v3119, 0
    %v3126 = vsel %vm431, %v3121, 0
    %v3128 = vsel %vm431, %v3123, 0
    %3130 = vmatprep.subr.mxu0 0.0
    %3131 = vmatpush1.xpose.msra.mxu0 %v3126
    %3132 = vmatprep.subr.mxu0 0.0
    %3133 = vmatpush1.xpose.msra.mxu0 %v3128
    %3134 = vmatprep.subr.mxu0 0.0
    %3135 = vmatpush1.xpose.msra.mxu0 0.0
    %3136 = vmatprep.subr.mxu0 0.0
    %3137 = vmatpush1.xpose.msra.mxu0 0.0
    %3138 = vmatprep.subr.mxu0 0.0
    %3139 = vmatpush1.xpose.msra.mxu0 0.0
    %3140 = vmatprep.subr.mxu0 0.0
    %3141 = vmatpush1.xpose.msra.mxu0 0.0
    %3142 = vmatprep.subr.mxu0 0.0
    %3143 = vmatpush1.xpose.msra.mxu0 0.0
    %3144 = vmatprep.subr.mxu0 0.0
    %3145 = vmatpush1.xpose.msra.mxu0 0.0
    %3146 = vmatprep.subr.mxu0 0.0
    %3147 = vmatpush1.xpose.msra.mxu0 0.0
    %3148 = vmatprep.subr.mxu0 0.0
    %3149 = vmatpush1.xpose.msra.mxu0 0.0
    %3150 = vmatprep.subr.mxu0 0.0
    %3151 = vmatpush1.xpose.msra.mxu0 0.0
    %3152 = vmatprep.subr.mxu0 0.0
    %3153 = vmatpush1.xpose.msra.mxu0 0.0
    %3154 = vmatprep.subr.mxu0 0.0
    %3155 = vmatpush1.xpose.msra.mxu0 0.0
    %3156 = vmatprep.subr.mxu0 0.0
    %3157 = vmatpush1.xpose.msra.mxu0 0.0
    %3158 = vmatprep.subr.mxu0 0.0
    %3159 = vmatpush1.xpose.msra.mxu0 0.0
    %3160 = vmatprep.subr.mxu0 0.0
    %3161 = vmatpush1.xpose.msra.mxu0 0.0
    %3162 = vmatprep.subr.mxu0 0.0
    %3163 = vmatpush1.xpose.msra.mxu0 0.0
    %3164 = vmatprep.subr.mxu0 0.0
    %3165 = vmatpush1.xpose.msra.mxu0 0.0
    %3166 = vmatprep.subr.mxu0 0.0
    %3167 = vmatpush1.xpose.msra.mxu0 0.0
    %3168 = vmatprep.subr.mxu0 0.0
    %3169 = vmatpush1.xpose.msra.mxu0 0.0
    %3170 = vmatprep.subr.mxu0 0.0
    %3171 = vmatpush1.xpose.msra.mxu0 0.0
    %3172 = vmatprep.subr.mxu0 0.0
    %3173 = vmatpush1.xpose.msra.mxu0 0.0
    %3174 = vmatprep.subr.mxu0 0.0
    %3175 = vmatpush1.xpose.msra.mxu0 0.0
    %3176 = vmatprep.subr.mxu0 0.0
    %3177 = vmatpush1.xpose.msra.mxu0 0.0
    %3178 = vmatprep.subr.mxu0 0.0
    %3179 = vmatpush1.xpose.msra.mxu0 0.0
    %3180 = vmatprep.subr.mxu0 0.0
    %3181 = vmatpush1.xpose.msra.mxu0 0.0
    %3182 = vmatprep.subr.mxu0 0.0
    %3183 = vmatpush1.xpose.msra.mxu0 0.0
    %3184 = vmatprep.subr.mxu0 0.0
    %3185 = vmatpush1.xpose.msra.mxu0 0.0
    %3186 = vmatprep.subr.mxu0 0.0
    %3187 = vmatpush1.xpose.msra.mxu0 0.0
    %3188 = vmatprep.subr.mxu0 0.0
    %3189 = vmatpush1.xpose.msra.mxu0 0.0
    %3190 = vmatprep.subr.mxu0 0.0
    %3191 = vmatpush1.xpose.msra.mxu0 0.0
    %3192 = vmatprep.subr.mxu0 0.0
    %3193 = vmatpush1.xpose.msra.mxu0 0.0
    %3194 = vmatprep.mubr.f32.mxu0 0.0
    %3195 = vmatmul.mubr.f32.gmra.mrb[0].mxu0 %v3124
    %v3196 = vpop.f32.mrb[0].mxu0
    %v3197 = vadd.f32 0.0, %v3196
    %v3198 = vpop.f32.mrb[0].mxu0
    %3199 = vdwg.mxu0
    %v3200 = vsel %vm1773, %v3115, -inf
    %3201 = vmax.xlane.f32.xlu0 %v3200
    %v3202 = vpop.xlane.xlu0 %3201
    %v3203 = vsel %vm1773, %v3197, -inf
    %3204 = vmax.xlane.f32.xlu0 %v3203
    %v3205 = vpop.xlane.xlu0 %3204
    %v3206 = vsub.f32 %v3115, %v3202
    %v3207 = vsub.f32 %v3197, %v3205
    %v3208 = vmul.f32 %v3206, 1.442695
    %v3209 = vpow.pop %v3208
    %v3210 = vmul.f32 %v3207, 1.442695
    %v3211 = vpow.pop %v3210
    %v3212 = vsel %vm1773, %v3209, 0.0
    %3213 = vadd.xlane.f32.xlu0 %v3212
    %v3214 = vpop.xlane.xlu0 %3213
    %v3215 = vsel %vm1773, %v3211, 0.0
    %3216 = vadd.xlane.f32.xlu0 %v3215
    %v3217 = vpop.xlane.xlu0 %3216
    %v3218 = vrcp.pop %v3214
    %v3219 = vrcp.pop %v3217
    %v3220 = vmul.f32 %v3209, %v3218
    %v3221 = vmul.f32 %v3211, %v3219
    %3222 = vrot.lane.b32.xlu0 %v318, 72
    %v3223 = vpop.permute.xlu0 %3222
    %3224 = vrot.lane.b32.xlu0 %v323, 72
    %v3225 = vpop.permute.xlu0 %3224
    %v3229 = vsel %vm1773, %v3220, 0
    %3231 = vmatprep.subr.mxu0 0.0
    %3232 = vmatpush1.msra.mxu0 %v3223
    %3233 = vmatprep.subr.mxu0 0.0
    %3234 = vmatpush1.msra.mxu0 %v3225
    %3235 = vmatprep.subr.mxu0 0.0
    %3236 = vmatpush1.msra.mxu0 0.0
    %3237 = vmatprep.subr.mxu0 0.0
    %3238 = vmatpush1.msra.mxu0 0.0
    %3239 = vmatprep.subr.mxu0 0.0
    %3240 = vmatpush1.msra.mxu0 0.0
    %3241 = vmatprep.subr.mxu0 0.0
    %3242 = vmatpush1.msra.mxu0 0.0
    %3243 = vmatprep.subr.mxu0 0.0
    %3244 = vmatpush1.msra.mxu0 0.0
    %3245 = vmatprep.subr.mxu0 0.0
    %3246 = vmatpush1.msra.mxu0 0.0
    %3247 = vmatprep.subr.mxu0 0.0
    %3248 = vmatpush1.msra.mxu0 0.0
    %3249 = vmatprep.subr.mxu0 0.0
    %3250 = vmatpush1.msra.mxu0 0.0
    %3251 = vmatprep.subr.mxu0 0.0
    %3252 = vmatpush1.msra.mxu0 0.0
    %3253 = vmatprep.subr.mxu0 0.0
    %3254 = vmatpush1.msra.mxu0 0.0
    %3255 = vmatprep.subr.mxu0 0.0
    %3256 = vmatpush1.msra.mxu0 0.0
    %3257 = vmatprep.subr.mxu0 0.0
    %3258 = vmatpush1.msra.mxu0 0.0
    %3259 = vmatprep.subr.mxu0 0.0
    %3260 = vmatpush1.msra.mxu0 0.0
    %3261 = vmatprep.subr.mxu0 0.0
    %3262 = vmatpush1.msra.mxu0 0.0
    %3263 = vmatprep.subr.mxu0 0.0
    %3264 = vmatpush1.msra.mxu0 0.0
    %3265 = vmatprep.subr.mxu0 0.0
    %3266 = vmatpush1.msra.mxu0 0.0
    %3267 = vmatprep.subr.mxu0 0.0
    %3268 = vmatpush1.msra.mxu0 0.0
    %3269 = vmatprep.subr.mxu0 0.0
    %3270 = vmatpush1.msra.mxu0 0.0
    %3271 = vmatprep.subr.mxu0 0.0
    %3272 = vmatpush1.msra.mxu0 0.0
    %3273 = vmatprep.subr.mxu0 0.0
    %3274 = vmatpush1.msra.mxu0 0.0
    %3275 = vmatprep.subr.mxu0 0.0
    %3276 = vmatpush1.msra.mxu0 0.0
    %3277 = vmatprep.subr.mxu0 0.0
    %3278 = vmatpush1.msra.mxu0 0.0
    %3279 = vmatprep.subr.mxu0 0.0
    %3280 = vmatpush1.msra.mxu0 0.0
    %3281 = vmatprep.subr.mxu0 0.0
    %3282 = vmatpush1.msra.mxu0 0.0
    %3283 = vmatprep.subr.mxu0 0.0
    %3284 = vmatpush1.msra.mxu0 0.0
    %3285 = vmatprep.subr.mxu0 0.0
    %3286 = vmatpush1.msra.mxu0 0.0
    %3287 = vmatprep.subr.mxu0 0.0
    %3288 = vmatpush1.msra.mxu0 0.0
    %3289 = vmatprep.subr.mxu0 0.0
    %3290 = vmatpush1.msra.mxu0 0.0
    %3291 = vmatprep.subr.mxu0 0.0
    %3292 = vmatpush1.msra.mxu0 0.0
    %3293 = vmatprep.subr.mxu0 0.0
    %3294 = vmatpush1.msra.mxu0 0.0
    %3295 = vmatprep.mubr.f32.mxu0 0.0
    %3296 = vmatmul.mubr.f32.gmra.mrb[0].mxu0 %v3229
    %v3297 = vpop.f32.mrb[0].mxu0
    %v3298 = vadd.f32 0.0, %v3297
    %v3299 = vpop.f32.mrb[0].mxu0
    %3300 = vdwg.mxu0
    %3301 = vrot.lane.b32.xlu0 %v328, 72
    %v3302 = vpop.permute.xlu0 %3301
    %3303 = vrot.lane.b32.xlu0 %v333, 72
    %v3304 = vpop.permute.xlu0 %3303
    %v3308 = vsel %vm1773, %v3221, 0
    %3310 = vmatprep.subr.mxu0 0.0
    %3311 = vmatpush1.msra.mxu0 %v3302
    %3312 = vmatprep.subr.mxu0 0.0
    %3313 = vmatpush1.msra.mxu0 %v3304
    %3314 = vmatprep.subr.mxu0 0.0
    %3315 = vmatpush1.msra.mxu0 0.0
    %3316 = vmatprep.subr.mxu0 0.0
    %3317 = vmatpush1.msra.mxu0 0.0
    %3318 = vmatprep.subr.mxu0 0.0
    %3319 = vmatpush1.msra.mxu0 0.0
    %3320 = vmatprep.subr.mxu0 0.0
    %3321 = vmatpush1.msra.mxu0 0.0
    %3322 = vmatprep.subr.mxu0 0.0
    %3323 = vmatpush1.msra.mxu0 0.0
    %3324 = vmatprep.subr.mxu0 0.0
    %3325 = vmatpush1.msra.mxu0 0.0
    %3326 = vmatprep.subr.mxu0 0.0
    %3327 = vmatpush1.msra.mxu0 0.0
    %3328 = vmatprep.subr.mxu0 0.0
    %3329 = vmatpush1.msra.mxu0 0.0
    %3330 = vmatprep.subr.mxu0 0.0
    %3331 = vmatpush1.msra.mxu0 0.0
    %3332 = vmatprep.subr.mxu0 0.0
    %3333 = vmatpush1.msra.mxu0 0.0
    %3334 = vmatprep.subr.mxu0 0.0
    %3335 = vmatpush1.msra.mxu0 0.0
    %3336 = vmatprep.subr.mxu0 0.0
    %3337 = vmatpush1.msra.mxu0 0.0
    %3338 = vmatprep.subr.mxu0 0.0
    %3339 = vmatpush1.msra.mxu0 0.0
    %3340 = vmatprep.subr.mxu0 0.0
    %3341 = vmatpush1.msra.mxu0 0.0
    %3342 = vmatprep.subr.mxu0 0.0
    %3343 = vmatpush1.msra.mxu0 0.0
    %3344 = vmatprep.subr.mxu0 0.0
    %3345 = vmatpush1.msra.mxu0 0.0
    %3346 = vmatprep.subr.mxu0 0.0
    %3347 = vmatpush1.msra.mxu0 0.0
    %3348 = vmatprep.subr.mxu0 0.0
    %3349 = vmatpush1.msra.mxu0 0.0
    %3350 = vmatprep.subr.mxu0 0.0
    %3351 = vmatpush1.msra.mxu0 0.0
    %3352 = vmatprep.subr.mxu0 0.0
    %3353 = vmatpush1.msra.mxu0 0.0
    %3354 = vmatprep.subr.mxu0 0.0
    %3355 = vmatpush1.msra.mxu0 0.0
    %3356 = vmatprep.subr.mxu0 0.0
    %3357 = vmatpush1.msra.mxu0 0.0
    %3358 = vmatprep.subr.mxu0 0.0
    %3359 = vmatpush1.msra.mxu0 0.0
    %3360 = vmatprep.subr.mxu0 0.0
    %3361 = vmatpush1.msra.mxu0 0.0
    %3362 = vmatprep.subr.mxu0 0.0
    %3363 = vmatpush1.msra.mxu0 0.0
    %3364 = vmatprep.subr.mxu0 0.0
    %3365 = vmatpush1.msra.mxu0 0.0
    %3366 = vmatprep.subr.mxu0 0.0
    %3367 = vmatpush1.msra.mxu0 0.0
    %3368 = vmatprep.subr.mxu0 0.0
    %3369 = vmatpush1.msra.mxu0 0.0
    %3370 = vmatprep.subr.mxu0 0.0
    %3371 = vmatpush1.msra.mxu0 0.0
    %3372 = vmatprep.subr.mxu0 0.0
    %3373 = vmatpush1.msra.mxu0 0.0
    %3374 = vmatprep.mubr.f32.mxu0 0.0
    %3375 = vmatmul.mubr.f32.gmra.mrb[0].mxu0 %v3308
    %v3376 = vpop.f32.mrb[0].mxu0
    %v3377 = vadd.f32 0.0, %v3376
    %v3378 = vpop.f32.mrb[0].mxu0
    %3379 = vdwg.mxu0
    %3382 = vrot.lane.b32.xlu0 %v2610, 8
    %v3383 = vpop.permute.xlu0 %3382
    %3384 = vrot.lane.b32.xlu0 %v2689, 8
    %v3385 = vpop.permute.xlu0 %3384
    %3390 = vrot.lane.b32.xlu0 %v2954, 16
    %v3391 = vpop.permute.xlu0 %3390
    %3392 = vrot.lane.b32.xlu0 %v3033, 16
    %v3393 = vpop.permute.xlu0 %3392
    %3398 = vrot.lane.b32.xlu0 %v3298, 24
    %v3399 = vpop.permute.xlu0 %3398
    %3400 = vrot.lane.b32.xlu0 %v3377, 24
    %v3401 = vpop.permute.xlu0 %3400
    %v3404 = vsel %vm431, %v2266, %v3383
    %v3405 = vsel %vm431, %v2345, %v3385
    %v3406 = vsel %vm1773, %v3404, %v3391
    %v3407 = vsel %vm1773, %v3405, %v3393
    %v3408 = vsel %vm1776, %v3406, %v3399
    %v3409 = vsel %vm1776, %v3407, %v3401
    %v3410 = vld [vmem:[#allocation8] sm:$0xff]
    %v3411 = vld [vmem:[#allocation8 + $0x8] sm:$0xff]
    %v3412 = vld [vmem:[#allocation8 + $0x10] sm:$0xff]
    %v3413 = vld [vmem:[#allocation8 + $0x18] sm:$0xff]
    %v3414 = vld [vmem:[%s11] sm:$0x1]
    %v3416 = vlaneseq
    %v3417 = vshrl.u32 %v3416, 7
    %v3418 = vsub.s32 0, %v3417
    %v3419 = vrot.slane %v3414, %v3418
    %v3422 = vsel %vm238, %v3408, 0
    %v3425 = vsel %vm238, %v3409, 0
    %3427 = vmatprep.subr.mxu0 0.0
    %3428 = vmatpush1.msra.mxu0 %v3410
    %3429 = vmatprep.subr.mxu0 0.0
    %3430 = vmatpush1.msra.mxu0 %v3411
    %3431 = vmatprep.subr.mxu0 0.0
    %3432 = vmatpush1.msra.mxu0 %v3412
    %3433 = vmatprep.subr.mxu0 0.0
    %3434 = vmatpush1.msra.mxu0 %v3413
    %3435 = vmatprep.subr.mxu0 0.0
    %3436 = vmatpush1.msra.mxu0 0.0
    %3437 = vmatprep.subr.mxu0 0.0
    %3438 = vmatpush1.msra.mxu0 0.0
    %3439 = vmatprep.subr.mxu0 0.0
    %3440 = vmatpush1.msra.mxu0 0.0
    %3441 = vmatprep.subr.mxu0 0.0
    %3442 = vmatpush1.msra.mxu0 0.0
    %3443 = vmatprep.subr.mxu0 0.0
    %3444 = vmatpush1.msra.mxu0 0.0
    %3445 = vmatprep.subr.mxu0 0.0
    %3446 = vmatpush1.msra.mxu0 0.0
    %3447 = vmatprep.subr.mxu0 0.0
    %3448 = vmatpush1.msra.mxu0 0.0
    %3449 = vmatprep.subr.mxu0 0.0
    %3450 = vmatpush1.msra.mxu0 0.0
    %3451 = vmatprep.subr.mxu0 0.0
    %3452 = vmatpush1.msra.mxu0 0.0
    %3453 = vmatprep.subr.mxu0 0.0
    %3454 = vmatpush1.msra.mxu0 0.0
    %3455 = vmatprep.subr.mxu0 0.0
    %3456 = vmatpush1.msra.mxu0 0.0
    %3457 = vmatprep.subr.mxu0 0.0
    %3458 = vmatpush1.msra.mxu0 0.0
    %3459 = vmatprep.subr.mxu0 0.0
    %3460 = vmatpush1.msra.mxu0 0.0
    %3461 = vmatprep.subr.mxu0 0.0
    %3462 = vmatpush1.msra.mxu0 0.0
    %3463 = vmatprep.subr.mxu0 0.0
    %3464 = vmatpush1.msra.mxu0 0.0
    %3465 = vmatprep.subr.mxu0 0.0
    %3466 = vmatpush1.msra.mxu0 0.0
    %3467 = vmatprep.subr.mxu0 0.0
    %3468 = vmatpush1.msra.mxu0 0.0
    %3469 = vmatprep.subr.mxu0 0.0
    %3470 = vmatpush1.msra.mxu0 0.0
    %3471 = vmatprep.subr.mxu0 0.0
    %3472 = vmatpush1.msra.mxu0 0.0
    %3473 = vmatprep.subr.mxu0 0.0
    %3474 = vmatpush1.msra.mxu0 0.0
    %3475 = vmatprep.subr.mxu0 0.0
    %3476 = vmatpush1.msra.mxu0 0.0
    %3477 = vmatprep.subr.mxu0 0.0
    %3478 = vmatpush1.msra.mxu0 0.0
    %3479 = vmatprep.subr.mxu0 0.0
    %3480 = vmatpush1.msra.mxu0 0.0
    %3481 = vmatprep.subr.mxu0 0.0
    %3482 = vmatpush1.msra.mxu0 0.0
    %3483 = vmatprep.subr.mxu0 0.0
    %3484 = vmatpush1.msra.mxu0 0.0
    %3485 = vmatprep.subr.mxu0 0.0
    %3486 = vmatpush1.msra.mxu0 0.0
    %3487 = vmatprep.subr.mxu0 0.0
    %3488 = vmatpush1.msra.mxu0 0.0
    %3489 = vmatprep.subr.mxu0 0.0
    %3490 = vmatpush1.msra.mxu0 0.0
    %3491 = vmatprep.mubr.f32.mxu0 0.0
    %3492 = vmatmul.mubr.f32.gmra.mrb[0].mxu0 %v3422
    %v3493 = vpop.f32.mrb[0].mxu0
    %v3494 = vadd.f32 %v3419, %v3493
    %v3495 = vpop.f32.mrb[0].mxu0
    %3496 = vmatprep.mubr.f32.mxu0 0.0
    %3497 = vmatmul.mubr.f32.gmra.mrb[0].mxu0 %v3425
    %v3498 = vpop.f32.mrb[0].mxu0
    %v3499 = vadd.f32 %v3419, %v3498
    %v3500 = vpop.f32.mrb[0].mxu0
    %3501 = vdwg.mxu0
    %v3502 = vadd.f32 %v1916, %v3494
    %v3503 = vadd.f32 %v1917, %v3499
    %v3504 = vld [vmem:[#allocation11] sm:$0x1]
    %v3505 = vld [vmem:[#allocation13] sm:$0x1]
    %v3506 = vsel %vm238, %v3502, 0.0
    %3507 = vadd.xlane.f32.xlu0 %v3506
    %v3508 = vpop.xlane.xlu0 %3507
    %v3509 = vsel %vm238, %v3503, 0.0
    %3510 = vadd.xlane.f32.xlu0 %v3509
    %v3511 = vpop.xlane.xlu0 %3510
    %v3512 = vmul.f32 %v3508, %v1881
    %v3513 = vmul.f32 %v3511, %v1881
    %v3514 = vsub.f32 %v3502, %v3512
    %v3515 = vsub.f32 %v3503, %v3513
    %v3516 = vmul.f32 %v3514, %v3514
    %v3517 = vmul.f32 %v3515, %v3515
    %v3518 = vsel %vm238, %v3516, 0.0
    %3519 = vadd.xlane.f32.xlu0 %v3518
    %v3520 = vpop.xlane.xlu0 %3519
    %v3521 = vsel %vm238, %v3517, 0.0
    %3522 = vadd.xlane.f32.xlu0 %v3521
    %v3523 = vpop.xlane.xlu0 %3522
    %v3524 = vmul.f32 %v3520, %v1881
    %v3525 = vmul.f32 %v3523, %v1881
    %v3526 = vadd.f32 %v3524, 1e-05
    %v3527 = vadd.f32 %v3525, 1e-05
    %v3528 = vrsqrt.pop %v3526
    %v3529 = vrsqrt.pop %v3527
    %v3530 = vmul.f32 %v3514, %v3528
    %v3531 = vmul.f32 %v3515, %v3529
    %v3533 = vlaneseq
    %v3534 = vshrl.u32 %v3533, 7
    %v3535 = vsub.s32 0, %v3534
    %v3536 = vrot.slane %v3504, %v3535
    %v3538 = vmul.f32 %v3530, %v3536
    %v3539 = vmul.f32 %v3531, %v3536
    %v3541 = vlaneseq
    %v3542 = vshrl.u32 %v3541, 7
    %v3543 = vsub.s32 0, %v3542
    %v3544 = vrot.slane %v3505, %v3543
    %v3546 = vadd.f32 %v3538, %v3544
    %v3547 = vadd.f32 %v3539, %v3544
    %v3548 = vld [vmem:[#allocation17] sm:$0xff]
    %v3549 = vld [vmem:[#allocation17 + $0x8] sm:$0xff]
    %v3550 = vld [vmem:[#allocation17 + $0x10] sm:$0xff]
    %v3551 = vld [vmem:[#allocation17 + $0x18] sm:$0xff]
    %v3552 = vld [vmem:[#allocation19] sm:$0x1]
    %v3554 = vlaneseq
    %v3555 = vshrl.u32 %v3554, 7
    %v3556 = vsub.s32 0, %v3555
    %v3557 = vrot.slane %v3552, %v3556
    %v3560 = vsel %vm238, %v3546, 0
    %v3563 = vsel %vm238, %v3547, 0
    %3565 = vmatprep.subr.mxu0 0.0
    %3566 = vmatpush1.msra.mxu0 %v3548
    %3567 = vmatprep.subr.mxu0 0.0
    %3568 = vmatpush1.msra.mxu0 %v3549
    %3569 = vmatprep.subr.mxu0 0.0
    %3570 = vmatpush1.msra.mxu0 %v3550
    %3571 = vmatprep.subr.mxu0 0.0
    %3572 = vmatpush1.msra.mxu0 %v3551
    %3573 = vmatprep.subr.mxu0 0.0
    %3574 = vmatpush1.msra.mxu0 0.0
    %3575 = vmatprep.subr.mxu0 0.0
    %3576 = vmatpush1.msra.mxu0 0.0
    %3577 = vmatprep.subr.mxu0 0.0
    %3578 = vmatpush1.msra.mxu0 0.0
    %3579 = vmatprep.subr.mxu0 0.0
    %3580 = vmatpush1.msra.mxu0 0.0
    %3581 = vmatprep.subr.mxu0 0.0
    %3582 = vmatpush1.msra.mxu0 0.0
    %3583 = vmatprep.subr.mxu0 0.0
    %3584 = vmatpush1.msra.mxu0 0.0
    %3585 = vmatprep.subr.mxu0 0.0
    %3586 = vmatpush1.msra.mxu0 0.0
    %3587 = vmatprep.subr.mxu0 0.0
    %3588 = vmatpush1.msra.mxu0 0.0
    %3589 = vmatprep.subr.mxu0 0.0
    %3590 = vmatpush1.msra.mxu0 0.0
    %3591 = vmatprep.subr.mxu0 0.0
    %3592 = vmatpush1.msra.mxu0 0.0
    %3593 = vmatprep.subr.mxu0 0.0
    %3594 = vmatpush1.msra.mxu0 0.0
    %3595 = vmatprep.subr.mxu0 0.0
    %3596 = vmatpush1.msra.mxu0 0.0
    %3597 = vmatprep.subr.mxu0 0.0
    %3598 = vmatpush1.msra.mxu0 0.0
    %3599 = vmatprep.subr.mxu0 0.0
    %3600 = vmatpush1.msra.mxu0 0.0
    %3601 = vmatprep.subr.mxu0 0.0
    %3602 = vmatpush1.msra.mxu0 0.0
    %3603 = vmatprep.subr.mxu0 0.0
    %3604 = vmatpush1.msra.mxu0 0.0
    %3605 = vmatprep.subr.mxu0 0.0
    %3606 = vmatpush1.msra.mxu0 0.0
    %3607 = vmatprep.subr.mxu0 0.0
    %3608 = vmatpush1.msra.mxu0 0.0
    %3609 = vmatprep.subr.mxu0 0.0
    %3610 = vmatpush1.msra.mxu0 0.0
    %3611 = vmatprep.subr.mxu0 0.0
    %3612 = vmatpush1.msra.mxu0 0.0
    %3613 = vmatprep.subr.mxu0 0.0
    %3614 = vmatpush1.msra.mxu0 0.0
    %3615 = vmatprep.subr.mxu0 0.0
    %3616 = vmatpush1.msra.mxu0 0.0
    %3617 = vmatprep.subr.mxu0 0.0
    %3618 = vmatpush1.msra.mxu0 0.0
    %3619 = vmatprep.subr.mxu0 0.0
    %3620 = vmatpush1.msra.mxu0 0.0
    %3621 = vmatprep.subr.mxu0 0.0
    %3622 = vmatpush1.msra.mxu0 0.0
    %3623 = vmatprep.subr.mxu0 0.0
    %3624 = vmatpush1.msra.mxu0 0.0
    %3625 = vmatprep.subr.mxu0 0.0
    %3626 = vmatpush1.msra.mxu0 0.0
    %3627 = vmatprep.subr.mxu0 0.0
    %3628 = vmatpush1.msra.mxu0 0.0
    %3629 = vmatprep.mubr.f32.mxu0 0.0
    %3630 = vmatmul.mubr.f32.gmra.mrb[0].mxu0 %v3560
    %v3631 = vpop.f32.mrb[0].mxu0
    %v3632 = vadd.f32 %v3557, %v3631
    %v3633 = vpop.f32.mrb[0].mxu0
    %3634 = vmatprep.mubr.f32.mxu0 0.0
    %3635 = vmatmul.mubr.f32.gmra.mrb[0].mxu0 %v3563
    %v3636 = vpop.f32.mrb[0].mxu0
    %v3637 = vadd.f32 %v3557, %v3636
    %v3638 = vpop.f32.mrb[0].mxu0
    %3639 = vdwg.mxu0
    %v3640 = vmax.f32 %v3632, 0.0
    %v3641 = vmax.f32 %v3637, 0.0
    %v3642 = vld [vmem:[%s20] sm:$0xff]
    %v3643 = vld [vmem:[%s20 + $0x8] sm:$0xff]
    %v3644 = vld [vmem:[%s20 + $0x10] sm:$0xff]
    %v3645 = vld [vmem:[%s20 + $0x18] sm:$0xff]
    %v3646 = vld [vmem:[%s20 + $0x20] sm:$0xff]
    %v3647 = vld [vmem:[%s20 + $0x28] sm:$0xff]
    %v3648 = vld [vmem:[%s20 + $0x30] sm:$0xff]
    %v3649 = vld [vmem:[%s20 + $0x38] sm:$0xff]
    %v3650 = vld [vmem:[%s21] sm:$0x1]
    %v3652 = vlaneseq
    %v3653 = vshrl.u32 %v3652, 7
    %v3654 = vsub.s32 0, %v3653
    %v3655 = vrot.slane %v3650, %v3654
    %vm3657 = vcmask 523264
    %v3659 = vsel %vm3657, %v3640, 0
    %v3662 = vsel %vm3657, %v3641, 0
    %3664 = vmatprep.subr.mxu0 0.0
    %3665 = vmatpush1.msra.mxu0 %v3642
    %3666 = vmatprep.subr.mxu0 0.0
    %3667 = vmatpush1.msra.mxu0 %v3643
    %3668 = vmatprep.subr.mxu0 0.0
    %3669 = vmatpush1.msra.mxu0 %v3644
    %3670 = vmatprep.subr.mxu0 0.0
    %3671 = vmatpush1.msra.mxu0 %v3645
    %3672 = vmatprep.subr.mxu0 0.0
    %3673 = vmatpush1.msra.mxu0 %v3646
    %3674 = vmatprep.subr.mxu0 0.0
    %3675 = vmatpush1.msra.mxu0 %v3647
    %3676 = vmatprep.subr.mxu0 0.0
    %3677 = vmatpush1.msra.mxu0 %v3648
    %3678 = vmatprep.subr.mxu0 0.0
    %3679 = vmatpush1.msra.mxu0 %v3649
    %3680 = vmatprep.subr.mxu0 0.0
    %3681 = vmatpush1.msra.mxu0 0.0
    %3682 = vmatprep.subr.mxu0 0.0
    %3683 = vmatpush1.msra.mxu0 0.0
    %3684 = vmatprep.subr.mxu0 0.0
    %3685 = vmatpush1.msra.mxu0 0.0
    %3686 = vmatprep.subr.mxu0 0.0
    %3687 = vmatpush1.msra.mxu0 0.0
    %3688 = vmatprep.subr.mxu0 0.0
    %3689 = vmatpush1.msra.mxu0 0.0
    %3690 = vmatprep.subr.mxu0 0.0
    %3691 = vmatpush1.msra.mxu0 0.0
    %3692 = vmatprep.subr.mxu0 0.0
    %3693 = vmatpush1.msra.mxu0 0.0
    %3694 = vmatprep.subr.mxu0 0.0
    %3695 = vmatpush1.msra.mxu0 0.0
    %3696 = vmatprep.subr.mxu0 0.0
    %3697 = vmatpush1.msra.mxu0 0.0
    %3698 = vmatprep.subr.mxu0 0.0
    %3699 = vmatpush1.msra.mxu0 0.0
    %3700 = vmatprep.subr.mxu0 0.0
    %3701 = vmatpush1.msra.mxu0 0.0
    %3702 = vmatprep.subr.mxu0 0.0
    %3703 = vmatpush1.msra.mxu0 0.0
    %3704 = vmatprep.subr.mxu0 0.0
    %3705 = vmatpush1.msra.mxu0 0.0
    %3706 = vmatprep.subr.mxu0 0.0
    %3707 = vmatpush1.msra.mxu0 0.0
    %3708 = vmatprep.subr.mxu0 0.0
    %3709 = vmatpush1.msra.mxu0 0.0
    %3710 = vmatprep.subr.mxu0 0.0
    %3711 = vmatpush1.msra.mxu0 0.0
    %3712 = vmatprep.subr.mxu0 0.0
    %3713 = vmatpush1.msra.mxu0 0.0
    %3714 = vmatprep.subr.mxu0 0.0
    %3715 = vmatpush1.msra.mxu0 0.0
    %3716 = vmatprep.subr.mxu0 0.0
    %3717 = vmatpush1.msra.mxu0 0.0
    %3718 = vmatprep.subr.mxu0 0.0
    %3719 = vmatpush1.msra.mxu0 0.0
    %3720 = vmatprep.subr.mxu0 0.0
    %3721 = vmatpush1.msra.mxu0 0.0
    %3722 = vmatprep.subr.mxu0 0.0
    %3723 = vmatpush1.msra.mxu0 0.0
    %3724 = vmatprep.subr.mxu0 0.0
    %3725 = vmatpush1.msra.mxu0 0.0
    %3726 = vmatprep.subr.mxu0 0.0
    %3727 = vmatpush1.msra.mxu0 0.0
    %3728 = vmatprep.mubr.f32.mxu0 0.0
    %3729 = vmatmul.mubr.f32.gmra.mrb[0].mxu0 %v3659
    %v3730 = vpop.f32.mrb[0].mxu0
    %v3731 = vadd.f32 %v3655, %v3730
    %v3732 = vpop.f32.mrb[0].mxu0
    %3733 = vmatprep.mubr.f32.mxu0 0.0
    %3734 = vmatmul.mubr.f32.gmra.mrb[0].mxu0 %v3662
    %v3735 = vpop.f32.mrb[0].mxu0
    %v3736 = vadd.f32 %v3655, %v3735
    %v3737 = vpop.f32.mrb[0].mxu0
    %3738 = vdwg.mxu0
    %v3739 = vadd.f32 %v3546, %v3731
    %v3740 = vadd.f32 %v3547, %v3736
    %v3741 = vld [vmem:[#allocation14] sm:$0x1]
    %v3742 = vld [vmem:[#allocation16] sm:$0x1]
    %v3743 = vsel %vm238, %v3739, 0.0
    %3744 = vadd.xlane.f32.xlu0 %v3743
    %v3745 = vpop.xlane.xlu0 %3744
    %v3746 = vsel %vm238, %v3740, 0.0
    %3747 = vadd.xlane.f32.xlu0 %v3746
    %v3748 = vpop.xlane.xlu0 %3747
    %v3749 = vmul.f32 %v3745, %v1881
    %v3750 = vmul.f32 %v3748, %v1881
    %v3751 = vsub.f32 %v3739, %v3749
    %v3752 = vsub.f32 %v3740, %v3750
    %v3753 = vmul.f32 %v3751, %v3751
    %v3754 = vmul.f32 %v3752, %v3752
    %v3755 = vsel %vm238, %v3753, 0.0
    %3756 = vadd.xlane.f32.xlu0 %v3755
    %v3757 = vpop.xlane.xlu0 %3756
    %v3758 = vsel %vm238, %v3754, 0.0
    %3759 = vadd.xlane.f32.xlu0 %v3758
    %v3760 = vpop.xlane.xlu0 %3759
    %v3761 = vmul.f32 %v3757, %v1881
    %v3762 = vmul.f32 %v3760, %v1881
    %v3763 = vadd.f32 %v3761, 1e-05
    %v3764 = vadd.f32 %v3762, 1e-05
    %v3765 = vrsqrt.pop %v3763
    %v3766 = vrsqrt.pop %v3764
    %v3767 = vmul.f32 %v3751, %v3765
    %v3768 = vmul.f32 %v3752, %v3766
    %v3770 = vlaneseq
    %v3771 = vshrl.u32 %v3770, 7
    %v3772 = vsub.s32 0, %v3771
    %v3773 = vrot.slane %v3741, %v3772
    %v3775 = vmul.f32 %v3767, %v3773
    %v3776 = vmul.f32 %v3768, %v3773
    %v3778 = vlaneseq
    %v3779 = vshrl.u32 %v3778, 7
    %v3780 = vsub.s32 0, %v3779
    %v3781 = vrot.slane %v3742, %v3780
    %v3783 = vadd.f32 %v3775, %v3781
    %v3784 = vadd.f32 %v3776, %v3781
    %s3785 = scalar_lea.vmem %s2, 32
    %v3786 = vld [vmem:[%s3785] sm:$0xff]
    %v3787 = vld [vmem:[%s3785 + $0x8] sm:$0xff]
    %v3788 = vld [vmem:[%s3785 + $0x10] sm:$0xff]
    %v3789 = vld [vmem:[%s3785 + $0x18] sm:$0xff]
    %s3790 = scalar_lea.vmem %s3, 1
    %v3791 = vld [vmem:[%s3790] sm:$0x1]
    %v3793 = vlaneseq
    %v3794 = vshrl.u32 %v3793, 7
    %v3795 = vsub.s32 0, %v3794
    %v3796 = vrot.slane %v3791, %v3795
    %v3799 = vsel %vm238, %v3783, 0
    %v3802 = vsel %vm238, %v3784, 0
    %3804 = vmatprep.subr.mxu0 0.0
    %3805 = vmatpush1.msra.mxu0 %v3786
    %3806 = vmatprep.subr.mxu0 0.0
    %3807 = vmatpush1.msra.mxu0 %v3787
    %3808 = vmatprep.subr.mxu0 0.0
    %3809 = vmatpush1.msra.mxu0 %v3788
    %3810 = vmatprep.subr.mxu0 0.0
    %3811 = vmatpush1.msra.mxu0 %v3789
    %3812 = vmatprep.subr.mxu0 0.0
    %3813 = vmatpush1.msra.mxu0 0.0
    %3814 = vmatprep.subr.mxu0 0.0
    %3815 = vmatpush1.msra.mxu0 0.0
    %3816 = vmatprep.subr.mxu0 0.0
    %3817 = vmatpush1.msra.mxu0 0.0
    %3818 = vmatprep.subr.mxu0 0.0
    %3819 = vmatpush1.msra.mxu0 0.0
    %3820 = vmatprep.subr.mxu0 0.0
    %3821 = vmatpush1.msra.mxu0 0.0
    %3822 = vmatprep.subr.mxu0 0.0
    %3823 = vmatpush1.msra.mxu0 0.0
    %3824 = vmatprep.subr.mxu0 0.0
    %3825 = vmatpush1.msra.mxu0 0.0
    %3826 = vmatprep.subr.mxu0 0.0
    %3827 = vmatpush1.msra.mxu0 0.0
    %3828 = vmatprep.subr.mxu0 0.0
    %3829 = vmatpush1.msra.mxu0 0.0
    %3830 = vmatprep.subr.mxu0 0.0
    %3831 = vmatpush1.msra.mxu0 0.0
    %3832 = vmatprep.subr.mxu0 0.0
    %3833 = vmatpush1.msra.mxu0 0.0
    %3834 = vmatprep.subr.mxu0 0.0
    %3835 = vmatpush1.msra.mxu0 0.0
    %3836 = vmatprep.subr.mxu0 0.0
    %3837 = vmatpush1.msra.mxu0 0.0
    %3838 = vmatprep.subr.mxu0 0.0
    %3839 = vmatpush1.msra.mxu0 0.0
    %3840 = vmatprep.subr.mxu0 0.0
    %3841 = vmatpush1.msra.mxu0 0.0
    %3842 = vmatprep.subr.mxu0 0.0
    %3843 = vmatpush1.msra.mxu0 0.0
    %3844 = vmatprep.subr.mxu0 0.0
    %3845 = vmatpush1.msra.mxu0 0.0
    %3846 = vmatprep.subr.mxu0 0.0
    %3847 = vmatpush1.msra.mxu0 0.0
    %3848 = vmatprep.subr.mxu0 0.0
    %3849 = vmatpush1.msra.mxu0 0.0
    %3850 = vmatprep.subr.mxu0 0.0
    %3851 = vmatpush1.msra.mxu0 0.0
    %3852 = vmatprep.subr.mxu0 0.0
    %3853 = vmatpush1.msra.mxu0 0.0
    %3854 = vmatprep.subr.mxu0 0.0
    %3855 = vmatpush1.msra.mxu0 0.0
    %3856 = vmatprep.subr.mxu0 0.0
    %3857 = vmatpush1.msra.mxu0 0.0
    %3858 = vmatprep.subr.mxu0 0.0
    %3859 = vmatpush1.msra.mxu0 0.0
    %3860 = vmatprep.subr.mxu0 0.0
    %3861 = vmatpush1.msra.mxu0 0.0
    %3862 = vmatprep.subr.mxu0 0.0
    %3863 = vmatpush1.msra.mxu0 0.0
    %3864 = vmatprep.subr.mxu0 0.0
    %3865 = vmatpush1.msra.mxu0 0.0
    %3866 = vmatprep.subr.mxu0 0.0
    %3867 = vmatpush1.msra.mxu0 0.0
    %3868 = vmatprep.mubr.f32.mxu0 0.0
    %3869 = vmatmul.mubr.f32.gmra.mrb[0].mxu0 %v3799
    %v3870 = vpop.f32.mrb[0].mxu0
    %v3871 = vadd.f32 %v3796, %v3870
    %v3872 = vpop.f32.mrb[0].mxu0
    %3873 = vmatprep.mubr.f32.mxu0 0.0
    %3874 = vmatmul.mubr.f32.gmra.mrb[0].mxu0 %v3802
    %v3875 = vpop.f32.mrb[0].mxu0
    %v3876 = vadd.f32 %v3796, %v3875
    %v3877 = vpop.f32.mrb[0].mxu0
    %3878 = vdwg.mxu0
    %3880 = vrot.lane.b32.xlu0 %v3871, 96
    %v3881 = vpop.permute.xlu0 %3880
    %v3882 = vsel %vm431, %v3871, 0
    %v3884 = vsel %vm431, %v3881, 0
    %3886 = vmatprep.subr.mxu0 0.0
    %3887 = vmatpush1.xpose.msra.mxu0 %v3884
    %3888 = vmatprep.subr.mxu0 0.0
    %3889 = vmatpush1.xpose.msra.mxu0 0.0
    %3890 = vmatprep.subr.mxu0 0.0
    %3891 = vmatpush1.xpose.msra.mxu0 0.0
    %3892 = vmatprep.subr.mxu0 0.0
    %3893 = vmatpush1.xpose.msra.mxu0 0.0
    %3894 = vmatprep.subr.mxu0 0.0
    %3895 = vmatpush1.xpose.msra.mxu0 0.0
    %3896 = vmatprep.subr.mxu0 0.0
    %3897 = vmatpush1.xpose.msra.mxu0 0.0
    %3898 = vmatprep.subr.mxu0 0.0
    %3899 = vmatpush1.xpose.msra.mxu0 0.0
    %3900 = vmatprep.subr.mxu0 0.0
    %3901 = vmatpush1.xpose.msra.mxu0 0.0
    %3902 = vmatprep.subr.mxu0 0.0
    %3903 = vmatpush1.xpose.msra.mxu0 0.0
    %3904 = vmatprep.subr.mxu0 0.0
    %3905 = vmatpush1.xpose.msra.mxu0 0.0
    %3906 = vmatprep.subr.mxu0 0.0
    %3907 = vmatpush1.xpose.msra.mxu0 0.0
    %3908 = vmatprep.subr.mxu0 0.0
    %3909 = vmatpush1.xpose.msra.mxu0 0.0
    %3910 = vmatprep.subr.mxu0 0.0
    %3911 = vmatpush1.xpose.msra.mxu0 0.0
    %3912 = vmatprep.subr.mxu0 0.0
    %3913 = vmatpush1.xpose.msra.mxu0 0.0
    %3914 = vmatprep.subr.mxu0 0.0
    %3915 = vmatpush1.xpose.msra.mxu0 0.0
    %3916 = vmatprep.subr.mxu0 0.0
    %3917 = vmatpush1.xpose.msra.mxu0 0.0
    %3918 = vmatprep.subr.mxu0 0.0
    %3919 = vmatpush1.xpose.msra.mxu0 0.0
    %3920 = vmatprep.subr.mxu0 0.0
    %3921 = vmatpush1.xpose.msra.mxu0 0.0
    %3922 = vmatprep.subr.mxu0 0.0
    %3923 = vmatpush1.xpose.msra.mxu0 0.0
    %3924 = vmatprep.subr.mxu0 0.0
    %3925 = vmatpush1.xpose.msra.mxu0 0.0
    %3926 = vmatprep.subr.mxu0 0.0
    %3927 = vmatpush1.xpose.msra.mxu0 0.0
    %3928 = vmatprep.subr.mxu0 0.0
    %3929 = vmatpush1.xpose.msra.mxu0 0.0
    %3930 = vmatprep.subr.mxu0 0.0
    %3931 = vmatpush1.xpose.msra.mxu0 0.0
    %3932 = vmatprep.subr.mxu0 0.0
    %3933 = vmatpush1.xpose.msra.mxu0 0.0
    %3934 = vmatprep.subr.mxu0 0.0
    %3935 = vmatpush1.xpose.msra.mxu0 0.0
    %3936 = vmatprep.subr.mxu0 0.0
    %3937 = vmatpush1.xpose.msra.mxu0 0.0
    %3938 = vmatprep.subr.mxu0 0.0
    %3939 = vmatpush1.xpose.msra.mxu0 0.0
    %3940 = vmatprep.subr.mxu0 0.0
    %3941 = vmatpush1.xpose.msra.mxu0 0.0
    %3942 = vmatprep.subr.mxu0 0.0
    %3943 = vmatpush1.xpose.msra.mxu0 0.0
    %3944 = vmatprep.subr.mxu0 0.0
    %3945 = vmatpush1.xpose.msra.mxu0 0.0
    %3946 = vmatprep.subr.mxu0 0.0
    %3947 = vmatpush1.xpose.msra.mxu0 0.0
    %3948 = vmatprep.subr.mxu0 0.0
    %3949 = vmatpush1.xpose.msra.mxu0 0.0
    %3950 = vmatprep.mubr.f32.mxu0 0.0
    %3951 = vmatmul.mubr.f32.gmra.mrb[0].mxu0 %v3882
    %v3952 = vpop.f32.mrb[0].mxu0
    %v3953 = vadd.f32 0.0, %v3952
    %v3954 = vpop.f32.mrb[0].mxu0
    %3955 = vdwg.mxu0
    %3957 = vrot.lane.b32.xlu0 %v3876, 96
    %v3958 = vpop.permute.xlu0 %3957
    %v3959 = vsel %vm431, %v3876, 0
    %v3961 = vsel %vm431, %v3958, 0
    %3963 = vmatprep.subr.mxu0 0.0
    %3964 = vmatpush1.xpose.msra.mxu0 %v3961
    %3965 = vmatprep.subr.mxu0 0.0
    %3966 = vmatpush1.xpose.msra.mxu0 0.0
    %3967 = vmatprep.subr.mxu0 0.0
    %3968 = vmatpush1.xpose.msra.mxu0 0.0
    %3969 = vmatprep.subr.mxu0 0.0
    %3970 = vmatpush1.xpose.msra.mxu0 0.0
    %3971 = vmatprep.subr.mxu0 0.0
    %3972 = vmatpush1.xpose.msra.mxu0 0.0
    %3973 = vmatprep.subr.mxu0 0.0
    %3974 = vmatpush1.xpose.msra.mxu0 0.0
    %3975 = vmatprep.subr.mxu0 0.0
    %3976 = vmatpush1.xpose.msra.mxu0 0.0
    %3977 = vmatprep.subr.mxu0 0.0
    %3978 = vmatpush1.xpose.msra.mxu0 0.0
    %3979 = vmatprep.subr.mxu0 0.0
    %3980 = vmatpush1.xpose.msra.mxu0 0.0
    %3981 = vmatprep.subr.mxu0 0.0
    %3982 = vmatpush1.xpose.msra.mxu0 0.0
    %3983 = vmatprep.subr.mxu0 0.0
    %3984 = vmatpush1.xpose.msra.mxu0 0.0
    %3985 = vmatprep.subr.mxu0 0.0
    %3986 = vmatpush1.xpose.msra.mxu0 0.0
    %3987 = vmatprep.subr.mxu0 0.0
    %3988 = vmatpush1.xpose.msra.mxu0 0.0
    %3989 = vmatprep.subr.mxu0 0.0
    %3990 = vmatpush1.xpose.msra.mxu0 0.0
    %3991 = vmatprep.subr.mxu0 0.0
    %3992 = vmatpush1.xpose.msra.mxu0 0.0
    %3993 = vmatprep.subr.mxu0 0.0
    %3994 = vmatpush1.xpose.msra.mxu0 0.0
    %3995 = vmatprep.subr.mxu0 0.0
    %3996 = vmatpush1.xpose.msra.mxu0 0.0
    %3997 = vmatprep.subr.mxu0 0.0
    %3998 = vmatpush1.xpose.msra.mxu0 0.0
    %3999 = vmatprep.subr.mxu0 0.0
    %4000 = vmatpush1.xpose.msra.mxu0 0.0
    %4001 = vmatprep.subr.mxu0 0.0
    %4002 = vmatpush1.xpose.msra.mxu0 0.0
    %4003 = vmatprep.subr.mxu0 0.0
    %4004 = vmatpush1.xpose.msra.mxu0 0.0
    %4005 = vmatprep.subr.mxu0 0.0
    %4006 = vmatpush1.xpose.msra.mxu0 0.0
    %4007 = vmatprep.subr.mxu0 0.0
    %4008 = vmatpush1.xpose.msra.mxu0 0.0
    %4009 = vmatprep.subr.mxu0 0.0
    %4010 = vmatpush1.xpose.msra.mxu0 0.0
    %4011 = vmatprep.subr.mxu0 0.0
    %4012 = vmatpush1.xpose.msra.mxu0 0.0
    %4013 = vmatprep.subr.mxu0 0.0
    %4014 = vmatpush1.xpose.msra.mxu0 0.0
    %4015 = vmatprep.subr.mxu0 0.0
    %4016 = vmatpush1.xpose.msra.mxu0 0.0
    %4017 = vmatprep.subr.mxu0 0.0
    %4018 = vmatpush1.xpose.msra.mxu0 0.0
    %4019 = vmatprep.subr.mxu0 0.0
    %4020 = vmatpush1.xpose.msra.mxu0 0.0
    %4021 = vmatprep.subr.mxu0 0.0
    %4022 = vmatpush1.xpose.msra.mxu0 0.0
    %4023 = vmatprep.subr.mxu0 0.0
    %4024 = vmatpush1.xpose.msra.mxu0 0.0
    %4025 = vmatprep.subr.mxu0 0.0
    %4026 = vmatpush1.xpose.msra.mxu0 0.0
    %4027 = vmatprep.mubr.f32.mxu0 0.0
    %4028 = vmatmul.mubr.f32.gmra.mrb[0].mxu0 %v3959
    %v4029 = vpop.f32.mrb[0].mxu0
    %v4030 = vadd.f32 0.0, %v4029
    %v4031 = vpop.f32.mrb[0].mxu0
    %4032 = vdwg.mxu0
    %v4033 = vsel %vm431, %v3953, -inf
    %4034 = vmax.xlane.f32.xlu0 %v4033
    %v4035 = vpop.xlane.xlu0 %4034
    %v4036 = vsel %vm431, %v4030, -inf
    %4037 = vmax.xlane.f32.xlu0 %v4036
    %v4038 = vpop.xlane.xlu0 %4037
    %v4039 = vsub.f32 %v3953, %v4035
    %v4040 = vsub.f32 %v4030, %v4038
    %v4041 = vmul.f32 %v4039, 1.442695
    %v4042 = vpow.pop %v4041
    %v4043 = vmul.f32 %v4040, 1.442695
    %v4044 = vpow.pop %v4043
    %v4045 = vsel %vm431, %v4042, 0.0
    %4046 = vadd.xlane.f32.xlu0 %v4045
    %v4047 = vpop.xlane.xlu0 %4046
    %v4048 = vsel %vm431, %v4044, 0.0
    %4049 = vadd.xlane.f32.xlu0 %v4048
    %v4050 = vpop.xlane.xlu0 %4049
    %v4051 = vrcp.pop %v4047
    %v4052 = vrcp.pop %v4050
    %v4053 = vmul.f32 %v4042, %v4051
    %v4054 = vmul.f32 %v4044, %v4052
    %4055 = vrot.lane.b32.xlu0 %v3871, 64
    %v4056 = vpop.permute.xlu0 %4055
    %v4059 = vsel %vm431, %v4053, 0
    %4061 = vmatprep.subr.mxu0 0.0
    %4062 = vmatpush1.msra.mxu0 %v4056
    %4063 = vmatprep.subr.mxu0 0.0
    %4064 = vmatpush1.msra.mxu0 0.0
    %4065 = vmatprep.subr.mxu0 0.0
    %4066 = vmatpush1.msra.mxu0 0.0
    %4067 = vmatprep.subr.mxu0 0.0
    %4068 = vmatpush1.msra.mxu0 0.0
    %4069 = vmatprep.subr.mxu0 0.0
    %4070 = vmatpush1.msra.mxu0 0.0
    %4071 = vmatprep.subr.mxu0 0.0
    %4072 = vmatpush1.msra.mxu0 0.0
    %4073 = vmatprep.subr.mxu0 0.0
    %4074 = vmatpush1.msra.mxu0 0.0
    %4075 = vmatprep.subr.mxu0 0.0
    %4076 = vmatpush1.msra.mxu0 0.0
    %4077 = vmatprep.subr.mxu0 0.0
    %4078 = vmatpush1.msra.mxu0 0.0
    %4079 = vmatprep.subr.mxu0 0.0
    %4080 = vmatpush1.msra.mxu0 0.0
    %4081 = vmatprep.subr.mxu0 0.0
    %4082 = vmatpush1.msra.mxu0 0.0
    %4083 = vmatprep.subr.mxu0 0.0
    %4084 = vmatpush1.msra.mxu0 0.0
    %4085 = vmatprep.subr.mxu0 0.0
    %4086 = vmatpush1.msra.mxu0 0.0
    %4087 = vmatprep.subr.mxu0 0.0
    %4088 = vmatpush1.msra.mxu0 0.0
    %4089 = vmatprep.subr.mxu0 0.0
    %4090 = vmatpush1.msra.mxu0 0.0
    %4091 = vmatprep.subr.mxu0 0.0
    %4092 = vmatpush1.msra.mxu0 0.0
    %4093 = vmatprep.subr.mxu0 0.0
    %4094 = vmatpush1.msra.mxu0 0.0
    %4095 = vmatprep.subr.mxu0 0.0
    %4096 = vmatpush1.msra.mxu0 0.0
    %4097 = vmatprep.subr.mxu0 0.0
    %4098 = vmatpush1.msra.mxu0 0.0
    %4099 = vmatprep.subr.mxu0 0.0
    %4100 = vmatpush1.msra.mxu0 0.0
    %4101 = vmatprep.subr.mxu0 0.0
    %4102 = vmatpush1.msra.mxu0 0.0
    %4103 = vmatprep.subr.mxu0 0.0
    %4104 = vmatpush1.msra.mxu0 0.0
    %4105 = vmatprep.subr.mxu0 0.0
    %4106 = vmatpush1.msra.mxu0 0.0
    %4107 = vmatprep.subr.mxu0 0.0
    %4108 = vmatpush1.msra.mxu0 0.0
    %4109 = vmatprep.subr.mxu0 0.0
    %4110 = vmatpush1.msra.mxu0 0.0
    %4111 = vmatprep.subr.mxu0 0.0
    %4112 = vmatpush1.msra.mxu0 0.0
    %4113 = vmatprep.subr.mxu0 0.0
    %4114 = vmatpush1.msra.mxu0 0.0
    %4115 = vmatprep.subr.mxu0 0.0
    %4116 = vmatpush1.msra.mxu0 0.0
    %4117 = vmatprep.subr.mxu0 0.0
    %4118 = vmatpush1.msra.mxu0 0.0
    %4119 = vmatprep.subr.mxu0 0.0
    %4120 = vmatpush1.msra.mxu0 0.0
    %4121 = vmatprep.subr.mxu0 0.0
    %4122 = vmatpush1.msra.mxu0 0.0
    %4123 = vmatprep.subr.mxu0 0.0
    %4124 = vmatpush1.msra.mxu0 0.0
    %4125 = vmatprep.mubr.f32.mxu0 0.0
    %4126 = vmatmul.mubr.f32.gmra.mrb[0].mxu0 %v4059
    %v4127 = vpop.f32.mrb[0].mxu0
    %v4128 = vadd.f32 0.0, %v4127
    %v4129 = vpop.f32.mrb[0].mxu0
    %4130 = vdwg.mxu0
    %4131 = vrot.lane.b32.xlu0 %v3876, 64
    %v4132 = vpop.permute.xlu0 %4131
    %v4135 = vsel %vm431, %v4054, 0
    %4137 = vmatprep.subr.mxu0 0.0
    %4138 = vmatpush1.msra.mxu0 %v4132
    %4139 = vmatprep.subr.mxu0 0.0
    %4140 = vmatpush1.msra.mxu0 0.0
    %4141 = vmatprep.subr.mxu0 0.0
    %4142 = vmatpush1.msra.mxu0 0.0
    %4143 = vmatprep.subr.mxu0 0.0
    %4144 = vmatpush1.msra.mxu0 0.0
    %4145 = vmatprep.subr.mxu0 0.0
    %4146 = vmatpush1.msra.mxu0 0.0
    %4147 = vmatprep.subr.mxu0 0.0
    %4148 = vmatpush1.msra.mxu0 0.0
    %4149 = vmatprep.subr.mxu0 0.0
    %4150 = vmatpush1.msra.mxu0 0.0
    %4151 = vmatprep.subr.mxu0 0.0
    %4152 = vmatpush1.msra.mxu0 0.0
    %4153 = vmatprep.subr.mxu0 0.0
    %4154 = vmatpush1.msra.mxu0 0.0
    %4155 = vmatprep.subr.mxu0 0.0
    %4156 = vmatpush1.msra.mxu0 0.0
    %4157 = vmatprep.subr.mxu0 0.0
    %4158 = vmatpush1.msra.mxu0 0.0
    %4159 = vmatprep.subr.mxu0 0.0
    %4160 = vmatpush1.msra.mxu0 0.0
    %4161 = vmatprep.subr.mxu0 0.0
    %4162 = vmatpush1.msra.mxu0 0.0
    %4163 = vmatprep.subr.mxu0 0.0
    %4164 = vmatpush1.msra.mxu0 0.0
    %4165 = vmatprep.subr.mxu0 0.0
    %4166 = vmatpush1.msra.mxu0 0.0
    %4167 = vmatprep.subr.mxu0 0.0
    %4168 = vmatpush1.msra.mxu0 0.0
    %4169 = vmatprep.subr.mxu0 0.0
    %4170 = vmatpush1.msra.mxu0 0.0
    %4171 = vmatprep.subr.mxu0 0.0
    %4172 = vmatpush1.msra.mxu0 0.0
    %4173 = vmatprep.subr.mxu0 0.0
    %4174 = vmatpush1.msra.mxu0 0.0
    %4175 = vmatprep.subr.mxu0 0.0
    %4176 = vmatpush1.msra.mxu0 0.0
    %4177 = vmatprep.subr.mxu0 0.0
    %4178 = vmatpush1.msra.mxu0 0.0
    %4179 = vmatprep.subr.mxu0 0.0
    %4180 = vmatpush1.msra.mxu0 0.0
    %4181 = vmatprep.subr.mxu0 0.0
    %4182 = vmatpush1.msra.mxu0 0.0
    %4183 = vmatprep.subr.mxu0 0.0
    %4184 = vmatpush1.msra.mxu0 0.0
    %4185 = vmatprep.subr.mxu0 0.0
    %4186 = vmatpush1.msra.mxu0 0.0
    %4187 = vmatprep.subr.mxu0 0.0
    %4188 = vmatpush1.msra.mxu0 0.0
    %4189 = vmatprep.subr.mxu0 0.0
    %4190 = vmatpush1.msra.mxu0 0.0
    %4191 = vmatprep.subr.mxu0 0.0
    %4192 = vmatpush1.msra.mxu0 0.0
    %4193 = vmatprep.subr.mxu0 0.0
    %4194 = vmatpush1.msra.mxu0 0.0
    %4195 = vmatprep.subr.mxu0 0.0
    %4196 = vmatpush1.msra.mxu0 0.0
    %4197 = vmatprep.subr.mxu0 0.0
    %4198 = vmatpush1.msra.mxu0 0.0
    %4199 = vmatprep.subr.mxu0 0.0
    %4200 = vmatpush1.msra.mxu0 0.0
    %4201 = vmatprep.mubr.f32.mxu0 0.0
    %4202 = vmatmul.mubr.f32.gmra.mrb[0].mxu0 %v4135
    %v4203 = vpop.f32.mrb[0].mxu0
    %v4204 = vadd.f32 0.0, %v4203
    %v4205 = vpop.f32.mrb[0].mxu0
    %4206 = vdwg.mxu0
    %4207 = vrot.lane.b32.xlu0 %v3871, 120
    %v4208 = vpop.permute.xlu0 %4207
    %4209 = vrot.lane.b32.xlu0 %v3871, 88
    %v4210 = vpop.permute.xlu0 %4209
    %v4211 = vsel %vm431, %v4208, 0
    %v4213 = vsel %vm431, %v4210, 0
    %4215 = vmatprep.subr.mxu0 0.0
    %4216 = vmatpush1.xpose.msra.mxu0 %v4213
    %4217 = vmatprep.subr.mxu0 0.0
    %4218 = vmatpush1.xpose.msra.mxu0 0.0
    %4219 = vmatprep.subr.mxu0 0.0
    %4220 = vmatpush1.xpose.msra.mxu0 0.0
    %4221 = vmatprep.subr.mxu0 0.0
    %4222 = vmatpush1.xpose.msra.mxu0 0.0
    %4223 = vmatprep.subr.mxu0 0.0
    %4224 = vmatpush1.xpose.msra.mxu0 0.0
    %4225 = vmatprep.subr.mxu0 0.0
    %4226 = vmatpush1.xpose.msra.mxu0 0.0
    %4227 = vmatprep.subr.mxu0 0.0
    %4228 = vmatpush1.xpose.msra.mxu0 0.0
    %4229 = vmatprep.subr.mxu0 0.0
    %4230 = vmatpush1.xpose.msra.mxu0 0.0
    %4231 = vmatprep.subr.mxu0 0.0
    %4232 = vmatpush1.xpose.msra.mxu0 0.0
    %4233 = vmatprep.subr.mxu0 0.0
    %4234 = vmatpush1.xpose.msra.mxu0 0.0
    %4235 = vmatprep.subr.mxu0 0.0
    %4236 = vmatpush1.xpose.msra.mxu0 0.0
    %4237 = vmatprep.subr.mxu0 0.0
    %4238 = vmatpush1.xpose.msra.mxu0 0.0
    %4239 = vmatprep.subr.mxu0 0.0
    %4240 = vmatpush1.xpose.msra.mxu0 0.0
    %4241 = vmatprep.subr.mxu0 0.0
    %4242 = vmatpush1.xpose.msra.mxu0 0.0
    %4243 = vmatprep.subr.mxu0 0.0
    %4244 = vmatpush1.xpose.msra.mxu0 0.0
    %4245 = vmatprep.subr.mxu0 0.0
    %4246 = vmatpush1.xpose.msra.mxu0 0.0
    %4247 = vmatprep.subr.mxu0 0.0
    %4248 = vmatpush1.xpose.msra.mxu0 0.0
    %4249 = vmatprep.subr.mxu0 0.0
    %4250 = vmatpush1.xpose.msra.mxu0 0.0
    %4251 = vmatprep.subr.mxu0 0.0
    %4252 = vmatpush1.xpose.msra.mxu0 0.0
    %4253 = vmatprep.subr.mxu0 0.0
    %4254 = vmatpush1.xpose.msra.mxu0 0.0
    %4255 = vmatprep.subr.mxu0 0.0
    %4256 = vmatpush1.xpose.msra.mxu0 0.0
    %4257 = vmatprep.subr.mxu0 0.0
    %4258 = vmatpush1.xpose.msra.mxu0 0.0
    %4259 = vmatprep.subr.mxu0 0.0
    %4260 = vmatpush1.xpose.msra.mxu0 0.0
    %4261 = vmatprep.subr.mxu0 0.0
    %4262 = vmatpush1.xpose.msra.mxu0 0.0
    %4263 = vmatprep.subr.mxu0 0.0
    %4264 = vmatpush1.xpose.msra.mxu0 0.0
    %4265 = vmatprep.subr.mxu0 0.0
    %4266 = vmatpush1.xpose.msra.mxu0 0.0
    %4267 = vmatprep.subr.mxu0 0.0
    %4268 = vmatpush1.xpose.msra.mxu0 0.0
    %4269 = vmatprep.subr.mxu0 0.0
    %4270 = vmatpush1.xpose.msra.mxu0 0.0
    %4271 = vmatprep.subr.mxu0 0.0
    %4272 = vmatpush1.xpose.msra.mxu0 0.0
    %4273 = vmatprep.subr.mxu0 0.0
    %4274 = vmatpush1.xpose.msra.mxu0 0.0
    %4275 = vmatprep.subr.mxu0 0.0
    %4276 = vmatpush1.xpose.msra.mxu0 0.0
    %4277 = vmatprep.subr.mxu0 0.0
    %4278 = vmatpush1.xpose.msra.mxu0 0.0
    %4279 = vmatprep.mubr.f32.mxu0 0.0
    %4280 = vmatmul.mubr.f32.gmra.mrb[0].mxu0 %v4211
    %v4281 = vpop.f32.mrb[0].mxu0
    %v4282 = vadd.f32 0.0, %v4281
    %v4283 = vpop.f32.mrb[0].mxu0
    %4284 = vdwg.mxu0
    %4285 = vrot.lane.b32.xlu0 %v3876, 120
    %v4286 = vpop.permute.xlu0 %4285
    %4287 = vrot.lane.b32.xlu0 %v3876, 88
    %v4288 = vpop.permute.xlu0 %4287
    %v4289 = vsel %vm431, %v4286, 0
    %v4291 = vsel %vm431, %v4288, 0
    %4293 = vmatprep.subr.mxu0 0.0
    %4294 = vmatpush1.xpose.msra.mxu0 %v4291
    %4295 = vmatprep.subr.mxu0 0.0
    %4296 = vmatpush1.xpose.msra.mxu0 0.0
    %4297 = vmatprep.subr.mxu0 0.0
    %4298 = vmatpush1.xpose.msra.mxu0 0.0
    %4299 = vmatprep.subr.mxu0 0.0
    %4300 = vmatpush1.xpose.msra.mxu0 0.0
    %4301 = vmatprep.subr.mxu0 0.0
    %4302 = vmatpush1.xpose.msra.mxu0 0.0
    %4303 = vmatprep.subr.mxu0 0.0
    %4304 = vmatpush1.xpose.msra.mxu0 0.0
    %4305 = vmatprep.subr.mxu0 0.0
    %4306 = vmatpush1.xpose.msra.mxu0 0.0
    %4307 = vmatprep.subr.mxu0 0.0
    %4308 = vmatpush1.xpose.msra.mxu0 0.0
    %4309 = vmatprep.subr.mxu0 0.0
    %4310 = vmatpush1.xpose.msra.mxu0 0.0
    %4311 = vmatprep.subr.mxu0 0.0
    %4312 = vmatpush1.xpose.msra.mxu0 0.0
    %4313 = vmatprep.subr.mxu0 0.0
    %4314 = vmatpush1.xpose.msra.mxu0 0.0
    %4315 = vmatprep.subr.mxu0 0.0
    %4316 = vmatpush1.xpose.msra.mxu0 0.0
    %4317 = vmatprep.subr.mxu0 0.0
    %4318 = vmatpush1.xpose.msra.mxu0 0.0
    %4319 = vmatprep.subr.mxu0 0.0
    %4320 = vmatpush1.xpose.msra.mxu0 0.0
    %4321 = vmatprep.subr.mxu0 0.0
    %4322 = vmatpush1.xpose.msra.mxu0 0.0
    %4323 = vmatprep.subr.mxu0 0.0
    %4324 = vmatpush1.xpose.msra.mxu0 0.0
    %4325 = vmatprep.subr.mxu0 0.0
    %4326 = vmatpush1.xpose.msra.mxu0 0.0
    %4327 = vmatprep.subr.mxu0 0.0
    %4328 = vmatpush1.xpose.msra.mxu0 0.0
    %4329 = vmatprep.subr.mxu0 0.0
    %4330 = vmatpush1.xpose.msra.mxu0 0.0
    %4331 = vmatprep.subr.mxu0 0.0
    %4332 = vmatpush1.xpose.msra.mxu0 0.0
    %4333 = vmatprep.subr.mxu0 0.0
    %4334 = vmatpush1.xpose.msra.mxu0 0.0
    %4335 = vmatprep.subr.mxu0 0.0
    %4336 = vmatpush1.xpose.msra.mxu0 0.0
    %4337 = vmatprep.subr.mxu0 0.0
    %4338 = vmatpush1.xpose.msra.mxu0 0.0
    %4339 = vmatprep.subr.mxu0 0.0
    %4340 = vmatpush1.xpose.msra.mxu0 0.0
    %4341 = vmatprep.subr.mxu0 0.0
    %4342 = vmatpush1.xpose.msra.mxu0 0.0
    %4343 = vmatprep.subr.mxu0 0.0
    %4344 = vmatpush1.xpose.msra.mxu0 0.0
    %4345 = vmatprep.subr.mxu0 0.0
    %4346 = vmatpush1.xpose.msra.mxu0 0.0
    %4347 = vmatprep.subr.mxu0 0.0
    %4348 = vmatpush1.xpose.msra.mxu0 0.0
    %4349 = vmatprep.subr.mxu0 0.0
    %4350 = vmatpush1.xpose.msra.mxu0 0.0
    %4351 = vmatprep.subr.mxu0 0.0
    %4352 = vmatpush1.xpose.msra.mxu0 0.0
    %4353 = vmatprep.subr.mxu0 0.0
    %4354 = vmatpush1.xpose.msra.mxu0 0.0
    %4355 = vmatprep.subr.mxu0 0.0
    %4356 = vmatpush1.xpose.msra.mxu0 0.0
    %4357 = vmatprep.mubr.f32.mxu0 0.0
    %4358 = vmatmul.mubr.f32.gmra.mrb[0].mxu0 %v4289
    %v4359 = vpop.f32.mrb[0].mxu0
    %v4360 = vadd.f32 0.0, %v4359
    %v4361 = vpop.f32.mrb[0].mxu0
    %4362 = vdwg.mxu0
    %v4363 = vsel %vm431, %v4282, -inf
    %4364 = vmax.xlane.f32.xlu0 %v4363
    %v4365 = vpop.xlane.xlu0 %4364
    %v4366 = vsel %vm431, %v4360, -inf
    %4367 = vmax.xlane.f32.xlu0 %v4366
    %v4368 = vpop.xlane.xlu0 %4367
    %v4369 = vsub.f32 %v4282, %v4365
    %v4370 = vsub.f32 %v4360, %v4368
    %v4371 = vmul.f32 %v4369, 1.442695
    %v4372 = vpow.pop %v4371
    %v4373 = vmul.f32 %v4370, 1.442695
    %v4374 = vpow.pop %v4373
    %v4375 = vsel %vm431, %v4372, 0.0
    %4376 = vadd.xlane.f32.xlu0 %v4375
    %v4377 = vpop.xlane.xlu0 %4376
    %v4378 = vsel %vm431, %v4374, 0.0
    %4379 = vadd.xlane.f32.xlu0 %v4378
    %v4380 = vpop.xlane.xlu0 %4379
    %v4381 = vrcp.pop %v4377
    %v4382 = vrcp.pop %v4380
    %v4383 = vmul.f32 %v4372, %v4381
    %v4384 = vmul.f32 %v4374, %v4382
    %4385 = vrot.lane.b32.xlu0 %v3871, 56
    %v4386 = vpop.permute.xlu0 %4385
    %v4389 = vsel %vm431, %v4383, 0
    %4391 = vmatprep.subr.mxu0 0.0
    %4392 = vmatpush1.msra.mxu0 %v4386
    %4393 = vmatprep.subr.mxu0 0.0
    %4394 = vmatpush1.msra.mxu0 0.0
    %4395 = vmatprep.subr.mxu0 0.0
    %4396 = vmatpush1.msra.mxu0 0.0
    %4397 = vmatprep.subr.mxu0 0.0
    %4398 = vmatpush1.msra.mxu0 0.0
    %4399 = vmatprep.subr.mxu0 0.0
    %4400 = vmatpush1.msra.mxu0 0.0
    %4401 = vmatprep.subr.mxu0 0.0
    %4402 = vmatpush1.msra.mxu0 0.0
    %4403 = vmatprep.subr.mxu0 0.0
    %4404 = vmatpush1.msra.mxu0 0.0
    %4405 = vmatprep.subr.mxu0 0.0
    %4406 = vmatpush1.msra.mxu0 0.0
    %4407 = vmatprep.subr.mxu0 0.0
    %4408 = vmatpush1.msra.mxu0 0.0
    %4409 = vmatprep.subr.mxu0 0.0
    %4410 = vmatpush1.msra.mxu0 0.0
    %4411 = vmatprep.subr.mxu0 0.0
    %4412 = vmatpush1.msra.mxu0 0.0
    %4413 = vmatprep.subr.mxu0 0.0
    %4414 = vmatpush1.msra.mxu0 0.0
    %4415 = vmatprep.subr.mxu0 0.0
    %4416 = vmatpush1.msra.mxu0 0.0
    %4417 = vmatprep.subr.mxu0 0.0
    %4418 = vmatpush1.msra.mxu0 0.0
    %4419 = vmatprep.subr.mxu0 0.0
    %4420 = vmatpush1.msra.mxu0 0.0
    %4421 = vmatprep.subr.mxu0 0.0
    %4422 = vmatpush1.msra.mxu0 0.0
    %4423 = vmatprep.subr.mxu0 0.0
    %4424 = vmatpush1.msra.mxu0 0.0
    %4425 = vmatprep.subr.mxu0 0.0
    %4426 = vmatpush1.msra.mxu0 0.0
    %4427 = vmatprep.subr.mxu0 0.0
    %4428 = vmatpush1.msra.mxu0 0.0
    %4429 = vmatprep.subr.mxu0 0.0
    %4430 = vmatpush1.msra.mxu0 0.0
    %4431 = vmatprep.subr.mxu0 0.0
    %4432 = vmatpush1.msra.mxu0 0.0
    %4433 = vmatprep.subr.mxu0 0.0
    %4434 = vmatpush1.msra.mxu0 0.0
    %4435 = vmatprep.subr.mxu0 0.0
    %4436 = vmatpush1.msra.mxu0 0.0
    %4437 = vmatprep.subr.mxu0 0.0
    %4438 = vmatpush1.msra.mxu0 0.0
    %4439 = vmatprep.subr.mxu0 0.0
    %4440 = vmatpush1.msra.mxu0 0.0
    %4441 = vmatprep.subr.mxu0 0.0
    %4442 = vmatpush1.msra.mxu0 0.0
    %4443 = vmatprep.subr.mxu0 0.0
    %4444 = vmatpush1.msra.mxu0 0.0
    %4445 = vmatprep.subr.mxu0 0.0
    %4446 = vmatpush1.msra.mxu0 0.0
    %4447 = vmatprep.subr.mxu0 0.0
    %4448 = vmatpush1.msra.mxu0 0.0
    %4449 = vmatprep.subr.mxu0 0.0
    %4450 = vmatpush1.msra.mxu0 0.0
    %4451 = vmatprep.subr.mxu0 0.0
    %4452 = vmatpush1.msra.mxu0 0.0
    %4453 = vmatprep.subr.mxu0 0.0
    %4454 = vmatpush1.msra.mxu0 0.0
    %4455 = vmatprep.mubr.f32.mxu0 0.0
    %4456 = vmatmul.mubr.f32.gmra.mrb[0].mxu0 %v4389
    %v4457 = vpop.f32.mrb[0].mxu0
    %v4458 = vadd.f32 0.0, %v4457
    %v4459 = vpop.f32.mrb[0].mxu0
    %4460 = vdwg.mxu0
    %4461 = vrot.lane.b32.xlu0 %v3876, 56
    %v4462 = vpop.permute.xlu0 %4461
    %v4465 = vsel %vm431, %v4384, 0
    %4467 = vmatprep.subr.mxu0 0.0
    %4468 = vmatpush1.msra.mxu0 %v4462
    %4469 = vmatprep.subr.mxu0 0.0
    %4470 = vmatpush1.msra.mxu0 0.0
    %4471 = vmatprep.subr.mxu0 0.0
    %4472 = vmatpush1.msra.mxu0 0.0
    %4473 = vmatprep.subr.mxu0 0.0
    %4474 = vmatpush1.msra.mxu0 0.0
    %4475 = vmatprep.subr.mxu0 0.0
    %4476 = vmatpush1.msra.mxu0 0.0
    %4477 = vmatprep.subr.mxu0 0.0
    %4478 = vmatpush1.msra.mxu0 0.0
    %4479 = vmatprep.subr.mxu0 0.0
    %4480 = vmatpush1.msra.mxu0 0.0
    %4481 = vmatprep.subr.mxu0 0.0
    %4482 = vmatpush1.msra.mxu0 0.0
    %4483 = vmatprep.subr.mxu0 0.0
    %4484 = vmatpush1.msra.mxu0 0.0
    %4485 = vmatprep.subr.mxu0 0.0
    %4486 = vmatpush1.msra.mxu0 0.0
    %4487 = vmatprep.subr.mxu0 0.0
    %4488 = vmatpush1.msra.mxu0 0.0
    %4489 = vmatprep.subr.mxu0 0.0
    %4490 = vmatpush1.msra.mxu0 0.0
    %4491 = vmatprep.subr.mxu0 0.0
    %4492 = vmatpush1.msra.mxu0 0.0
    %4493 = vmatprep.subr.mxu0 0.0
    %4494 = vmatpush1.msra.mxu0 0.0
    %4495 = vmatprep.subr.mxu0 0.0
    %4496 = vmatpush1.msra.mxu0 0.0
    %4497 = vmatprep.subr.mxu0 0.0
    %4498 = vmatpush1.msra.mxu0 0.0
    %4499 = vmatprep.subr.mxu0 0.0
    %4500 = vmatpush1.msra.mxu0 0.0
    %4501 = vmatprep.subr.mxu0 0.0
    %4502 = vmatpush1.msra.mxu0 0.0
    %4503 = vmatprep.subr.mxu0 0.0
    %4504 = vmatpush1.msra.mxu0 0.0
    %4505 = vmatprep.subr.mxu0 0.0
    %4506 = vmatpush1.msra.mxu0 0.0
    %4507 = vmatprep.subr.mxu0 0.0
    %4508 = vmatpush1.msra.mxu0 0.0
    %4509 = vmatprep.subr.mxu0 0.0
    %4510 = vmatpush1.msra.mxu0 0.0
    %4511 = vmatprep.subr.mxu0 0.0
    %4512 = vmatpush1.msra.mxu0 0.0
    %4513 = vmatprep.subr.mxu0 0.0
    %4514 = vmatpush1.msra.mxu0 0.0
    %4515 = vmatprep.subr.mxu0 0.0
    %4516 = vmatpush1.msra.mxu0 0.0
    %4517 = vmatprep.subr.mxu0 0.0
    %4518 = vmatpush1.msra.mxu0 0.0
    %4519 = vmatprep.subr.mxu0 0.0
    %4520 = vmatpush1.msra.mxu0 0.0
    %4521 = vmatprep.subr.mxu0 0.0
    %4522 = vmatpush1.msra.mxu0 0.0
    %4523 = vmatprep.subr.mxu0 0.0
    %4524 = vmatpush1.msra.mxu0 0.0
    %4525 = vmatprep.subr.mxu0 0.0
    %4526 = vmatpush1.msra.mxu0 0.0
    %4527 = vmatprep.subr.mxu0 0.0
    %4528 = vmatpush1.msra.mxu0 0.0
    %4529 = vmatprep.subr.mxu0 0.0
    %4530 = vmatpush1.msra.mxu0 0.0
    %4531 = vmatprep.mubr.f32.mxu0 0.0
    %4532 = vmatmul.mubr.f32.gmra.mrb[0].mxu0 %v4465
    %v4533 = vpop.f32.mrb[0].mxu0
    %v4534 = vadd.f32 0.0, %v4533
    %v4535 = vpop.f32.mrb[0].mxu0
    %4536 = vdwg.mxu0
    %4537 = vrot.lane.b32.xlu0 %v3871, 112
    %v4538 = vpop.permute.xlu0 %4537
    %4539 = vrot.lane.b32.xlu0 %v3871, 80
    %v4540 = vpop.permute.xlu0 %4539
    %v4541 = vsel %vm431, %v4538, 0
    %v4543 = vsel %vm431, %v4540, 0
    %4545 = vmatprep.subr.mxu0 0.0
    %4546 = vmatpush1.xpose.msra.mxu0 %v4543
    %4547 = vmatprep.subr.mxu0 0.0
    %4548 = vmatpush1.xpose.msra.mxu0 0.0
    %4549 = vmatprep.subr.mxu0 0.0
    %4550 = vmatpush1.xpose.msra.mxu0 0.0
    %4551 = vmatprep.subr.mxu0 0.0
    %4552 = vmatpush1.xpose.msra.mxu0 0.0
    %4553 = vmatprep.subr.mxu0 0.0
    %4554 = vmatpush1.xpose.msra.mxu0 0.0
    %4555 = vmatprep.subr.mxu0 0.0
    %4556 = vmatpush1.xpose.msra.mxu0 0.0
    %4557 = vmatprep.subr.mxu0 0.0
    %4558 = vmatpush1.xpose.msra.mxu0 0.0
    %4559 = vmatprep.subr.mxu0 0.0
    %4560 = vmatpush1.xpose.msra.mxu0 0.0
    %4561 = vmatprep.subr.mxu0 0.0
    %4562 = vmatpush1.xpose.msra.mxu0 0.0
    %4563 = vmatprep.subr.mxu0 0.0
    %4564 = vmatpush1.xpose.msra.mxu0 0.0
    %4565 = vmatprep.subr.mxu0 0.0
    %4566 = vmatpush1.xpose.msra.mxu0 0.0
    %4567 = vmatprep.subr.mxu0 0.0
    %4568 = vmatpush1.xpose.msra.mxu0 0.0
    %4569 = vmatprep.subr.mxu0 0.0
    %4570 = vmatpush1.xpose.msra.mxu0 0.0
    %4571 = vmatprep.subr.mxu0 0.0
    %4572 = vmatpush1.xpose.msra.mxu0 0.0
    %4573 = vmatprep.subr.mxu0 0.0
    %4574 = vmatpush1.xpose.msra.mxu0 0.0
    %4575 = vmatprep.subr.mxu0 0.0
    %4576 = vmatpush1.xpose.msra.mxu0 0.0
    %4577 = vmatprep.subr.mxu0 0.0
    %4578 = vmatpush1.xpose.msra.mxu0 0.0
    %4579 = vmatprep.subr.mxu0 0.0
    %4580 = vmatpush1.xpose.msra.mxu0 0.0
    %4581 = vmatprep.subr.mxu0 0.0
    %4582 = vmatpush1.xpose.msra.mxu0 0.0
    %4583 = vmatprep.subr.mxu0 0.0
    %4584 = vmatpush1.xpose.msra.mxu0 0.0
    %4585 = vmatprep.subr.mxu0 0.0
    %4586 = vmatpush1.xpose.msra.mxu0 0.0
    %4587 = vmatprep.subr.mxu0 0.0
    %4588 = vmatpush1.xpose.msra.mxu0 0.0
    %4589 = vmatprep.subr.mxu0 0.0
    %4590 = vmatpush1.xpose.msra.mxu0 0.0
    %4591 = vmatprep.subr.mxu0 0.0
    %4592 = vmatpush1.xpose.msra.mxu0 0.0
    %4593 = vmatprep.subr.mxu0 0.0
    %4594 = vmatpush1.xpose.msra.mxu0 0.0
    %4595 = vmatprep.subr.mxu0 0.0
    %4596 = vmatpush1.xpose.msra.mxu0 0.0
    %4597 = vmatprep.subr.mxu0 0.0
    %4598 = vmatpush1.xpose.msra.mxu0 0.0
    %4599 = vmatprep.subr.mxu0 0.0
    %4600 = vmatpush1.xpose.msra.mxu0 0.0
    %4601 = vmatprep.subr.mxu0 0.0
    %4602 = vmatpush1.xpose.msra.mxu0 0.0
    %4603 = vmatprep.subr.mxu0 0.0
    %4604 = vmatpush1.xpose.msra.mxu0 0.0
    %4605 = vmatprep.subr.mxu0 0.0
    %4606 = vmatpush1.xpose.msra.mxu0 0.0
    %4607 = vmatprep.subr.mxu0 0.0
    %4608 = vmatpush1.xpose.msra.mxu0 0.0
    %4609 = vmatprep.mubr.f32.mxu0 0.0
    %4610 = vmatmul.mubr.f32.gmra.mrb[0].mxu0 %v4541
    %v4611 = vpop.f32.mrb[0].mxu0
    %v4612 = vadd.f32 0.0, %v4611
    %v4613 = vpop.f32.mrb[0].mxu0
    %4614 = vdwg.mxu0
    %4615 = vrot.lane.b32.xlu0 %v3876, 112
    %v4616 = vpop.permute.xlu0 %4615
    %4617 = vrot.lane.b32.xlu0 %v3876, 80
    %v4618 = vpop.permute.xlu0 %4617
    %v4619 = vsel %vm431, %v4616, 0
    %v4621 = vsel %vm431, %v4618, 0
    %4623 = vmatprep.subr.mxu0 0.0
    %4624 = vmatpush1.xpose.msra.mxu0 %v4621
    %4625 = vmatprep.subr.mxu0 0.0
    %4626 = vmatpush1.xpose.msra.mxu0 0.0
    %4627 = vmatprep.subr.mxu0 0.0
    %4628 = vmatpush1.xpose.msra.mxu0 0.0
    %4629 = vmatprep.subr.mxu0 0.0
    %4630 = vmatpush1.xpose.msra.mxu0 0.0
    %4631 = vmatprep.subr.mxu0 0.0
    %4632 = vmatpush1.xpose.msra.mxu0 0.0
    %4633 = vmatprep.subr.mxu0 0.0
    %4634 = vmatpush1.xpose.msra.mxu0 0.0
    %4635 = vmatprep.subr.mxu0 0.0
    %4636 = vmatpush1.xpose.msra.mxu0 0.0
    %4637 = vmatprep.subr.mxu0 0.0
    %4638 = vmatpush1.xpose.msra.mxu0 0.0
    %4639 = vmatprep.subr.mxu0 0.0
    %4640 = vmatpush1.xpose.msra.mxu0 0.0
    %4641 = vmatprep.subr.mxu0 0.0
    %4642 = vmatpush1.xpose.msra.mxu0 0.0
    %4643 = vmatprep.subr.mxu0 0.0
    %4644 = vmatpush1.xpose.msra.mxu0 0.0
    %4645 = vmatprep.subr.mxu0 0.0
    %4646 = vmatpush1.xpose.msra.mxu0 0.0
    %4647 = vmatprep.subr.mxu0 0.0
    %4648 = vmatpush1.xpose.msra.mxu0 0.0
    %4649 = vmatprep.subr.mxu0 0.0
    %4650 = vmatpush1.xpose.msra.mxu0 0.0
    %4651 = vmatprep.subr.mxu0 0.0
    %4652 = vmatpush1.xpose.msra.mxu0 0.0
    %4653 = vmatprep.subr.mxu0 0.0
    %4654 = vmatpush1.xpose.msra.mxu0 0.0
    %4655 = vmatprep.subr.mxu0 0.0
    %4656 = vmatpush1.xpose.msra.mxu0 0.0
    %4657 = vmatprep.subr.mxu0 0.0
    %4658 = vmatpush1.xpose.msra.mxu0 0.0
    %4659 = vmatprep.subr.mxu0 0.0
    %4660 = vmatpush1.xpose.msra.mxu0 0.0
    %4661 = vmatprep.subr.mxu0 0.0
    %4662 = vmatpush1.xpose.msra.mxu0 0.0
    %4663 = vmatprep.subr.mxu0 0.0
    %4664 = vmatpush1.xpose.msra.mxu0 0.0
    %4665 = vmatprep.subr.mxu0 0.0
    %4666 = vmatpush1.xpose.msra.mxu0 0.0
    %4667 = vmatprep.subr.mxu0 0.0
    %4668 = vmatpush1.xpose.msra.mxu0 0.0
    %4669 = vmatprep.subr.mxu0 0.0
    %4670 = vmatpush1.xpose.msra.mxu0 0.0
    %4671 = vmatprep.subr.mxu0 0.0
    %4672 = vmatpush1.xpose.msra.mxu0 0.0
    %4673 = vmatprep.subr.mxu0 0.0
    %4674 = vmatpush1.xpose.msra.mxu0 0.0
    %4675 = vmatprep.subr.mxu0 0.0
    %4676 = vmatpush1.xpose.msra.mxu0 0.0
    %4677 = vmatprep.subr.mxu0 0.0
    %4678 = vmatpush1.xpose.msra.mxu0 0.0
    %4679 = vmatprep.subr.mxu0 0.0
    %4680 = vmatpush1.xpose.msra.mxu0 0.0
    %4681 = vmatprep.subr.mxu0 0.0
    %4682 = vmatpush1.xpose.msra.mxu0 0.0
    %4683 = vmatprep.subr.mxu0 0.0
    %4684 = vmatpush1.xpose.msra.mxu0 0.0
    %4685 = vmatprep.subr.mxu0 0.0
    %4686 = vmatpush1.xpose.msra.mxu0 0.0
    %4687 = vmatprep.mubr.f32.mxu0 0.0
    %4688 = vmatmul.mubr.f32.gmra.mrb[0].mxu0 %v4619
    %v4689 = vpop.f32.mrb[0].mxu0
    %v4690 = vadd.f32 0.0, %v4689
    %v4691 = vpop.f32.mrb[0].mxu0
    %4692 = vdwg.mxu0
    %v4693 = vsel %vm431, %v4612, -inf
    %4694 = vmax.xlane.f32.xlu0 %v4693
    %v4695 = vpop.xlane.xlu0 %4694
    %v4696 = vsel %vm431, %v4690, -inf
    %4697 = vmax.xlane.f32.xlu0 %v4696
    %v4698 = vpop.xlane.xlu0 %4697
    %v4699 = vsub.f32 %v4612, %v4695
    %v4700 = vsub.f32 %v4690, %v4698
    %v4701 = vmul.f32 %v4699, 1.442695
    %v4702 = vpow.pop %v4701
    %v4703 = vmul.f32 %v4700, 1.442695
    %v4704 = vpow.pop %v4703
    %v4705 = vsel %vm431, %v4702, 0.0
    %4706 = vadd.xlane.f32.xlu0 %v4705
    %v4707 = vpop.xlane.xlu0 %4706
    %v4708 = vsel %vm431, %v4704, 0.0
    %4709 = vadd.xlane.f32.xlu0 %v4708
    %v4710 = vpop.xlane.xlu0 %4709
    %v4711 = vrcp.pop %v4707
    %v4712 = vrcp.pop %v4710
    %v4713 = vmul.f32 %v4702, %v4711
    %v4714 = vmul.f32 %v4704, %v4712
    %4715 = vrot.lane.b32.xlu0 %v3871, 48
    %v4716 = vpop.permute.xlu0 %4715
    %v4719 = vsel %vm431, %v4713, 0
    %4721 = vmatprep.subr.mxu0 0.0
    %4722 = vmatpush1.msra.mxu0 %v4716
    %4723 = vmatprep.subr.mxu0 0.0
    %4724 = vmatpush1.msra.mxu0 0.0
    %4725 = vmatprep.subr.mxu0 0.0
    %4726 = vmatpush1.msra.mxu0 0.0
    %4727 = vmatprep.subr.mxu0 0.0
    %4728 = vmatpush1.msra.mxu0 0.0
    %4729 = vmatprep.subr.mxu0 0.0
    %4730 = vmatpush1.msra.mxu0 0.0
    %4731 = vmatprep.subr.mxu0 0.0
    %4732 = vmatpush1.msra.mxu0 0.0
    %4733 = vmatprep.subr.mxu0 0.0
    %4734 = vmatpush1.msra.mxu0 0.0
    %4735 = vmatprep.subr.mxu0 0.0
    %4736 = vmatpush1.msra.mxu0 0.0
    %4737 = vmatprep.subr.mxu0 0.0
    %4738 = vmatpush1.msra.mxu0 0.0
    %4739 = vmatprep.subr.mxu0 0.0
    %4740 = vmatpush1.msra.mxu0 0.0
    %4741 = vmatprep.subr.mxu0 0.0
    %4742 = vmatpush1.msra.mxu0 0.0
    %4743 = vmatprep.subr.mxu0 0.0
    %4744 = vmatpush1.msra.mxu0 0.0
    %4745 = vmatprep.subr.mxu0 0.0
    %4746 = vmatpush1.msra.mxu0 0.0
    %4747 = vmatprep.subr.mxu0 0.0
    %4748 = vmatpush1.msra.mxu0 0.0
    %4749 = vmatprep.subr.mxu0 0.0
    %4750 = vmatpush1.msra.mxu0 0.0
    %4751 = vmatprep.subr.mxu0 0.0
    %4752 = vmatpush1.msra.mxu0 0.0
    %4753 = vmatprep.subr.mxu0 0.0
    %4754 = vmatpush1.msra.mxu0 0.0
    %4755 = vmatprep.subr.mxu0 0.0
    %4756 = vmatpush1.msra.mxu0 0.0
    %4757 = vmatprep.subr.mxu0 0.0
    %4758 = vmatpush1.msra.mxu0 0.0
    %4759 = vmatprep.subr.mxu0 0.0
    %4760 = vmatpush1.msra.mxu0 0.0
    %4761 = vmatprep.subr.mxu0 0.0
    %4762 = vmatpush1.msra.mxu0 0.0
    %4763 = vmatprep.subr.mxu0 0.0
    %4764 = vmatpush1.msra.mxu0 0.0
    %4765 = vmatprep.subr.mxu0 0.0
    %4766 = vmatpush1.msra.mxu0 0.0
    %4767 = vmatprep.subr.mxu0 0.0
    %4768 = vmatpush1.msra.mxu0 0.0
    %4769 = vmatprep.subr.mxu0 0.0
    %4770 = vmatpush1.msra.mxu0 0.0
    %4771 = vmatprep.subr.mxu0 0.0
    %4772 = vmatpush1.msra.mxu0 0.0
    %4773 = vmatprep.subr.mxu0 0.0
    %4774 = vmatpush1.msra.mxu0 0.0
    %4775 = vmatprep.subr.mxu0 0.0
    %4776 = vmatpush1.msra.mxu0 0.0
    %4777 = vmatprep.subr.mxu0 0.0
    %4778 = vmatpush1.msra.mxu0 0.0
    %4779 = vmatprep.subr.mxu0 0.0
    %4780 = vmatpush1.msra.mxu0 0.0
    %4781 = vmatprep.subr.mxu0 0.0
    %4782 = vmatpush1.msra.mxu0 0.0
    %4783 = vmatprep.subr.mxu0 0.0
    %4784 = vmatpush1.msra.mxu0 0.0
    %4785 = vmatprep.mubr.f32.mxu0 0.0
    %4786 = vmatmul.mubr.f32.gmra.mrb[0].mxu0 %v4719
    %v4787 = vpop.f32.mrb[0].mxu0
    %v4788 = vadd.f32 0.0, %v4787
    %v4789 = vpop.f32.mrb[0].mxu0
    %4790 = vdwg.mxu0
    %4791 = vrot.lane.b32.xlu0 %v3876, 48
    %v4792 = vpop.permute.xlu0 %4791
    %v4795 = vsel %vm431, %v4714, 0
    %4797 = vmatprep.subr.mxu0 0.0
    %4798 = vmatpush1.msra.mxu0 %v4792
    %4799 = vmatprep.subr.mxu0 0.0
    %4800 = vmatpush1.msra.mxu0 0.0
    %4801 = vmatprep.subr.mxu0 0.0
    %4802 = vmatpush1.msra.mxu0 0.0
    %4803 = vmatprep.subr.mxu0 0.0
    %4804 = vmatpush1.msra.mxu0 0.0
    %4805 = vmatprep.subr.mxu0 0.0
    %4806 = vmatpush1.msra.mxu0 0.0
    %4807 = vmatprep.subr.mxu0 0.0
    %4808 = vmatpush1.msra.mxu0 0.0
    %4809 = vmatprep.subr.mxu0 0.0
    %4810 = vmatpush1.msra.mxu0 0.0
    %4811 = vmatprep.subr.mxu0 0.0
    %4812 = vmatpush1.msra.mxu0 0.0
    %4813 = vmatprep.subr.mxu0 0.0
    %4814 = vmatpush1.msra.mxu0 0.0
    %4815 = vmatprep.subr.mxu0 0.0
    %4816 = vmatpush1.msra.mxu0 0.0
    %4817 = vmatprep.subr.mxu0 0.0
    %4818 = vmatpush1.msra.mxu0 0.0
    %4819 = vmatprep.subr.mxu0 0.0
    %4820 = vmatpush1.msra.mxu0 0.0
    %4821 = vmatprep.subr.mxu0 0.0
    %4822 = vmatpush1.msra.mxu0 0.0
    %4823 = vmatprep.subr.mxu0 0.0
    %4824 = vmatpush1.msra.mxu0 0.0
    %4825 = vmatprep.subr.mxu0 0.0
    %4826 = vmatpush1.msra.mxu0 0.0
    %4827 = vmatprep.subr.mxu0 0.0
    %4828 = vmatpush1.msra.mxu0 0.0
    %4829 = vmatprep.subr.mxu0 0.0
    %4830 = vmatpush1.msra.mxu0 0.0
    %4831 = vmatprep.subr.mxu0 0.0
    %4832 = vmatpush1.msra.mxu0 0.0
    %4833 = vmatprep.subr.mxu0 0.0
    %4834 = vmatpush1.msra.mxu0 0.0
    %4835 = vmatprep.subr.mxu0 0.0
    %4836 = vmatpush1.msra.mxu0 0.0
    %4837 = vmatprep.subr.mxu0 0.0
    %4838 = vmatpush1.msra.mxu0 0.0
    %4839 = vmatprep.subr.mxu0 0.0
    %4840 = vmatpush1.msra.mxu0 0.0
    %4841 = vmatprep.subr.mxu0 0.0
    %4842 = vmatpush1.msra.mxu0 0.0
    %4843 = vmatprep.subr.mxu0 0.0
    %4844 = vmatpush1.msra.mxu0 0.0
    %4845 = vmatprep.subr.mxu0 0.0
    %4846 = vmatpush1.msra.mxu0 0.0
    %4847 = vmatprep.subr.mxu0 0.0
    %4848 = vmatpush1.msra.mxu0 0.0
    %4849 = vmatprep.subr.mxu0 0.0
    %4850 = vmatpush1.msra.mxu0 0.0
    %4851 = vmatprep.subr.mxu0 0.0
    %4852 = vmatpush1.msra.mxu0 0.0
    %4853 = vmatprep.subr.mxu0 0.0
    %4854 = vmatpush1.msra.mxu0 0.0
    %4855 = vmatprep.subr.mxu0 0.0
    %4856 = vmatpush1.msra.mxu0 0.0
    %4857 = vmatprep.subr.mxu0 0.0
    %4858 = vmatpush1.msra.mxu0 0.0
    %4859 = vmatprep.subr.mxu0 0.0
    %4860 = vmatpush1.msra.mxu0 0.0
    %4861 = vmatprep.mubr.f32.mxu0 0.0
    %4862 = vmatmul.mubr.f32.gmra.mrb[0].mxu0 %v4795
    %v4863 = vpop.f32.mrb[0].mxu0
    %v4864 = vadd.f32 0.0, %v4863
    %v4865 = vpop.f32.mrb[0].mxu0
    %4866 = vdwg.mxu0
    %4867 = vrot.lane.b32.xlu0 %v3871, 104
    %v4868 = vpop.permute.xlu0 %4867
    %4869 = vrot.lane.b32.xlu0 %v3871, 72
    %v4870 = vpop.permute.xlu0 %4869
    %v4871 = vsel %vm431, %v4868, 0
    %v4873 = vsel %vm431, %v4870, 0
    %4875 = vmatprep.subr.mxu0 0.0
    %4876 = vmatpush1.xpose.msra.mxu0 %v4873
    %4877 = vmatprep.subr.mxu0 0.0
    %4878 = vmatpush1.xpose.msra.mxu0 0.0
    %4879 = vmatprep.subr.mxu0 0.0
    %4880 = vmatpush1.xpose.msra.mxu0 0.0
    %4881 = vmatprep.subr.mxu0 0.0
    %4882 = vmatpush1.xpose.msra.mxu0 0.0
    %4883 = vmatprep.subr.mxu0 0.0
    %4884 = vmatpush1.xpose.msra.mxu0 0.0
    %4885 = vmatprep.subr.mxu0 0.0
    %4886 = vmatpush1.xpose.msra.mxu0 0.0
    %4887 = vmatprep.subr.mxu0 0.0
    %4888 = vmatpush1.xpose.msra.mxu0 0.0
    %4889 = vmatprep.subr.mxu0 0.0
    %4890 = vmatpush1.xpose.msra.mxu0 0.0
    %4891 = vmatprep.subr.mxu0 0.0
    %4892 = vmatpush1.xpose.msra.mxu0 0.0
    %4893 = vmatprep.subr.mxu0 0.0
    %4894 = vmatpush1.xpose.msra.mxu0 0.0
    %4895 = vmatprep.subr.mxu0 0.0
    %4896 = vmatpush1.xpose.msra.mxu0 0.0
    %4897 = vmatprep.subr.mxu0 0.0
    %4898 = vmatpush1.xpose.msra.mxu0 0.0
    %4899 = vmatprep.subr.mxu0 0.0
    %4900 = vmatpush1.xpose.msra.mxu0 0.0
    %4901 = vmatprep.subr.mxu0 0.0
    %4902 = vmatpush1.xpose.msra.mxu0 0.0
    %4903 = vmatprep.subr.mxu0 0.0
    %4904 = vmatpush1.xpose.msra.mxu0 0.0
    %4905 = vmatprep.subr.mxu0 0.0
    %4906 = vmatpush1.xpose.msra.mxu0 0.0
    %4907 = vmatprep.subr.mxu0 0.0
    %4908 = vmatpush1.xpose.msra.mxu0 0.0
    %4909 = vmatprep.subr.mxu0 0.0
    %4910 = vmatpush1.xpose.msra.mxu0 0.0
    %4911 = vmatprep.subr.mxu0 0.0
    %4912 = vmatpush1.xpose.msra.mxu0 0.0
    %4913 = vmatprep.subr.mxu0 0.0
    %4914 = vmatpush1.xpose.msra.mxu0 0.0
    %4915 = vmatprep.subr.mxu0 0.0
    %4916 = vmatpush1.xpose.msra.mxu0 0.0
    %4917 = vmatprep.subr.mxu0 0.0
    %4918 = vmatpush1.xpose.msra.mxu0 0.0
    %4919 = vmatprep.subr.mxu0 0.0
    %4920 = vmatpush1.xpose.msra.mxu0 0.0
    %4921 = vmatprep.subr.mxu0 0.0
    %4922 = vmatpush1.xpose.msra.mxu0 0.0
    %4923 = vmatprep.subr.mxu0 0.0
    %4924 = vmatpush1.xpose.msra.mxu0 0.0
    %4925 = vmatprep.subr.mxu0 0.0
    %4926 = vmatpush1.xpose.msra.mxu0 0.0
    %4927 = vmatprep.subr.mxu0 0.0
    %4928 = vmatpush1.xpose.msra.mxu0 0.0
    %4929 = vmatprep.subr.mxu0 0.0
    %4930 = vmatpush1.xpose.msra.mxu0 0.0
    %4931 = vmatprep.subr.mxu0 0.0
    %4932 = vmatpush1.xpose.msra.mxu0 0.0
    %4933 = vmatprep.subr.mxu0 0.0
    %4934 = vmatpush1.xpose.msra.mxu0 0.0
    %4935 = vmatprep.subr.mxu0 0.0
    %4936 = vmatpush1.xpose.msra.mxu0 0.0
    %4937 = vmatprep.subr.mxu0 0.0
    %4938 = vmatpush1.xpose.msra.mxu0 0.0
    %4939 = vmatprep.mubr.f32.mxu0 0.0
    %4940 = vmatmul.mubr.f32.gmra.mrb[0].mxu0 %v4871
    %v4941 = vpop.f32.mrb[0].mxu0
    %v4942 = vadd.f32 0.0, %v4941
    %v4943 = vpop.f32.mrb[0].mxu0
    %4944 = vdwg.mxu0
    %4945 = vrot.lane.b32.xlu0 %v3876, 104
    %v4946 = vpop.permute.xlu0 %4945
    %4947 = vrot.lane.b32.xlu0 %v3876, 72
    %v4948 = vpop.permute.xlu0 %4947
    %v4949 = vsel %vm431, %v4946, 0
    %v4951 = vsel %vm431, %v4948, 0
    %4953 = vmatprep.subr.mxu0 0.0
    %4954 = vmatpush1.xpose.msra.mxu0 %v4951
    %4955 = vmatprep.subr.mxu0 0.0
    %4956 = vmatpush1.xpose.msra.mxu0 0.0
    %4957 = vmatprep.subr.mxu0 0.0
    %4958 = vmatpush1.xpose.msra.mxu0 0.0
    %4959 = vmatprep.subr.mxu0 0.0
    %4960 = vmatpush1.xpose.msra.mxu0 0.0
    %4961 = vmatprep.subr.mxu0 0.0
    %4962 = vmatpush1.xpose.msra.mxu0 0.0
    %4963 = vmatprep.subr.mxu0 0.0
    %4964 = vmatpush1.xpose.msra.mxu0 0.0
    %4965 = vmatprep.subr.mxu0 0.0
    %4966 = vmatpush1.xpose.msra.mxu0 0.0
    %4967 = vmatprep.subr.mxu0 0.0
    %4968 = vmatpush1.xpose.msra.mxu0 0.0
    %4969 = vmatprep.subr.mxu0 0.0
    %4970 = vmatpush1.xpose.msra.mxu0 0.0
    %4971 = vmatprep.subr.mxu0 0.0
    %4972 = vmatpush1.xpose.msra.mxu0 0.0
    %4973 = vmatprep.subr.mxu0 0.0
    %4974 = vmatpush1.xpose.msra.mxu0 0.0
    %4975 = vmatprep.subr.mxu0 0.0
    %4976 = vmatpush1.xpose.msra.mxu0 0.0
    %4977 = vmatprep.subr.mxu0 0.0
    %4978 = vmatpush1.xpose.msra.mxu0 0.0
    %4979 = vmatprep.subr.mxu0 0.0
    %4980 = vmatpush1.xpose.msra.mxu0 0.0
    %4981 = vmatprep.subr.mxu0 0.0
    %4982 = vmatpush1.xpose.msra.mxu0 0.0
    %4983 = vmatprep.subr.mxu0 0.0
    %4984 = vmatpush1.xpose.msra.mxu0 0.0
    %4985 = vmatprep.subr.mxu0 0.0
    %4986 = vmatpush1.xpose.msra.mxu0 0.0
    %4987 = vmatprep.subr.mxu0 0.0
    %4988 = vmatpush1.xpose.msra.mxu0 0.0
    %4989 = vmatprep.subr.mxu0 0.0
    %4990 = vmatpush1.xpose.msra.mxu0 0.0
    %4991 = vmatprep.subr.mxu0 0.0
    %4992 = vmatpush1.xpose.msra.mxu0 0.0
    %4993 = vmatprep.subr.mxu0 0.0
    %4994 = vmatpush1.xpose.msra.mxu0 0.0
    %4995 = vmatprep.subr.mxu0 0.0
    %4996 = vmatpush1.xpose.msra.mxu0 0.0
    %4997 = vmatprep.subr.mxu0 0.0
    %4998 = vmatpush1.xpose.msra.mxu0 0.0
    %4999 = vmatprep.subr.mxu0 0.0
    %5000 = vmatpush1.xpose.msra.mxu0 0.0
    %5001 = vmatprep.subr.mxu0 0.0
    %5002 = vmatpush1.xpose.msra.mxu0 0.0
    %5003 = vmatprep.subr.mxu0 0.0
    %5004 = vmatpush1.xpose.msra.mxu0 0.0
    %5005 = vmatprep.subr.mxu0 0.0
    %5006 = vmatpush1.xpose.msra.mxu0 0.0
    %5007 = vmatprep.subr.mxu0 0.0
    %5008 = vmatpush1.xpose.msra.mxu0 0.0
    %5009 = vmatprep.subr.mxu0 0.0
    %5010 = vmatpush1.xpose.msra.mxu0 0.0
    %5011 = vmatprep.subr.mxu0 0.0
    %5012 = vmatpush1.xpose.msra.mxu0 0.0
    %5013 = vmatprep.subr.mxu0 0.0
    %5014 = vmatpush1.xpose.msra.mxu0 0.0
    %5015 = vmatprep.subr.mxu0 0.0
    %5016 = vmatpush1.xpose.msra.mxu0 0.0
    %5017 = vmatprep.mubr.f32.mxu0 0.0
    %5018 = vmatmul.mubr.f32.gmra.mrb[0].mxu0 %v4949
    %v5019 = vpop.f32.mrb[0].mxu0
    %v5020 = vadd.f32 0.0, %v5019
    %v5021 = vpop.f32.mrb[0].mxu0
    %5022 = vdwg.mxu0
    %v5023 = vsel %vm431, %v4942, -inf
    %5024 = vmax.xlane.f32.xlu0 %v5023
    %v5025 = vpop.xlane.xlu0 %5024
    %v5026 = vsel %vm431, %v5020, -inf
    %5027 = vmax.xlane.f32.xlu0 %v5026
    %v5028 = vpop.xlane.xlu0 %5027
    %v5029 = vsub.f32 %v4942, %v5025
    %v5030 = vsub.f32 %v5020, %v5028
    %v5031 = vmul.f32 %v5029, 1.442695
    %v5032 = vpow.pop %v5031
    %v5033 = vmul.f32 %v5030, 1.442695
    %v5034 = vpow.pop %v5033
    %v5035 = vsel %vm431, %v5032, 0.0
    %5036 = vadd.xlane.f32.xlu0 %v5035
    %v5037 = vpop.xlane.xlu0 %5036
    %v5038 = vsel %vm431, %v5034, 0.0
    %5039 = vadd.xlane.f32.xlu0 %v5038
    %v5040 = vpop.xlane.xlu0 %5039
    %v5041 = vrcp.pop %v5037
    %v5042 = vrcp.pop %v5040
    %v5043 = vmul.f32 %v5032, %v5041
    %v5044 = vmul.f32 %v5034, %v5042
    %5045 = vrot.lane.b32.xlu0 %v3871, 40
    %v5046 = vpop.permute.xlu0 %5045
    %v5049 = vsel %vm431, %v5043, 0
    %5051 = vmatprep.subr.mxu0 0.0
    %5052 = vmatpush1.msra.mxu0 %v5046
    %5053 = vmatprep.subr.mxu0 0.0
    %5054 = vmatpush1.msra.mxu0 0.0
    %5055 = vmatprep.subr.mxu0 0.0
    %5056 = vmatpush1.msra.mxu0 0.0
    %5057 = vmatprep.subr.mxu0 0.0
    %5058 = vmatpush1.msra.mxu0 0.0
    %5059 = vmatprep.subr.mxu0 0.0
    %5060 = vmatpush1.msra.mxu0 0.0
    %5061 = vmatprep.subr.mxu0 0.0
    %5062 = vmatpush1.msra.mxu0 0.0
    %5063 = vmatprep.subr.mxu0 0.0
    %5064 = vmatpush1.msra.mxu0 0.0
    %5065 = vmatprep.subr.mxu0 0.0
    %5066 = vmatpush1.msra.mxu0 0.0
    %5067 = vmatprep.subr.mxu0 0.0
    %5068 = vmatpush1.msra.mxu0 0.0
    %5069 = vmatprep.subr.mxu0 0.0
    %5070 = vmatpush1.msra.mxu0 0.0
    %5071 = vmatprep.subr.mxu0 0.0
    %5072 = vmatpush1.msra.mxu0 0.0
    %5073 = vmatprep.subr.mxu0 0.0
    %5074 = vmatpush1.msra.mxu0 0.0
    %5075 = vmatprep.subr.mxu0 0.0
    %5076 = vmatpush1.msra.mxu0 0.0
    %5077 = vmatprep.subr.mxu0 0.0
    %5078 = vmatpush1.msra.mxu0 0.0
    %5079 = vmatprep.subr.mxu0 0.0
    %5080 = vmatpush1.msra.mxu0 0.0
    %5081 = vmatprep.subr.mxu0 0.0
    %5082 = vmatpush1.msra.mxu0 0.0
    %5083 = vmatprep.subr.mxu0 0.0
    %5084 = vmatpush1.msra.mxu0 0.0
    %5085 = vmatprep.subr.mxu0 0.0
    %5086 = vmatpush1.msra.mxu0 0.0
    %5087 = vmatprep.subr.mxu0 0.0
    %5088 = vmatpush1.msra.mxu0 0.0
    %5089 = vmatprep.subr.mxu0 0.0
    %5090 = vmatpush1.msra.mxu0 0.0
    %5091 = vmatprep.subr.mxu0 0.0
    %5092 = vmatpush1.msra.mxu0 0.0
    %5093 = vmatprep.subr.mxu0 0.0
    %5094 = vmatpush1.msra.mxu0 0.0
    %5095 = vmatprep.subr.mxu0 0.0
    %5096 = vmatpush1.msra.mxu0 0.0
    %5097 = vmatprep.subr.mxu0 0.0
    %5098 = vmatpush1.msra.mxu0 0.0
    %5099 = vmatprep.subr.mxu0 0.0
    %5100 = vmatpush1.msra.mxu0 0.0
    %5101 = vmatprep.subr.mxu0 0.0
    %5102 = vmatpush1.msra.mxu0 0.0
    %5103 = vmatprep.subr.mxu0 0.0
    %5104 = vmatpush1.msra.mxu0 0.0
    %5105 = vmatprep.subr.mxu0 0.0
    %5106 = vmatpush1.msra.mxu0 0.0
    %5107 = vmatprep.subr.mxu0 0.0
    %5108 = vmatpush1.msra.mxu0 0.0
    %5109 = vmatprep.subr.mxu0 0.0
    %5110 = vmatpush1.msra.mxu0 0.0
    %5111 = vmatprep.subr.mxu0 0.0
    %5112 = vmatpush1.msra.mxu0 0.0
    %5113 = vmatprep.subr.mxu0 0.0
    %5114 = vmatpush1.msra.mxu0 0.0
    %5115 = vmatprep.mubr.f32.mxu0 0.0
    %5116 = vmatmul.mubr.f32.gmra.mrb[0].mxu0 %v5049
    %v5117 = vpop.f32.mrb[0].mxu0
    %v5118 = vadd.f32 0.0, %v5117
    %v5119 = vpop.f32.mrb[0].mxu0
    %5120 = vdwg.mxu0
    %5121 = vrot.lane.b32.xlu0 %v3876, 40
    %v5122 = vpop.permute.xlu0 %5121
    %v5125 = vsel %vm431, %v5044, 0
    %5127 = vmatprep.subr.mxu0 0.0
    %5128 = vmatpush1.msra.mxu0 %v5122
    %5129 = vmatprep.subr.mxu0 0.0
    %5130 = vmatpush1.msra.mxu0 0.0
    %5131 = vmatprep.subr.mxu0 0.0
    %5132 = vmatpush1.msra.mxu0 0.0
    %5133 = vmatprep.subr.mxu0 0.0
    %5134 = vmatpush1.msra.mxu0 0.0
    %5135 = vmatprep.subr.mxu0 0.0
    %5136 = vmatpush1.msra.mxu0 0.0
    %5137 = vmatprep.subr.mxu0 0.0
    %5138 = vmatpush1.msra.mxu0 0.0
    %5139 = vmatprep.subr.mxu0 0.0
    %5140 = vmatpush1.msra.mxu0 0.0
    %5141 = vmatprep.subr.mxu0 0.0
    %5142 = vmatpush1.msra.mxu0 0.0
    %5143 = vmatprep.subr.mxu0 0.0
    %5144 = vmatpush1.msra.mxu0 0.0
    %5145 = vmatprep.subr.mxu0 0.0
    %5146 = vmatpush1.msra.mxu0 0.0
    %5147 = vmatprep.subr.mxu0 0.0
    %5148 = vmatpush1.msra.mxu0 0.0
    %5149 = vmatprep.subr.mxu0 0.0
    %5150 = vmatpush1.msra.mxu0 0.0
    %5151 = vmatprep.subr.mxu0 0.0
    %5152 = vmatpush1.msra.mxu0 0.0
    %5153 = vmatprep.subr.mxu0 0.0
    %5154 = vmatpush1.msra.mxu0 0.0
    %5155 = vmatprep.subr.mxu0 0.0
    %5156 = vmatpush1.msra.mxu0 0.0
    %5157 = vmatprep.subr.mxu0 0.0
    %5158 = vmatpush1.msra.mxu0 0.0
    %5159 = vmatprep.subr.mxu0 0.0
    %5160 = vmatpush1.msra.mxu0 0.0
    %5161 = vmatprep.subr.mxu0 0.0
    %5162 = vmatpush1.msra.mxu0 0.0
    %5163 = vmatprep.subr.mxu0 0.0
    %5164 = vmatpush1.msra.mxu0 0.0
    %5165 = vmatprep.subr.mxu0 0.0
    %5166 = vmatpush1.msra.mxu0 0.0
    %5167 = vmatprep.subr.mxu0 0.0
    %5168 = vmatpush1.msra.mxu0 0.0
    %5169 = vmatprep.subr.mxu0 0.0
    %5170 = vmatpush1.msra.mxu0 0.0
    %5171 = vmatprep.subr.mxu0 0.0
    %5172 = vmatpush1.msra.mxu0 0.0
    %5173 = vmatprep.subr.mxu0 0.0
    %5174 = vmatpush1.msra.mxu0 0.0
    %5175 = vmatprep.subr.mxu0 0.0
    %5176 = vmatpush1.msra.mxu0 0.0
    %5177 = vmatprep.subr.mxu0 0.0
    %5178 = vmatpush1.msra.mxu0 0.0
    %5179 = vmatprep.subr.mxu0 0.0
    %5180 = vmatpush1.msra.mxu0 0.0
    %5181 = vmatprep.subr.mxu0 0.0
    %5182 = vmatpush1.msra.mxu0 0.0
    %5183 = vmatprep.subr.mxu0 0.0
    %5184 = vmatpush1.msra.mxu0 0.0
    %5185 = vmatprep.subr.mxu0 0.0
    %5186 = vmatpush1.msra.mxu0 0.0
    %5187 = vmatprep.subr.mxu0 0.0
    %5188 = vmatpush1.msra.mxu0 0.0
    %5189 = vmatprep.subr.mxu0 0.0
    %5190 = vmatpush1.msra.mxu0 0.0
    %5191 = vmatprep.mubr.f32.mxu0 0.0
    %5192 = vmatmul.mubr.f32.gmra.mrb[0].mxu0 %v5125
    %v5193 = vpop.f32.mrb[0].mxu0
    %v5194 = vadd.f32 0.0, %v5193
    %v5195 = vpop.f32.mrb[0].mxu0
    %5196 = vdwg.mxu0
    %5199 = vrot.lane.b32.xlu0 %v4458, 8
    %v5200 = vpop.permute.xlu0 %5199
    %5201 = vrot.lane.b32.xlu0 %v4534, 8
    %v5202 = vpop.permute.xlu0 %5201
    %5207 = vrot.lane.b32.xlu0 %v4788, 16
    %v5208 = vpop.permute.xlu0 %5207
    %5209 = vrot.lane.b32.xlu0 %v4864, 16
    %v5210 = vpop.permute.xlu0 %5209
    %5215 = vrot.lane.b32.xlu0 %v5118, 24
    %v5216 = vpop.permute.xlu0 %5215
    %5217 = vrot.lane.b32.xlu0 %v5194, 24
    %v5218 = vpop.permute.xlu0 %5217
    %v5221 = vsel %vm431, %v4128, %v5200
    %v5222 = vsel %vm431, %v4204, %v5202
    %v5223 = vsel %vm1773, %v5221, %v5208
    %v5224 = vsel %vm1773, %v5222, %v5210
    %v5225 = vsel %vm1776, %v5223, %v5216
    %v5226 = vsel %vm1776, %v5224, %v5218
    %s5227 = scalar_lea.vmem %s4, 32
    %v5228 = vld [vmem:[%s5227] sm:$0xff]
    %v5229 = vld [vmem:[%s5227 + $0x8] sm:$0xff]
    %v5230 = vld [vmem:[%s5227 + $0x10] sm:$0xff]
    %v5231 = vld [vmem:[%s5227 + $0x18] sm:$0xff]
    %s5232 = scalar_lea.vmem %s5, 1
    %v5233 = vld [vmem:[%s5232] sm:$0x1]
    %v5235 = vlaneseq
    %v5236 = vshrl.u32 %v5235, 7
    %v5237 = vsub.s32 0, %v5236
    %v5238 = vrot.slane %v5233, %v5237
    %v5241 = vsel %vm238, %v5225, 0
    %v5244 = vsel %vm238, %v5226, 0
    %5246 = vmatprep.subr.mxu0 0.0
    %5247 = vmatpush1.msra.mxu0 %v5228
    %5248 = vmatprep.subr.mxu0 0.0
    %5249 = vmatpush1.msra.mxu0 %v5229
    %5250 = vmatprep.subr.mxu0 0.0
    %5251 = vmatpush1.msra.mxu0 %v5230
    %5252 = vmatprep.subr.mxu0 0.0
    %5253 = vmatpush1.msra.mxu0 %v5231
    %5254 = vmatprep.subr.mxu0 0.0
    %5255 = vmatpush1.msra.mxu0 0.0
    %5256 = vmatprep.subr.mxu0 0.0
    %5257 = vmatpush1.msra.mxu0 0.0
    %5258 = vmatprep.subr.mxu0 0.0
    %5259 = vmatpush1.msra.mxu0 0.0
    %5260 = vmatprep.subr.mxu0 0.0
    %5261 = vmatpush1.msra.mxu0 0.0
    %5262 = vmatprep.subr.mxu0 0.0
    %5263 = vmatpush1.msra.mxu0 0.0
    %5264 = vmatprep.subr.mxu0 0.0
    %5265 = vmatpush1.msra.mxu0 0.0
    %5266 = vmatprep.subr.mxu0 0.0
    %5267 = vmatpush1.msra.mxu0 0.0
    %5268 = vmatprep.subr.mxu0 0.0
    %5269 = vmatpush1.msra.mxu0 0.0
    %5270 = vmatprep.subr.mxu0 0.0
    %5271 = vmatpush1.msra.mxu0 0.0
    %5272 = vmatprep.subr.mxu0 0.0
    %5273 = vmatpush1.msra.mxu0 0.0
    %5274 = vmatprep.subr.mxu0 0.0
    %5275 = vmatpush1.msra.mxu0 0.0
    %5276 = vmatprep.subr.mxu0 0.0
    %5277 = vmatpush1.msra.mxu0 0.0
    %5278 = vmatprep.subr.mxu0 0.0
    %5279 = vmatpush1.msra.mxu0 0.0
    %5280 = vmatprep.subr.mxu0 0.0
    %5281 = vmatpush1.msra.mxu0 0.0
    %5282 = vmatprep.subr.mxu0 0.0
    %5283 = vmatpush1.msra.mxu0 0.0
    %5284 = vmatprep.subr.mxu0 0.0
    %5285 = vmatpush1.msra.mxu0 0.0
    %5286 = vmatprep.subr.mxu0 0.0
    %5287 = vmatpush1.msra.mxu0 0.0
    %5288 = vmatprep.subr.mxu0 0.0
    %5289 = vmatpush1.msra.mxu0 0.0
    %5290 = vmatprep.subr.mxu0 0.0
    %5291 = vmatpush1.msra.mxu0 0.0
    %5292 = vmatprep.subr.mxu0 0.0
    %5293 = vmatpush1.msra.mxu0 0.0
    %5294 = vmatprep.subr.mxu0 0.0
    %5295 = vmatpush1.msra.mxu0 0.0
    %5296 = vmatprep.subr.mxu0 0.0
    %5297 = vmatpush1.msra.mxu0 0.0
    %5298 = vmatprep.subr.mxu0 0.0
    %5299 = vmatpush1.msra.mxu0 0.0
    %5300 = vmatprep.subr.mxu0 0.0
    %5301 = vmatpush1.msra.mxu0 0.0
    %5302 = vmatprep.subr.mxu0 0.0
    %5303 = vmatpush1.msra.mxu0 0.0
    %5304 = vmatprep.subr.mxu0 0.0
    %5305 = vmatpush1.msra.mxu0 0.0
    %5306 = vmatprep.subr.mxu0 0.0
    %5307 = vmatpush1.msra.mxu0 0.0
    %5308 = vmatprep.subr.mxu0 0.0
    %5309 = vmatpush1.msra.mxu0 0.0
    %5310 = vmatprep.mubr.f32.mxu0 0.0
    %5311 = vmatmul.mubr.f32.gmra.mrb[0].mxu0 %v5241
    %v5312 = vpop.f32.mrb[0].mxu0
    %v5313 = vadd.f32 %v5238, %v5312
    %v5314 = vpop.f32.mrb[0].mxu0
    %5315 = vmatprep.mubr.f32.mxu0 0.0
    %5316 = vmatmul.mubr.f32.gmra.mrb[0].mxu0 %v5244
    %v5317 = vpop.f32.mrb[0].mxu0
    %v5318 = vadd.f32 %v5238, %v5317
    %v5319 = vpop.f32.mrb[0].mxu0
    %5320 = vdwg.mxu0
    %v5321 = vadd.f32 %v3783, %v5313
    %v5322 = vadd.f32 %v3784, %v5318
    %s5323 = scalar_lea.vmem %s12, 1
    %v5324 = vld [vmem:[%s5323] sm:$0x1]
    %s5325 = scalar_lea.vmem [#allocation10], 1
    %v5326 = vld [vmem:[%s5325] sm:$0x1]
    %v5327 = vsel %vm238, %v5321, 0.0
    %5328 = vadd.xlane.f32.xlu0 %v5327
    %v5329 = vpop.xlane.xlu0 %5328
    %v5330 = vsel %vm238, %v5322, 0.0
    %5331 = vadd.xlane.f32.xlu0 %v5330
    %v5332 = vpop.xlane.xlu0 %5331
    %v5333 = vmul.f32 %v5329, %v1881
    %v5334 = vmul.f32 %v5332, %v1881
    %v5335 = vsub.f32 %v5321, %v5333
    %v5336 = vsub.f32 %v5322, %v5334
    %v5337 = vmul.f32 %v5335, %v5335
    %v5338 = vmul.f32 %v5336, %v5336
    %v5339 = vsel %vm238, %v5337, 0.0
    %5340 = vadd.xlane.f32.xlu0 %v5339
    %v5341 = vpop.xlane.xlu0 %5340
    %v5342 = vsel %vm238, %v5338, 0.0
    %5343 = vadd.xlane.f32.xlu0 %v5342
    %v5344 = vpop.xlane.xlu0 %5343
    %v5345 = vmul.f32 %v5341, %v1881
    %v5346 = vmul.f32 %v5344, %v1881
    %v5347 = vadd.f32 %v5345, 1e-05
    %v5348 = vadd.f32 %v5346, 1e-05
    %v5349 = vrsqrt.pop %v5347
    %v5350 = vrsqrt.pop %v5348
    %v5351 = vmul.f32 %v5335, %v5349
    %v5352 = vmul.f32 %v5336, %v5350
    %v5354 = vlaneseq
    %v5355 = vshrl.u32 %v5354, 7
    %v5356 = vsub.s32 0, %v5355
    %v5357 = vrot.slane %v5324, %v5356
    %v5359 = vmul.f32 %v5351, %v5357
    %v5360 = vmul.f32 %v5352, %v5357
    %v5362 = vlaneseq
    %v5363 = vshrl.u32 %v5362, 7
    %v5364 = vsub.s32 0, %v5363
    %v5365 = vrot.slane %v5326, %v5364
    %v5367 = vadd.f32 %v5359, %v5365
    %v5368 = vadd.f32 %v5360, %v5365
    %s5369 = scalar_lea.vmem %s6, 32
    %v5370 = vld [vmem:[%s5369] sm:$0xff]
    %v5371 = vld [vmem:[%s5369 + $0x8] sm:$0xff]
    %v5372 = vld [vmem:[%s5369 + $0x10] sm:$0xff]
    %v5373 = vld [vmem:[%s5369 + $0x18] sm:$0xff]
    %s5374 = scalar_lea.vmem %s7, 1
    %v5375 = vld [vmem:[%s5374] sm:$0x1]
    %v5377 = vlaneseq
    %v5378 = vshrl.u32 %v5377, 7
    %v5379 = vsub.s32 0, %v5378
    %v5380 = vrot.slane %v5375, %v5379
    %v5383 = vsel %vm238, %v5367, 0
    %v5386 = vsel %vm238, %v5368, 0
    %5388 = vmatprep.subr.mxu0 0.0
    %5389 = vmatpush1.msra.mxu0 %v5370
    %5390 = vmatprep.subr.mxu0 0.0
    %5391 = vmatpush1.msra.mxu0 %v5371
    %5392 = vmatprep.subr.mxu0 0.0
    %5393 = vmatpush1.msra.mxu0 %v5372
    %5394 = vmatprep.subr.mxu0 0.0
    %5395 = vmatpush1.msra.mxu0 %v5373
    %5396 = vmatprep.subr.mxu0 0.0
    %5397 = vmatpush1.msra.mxu0 0.0
    %5398 = vmatprep.subr.mxu0 0.0
    %5399 = vmatpush1.msra.mxu0 0.0
    %5400 = vmatprep.subr.mxu0 0.0
    %5401 = vmatpush1.msra.mxu0 0.0
    %5402 = vmatprep.subr.mxu0 0.0
    %5403 = vmatpush1.msra.mxu0 0.0
    %5404 = vmatprep.subr.mxu0 0.0
    %5405 = vmatpush1.msra.mxu0 0.0
    %5406 = vmatprep.subr.mxu0 0.0
    %5407 = vmatpush1.msra.mxu0 0.0
    %5408 = vmatprep.subr.mxu0 0.0
    %5409 = vmatpush1.msra.mxu0 0.0
    %5410 = vmatprep.subr.mxu0 0.0
    %5411 = vmatpush1.msra.mxu0 0.0
    %5412 = vmatprep.subr.mxu0 0.0
    %5413 = vmatpush1.msra.mxu0 0.0
    %5414 = vmatprep.subr.mxu0 0.0
    %5415 = vmatpush1.msra.mxu0 0.0
    %5416 = vmatprep.subr.mxu0 0.0
    %5417 = vmatpush1.msra.mxu0 0.0
    %5418 = vmatprep.subr.mxu0 0.0
    %5419 = vmatpush1.msra.mxu0 0.0
    %5420 = vmatprep.subr.mxu0 0.0
    %5421 = vmatpush1.msra.mxu0 0.0
    %5422 = vmatprep.subr.mxu0 0.0
    %5423 = vmatpush1.msra.mxu0 0.0
    %5424 = vmatprep.subr.mxu0 0.0
    %5425 = vmatpush1.msra.mxu0 0.0
    %5426 = vmatprep.subr.mxu0 0.0
    %5427 = vmatpush1.msra.mxu0 0.0
    %5428 = vmatprep.subr.mxu0 0.0
    %5429 = vmatpush1.msra.mxu0 0.0
    %5430 = vmatprep.subr.mxu0 0.0
    %5431 = vmatpush1.msra.mxu0 0.0
    %5432 = vmatprep.subr.mxu0 0.0
    %5433 = vmatpush1.msra.mxu0 0.0
    %5434 = vmatprep.subr.mxu0 0.0
    %5435 = vmatpush1.msra.mxu0 0.0
    %5436 = vmatprep.subr.mxu0 0.0
    %5437 = vmatpush1.msra.mxu0 0.0
    %5438 = vmatprep.subr.mxu0 0.0
    %5439 = vmatpush1.msra.mxu0 0.0
    %5440 = vmatprep.subr.mxu0 0.0
    %5441 = vmatpush1.msra.mxu0 0.0
    %5442 = vmatprep.subr.mxu0 0.0
    %5443 = vmatpush1.msra.mxu0 0.0
    %5444 = vmatprep.subr.mxu0 0.0
    %5445 = vmatpush1.msra.mxu0 0.0
    %5446 = vmatprep.subr.mxu0 0.0
    %5447 = vmatpush1.msra.mxu0 0.0
    %5448 = vmatprep.subr.mxu0 0.0
    %5449 = vmatpush1.msra.mxu0 0.0
    %5450 = vmatprep.subr.mxu0 0.0
    %5451 = vmatpush1.msra.mxu0 0.0
    %5452 = vmatprep.mubr.f32.mxu0 0.0
    %5453 = vmatmul.mubr.f32.gmra.mrb[0].mxu0 %v5383
    %v5454 = vpop.f32.mrb[0].mxu0
    %v5455 = vadd.f32 %v5380, %v5454
    %v5456 = vpop.f32.mrb[0].mxu0
    %5457 = vmatprep.mubr.f32.mxu0 0.0
    %5458 = vmatmul.mubr.f32.gmra.mrb[0].mxu0 %v5386
    %v5459 = vpop.f32.mrb[0].mxu0
    %v5460 = vadd.f32 %v5380, %v5459
    %v5461 = vpop.f32.mrb[0].mxu0
    %5462 = vdwg.mxu0
    %5463 = vrot.lane.b32.xlu0 %v318, 64
    %v5464 = vpop.permute.xlu0 %5463
    %5465 = vrot.lane.b32.xlu0 %v323, 64
    %v5466 = vpop.permute.xlu0 %5465
    %v5468 = vsel %vm431, %v5455, 0
    %v5470 = vsel %vm431, %v5464, 0
    %v5472 = vsel %vm431, %v5466, 0
    %5474 = vmatprep.subr.mxu0 0.0
    %5475 = vmatpush1.xpose.msra.mxu0 %v5470
    %5476 = vmatprep.subr.mxu0 0.0
    %5477 = vmatpush1.xpose.msra.mxu0 %v5472
    %5478 = vmatprep.subr.mxu0 0.0
    %5479 = vmatpush1.xpose.msra.mxu0 0.0
    %5480 = vmatprep.subr.mxu0 0.0
    %5481 = vmatpush1.xpose.msra.mxu0 0.0
    %5482 = vmatprep.subr.mxu0 0.0
    %5483 = vmatpush1.xpose.msra.mxu0 0.0
    %5484 = vmatprep.subr.mxu0 0.0
    %5485 = vmatpush1.xpose.msra.mxu0 0.0
    %5486 = vmatprep.subr.mxu0 0.0
    %5487 = vmatpush1.xpose.msra.mxu0 0.0
    %5488 = vmatprep.subr.mxu0 0.0
    %5489 = vmatpush1.xpose.msra.mxu0 0.0
    %5490 = vmatprep.subr.mxu0 0.0
    %5491 = vmatpush1.xpose.msra.mxu0 0.0
    %5492 = vmatprep.subr.mxu0 0.0
    %5493 = vmatpush1.xpose.msra.mxu0 0.0
    %5494 = vmatprep.subr.mxu0 0.0
    %5495 = vmatpush1.xpose.msra.mxu0 0.0
    %5496 = vmatprep.subr.mxu0 0.0
    %5497 = vmatpush1.xpose.msra.mxu0 0.0
    %5498 = vmatprep.subr.mxu0 0.0
    %5499 = vmatpush1.xpose.msra.mxu0 0.0
    %5500 = vmatprep.subr.mxu0 0.0
    %5501 = vmatpush1.xpose.msra.mxu0 0.0
    %5502 = vmatprep.subr.mxu0 0.0
    %5503 = vmatpush1.xpose.msra.mxu0 0.0
    %5504 = vmatprep.subr.mxu0 0.0
    %5505 = vmatpush1.xpose.msra.mxu0 0.0
    %5506 = vmatprep.subr.mxu0 0.0
    %5507 = vmatpush1.xpose.msra.mxu0 0.0
    %5508 = vmatprep.subr.mxu0 0.0
    %5509 = vmatpush1.xpose.msra.mxu0 0.0
    %5510 = vmatprep.subr.mxu0 0.0
    %5511 = vmatpush1.xpose.msra.mxu0 0.0
    %5512 = vmatprep.subr.mxu0 0.0
    %5513 = vmatpush1.xpose.msra.mxu0 0.0
    %5514 = vmatprep.subr.mxu0 0.0
    %5515 = vmatpush1.xpose.msra.mxu0 0.0
    %5516 = vmatprep.subr.mxu0 0.0
    %5517 = vmatpush1.xpose.msra.mxu0 0.0
    %5518 = vmatprep.subr.mxu0 0.0
    %5519 = vmatpush1.xpose.msra.mxu0 0.0
    %5520 = vmatprep.subr.mxu0 0.0
    %5521 = vmatpush1.xpose.msra.mxu0 0.0
    %5522 = vmatprep.subr.mxu0 0.0
    %5523 = vmatpush1.xpose.msra.mxu0 0.0
    %5524 = vmatprep.subr.mxu0 0.0
    %5525 = vmatpush1.xpose.msra.mxu0 0.0
    %5526 = vmatprep.subr.mxu0 0.0
    %5527 = vmatpush1.xpose.msra.mxu0 0.0
    %5528 = vmatprep.subr.mxu0 0.0
    %5529 = vmatpush1.xpose.msra.mxu0 0.0
    %5530 = vmatprep.subr.mxu0 0.0
    %5531 = vmatpush1.xpose.msra.mxu0 0.0
    %5532 = vmatprep.subr.mxu0 0.0
    %5533 = vmatpush1.xpose.msra.mxu0 0.0
    %5534 = vmatprep.subr.mxu0 0.0
    %5535 = vmatpush1.xpose.msra.mxu0 0.0
    %5536 = vmatprep.subr.mxu0 0.0
    %5537 = vmatpush1.xpose.msra.mxu0 0.0
    %5538 = vmatprep.mubr.f32.mxu0 0.0
    %5539 = vmatmul.mubr.f32.gmra.mrb[0].mxu0 %v5468
    %v5540 = vpop.f32.mrb[0].mxu0
    %v5541 = vadd.f32 0.0, %v5540
    %v5542 = vpop.f32.mrb[0].mxu0
    %5543 = vdwg.mxu0
    %5544 = vrot.lane.b32.xlu0 %v328, 64
    %v5545 = vpop.permute.xlu0 %5544
    %5546 = vrot.lane.b32.xlu0 %v333, 64
    %v5547 = vpop.permute.xlu0 %5546
    %v5549 = vsel %vm431, %v5460, 0
    %v5551 = vsel %vm431, %v5545, 0
    %v5553 = vsel %vm431, %v5547, 0
    %5555 = vmatprep.subr.mxu0 0.0
    %5556 = vmatpush1.xpose.msra.mxu0 %v5551
    %5557 = vmatprep.subr.mxu0 0.0
    %5558 = vmatpush1.xpose.msra.mxu0 %v5553
    %5559 = vmatprep.subr.mxu0 0.0
    %5560 = vmatpush1.xpose.msra.mxu0 0.0
    %5561 = vmatprep.subr.mxu0 0.0
    %5562 = vmatpush1.xpose.msra.mxu0 0.0
    %5563 = vmatprep.subr.mxu0 0.0
    %5564 = vmatpush1.xpose.msra.mxu0 0.0
    %5565 = vmatprep.subr.mxu0 0.0
    %5566 = vmatpush1.xpose.msra.mxu0 0.0
    %5567 = vmatprep.subr.mxu0 0.0
    %5568 = vmatpush1.xpose.msra.mxu0 0.0
    %5569 = vmatprep.subr.mxu0 0.0
    %5570 = vmatpush1.xpose.msra.mxu0 0.0
    %5571 = vmatprep.subr.mxu0 0.0
    %5572 = vmatpush1.xpose.msra.mxu0 0.0
    %5573 = vmatprep.subr.mxu0 0.0
    %5574 = vmatpush1.xpose.msra.mxu0 0.0
    %5575 = vmatprep.subr.mxu0 0.0
    %5576 = vmatpush1.xpose.msra.mxu0 0.0
    %5577 = vmatprep.subr.mxu0 0.0
    %5578 = vmatpush1.xpose.msra.mxu0 0.0
    %5579 = vmatprep.subr.mxu0 0.0
    %5580 = vmatpush1.xpose.msra.mxu0 0.0
    %5581 = vmatprep.subr.mxu0 0.0
    %5582 = vmatpush1.xpose.msra.mxu0 0.0
    %5583 = vmatprep.subr.mxu0 0.0
    %5584 = vmatpush1.xpose.msra.mxu0 0.0
    %5585 = vmatprep.subr.mxu0 0.0
    %5586 = vmatpush1.xpose.msra.mxu0 0.0
    %5587 = vmatprep.subr.mxu0 0.0
    %5588 = vmatpush1.xpose.msra.mxu0 0.0
    %5589 = vmatprep.subr.mxu0 0.0
    %5590 = vmatpush1.xpose.msra.mxu0 0.0
    %5591 = vmatprep.subr.mxu0 0.0
    %5592 = vmatpush1.xpose.msra.mxu0 0.0
    %5593 = vmatprep.subr.mxu0 0.0
    %5594 = vmatpush1.xpose.msra.mxu0 0.0
    %5595 = vmatprep.subr.mxu0 0.0
    %5596 = vmatpush1.xpose.msra.mxu0 0.0
    %5597 = vmatprep.subr.mxu0 0.0
    %5598 = vmatpush1.xpose.msra.mxu0 0.0
    %5599 = vmatprep.subr.mxu0 0.0
    %5600 = vmatpush1.xpose.msra.mxu0 0.0
    %5601 = vmatprep.subr.mxu0 0.0
    %5602 = vmatpush1.xpose.msra.mxu0 0.0
    %5603 = vmatprep.subr.mxu0 0.0
    %5604 = vmatpush1.xpose.msra.mxu0 0.0
    %5605 = vmatprep.subr.mxu0 0.0
    %5606 = vmatpush1.xpose.msra.mxu0 0.0
    %5607 = vmatprep.subr.mxu0 0.0
    %5608 = vmatpush1.xpose.msra.mxu0 0.0
    %5609 = vmatprep.subr.mxu0 0.0
    %5610 = vmatpush1.xpose.msra.mxu0 0.0
    %5611 = vmatprep.subr.mxu0 0.0
    %5612 = vmatpush1.xpose.msra.mxu0 0.0
    %5613 = vmatprep.subr.mxu0 0.0
    %5614 = vmatpush1.xpose.msra.mxu0 0.0
    %5615 = vmatprep.subr.mxu0 0.0
    %5616 = vmatpush1.xpose.msra.mxu0 0.0
    %5617 = vmatprep.subr.mxu0 0.0
    %5618 = vmatpush1.xpose.msra.mxu0 0.0
    %5619 = vmatprep.mubr.f32.mxu0 0.0
    %5620 = vmatmul.mubr.f32.gmra.mrb[0].mxu0 %v5549
    %v5621 = vpop.f32.mrb[0].mxu0
    %v5622 = vadd.f32 0.0, %v5621
    %v5623 = vpop.f32.mrb[0].mxu0
    %5624 = vdwg.mxu0
    %v5625 = vsel %vm1773, %v5541, -inf
    %5626 = vmax.xlane.f32.xlu0 %v5625
    %v5627 = vpop.xlane.xlu0 %5626
    %v5628 = vsel %vm1773, %v5622, -inf
    %5629 = vmax.xlane.f32.xlu0 %v5628
    %v5630 = vpop.xlane.xlu0 %5629
    %v5631 = vsub.f32 %v5541, %v5627
    %v5632 = vsub.f32 %v5622, %v5630
    %v5633 = vmul.f32 %v5631, 1.442695
    %v5634 = vpow.pop %v5633
    %v5635 = vmul.f32 %v5632, 1.442695
    %v5636 = vpow.pop %v5635
    %v5637 = vsel %vm1773, %v5634, 0.0
    %5638 = vadd.xlane.f32.xlu0 %v5637
    %v5639 = vpop.xlane.xlu0 %5638
    %v5640 = vsel %vm1773, %v5636, 0.0
    %5641 = vadd.xlane.f32.xlu0 %v5640
    %v5642 = vpop.xlane.xlu0 %5641
    %v5643 = vrcp.pop %v5639
    %v5644 = vrcp.pop %v5642
    %v5645 = vmul.f32 %v5634, %v5643
    %v5646 = vmul.f32 %v5636, %v5644
    %5647 = vrot.lane.b32.xlu0 %v318, 32
    %v5648 = vpop.permute.xlu0 %5647
    %5649 = vrot.lane.b32.xlu0 %v323, 32
    %v5650 = vpop.permute.xlu0 %5649
    %v5654 = vsel %vm1773, %v5645, 0
    %5656 = vmatprep.subr.mxu0 0.0
    %5657 = vmatpush1.msra.mxu0 %v5648
    %5658 = vmatprep.subr.mxu0 0.0
    %5659 = vmatpush1.msra.mxu0 %v5650
    %5660 = vmatprep.subr.mxu0 0.0
    %5661 = vmatpush1.msra.mxu0 0.0
    %5662 = vmatprep.subr.mxu0 0.0
    %5663 = vmatpush1.msra.mxu0 0.0
    %5664 = vmatprep.subr.mxu0 0.0
    %5665 = vmatpush1.msra.mxu0 0.0
    %5666 = vmatprep.subr.mxu0 0.0
    %5667 = vmatpush1.msra.mxu0 0.0
    %5668 = vmatprep.subr.mxu0 0.0
    %5669 = vmatpush1.msra.mxu0 0.0
    %5670 = vmatprep.subr.mxu0 0.0
    %5671 = vmatpush1.msra.mxu0 0.0
    %5672 = vmatprep.subr.mxu0 0.0
    %5673 = vmatpush1.msra.mxu0 0.0
    %5674 = vmatprep.subr.mxu0 0.0
    %5675 = vmatpush1.msra.mxu0 0.0
    %5676 = vmatprep.subr.mxu0 0.0
    %5677 = vmatpush1.msra.mxu0 0.0
    %5678 = vmatprep.subr.mxu0 0.0
    %5679 = vmatpush1.msra.mxu0 0.0
    %5680 = vmatprep.subr.mxu0 0.0
    %5681 = vmatpush1.msra.mxu0 0.0
    %5682 = vmatprep.subr.mxu0 0.0
    %5683 = vmatpush1.msra.mxu0 0.0
    %5684 = vmatprep.subr.mxu0 0.0
    %5685 = vmatpush1.msra.mxu0 0.0
    %5686 = vmatprep.subr.mxu0 0.0
    %5687 = vmatpush1.msra.mxu0 0.0
    %5688 = vmatprep.subr.mxu0 0.0
    %5689 = vmatpush1.msra.mxu0 0.0
    %5690 = vmatprep.subr.mxu0 0.0
    %5691 = vmatpush1.msra.mxu0 0.0
    %5692 = vmatprep.subr.mxu0 0.0
    %5693 = vmatpush1.msra.mxu0 0.0
    %5694 = vmatprep.subr.mxu0 0.0
    %5695 = vmatpush1.msra.mxu0 0.0
    %5696 = vmatprep.subr.mxu0 0.0
    %5697 = vmatpush1.msra.mxu0 0.0
    %5698 = vmatprep.subr.mxu0 0.0
    %5699 = vmatpush1.msra.mxu0 0.0
    %5700 = vmatprep.subr.mxu0 0.0
    %5701 = vmatpush1.msra.mxu0 0.0
    %5702 = vmatprep.subr.mxu0 0.0
    %5703 = vmatpush1.msra.mxu0 0.0
    %5704 = vmatprep.subr.mxu0 0.0
    %5705 = vmatpush1.msra.mxu0 0.0
    %5706 = vmatprep.subr.mxu0 0.0
    %5707 = vmatpush1.msra.mxu0 0.0
    %5708 = vmatprep.subr.mxu0 0.0
    %5709 = vmatpush1.msra.mxu0 0.0
    %5710 = vmatprep.subr.mxu0 0.0
    %5711 = vmatpush1.msra.mxu0 0.0
    %5712 = vmatprep.subr.mxu0 0.0
    %5713 = vmatpush1.msra.mxu0 0.0
    %5714 = vmatprep.subr.mxu0 0.0
    %5715 = vmatpush1.msra.mxu0 0.0
    %5716 = vmatprep.subr.mxu0 0.0
    %5717 = vmatpush1.msra.mxu0 0.0
    %5718 = vmatprep.subr.mxu0 0.0
    %5719 = vmatpush1.msra.mxu0 0.0
    %5720 = vmatprep.mubr.f32.mxu0 0.0
    %5721 = vmatmul.mubr.f32.gmra.mrb[0].mxu0 %v5654
    %v5722 = vpop.f32.mrb[0].mxu0
    %v5723 = vadd.f32 0.0, %v5722
    %v5724 = vpop.f32.mrb[0].mxu0
    %5725 = vdwg.mxu0
    %5726 = vrot.lane.b32.xlu0 %v328, 32
    %v5727 = vpop.permute.xlu0 %5726
    %5728 = vrot.lane.b32.xlu0 %v333, 32
    %v5729 = vpop.permute.xlu0 %5728
    %v5733 = vsel %vm1773, %v5646, 0
    %5735 = vmatprep.subr.mxu0 0.0
    %5736 = vmatpush1.msra.mxu0 %v5727
    %5737 = vmatprep.subr.mxu0 0.0
    %5738 = vmatpush1.msra.mxu0 %v5729
    %5739 = vmatprep.subr.mxu0 0.0
    %5740 = vmatpush1.msra.mxu0 0.0
    %5741 = vmatprep.subr.mxu0 0.0
    %5742 = vmatpush1.msra.mxu0 0.0
    %5743 = vmatprep.subr.mxu0 0.0
    %5744 = vmatpush1.msra.mxu0 0.0
    %5745 = vmatprep.subr.mxu0 0.0
    %5746 = vmatpush1.msra.mxu0 0.0
    %5747 = vmatprep.subr.mxu0 0.0
    %5748 = vmatpush1.msra.mxu0 0.0
    %5749 = vmatprep.subr.mxu0 0.0
    %5750 = vmatpush1.msra.mxu0 0.0
    %5751 = vmatprep.subr.mxu0 0.0
    %5752 = vmatpush1.msra.mxu0 0.0
    %5753 = vmatprep.subr.mxu0 0.0
    %5754 = vmatpush1.msra.mxu0 0.0
    %5755 = vmatprep.subr.mxu0 0.0
    %5756 = vmatpush1.msra.mxu0 0.0
    %5757 = vmatprep.subr.mxu0 0.0
    %5758 = vmatpush1.msra.mxu0 0.0
    %5759 = vmatprep.subr.mxu0 0.0
    %5760 = vmatpush1.msra.mxu0 0.0
    %5761 = vmatprep.subr.mxu0 0.0
    %5762 = vmatpush1.msra.mxu0 0.0
    %5763 = vmatprep.subr.mxu0 0.0
    %5764 = vmatpush1.msra.mxu0 0.0
    %5765 = vmatprep.subr.mxu0 0.0
    %5766 = vmatpush1.msra.mxu0 0.0
    %5767 = vmatprep.subr.mxu0 0.0
    %5768 = vmatpush1.msra.mxu0 0.0
    %5769 = vmatprep.subr.mxu0 0.0
    %5770 = vmatpush1.msra.mxu0 0.0
    %5771 = vmatprep.subr.mxu0 0.0
    %5772 = vmatpush1.msra.mxu0 0.0
    %5773 = vmatprep.subr.mxu0 0.0
    %5774 = vmatpush1.msra.mxu0 0.0
    %5775 = vmatprep.subr.mxu0 0.0
    %5776 = vmatpush1.msra.mxu0 0.0
    %5777 = vmatprep.subr.mxu0 0.0
    %5778 = vmatpush1.msra.mxu0 0.0
    %5779 = vmatprep.subr.mxu0 0.0
    %5780 = vmatpush1.msra.mxu0 0.0
    %5781 = vmatprep.subr.mxu0 0.0
    %5782 = vmatpush1.msra.mxu0 0.0
    %5783 = vmatprep.subr.mxu0 0.0
    %5784 = vmatpush1.msra.mxu0 0.0
    %5785 = vmatprep.subr.mxu0 0.0
    %5786 = vmatpush1.msra.mxu0 0.0
    %5787 = vmatprep.subr.mxu0 0.0
    %5788 = vmatpush1.msra.mxu0 0.0
    %5789 = vmatprep.subr.mxu0 0.0
    %5790 = vmatpush1.msra.mxu0 0.0
    %5791 = vmatprep.subr.mxu0 0.0
    %5792 = vmatpush1.msra.mxu0 0.0
    %5793 = vmatprep.subr.mxu0 0.0
    %5794 = vmatpush1.msra.mxu0 0.0
    %5795 = vmatprep.subr.mxu0 0.0
    %5796 = vmatpush1.msra.mxu0 0.0
    %5797 = vmatprep.subr.mxu0 0.0
    %5798 = vmatpush1.msra.mxu0 0.0
    %5799 = vmatprep.mubr.f32.mxu0 0.0
    %5800 = vmatmul.mubr.f32.gmra.mrb[0].mxu0 %v5733
    %v5801 = vpop.f32.mrb[0].mxu0
    %v5802 = vadd.f32 0.0, %v5801
    %v5803 = vpop.f32.mrb[0].mxu0
    %5804 = vdwg.mxu0
    %5805 = vrot.lane.b32.xlu0 %v5455, 120
    %v5806 = vpop.permute.xlu0 %5805
    %5807 = vrot.lane.b32.xlu0 %v318, 56
    %v5808 = vpop.permute.xlu0 %5807
    %5809 = vrot.lane.b32.xlu0 %v323, 56
    %v5810 = vpop.permute.xlu0 %5809
    %v5811 = vsel %vm431, %v5806, 0
    %v5813 = vsel %vm431, %v5808, 0
    %v5815 = vsel %vm431, %v5810, 0
    %5817 = vmatprep.subr.mxu0 0.0
    %5818 = vmatpush1.xpose.msra.mxu0 %v5813
    %5819 = vmatprep.subr.mxu0 0.0
    %5820 = vmatpush1.xpose.msra.mxu0 %v5815
    %5821 = vmatprep.subr.mxu0 0.0
    %5822 = vmatpush1.xpose.msra.mxu0 0.0
    %5823 = vmatprep.subr.mxu0 0.0
    %5824 = vmatpush1.xpose.msra.mxu0 0.0
    %5825 = vmatprep.subr.mxu0 0.0
    %5826 = vmatpush1.xpose.msra.mxu0 0.0
    %5827 = vmatprep.subr.mxu0 0.0
    %5828 = vmatpush1.xpose.msra.mxu0 0.0
    %5829 = vmatprep.subr.mxu0 0.0
    %5830 = vmatpush1.xpose.msra.mxu0 0.0
    %5831 = vmatprep.subr.mxu0 0.0
    %5832 = vmatpush1.xpose.msra.mxu0 0.0
    %5833 = vmatprep.subr.mxu0 0.0
    %5834 = vmatpush1.xpose.msra.mxu0 0.0
    %5835 = vmatprep.subr.mxu0 0.0
    %5836 = vmatpush1.xpose.msra.mxu0 0.0
    %5837 = vmatprep.subr.mxu0 0.0
    %5838 = vmatpush1.xpose.msra.mxu0 0.0
    %5839 = vmatprep.subr.mxu0 0.0
    %5840 = vmatpush1.xpose.msra.mxu0 0.0
    %5841 = vmatprep.subr.mxu0 0.0
    %5842 = vmatpush1.xpose.msra.mxu0 0.0
    %5843 = vmatprep.subr.mxu0 0.0
    %5844 = vmatpush1.xpose.msra.mxu0 0.0
    %5845 = vmatprep.subr.mxu0 0.0
    %5846 = vmatpush1.xpose.msra.mxu0 0.0
    %5847 = vmatprep.subr.mxu0 0.0
    %5848 = vmatpush1.xpose.msra.mxu0 0.0
    %5849 = vmatprep.subr.mxu0 0.0
    %5850 = vmatpush1.xpose.msra.mxu0 0.0
    %5851 = vmatprep.subr.mxu0 0.0
    %5852 = vmatpush1.xpose.msra.mxu0 0.0
    %5853 = vmatprep.subr.mxu0 0.0
    %5854 = vmatpush1.xpose.msra.mxu0 0.0
    %5855 = vmatprep.subr.mxu0 0.0
    %5856 = vmatpush1.xpose.msra.mxu0 0.0
    %5857 = vmatprep.subr.mxu0 0.0
    %5858 = vmatpush1.xpose.msra.mxu0 0.0
    %5859 = vmatprep.subr.mxu0 0.0
    %5860 = vmatpush1.xpose.msra.mxu0 0.0
    %5861 = vmatprep.subr.mxu0 0.0
    %5862 = vmatpush1.xpose.msra.mxu0 0.0
    %5863 = vmatprep.subr.mxu0 0.0
    %5864 = vmatpush1.xpose.msra.mxu0 0.0
    %5865 = vmatprep.subr.mxu0 0.0
    %5866 = vmatpush1.xpose.msra.mxu0 0.0
    %5867 = vmatprep.subr.mxu0 0.0
    %5868 = vmatpush1.xpose.msra.mxu0 0.0
    %5869 = vmatprep.subr.mxu0 0.0
    %5870 = vmatpush1.xpose.msra.mxu0 0.0
    %5871 = vmatprep.subr.mxu0 0.0
    %5872 = vmatpush1.xpose.msra.mxu0 0.0
    %5873 = vmatprep.subr.mxu0 0.0
    %5874 = vmatpush1.xpose.msra.mxu0 0.0
    %5875 = vmatprep.subr.mxu0 0.0
    %5876 = vmatpush1.xpose.msra.mxu0 0.0
    %5877 = vmatprep.subr.mxu0 0.0
    %5878 = vmatpush1.xpose.msra.mxu0 0.0
    %5879 = vmatprep.subr.mxu0 0.0
    %5880 = vmatpush1.xpose.msra.mxu0 0.0
    %5881 = vmatprep.mubr.f32.mxu0 0.0
    %5882 = vmatmul.mubr.f32.gmra.mrb[0].mxu0 %v5811
    %v5883 = vpop.f32.mrb[0].mxu0
    %v5884 = vadd.f32 0.0, %v5883
    %v5885 = vpop.f32.mrb[0].mxu0
    %5886 = vdwg.mxu0
    %5887 = vrot.lane.b32.xlu0 %v5460, 120
    %v5888 = vpop.permute.xlu0 %5887
    %5889 = vrot.lane.b32.xlu0 %v328, 56
    %v5890 = vpop.permute.xlu0 %5889
    %5891 = vrot.lane.b32.xlu0 %v333, 56
    %v5892 = vpop.permute.xlu0 %5891
    %v5893 = vsel %vm431, %v5888, 0
    %v5895 = vsel %vm431, %v5890, 0
    %v5897 = vsel %vm431, %v5892, 0
    %5899 = vmatprep.subr.mxu0 0.0
    %5900 = vmatpush1.xpose.msra.mxu0 %v5895
    %5901 = vmatprep.subr.mxu0 0.0
    %5902 = vmatpush1.xpose.msra.mxu0 %v5897
    %5903 = vmatprep.subr.mxu0 0.0
    %5904 = vmatpush1.xpose.msra.mxu0 0.0
    %5905 = vmatprep.subr.mxu0 0.0
    %5906 = vmatpush1.xpose.msra.mxu0 0.0
    %5907 = vmatprep.subr.mxu0 0.0
    %5908 = vmatpush1.xpose.msra.mxu0 0.0
    %5909 = vmatprep.subr.mxu0 0.0
    %5910 = vmatpush1.xpose.msra.mxu0 0.0
    %5911 = vmatprep.subr.mxu0 0.0
    %5912 = vmatpush1.xpose.msra.mxu0 0.0
    %5913 = vmatprep.subr.mxu0 0.0
    %5914 = vmatpush1.xpose.msra.mxu0 0.0
    %5915 = vmatprep.subr.mxu0 0.0
    %5916 = vmatpush1.xpose.msra.mxu0 0.0
    %5917 = vmatprep.subr.mxu0 0.0
    %5918 = vmatpush1.xpose.msra.mxu0 0.0
    %5919 = vmatprep.subr.mxu0 0.0
    %5920 = vmatpush1.xpose.msra.mxu0 0.0
    %5921 = vmatprep.subr.mxu0 0.0
    %5922 = vmatpush1.xpose.msra.mxu0 0.0
    %5923 = vmatprep.subr.mxu0 0.0
    %5924 = vmatpush1.xpose.msra.mxu0 0.0
    %5925 = vmatprep.subr.mxu0 0.0
    %5926 = vmatpush1.xpose.msra.mxu0 0.0
    %5927 = vmatprep.subr.mxu0 0.0
    %5928 = vmatpush1.xpose.msra.mxu0 0.0
    %5929 = vmatprep.subr.mxu0 0.0
    %5930 = vmatpush1.xpose.msra.mxu0 0.0
    %5931 = vmatprep.subr.mxu0 0.0
    %5932 = vmatpush1.xpose.msra.mxu0 0.0
    %5933 = vmatprep.subr.mxu0 0.0
    %5934 = vmatpush1.xpose.msra.mxu0 0.0
    %5935 = vmatprep.subr.mxu0 0.0
    %5936 = vmatpush1.xpose.msra.mxu0 0.0
    %5937 = vmatprep.subr.mxu0 0.0
    %5938 = vmatpush1.xpose.msra.mxu0 0.0
    %5939 = vmatprep.subr.mxu0 0.0
    %5940 = vmatpush1.xpose.msra.mxu0 0.0
    %5941 = vmatprep.subr.mxu0 0.0
    %5942 = vmatpush1.xpose.msra.mxu0 0.0
    %5943 = vmatprep.subr.mxu0 0.0
    %5944 = vmatpush1.xpose.msra.mxu0 0.0
    %5945 = vmatprep.subr.mxu0 0.0
    %5946 = vmatpush1.xpose.msra.mxu0 0.0
    %5947 = vmatprep.subr.mxu0 0.0
    %5948 = vmatpush1.xpose.msra.mxu0 0.0
    %5949 = vmatprep.subr.mxu0 0.0
    %5950 = vmatpush1.xpose.msra.mxu0 0.0
    %5951 = vmatprep.subr.mxu0 0.0
    %5952 = vmatpush1.xpose.msra.mxu0 0.0
    %5953 = vmatprep.subr.mxu0 0.0
    %5954 = vmatpush1.xpose.msra.mxu0 0.0
    %5955 = vmatprep.subr.mxu0 0.0
    %5956 = vmatpush1.xpose.msra.mxu0 0.0
    %5957 = vmatprep.subr.mxu0 0.0
    %5958 = vmatpush1.xpose.msra.mxu0 0.0
    %5959 = vmatprep.subr.mxu0 0.0
    %5960 = vmatpush1.xpose.msra.mxu0 0.0
    %5961 = vmatprep.subr.mxu0 0.0
    %5962 = vmatpush1.xpose.msra.mxu0 0.0
    %5963 = vmatprep.mubr.f32.mxu0 0.0
    %5964 = vmatmul.mubr.f32.gmra.mrb[0].mxu0 %v5893
    %v5965 = vpop.f32.mrb[0].mxu0
    %v5966 = vadd.f32 0.0, %v5965
    %v5967 = vpop.f32.mrb[0].mxu0
    %5968 = vdwg.mxu0
    %v5969 = vsel %vm1773, %v5884, -inf
    %5970 = vmax.xlane.f32.xlu0 %v5969
    %v5971 = vpop.xlane.xlu0 %5970
    %v5972 = vsel %vm1773, %v5966, -inf
    %5973 = vmax.xlane.f32.xlu0 %v5972
    %v5974 = vpop.xlane.xlu0 %5973
    %v5975 = vsub.f32 %v5884, %v5971
    %v5976 = vsub.f32 %v5966, %v5974
    %v5977 = vmul.f32 %v5975, 1.442695
    %v5978 = vpow.pop %v5977
    %v5979 = vmul.f32 %v5976, 1.442695
    %v5980 = vpow.pop %v5979
    %v5981 = vsel %vm1773, %v5978, 0.0
    %5982 = vadd.xlane.f32.xlu0 %v5981
    %v5983 = vpop.xlane.xlu0 %5982
    %v5984 = vsel %vm1773, %v5980, 0.0
    %5985 = vadd.xlane.f32.xlu0 %v5984
    %v5986 = vpop.xlane.xlu0 %5985
    %v5987 = vrcp.pop %v5983
    %v5988 = vrcp.pop %v5986
    %v5989 = vmul.f32 %v5978, %v5987
    %v5990 = vmul.f32 %v5980, %v5988
    %5991 = vrot.lane.b32.xlu0 %v318, 24
    %v5992 = vpop.permute.xlu0 %5991
    %5993 = vrot.lane.b32.xlu0 %v323, 24
    %v5994 = vpop.permute.xlu0 %5993
    %v5998 = vsel %vm1773, %v5989, 0
    %6000 = vmatprep.subr.mxu0 0.0
    %6001 = vmatpush1.msra.mxu0 %v5992
    %6002 = vmatprep.subr.mxu0 0.0
    %6003 = vmatpush1.msra.mxu0 %v5994
    %6004 = vmatprep.subr.mxu0 0.0
    %6005 = vmatpush1.msra.mxu0 0.0
    %6006 = vmatprep.subr.mxu0 0.0
    %6007 = vmatpush1.msra.mxu0 0.0
    %6008 = vmatprep.subr.mxu0 0.0
    %6009 = vmatpush1.msra.mxu0 0.0
    %6010 = vmatprep.subr.mxu0 0.0
    %6011 = vmatpush1.msra.mxu0 0.0
    %6012 = vmatprep.subr.mxu0 0.0
    %6013 = vmatpush1.msra.mxu0 0.0
    %6014 = vmatprep.subr.mxu0 0.0
    %6015 = vmatpush1.msra.mxu0 0.0
    %6016 = vmatprep.subr.mxu0 0.0
    %6017 = vmatpush1.msra.mxu0 0.0
    %6018 = vmatprep.subr.mxu0 0.0
    %6019 = vmatpush1.msra.mxu0 0.0
    %6020 = vmatprep.subr.mxu0 0.0
    %6021 = vmatpush1.msra.mxu0 0.0
    %6022 = vmatprep.subr.mxu0 0.0
    %6023 = vmatpush1.msra.mxu0 0.0
    %6024 = vmatprep.subr.mxu0 0.0
    %6025 = vmatpush1.msra.mxu0 0.0
    %6026 = vmatprep.subr.mxu0 0.0
    %6027 = vmatpush1.msra.mxu0 0.0
    %6028 = vmatprep.subr.mxu0 0.0
    %6029 = vmatpush1.msra.mxu0 0.0
    %6030 = vmatprep.subr.mxu0 0.0
    %6031 = vmatpush1.msra.mxu0 0.0
    %6032 = vmatprep.subr.mxu0 0.0
    %6033 = vmatpush1.msra.mxu0 0.0
    %6034 = vmatprep.subr.mxu0 0.0
    %6035 = vmatpush1.msra.mxu0 0.0
    %6036 = vmatprep.subr.mxu0 0.0
    %6037 = vmatpush1.msra.mxu0 0.0
    %6038 = vmatprep.subr.mxu0 0.0
    %6039 = vmatpush1.msra.mxu0 0.0
    %6040 = vmatprep.subr.mxu0 0.0
    %6041 = vmatpush1.msra.mxu0 0.0
    %6042 = vmatprep.subr.mxu0 0.0
    %6043 = vmatpush1.msra.mxu0 0.0
    %6044 = vmatprep.subr.mxu0 0.0
    %6045 = vmatpush1.msra.mxu0 0.0
    %6046 = vmatprep.subr.mxu0 0.0
    %6047 = vmatpush1.msra.mxu0 0.0
    %6048 = vmatprep.subr.mxu0 0.0
    %6049 = vmatpush1.msra.mxu0 0.0
    %6050 = vmatprep.subr.mxu0 0.0
    %6051 = vmatpush1.msra.mxu0 0.0
    %6052 = vmatprep.subr.mxu0 0.0
    %6053 = vmatpush1.msra.mxu0 0.0
    %6054 = vmatprep.subr.mxu0 0.0
    %6055 = vmatpush1.msra.mxu0 0.0
    %6056 = vmatprep.subr.mxu0 0.0
    %6057 = vmatpush1.msra.mxu0 0.0
    %6058 = vmatprep.subr.mxu0 0.0
    %6059 = vmatpush1.msra.mxu0 0.0
    %6060 = vmatprep.subr.mxu0 0.0
    %6061 = vmatpush1.msra.mxu0 0.0
    %6062 = vmatprep.subr.mxu0 0.0
    %6063 = vmatpush1.msra.mxu0 0.0
    %6064 = vmatprep.mubr.f32.mxu0 0.0
    %6065 = vmatmul.mubr.f32.gmra.mrb[0].mxu0 %v5998
    %v6066 = vpop.f32.mrb[0].mxu0
    %v6067 = vadd.f32 0.0, %v6066
    %v6068 = vpop.f32.mrb[0].mxu0
    %6069 = vdwg.mxu0
    %6070 = vrot.lane.b32.xlu0 %v328, 24
    %v6071 = vpop.permute.xlu0 %6070
    %6072 = vrot.lane.b32.xlu0 %v333, 24
    %v6073 = vpop.permute.xlu0 %6072
    %v6077 = vsel %vm1773, %v5990, 0
    %6079 = vmatprep.subr.mxu0 0.0
    %6080 = vmatpush1.msra.mxu0 %v6071
    %6081 = vmatprep.subr.mxu0 0.0
    %6082 = vmatpush1.msra.mxu0 %v6073
    %6083 = vmatprep.subr.mxu0 0.0
    %6084 = vmatpush1.msra.mxu0 0.0
    %6085 = vmatprep.subr.mxu0 0.0
    %6086 = vmatpush1.msra.mxu0 0.0
    %6087 = vmatprep.subr.mxu0 0.0
    %6088 = vmatpush1.msra.mxu0 0.0
    %6089 = vmatprep.subr.mxu0 0.0
    %6090 = vmatpush1.msra.mxu0 0.0
    %6091 = vmatprep.subr.mxu0 0.0
    %6092 = vmatpush1.msra.mxu0 0.0
    %6093 = vmatprep.subr.mxu0 0.0
    %6094 = vmatpush1.msra.mxu0 0.0
    %6095 = vmatprep.subr.mxu0 0.0
    %6096 = vmatpush1.msra.mxu0 0.0
    %6097 = vmatprep.subr.mxu0 0.0
    %6098 = vmatpush1.msra.mxu0 0.0
    %6099 = vmatprep.subr.mxu0 0.0
    %6100 = vmatpush1.msra.mxu0 0.0
    %6101 = vmatprep.subr.mxu0 0.0
    %6102 = vmatpush1.msra.mxu0 0.0
    %6103 = vmatprep.subr.mxu0 0.0
    %6104 = vmatpush1.msra.mxu0 0.0
    %6105 = vmatprep.subr.mxu0 0.0
    %6106 = vmatpush1.msra.mxu0 0.0
    %6107 = vmatprep.subr.mxu0 0.0
    %6108 = vmatpush1.msra.mxu0 0.0
    %6109 = vmatprep.subr.mxu0 0.0
    %6110 = vmatpush1.msra.mxu0 0.0
    %6111 = vmatprep.subr.mxu0 0.0
    %6112 = vmatpush1.msra.mxu0 0.0
    %6113 = vmatprep.subr.mxu0 0.0
    %6114 = vmatpush1.msra.mxu0 0.0
    %6115 = vmatprep.subr.mxu0 0.0
    %6116 = vmatpush1.msra.mxu0 0.0
    %6117 = vmatprep.subr.mxu0 0.0
    %6118 = vmatpush1.msra.mxu0 0.0
    %6119 = vmatprep.subr.mxu0 0.0
    %6120 = vmatpush1.msra.mxu0 0.0
    %6121 = vmatprep.subr.mxu0 0.0
    %6122 = vmatpush1.msra.mxu0 0.0
    %6123 = vmatprep.subr.mxu0 0.0
    %6124 = vmatpush1.msra.mxu0 0.0
    %6125 = vmatprep.subr.mxu0 0.0
    %6126 = vmatpush1.msra.mxu0 0.0
    %6127 = vmatprep.subr.mxu0 0.0
    %6128 = vmatpush1.msra.mxu0 0.0
    %6129 = vmatprep.subr.mxu0 0.0
    %6130 = vmatpush1.msra.mxu0 0.0
    %6131 = vmatprep.subr.mxu0 0.0
    %6132 = vmatpush1.msra.mxu0 0.0
    %6133 = vmatprep.subr.mxu0 0.0
    %6134 = vmatpush1.msra.mxu0 0.0
    %6135 = vmatprep.subr.mxu0 0.0
    %6136 = vmatpush1.msra.mxu0 0.0
    %6137 = vmatprep.subr.mxu0 0.0
    %6138 = vmatpush1.msra.mxu0 0.0
    %6139 = vmatprep.subr.mxu0 0.0
    %6140 = vmatpush1.msra.mxu0 0.0
    %6141 = vmatprep.subr.mxu0 0.0
    %6142 = vmatpush1.msra.mxu0 0.0
    %6143 = vmatprep.mubr.f32.mxu0 0.0
    %6144 = vmatmul.mubr.f32.gmra.mrb[0].mxu0 %v6077
    %v6145 = vpop.f32.mrb[0].mxu0
    %v6146 = vadd.f32 0.0, %v6145
    %v6147 = vpop.f32.mrb[0].mxu0
    %6148 = vdwg.mxu0
    %6149 = vrot.lane.b32.xlu0 %v5455, 112
    %v6150 = vpop.permute.xlu0 %6149
    %6151 = vrot.lane.b32.xlu0 %v318, 48
    %v6152 = vpop.permute.xlu0 %6151
    %6153 = vrot.lane.b32.xlu0 %v323, 48
    %v6154 = vpop.permute.xlu0 %6153
    %v6155 = vsel %vm431, %v6150, 0
    %v6157 = vsel %vm431, %v6152, 0
    %v6159 = vsel %vm431, %v6154, 0
    %6161 = vmatprep.subr.mxu0 0.0
    %6162 = vmatpush1.xpose.msra.mxu0 %v6157
    %6163 = vmatprep.subr.mxu0 0.0
    %6164 = vmatpush1.xpose.msra.mxu0 %v6159
    %6165 = vmatprep.subr.mxu0 0.0
    %6166 = vmatpush1.xpose.msra.mxu0 0.0
    %6167 = vmatprep.subr.mxu0 0.0
    %6168 = vmatpush1.xpose.msra.mxu0 0.0
    %6169 = vmatprep.subr.mxu0 0.0
    %6170 = vmatpush1.xpose.msra.mxu0 0.0
    %6171 = vmatprep.subr.mxu0 0.0
    %6172 = vmatpush1.xpose.msra.mxu0 0.0
    %6173 = vmatprep.subr.mxu0 0.0
    %6174 = vmatpush1.xpose.msra.mxu0 0.0
    %6175 = vmatprep.subr.mxu0 0.0
    %6176 = vmatpush1.xpose.msra.mxu0 0.0
    %6177 = vmatprep.subr.mxu0 0.0
    %6178 = vmatpush1.xpose.msra.mxu0 0.0
    %6179 = vmatprep.subr.mxu0 0.0
    %6180 = vmatpush1.xpose.msra.mxu0 0.0
    %6181 = vmatprep.subr.mxu0 0.0
    %6182 = vmatpush1.xpose.msra.mxu0 0.0
    %6183 = vmatprep.subr.mxu0 0.0
    %6184 = vmatpush1.xpose.msra.mxu0 0.0
    %6185 = vmatprep.subr.mxu0 0.0
    %6186 = vmatpush1.xpose.msra.mxu0 0.0
    %6187 = vmatprep.subr.mxu0 0.0
    %6188 = vmatpush1.xpose.msra.mxu0 0.0
    %6189 = vmatprep.subr.mxu0 0.0
    %6190 = vmatpush1.xpose.msra.mxu0 0.0
    %6191 = vmatprep.subr.mxu0 0.0
    %6192 = vmatpush1.xpose.msra.mxu0 0.0
    %6193 = vmatprep.subr.mxu0 0.0
    %6194 = vmatpush1.xpose.msra.mxu0 0.0
    %6195 = vmatprep.subr.mxu0 0.0
    %6196 = vmatpush1.xpose.msra.mxu0 0.0
    %6197 = vmatprep.subr.mxu0 0.0
    %6198 = vmatpush1.xpose.msra.mxu0 0.0
    %6199 = vmatprep.subr.mxu0 0.0
    %6200 = vmatpush1.xpose.msra.mxu0 0.0
    %6201 = vmatprep.subr.mxu0 0.0
    %6202 = vmatpush1.xpose.msra.mxu0 0.0
    %6203 = vmatprep.subr.mxu0 0.0
    %6204 = vmatpush1.xpose.msra.mxu0 0.0
    %6205 = vmatprep.subr.mxu0 0.0
    %6206 = vmatpush1.xpose.msra.mxu0 0.0
    %6207 = vmatprep.subr.mxu0 0.0
    %6208 = vmatpush1.xpose.msra.mxu0 0.0
    %6209 = vmatprep.subr.mxu0 0.0
    %6210 = vmatpush1.xpose.msra.mxu0 0.0
    %6211 = vmatprep.subr.mxu0 0.0
    %6212 = vmatpush1.xpose.msra.mxu0 0.0
    %6213 = vmatprep.subr.mxu0 0.0
    %6214 = vmatpush1.xpose.msra.mxu0 0.0
    %6215 = vmatprep.subr.mxu0 0.0
    %6216 = vmatpush1.xpose.msra.mxu0 0.0
    %6217 = vmatprep.subr.mxu0 0.0
    %6218 = vmatpush1.xpose.msra.mxu0 0.0
    %6219 = vmatprep.subr.mxu0 0.0
    %6220 = vmatpush1.xpose.msra.mxu0 0.0
    %6221 = vmatprep.subr.mxu0 0.0
    %6222 = vmatpush1.xpose.msra.mxu0 0.0
    %6223 = vmatprep.subr.mxu0 0.0
    %6224 = vmatpush1.xpose.msra.mxu0 0.0
    %6225 = vmatprep.mubr.f32.mxu0 0.0
    %6226 = vmatmul.mubr.f32.gmra.mrb[0].mxu0 %v6155
    %v6227 = vpop.f32.mrb[0].mxu0
    %v6228 = vadd.f32 0.0, %v6227
    %v6229 = vpop.f32.mrb[0].mxu0
    %6230 = vdwg.mxu0
    %6231 = vrot.lane.b32.xlu0 %v5460, 112
    %v6232 = vpop.permute.xlu0 %6231
    %6233 = vrot.lane.b32.xlu0 %v328, 48
    %v6234 = vpop.permute.xlu0 %6233
    %6235 = vrot.lane.b32.xlu0 %v333, 48
    %v6236 = vpop.permute.xlu0 %6235
    %v6237 = vsel %vm431, %v6232, 0
    %v6239 = vsel %vm431, %v6234, 0
    %v6241 = vsel %vm431, %v6236, 0
    %6243 = vmatprep.subr.mxu0 0.0
    %6244 = vmatpush1.xpose.msra.mxu0 %v6239
    %6245 = vmatprep.subr.mxu0 0.0
    %6246 = vmatpush1.xpose.msra.mxu0 %v6241
    %6247 = vmatprep.subr.mxu0 0.0
    %6248 = vmatpush1.xpose.msra.mxu0 0.0
    %6249 = vmatprep.subr.mxu0 0.0
    %6250 = vmatpush1.xpose.msra.mxu0 0.0
    %6251 = vmatprep.subr.mxu0 0.0
    %6252 = vmatpush1.xpose.msra.mxu0 0.0
    %6253 = vmatprep.subr.mxu0 0.0
    %6254 = vmatpush1.xpose.msra.mxu0 0.0
    %6255 = vmatprep.subr.mxu0 0.0
    %6256 = vmatpush1.xpose.msra.mxu0 0.0
    %6257 = vmatprep.subr.mxu0 0.0
    %6258 = vmatpush1.xpose.msra.mxu0 0.0
    %6259 = vmatprep.subr.mxu0 0.0
    %6260 = vmatpush1.xpose.msra.mxu0 0.0
    %6261 = vmatprep.subr.mxu0 0.0
    %6262 = vmatpush1.xpose.msra.mxu0 0.0
    %6263 = vmatprep.subr.mxu0 0.0
    %6264 = vmatpush1.xpose.msra.mxu0 0.0
    %6265 = vmatprep.subr.mxu0 0.0
    %6266 = vmatpush1.xpose.msra.mxu0 0.0
    %6267 = vmatprep.subr.mxu0 0.0
    %6268 = vmatpush1.xpose.msra.mxu0 0.0
    %6269 = vmatprep.subr.mxu0 0.0
    %6270 = vmatpush1.xpose.msra.mxu0 0.0
    %6271 = vmatprep.subr.mxu0 0.0
    %6272 = vmatpush1.xpose.msra.mxu0 0.0
    %6273 = vmatprep.subr.mxu0 0.0
    %6274 = vmatpush1.xpose.msra.mxu0 0.0
    %6275 = vmatprep.subr.mxu0 0.0
    %6276 = vmatpush1.xpose.msra.mxu0 0.0
    %6277 = vmatprep.subr.mxu0 0.0
    %6278 = vmatpush1.xpose.msra.mxu0 0.0
    %6279 = vmatprep.subr.mxu0 0.0
    %6280 = vmatpush1.xpose.msra.mxu0 0.0
    %6281 = vmatprep.subr.mxu0 0.0
    %6282 = vmatpush1.xpose.msra.mxu0 0.0
    %6283 = vmatprep.subr.mxu0 0.0
    %6284 = vmatpush1.xpose.msra.mxu0 0.0
    %6285 = vmatprep.subr.mxu0 0.0
    %6286 = vmatpush1.xpose.msra.mxu0 0.0
    %6287 = vmatprep.subr.mxu0 0.0
    %6288 = vmatpush1.xpose.msra.mxu0 0.0
    %6289 = vmatprep.subr.mxu0 0.0
    %6290 = vmatpush1.xpose.msra.mxu0 0.0
    %6291 = vmatprep.subr.mxu0 0.0
    %6292 = vmatpush1.xpose.msra.mxu0 0.0
    %6293 = vmatprep.subr.mxu0 0.0
    %6294 = vmatpush1.xpose.msra.mxu0 0.0
    %6295 = vmatprep.subr.mxu0 0.0
    %6296 = vmatpush1.xpose.msra.mxu0 0.0
    %6297 = vmatprep.subr.mxu0 0.0
    %6298 = vmatpush1.xpose.msra.mxu0 0.0
    %6299 = vmatprep.subr.mxu0 0.0
    %6300 = vmatpush1.xpose.msra.mxu0 0.0
    %6301 = vmatprep.subr.mxu0 0.0
    %6302 = vmatpush1.xpose.msra.mxu0 0.0
    %6303 = vmatprep.subr.mxu0 0.0
    %6304 = vmatpush1.xpose.msra.mxu0 0.0
    %6305 = vmatprep.subr.mxu0 0.0
    %6306 = vmatpush1.xpose.msra.mxu0 0.0
    %6307 = vmatprep.mubr.f32.mxu0 0.0
    %6308 = vmatmul.mubr.f32.gmra.mrb[0].mxu0 %v6237
    %v6309 = vpop.f32.mrb[0].mxu0
    %v6310 = vadd.f32 0.0, %v6309
    %v6311 = vpop.f32.mrb[0].mxu0
    %6312 = vdwg.mxu0
    %v6313 = vsel %vm1773, %v6228, -inf
    %6314 = vmax.xlane.f32.xlu0 %v6313
    %v6315 = vpop.xlane.xlu0 %6314
    %v6316 = vsel %vm1773, %v6310, -inf
    %6317 = vmax.xlane.f32.xlu0 %v6316
    %v6318 = vpop.xlane.xlu0 %6317
    %v6319 = vsub.f32 %v6228, %v6315
    %v6320 = vsub.f32 %v6310, %v6318
    %v6321 = vmul.f32 %v6319, 1.442695
    %v6322 = vpow.pop %v6321
    %v6323 = vmul.f32 %v6320, 1.442695
    %v6324 = vpow.pop %v6323
    %v6325 = vsel %vm1773, %v6322, 0.0
    %6326 = vadd.xlane.f32.xlu0 %v6325
    %v6327 = vpop.xlane.xlu0 %6326
    %v6328 = vsel %vm1773, %v6324, 0.0
    %6329 = vadd.xlane.f32.xlu0 %v6328
    %v6330 = vpop.xlane.xlu0 %6329
    %v6331 = vrcp.pop %v6327
    %v6332 = vrcp.pop %v6330
    %v6333 = vmul.f32 %v6322, %v6331
    %v6334 = vmul.f32 %v6324, %v6332
    %6335 = vrot.lane.b32.xlu0 %v318, 16
    %v6336 = vpop.permute.xlu0 %6335
    %6337 = vrot.lane.b32.xlu0 %v323, 16
    %v6338 = vpop.permute.xlu0 %6337
    %v6342 = vsel %vm1773, %v6333, 0
    %6344 = vmatprep.subr.mxu0 0.0
    %6345 = vmatpush1.msra.mxu0 %v6336
    %6346 = vmatprep.subr.mxu0 0.0
    %6347 = vmatpush1.msra.mxu0 %v6338
    %6348 = vmatprep.subr.mxu0 0.0
    %6349 = vmatpush1.msra.mxu0 0.0
    %6350 = vmatprep.subr.mxu0 0.0
    %6351 = vmatpush1.msra.mxu0 0.0
    %6352 = vmatprep.subr.mxu0 0.0
    %6353 = vmatpush1.msra.mxu0 0.0
    %6354 = vmatprep.subr.mxu0 0.0
    %6355 = vmatpush1.msra.mxu0 0.0
    %6356 = vmatprep.subr.mxu0 0.0
    %6357 = vmatpush1.msra.mxu0 0.0
    %6358 = vmatprep.subr.mxu0 0.0
    %6359 = vmatpush1.msra.mxu0 0.0
    %6360 = vmatprep.subr.mxu0 0.0
    %6361 = vmatpush1.msra.mxu0 0.0
    %6362 = vmatprep.subr.mxu0 0.0
    %6363 = vmatpush1.msra.mxu0 0.0
    %6364 = vmatprep.subr.mxu0 0.0
    %6365 = vmatpush1.msra.mxu0 0.0
    %6366 = vmatprep.subr.mxu0 0.0
    %6367 = vmatpush1.msra.mxu0 0.0
    %6368 = vmatprep.subr.mxu0 0.0
    %6369 = vmatpush1.msra.mxu0 0.0
    %6370 = vmatprep.subr.mxu0 0.0
    %6371 = vmatpush1.msra.mxu0 0.0
    %6372 = vmatprep.subr.mxu0 0.0
    %6373 = vmatpush1.msra.mxu0 0.0
    %6374 = vmatprep.subr.mxu0 0.0
    %6375 = vmatpush1.msra.mxu0 0.0
    %6376 = vmatprep.subr.mxu0 0.0
    %6377 = vmatpush1.msra.mxu0 0.0
    %6378 = vmatprep.subr.mxu0 0.0
    %6379 = vmatpush1.msra.mxu0 0.0
    %6380 = vmatprep.subr.mxu0 0.0
    %6381 = vmatpush1.msra.mxu0 0.0
    %6382 = vmatprep.subr.mxu0 0.0
    %6383 = vmatpush1.msra.mxu0 0.0
    %6384 = vmatprep.subr.mxu0 0.0
    %6385 = vmatpush1.msra.mxu0 0.0
    %6386 = vmatprep.subr.mxu0 0.0
    %6387 = vmatpush1.msra.mxu0 0.0
    %6388 = vmatprep.subr.mxu0 0.0
    %6389 = vmatpush1.msra.mxu0 0.0
    %6390 = vmatprep.subr.mxu0 0.0
    %6391 = vmatpush1.msra.mxu0 0.0
    %6392 = vmatprep.subr.mxu0 0.0
    %6393 = vmatpush1.msra.mxu0 0.0
    %6394 = vmatprep.subr.mxu0 0.0
    %6395 = vmatpush1.msra.mxu0 0.0
    %6396 = vmatprep.subr.mxu0 0.0
    %6397 = vmatpush1.msra.mxu0 0.0
    %6398 = vmatprep.subr.mxu0 0.0
    %6399 = vmatpush1.msra.mxu0 0.0
    %6400 = vmatprep.subr.mxu0 0.0
    %6401 = vmatpush1.msra.mxu0 0.0
    %6402 = vmatprep.subr.mxu0 0.0
    %6403 = vmatpush1.msra.mxu0 0.0
    %6404 = vmatprep.subr.mxu0 0.0
    %6405 = vmatpush1.msra.mxu0 0.0
    %6406 = vmatprep.subr.mxu0 0.0
    %6407 = vmatpush1.msra.mxu0 0.0
    %6408 = vmatprep.mubr.f32.mxu0 0.0
    %6409 = vmatmul.mubr.f32.gmra.mrb[0].mxu0 %v6342
    %v6410 = vpop.f32.mrb[0].mxu0
    %v6411 = vadd.f32 0.0, %v6410
    %v6412 = vpop.f32.mrb[0].mxu0
    %6413 = vdwg.mxu0
    %6414 = vrot.lane.b32.xlu0 %v328, 16
    %v6415 = vpop.permute.xlu0 %6414
    %6416 = vrot.lane.b32.xlu0 %v333, 16
    %v6417 = vpop.permute.xlu0 %6416
    %v6421 = vsel %vm1773, %v6334, 0
    %6423 = vmatprep.subr.mxu0 0.0
    %6424 = vmatpush1.msra.mxu0 %v6415
    %6425 = vmatprep.subr.mxu0 0.0
    %6426 = vmatpush1.msra.mxu0 %v6417
    %6427 = vmatprep.subr.mxu0 0.0
    %6428 = vmatpush1.msra.mxu0 0.0
    %6429 = vmatprep.subr.mxu0 0.0
    %6430 = vmatpush1.msra.mxu0 0.0
    %6431 = vmatprep.subr.mxu0 0.0
    %6432 = vmatpush1.msra.mxu0 0.0
    %6433 = vmatprep.subr.mxu0 0.0
    %6434 = vmatpush1.msra.mxu0 0.0
    %6435 = vmatprep.subr.mxu0 0.0
    %6436 = vmatpush1.msra.mxu0 0.0
    %6437 = vmatprep.subr.mxu0 0.0
    %6438 = vmatpush1.msra.mxu0 0.0
    %6439 = vmatprep.subr.mxu0 0.0
    %6440 = vmatpush1.msra.mxu0 0.0
    %6441 = vmatprep.subr.mxu0 0.0
    %6442 = vmatpush1.msra.mxu0 0.0
    %6443 = vmatprep.subr.mxu0 0.0
    %6444 = vmatpush1.msra.mxu0 0.0
    %6445 = vmatprep.subr.mxu0 0.0
    %6446 = vmatpush1.msra.mxu0 0.0
    %6447 = vmatprep.subr.mxu0 0.0
    %6448 = vmatpush1.msra.mxu0 0.0
    %6449 = vmatprep.subr.mxu0 0.0
    %6450 = vmatpush1.msra.mxu0 0.0
    %6451 = vmatprep.subr.mxu0 0.0
    %6452 = vmatpush1.msra.mxu0 0.0
    %6453 = vmatprep.subr.mxu0 0.0
    %6454 = vmatpush1.msra.mxu0 0.0
    %6455 = vmatprep.subr.mxu0 0.0
    %6456 = vmatpush1.msra.mxu0 0.0
    %6457 = vmatprep.subr.mxu0 0.0
    %6458 = vmatpush1.msra.mxu0 0.0
    %6459 = vmatprep.subr.mxu0 0.0
    %6460 = vmatpush1.msra.mxu0 0.0
    %6461 = vmatprep.subr.mxu0 0.0
    %6462 = vmatpush1.msra.mxu0 0.0
    %6463 = vmatprep.subr.mxu0 0.0
    %6464 = vmatpush1.msra.mxu0 0.0
    %6465 = vmatprep.subr.mxu0 0.0
    %6466 = vmatpush1.msra.mxu0 0.0
    %6467 = vmatprep.subr.mxu0 0.0
    %6468 = vmatpush1.msra.mxu0 0.0
    %6469 = vmatprep.subr.mxu0 0.0
    %6470 = vmatpush1.msra.mxu0 0.0
    %6471 = vmatprep.subr.mxu0 0.0
    %6472 = vmatpush1.msra.mxu0 0.0
    %6473 = vmatprep.subr.mxu0 0.0
    %6474 = vmatpush1.msra.mxu0 0.0
    %6475 = vmatprep.subr.mxu0 0.0
    %6476 = vmatpush1.msra.mxu0 0.0
    %6477 = vmatprep.subr.mxu0 0.0
    %6478 = vmatpush1.msra.mxu0 0.0
    %6479 = vmatprep.subr.mxu0 0.0
    %6480 = vmatpush1.msra.mxu0 0.0
    %6481 = vmatprep.subr.mxu0 0.0
    %6482 = vmatpush1.msra.mxu0 0.0
    %6483 = vmatprep.subr.mxu0 0.0
    %6484 = vmatpush1.msra.mxu0 0.0
    %6485 = vmatprep.subr.mxu0 0.0
    %6486 = vmatpush1.msra.mxu0 0.0
    %6487 = vmatprep.mubr.f32.mxu0 0.0
    %6488 = vmatmul.mubr.f32.gmra.mrb[0].mxu0 %v6421
    %v6489 = vpop.f32.mrb[0].mxu0
    %v6490 = vadd.f32 0.0, %v6489
    %v6491 = vpop.f32.mrb[0].mxu0
    %6492 = vdwg.mxu0
    %6493 = vrot.lane.b32.xlu0 %v5455, 104
    %v6494 = vpop.permute.xlu0 %6493
    %6495 = vrot.lane.b32.xlu0 %v318, 40
    %v6496 = vpop.permute.xlu0 %6495
    %6497 = vrot.lane.b32.xlu0 %v323, 40
    %v6498 = vpop.permute.xlu0 %6497
    %v6499 = vsel %vm431, %v6494, 0
    %v6501 = vsel %vm431, %v6496, 0
    %v6503 = vsel %vm431, %v6498, 0
    %6505 = vmatprep.subr.mxu0 0.0
    %6506 = vmatpush1.xpose.msra.mxu0 %v6501
    %6507 = vmatprep.subr.mxu0 0.0
    %6508 = vmatpush1.xpose.msra.mxu0 %v6503
    %6509 = vmatprep.subr.mxu0 0.0
    %6510 = vmatpush1.xpose.msra.mxu0 0.0
    %6511 = vmatprep.subr.mxu0 0.0
    %6512 = vmatpush1.xpose.msra.mxu0 0.0
    %6513 = vmatprep.subr.mxu0 0.0
    %6514 = vmatpush1.xpose.msra.mxu0 0.0
    %6515 = vmatprep.subr.mxu0 0.0
    %6516 = vmatpush1.xpose.msra.mxu0 0.0
    %6517 = vmatprep.subr.mxu0 0.0
    %6518 = vmatpush1.xpose.msra.mxu0 0.0
    %6519 = vmatprep.subr.mxu0 0.0
    %6520 = vmatpush1.xpose.msra.mxu0 0.0
    %6521 = vmatprep.subr.mxu0 0.0
    %6522 = vmatpush1.xpose.msra.mxu0 0.0
    %6523 = vmatprep.subr.mxu0 0.0
    %6524 = vmatpush1.xpose.msra.mxu0 0.0
    %6525 = vmatprep.subr.mxu0 0.0
    %6526 = vmatpush1.xpose.msra.mxu0 0.0
    %6527 = vmatprep.subr.mxu0 0.0
    %6528 = vmatpush1.xpose.msra.mxu0 0.0
    %6529 = vmatprep.subr.mxu0 0.0
    %6530 = vmatpush1.xpose.msra.mxu0 0.0
    %6531 = vmatprep.subr.mxu0 0.0
    %6532 = vmatpush1.xpose.msra.mxu0 0.0
    %6533 = vmatprep.subr.mxu0 0.0
    %6534 = vmatpush1.xpose.msra.mxu0 0.0
    %6535 = vmatprep.subr.mxu0 0.0
    %6536 = vmatpush1.xpose.msra.mxu0 0.0
    %6537 = vmatprep.subr.mxu0 0.0
    %6538 = vmatpush1.xpose.msra.mxu0 0.0
    %6539 = vmatprep.subr.mxu0 0.0
    %6540 = vmatpush1.xpose.msra.mxu0 0.0
    %6541 = vmatprep.subr.mxu0 0.0
    %6542 = vmatpush1.xpose.msra.mxu0 0.0
    %6543 = vmatprep.subr.mxu0 0.0
    %6544 = vmatpush1.xpose.msra.mxu0 0.0
    %6545 = vmatprep.subr.mxu0 0.0
    %6546 = vmatpush1.xpose.msra.mxu0 0.0
    %6547 = vmatprep.subr.mxu0 0.0
    %6548 = vmatpush1.xpose.msra.mxu0 0.0
    %6549 = vmatprep.subr.mxu0 0.0
    %6550 = vmatpush1.xpose.msra.mxu0 0.0
    %6551 = vmatprep.subr.mxu0 0.0
    %6552 = vmatpush1.xpose.msra.mxu0 0.0
    %6553 = vmatprep.subr.mxu0 0.0
    %6554 = vmatpush1.xpose.msra.mxu0 0.0
    %6555 = vmatprep.subr.mxu0 0.0
    %6556 = vmatpush1.xpose.msra.mxu0 0.0
    %6557 = vmatprep.subr.mxu0 0.0
    %6558 = vmatpush1.xpose.msra.mxu0 0.0
    %6559 = vmatprep.subr.mxu0 0.0
    %6560 = vmatpush1.xpose.msra.mxu0 0.0
    %6561 = vmatprep.subr.mxu0 0.0
    %6562 = vmatpush1.xpose.msra.mxu0 0.0
    %6563 = vmatprep.subr.mxu0 0.0
    %6564 = vmatpush1.xpose.msra.mxu0 0.0
    %6565 = vmatprep.subr.mxu0 0.0
    %6566 = vmatpush1.xpose.msra.mxu0 0.0
    %6567 = vmatprep.subr.mxu0 0.0
    %6568 = vmatpush1.xpose.msra.mxu0 0.0
    %6569 = vmatprep.mubr.f32.mxu0 0.0
    %6570 = vmatmul.mubr.f32.gmra.mrb[0].mxu0 %v6499
    %v6571 = vpop.f32.mrb[0].mxu0
    %v6572 = vadd.f32 0.0, %v6571
    %v6573 = vpop.f32.mrb[0].mxu0
    %6574 = vdwg.mxu0
    %6575 = vrot.lane.b32.xlu0 %v5460, 104
    %v6576 = vpop.permute.xlu0 %6575
    %6577 = vrot.lane.b32.xlu0 %v328, 40
    %v6578 = vpop.permute.xlu0 %6577
    %6579 = vrot.lane.b32.xlu0 %v333, 40
    %v6580 = vpop.permute.xlu0 %6579
    %v6581 = vsel %vm431, %v6576, 0
    %v6583 = vsel %vm431, %v6578, 0
    %v6585 = vsel %vm431, %v6580, 0
    %6587 = vmatprep.subr.mxu0 0.0
    %6588 = vmatpush1.xpose.msra.mxu0 %v6583
    %6589 = vmatprep.subr.mxu0 0.0
    %6590 = vmatpush1.xpose.msra.mxu0 %v6585
    %6591 = vmatprep.subr.mxu0 0.0
    %6592 = vmatpush1.xpose.msra.mxu0 0.0
    %6593 = vmatprep.subr.mxu0 0.0
    %6594 = vmatpush1.xpose.msra.mxu0 0.0
    %6595 = vmatprep.subr.mxu0 0.0
    %6596 = vmatpush1.xpose.msra.mxu0 0.0
    %6597 = vmatprep.subr.mxu0 0.0
    %6598 = vmatpush1.xpose.msra.mxu0 0.0
    %6599 = vmatprep.subr.mxu0 0.0
    %6600 = vmatpush1.xpose.msra.mxu0 0.0
    %6601 = vmatprep.subr.mxu0 0.0
    %6602 = vmatpush1.xpose.msra.mxu0 0.0
    %6603 = vmatprep.subr.mxu0 0.0
    %6604 = vmatpush1.xpose.msra.mxu0 0.0
    %6605 = vmatprep.subr.mxu0 0.0
    %6606 = vmatpush1.xpose.msra.mxu0 0.0
    %6607 = vmatprep.subr.mxu0 0.0
    %6608 = vmatpush1.xpose.msra.mxu0 0.0
    %6609 = vmatprep.subr.mxu0 0.0
    %6610 = vmatpush1.xpose.msra.mxu0 0.0
    %6611 = vmatprep.subr.mxu0 0.0
    %6612 = vmatpush1.xpose.msra.mxu0 0.0
    %6613 = vmatprep.subr.mxu0 0.0
    %6614 = vmatpush1.xpose.msra.mxu0 0.0
    %6615 = vmatprep.subr.mxu0 0.0
    %6616 = vmatpush1.xpose.msra.mxu0 0.0
    %6617 = vmatprep.subr.mxu0 0.0
    %6618 = vmatpush1.xpose.msra.mxu0 0.0
    %6619 = vmatprep.subr.mxu0 0.0
    %6620 = vmatpush1.xpose.msra.mxu0 0.0
    %6621 = vmatprep.subr.mxu0 0.0
    %6622 = vmatpush1.xpose.msra.mxu0 0.0
    %6623 = vmatprep.subr.mxu0 0.0
    %6624 = vmatpush1.xpose.msra.mxu0 0.0
    %6625 = vmatprep.subr.mxu0 0.0
    %6626 = vmatpush1.xpose.msra.mxu0 0.0
    %6627 = vmatprep.subr.mxu0 0.0
    %6628 = vmatpush1.xpose.msra.mxu0 0.0
    %6629 = vmatprep.subr.mxu0 0.0
    %6630 = vmatpush1.xpose.msra.mxu0 0.0
    %6631 = vmatprep.subr.mxu0 0.0
    %6632 = vmatpush1.xpose.msra.mxu0 0.0
    %6633 = vmatprep.subr.mxu0 0.0
    %6634 = vmatpush1.xpose.msra.mxu0 0.0
    %6635 = vmatprep.subr.mxu0 0.0
    %6636 = vmatpush1.xpose.msra.mxu0 0.0
    %6637 = vmatprep.subr.mxu0 0.0
    %6638 = vmatpush1.xpose.msra.mxu0 0.0
    %6639 = vmatprep.subr.mxu0 0.0
    %6640 = vmatpush1.xpose.msra.mxu0 0.0
    %6641 = vmatprep.subr.mxu0 0.0
    %6642 = vmatpush1.xpose.msra.mxu0 0.0
    %6643 = vmatprep.subr.mxu0 0.0
    %6644 = vmatpush1.xpose.msra.mxu0 0.0
    %6645 = vmatprep.subr.mxu0 0.0
    %6646 = vmatpush1.xpose.msra.mxu0 0.0
    %6647 = vmatprep.subr.mxu0 0.0
    %6648 = vmatpush1.xpose.msra.mxu0 0.0
    %6649 = vmatprep.subr.mxu0 0.0
    %6650 = vmatpush1.xpose.msra.mxu0 0.0
    %6651 = vmatprep.mubr.f32.mxu0 0.0
    %6652 = vmatmul.mubr.f32.gmra.mrb[0].mxu0 %v6581
    %v6653 = vpop.f32.mrb[0].mxu0
    %v6654 = vadd.f32 0.0, %v6653
    %v6655 = vpop.f32.mrb[0].mxu0
    %6656 = vdwg.mxu0
    %v6657 = vsel %vm1773, %v6572, -inf
    %6658 = vmax.xlane.f32.xlu0 %v6657
    %v6659 = vpop.xlane.xlu0 %6658
    %v6660 = vsel %vm1773, %v6654, -inf
    %6661 = vmax.xlane.f32.xlu0 %v6660
    %v6662 = vpop.xlane.xlu0 %6661
    %v6663 = vsub.f32 %v6572, %v6659
    %v6664 = vsub.f32 %v6654, %v6662
    %v6665 = vmul.f32 %v6663, 1.442695
    %v6666 = vpow.pop %v6665
    %v6667 = vmul.f32 %v6664, 1.442695
    %v6668 = vpow.pop %v6667
    %v6669 = vsel %vm1773, %v6666, 0.0
    %6670 = vadd.xlane.f32.xlu0 %v6669
    %v6671 = vpop.xlane.xlu0 %6670
    %v6672 = vsel %vm1773, %v6668, 0.0
    %6673 = vadd.xlane.f32.xlu0 %v6672
    %v6674 = vpop.xlane.xlu0 %6673
    %v6675 = vrcp.pop %v6671
    %v6676 = vrcp.pop %v6674
    %v6677 = vmul.f32 %v6666, %v6675
    %v6678 = vmul.f32 %v6668, %v6676
    %6679 = vrot.lane.b32.xlu0 %v318, 8
    %v6680 = vpop.permute.xlu0 %6679
    %6681 = vrot.lane.b32.xlu0 %v323, 8
    %v6682 = vpop.permute.xlu0 %6681
    %v6686 = vsel %vm1773, %v6677, 0
    %6688 = vmatprep.subr.mxu0 0.0
    %6689 = vmatpush1.msra.mxu0 %v6680
    %6690 = vmatprep.subr.mxu0 0.0
    %6691 = vmatpush1.msra.mxu0 %v6682
    %6692 = vmatprep.subr.mxu0 0.0
    %6693 = vmatpush1.msra.mxu0 0.0
    %6694 = vmatprep.subr.mxu0 0.0
    %6695 = vmatpush1.msra.mxu0 0.0
    %6696 = vmatprep.subr.mxu0 0.0
    %6697 = vmatpush1.msra.mxu0 0.0
    %6698 = vmatprep.subr.mxu0 0.0
    %6699 = vmatpush1.msra.mxu0 0.0
    %6700 = vmatprep.subr.mxu0 0.0
    %6701 = vmatpush1.msra.mxu0 0.0
    %6702 = vmatprep.subr.mxu0 0.0
    %6703 = vmatpush1.msra.mxu0 0.0
    %6704 = vmatprep.subr.mxu0 0.0
    %6705 = vmatpush1.msra.mxu0 0.0
    %6706 = vmatprep.subr.mxu0 0.0
    %6707 = vmatpush1.msra.mxu0 0.0
    %6708 = vmatprep.subr.mxu0 0.0
    %6709 = vmatpush1.msra.mxu0 0.0
    %6710 = vmatprep.subr.mxu0 0.0
    %6711 = vmatpush1.msra.mxu0 0.0
    %6712 = vmatprep.subr.mxu0 0.0
    %6713 = vmatpush1.msra.mxu0 0.0
    %6714 = vmatprep.subr.mxu0 0.0
    %6715 = vmatpush1.msra.mxu0 0.0
    %6716 = vmatprep.subr.mxu0 0.0
    %6717 = vmatpush1.msra.mxu0 0.0
    %6718 = vmatprep.subr.mxu0 0.0
    %6719 = vmatpush1.msra.mxu0 0.0
    %6720 = vmatprep.subr.mxu0 0.0
    %6721 = vmatpush1.msra.mxu0 0.0
    %6722 = vmatprep.subr.mxu0 0.0
    %6723 = vmatpush1.msra.mxu0 0.0
    %6724 = vmatprep.subr.mxu0 0.0
    %6725 = vmatpush1.msra.mxu0 0.0
    %6726 = vmatprep.subr.mxu0 0.0
    %6727 = vmatpush1.msra.mxu0 0.0
    %6728 = vmatprep.subr.mxu0 0.0
    %6729 = vmatpush1.msra.mxu0 0.0
    %6730 = vmatprep.subr.mxu0 0.0
    %6731 = vmatpush1.msra.mxu0 0.0
    %6732 = vmatprep.subr.mxu0 0.0
    %6733 = vmatpush1.msra.mxu0 0.0
    %6734 = vmatprep.subr.mxu0 0.0
    %6735 = vmatpush1.msra.mxu0 0.0
    %6736 = vmatprep.subr.mxu0 0.0
    %6737 = vmatpush1.msra.mxu0 0.0
    %6738 = vmatprep.subr.mxu0 0.0
    %6739 = vmatpush1.msra.mxu0 0.0
    %6740 = vmatprep.subr.mxu0 0.0
    %6741 = vmatpush1.msra.mxu0 0.0
    %6742 = vmatprep.subr.mxu0 0.0
    %6743 = vmatpush1.msra.mxu0 0.0
    %6744 = vmatprep.subr.mxu0 0.0
    %6745 = vmatpush1.msra.mxu0 0.0
    %6746 = vmatprep.subr.mxu0 0.0
    %6747 = vmatpush1.msra.mxu0 0.0
    %6748 = vmatprep.subr.mxu0 0.0
    %6749 = vmatpush1.msra.mxu0 0.0
    %6750 = vmatprep.subr.mxu0 0.0
    %6751 = vmatpush1.msra.mxu0 0.0
    %6752 = vmatprep.mubr.f32.mxu0 0.0
    %6753 = vmatmul.mubr.f32.gmra.mrb[0].mxu0 %v6686
    %v6754 = vpop.f32.mrb[0].mxu0
    %v6755 = vadd.f32 0.0, %v6754
    %v6756 = vpop.f32.mrb[0].mxu0
    %6757 = vdwg.mxu0
    %6758 = vrot.lane.b32.xlu0 %v328, 8
    %v6759 = vpop.permute.xlu0 %6758
    %6760 = vrot.lane.b32.xlu0 %v333, 8
    %v6761 = vpop.permute.xlu0 %6760
    %v6765 = vsel %vm1773, %v6678, 0
    %6767 = vmatprep.subr.mxu0 0.0
    %6768 = vmatpush1.msra.mxu0 %v6759
    %6769 = vmatprep.subr.mxu0 0.0
    %6770 = vmatpush1.msra.mxu0 %v6761
    %6771 = vmatprep.subr.mxu0 0.0
    %6772 = vmatpush1.msra.mxu0 0.0
    %6773 = vmatprep.subr.mxu0 0.0
    %6774 = vmatpush1.msra.mxu0 0.0
    %6775 = vmatprep.subr.mxu0 0.0
    %6776 = vmatpush1.msra.mxu0 0.0
    %6777 = vmatprep.subr.mxu0 0.0
    %6778 = vmatpush1.msra.mxu0 0.0
    %6779 = vmatprep.subr.mxu0 0.0
    %6780 = vmatpush1.msra.mxu0 0.0
    %6781 = vmatprep.subr.mxu0 0.0
    %6782 = vmatpush1.msra.mxu0 0.0
    %6783 = vmatprep.subr.mxu0 0.0
    %6784 = vmatpush1.msra.mxu0 0.0
    %6785 = vmatprep.subr.mxu0 0.0
    %6786 = vmatpush1.msra.mxu0 0.0
    %6787 = vmatprep.subr.mxu0 0.0
    %6788 = vmatpush1.msra.mxu0 0.0
    %6789 = vmatprep.subr.mxu0 0.0
    %6790 = vmatpush1.msra.mxu0 0.0
    %6791 = vmatprep.subr.mxu0 0.0
    %6792 = vmatpush1.msra.mxu0 0.0
    %6793 = vmatprep.subr.mxu0 0.0
    %6794 = vmatpush1.msra.mxu0 0.0
    %6795 = vmatprep.subr.mxu0 0.0
    %6796 = vmatpush1.msra.mxu0 0.0
    %6797 = vmatprep.subr.mxu0 0.0
    %6798 = vmatpush1.msra.mxu0 0.0
    %6799 = vmatprep.subr.mxu0 0.0
    %6800 = vmatpush1.msra.mxu0 0.0
    %6801 = vmatprep.subr.mxu0 0.0
    %6802 = vmatpush1.msra.mxu0 0.0
    %6803 = vmatprep.subr.mxu0 0.0
    %6804 = vmatpush1.msra.mxu0 0.0
    %6805 = vmatprep.subr.mxu0 0.0
    %6806 = vmatpush1.msra.mxu0 0.0
    %6807 = vmatprep.subr.mxu0 0.0
    %6808 = vmatpush1.msra.mxu0 0.0
    %6809 = vmatprep.subr.mxu0 0.0
    %6810 = vmatpush1.msra.mxu0 0.0
    %6811 = vmatprep.subr.mxu0 0.0
    %6812 = vmatpush1.msra.mxu0 0.0
    %6813 = vmatprep.subr.mxu0 0.0
    %6814 = vmatpush1.msra.mxu0 0.0
    %6815 = vmatprep.subr.mxu0 0.0
    %6816 = vmatpush1.msra.mxu0 0.0
    %6817 = vmatprep.subr.mxu0 0.0
    %6818 = vmatpush1.msra.mxu0 0.0
    %6819 = vmatprep.subr.mxu0 0.0
    %6820 = vmatpush1.msra.mxu0 0.0
    %6821 = vmatprep.subr.mxu0 0.0
    %6822 = vmatpush1.msra.mxu0 0.0
    %6823 = vmatprep.subr.mxu0 0.0
    %6824 = vmatpush1.msra.mxu0 0.0
    %6825 = vmatprep.subr.mxu0 0.0
    %6826 = vmatpush1.msra.mxu0 0.0
    %6827 = vmatprep.subr.mxu0 0.0
    %6828 = vmatpush1.msra.mxu0 0.0
    %6829 = vmatprep.subr.mxu0 0.0
    %6830 = vmatpush1.msra.mxu0 0.0
    %6831 = vmatprep.mubr.f32.mxu0 0.0
    %6832 = vmatmul.mubr.f32.gmra.mrb[0].mxu0 %v6765
    %v6833 = vpop.f32.mrb[0].mxu0
    %v6834 = vadd.f32 0.0, %v6833
    %v6835 = vpop.f32.mrb[0].mxu0
    %6836 = vdwg.mxu0
    %6839 = vrot.lane.b32.xlu0 %v6067, 8
    %v6840 = vpop.permute.xlu0 %6839
    %6841 = vrot.lane.b32.xlu0 %v6146, 8
    %v6842 = vpop.permute.xlu0 %6841
    %6847 = vrot.lane.b32.xlu0 %v6411, 16
    %v6848 = vpop.permute.xlu0 %6847
    %6849 = vrot.lane.b32.xlu0 %v6490, 16
    %v6850 = vpop.permute.xlu0 %6849
    %6855 = vrot.lane.b32.xlu0 %v6755, 24
    %v6856 = vpop.permute.xlu0 %6855
    %6857 = vrot.lane.b32.xlu0 %v6834, 24
    %v6858 = vpop.permute.xlu0 %6857
    %v6861 = vsel %vm431, %v5723, %v6840
    %v6862 = vsel %vm431, %v5802, %v6842
    %v6863 = vsel %vm1773, %v6861, %v6848
    %v6864 = vsel %vm1773, %v6862, %v6850
    %v6865 = vsel %vm1776, %v6863, %v6856
    %v6866 = vsel %vm1776, %v6864, %v6858
    %s6867 = scalar_lea.vmem [#allocation8], 32
    %v6868 = vld [vmem:[%s6867] sm:$0xff]
    %v6869 = vld [vmem:[%s6867 + $0x8] sm:$0xff]
    %v6870 = vld [vmem:[%s6867 + $0x10] sm:$0xff]
    %v6871 = vld [vmem:[%s6867 + $0x18] sm:$0xff]
    %s6872 = scalar_lea.vmem %s11, 1
    %v6873 = vld [vmem:[%s6872] sm:$0x1]
    %v6875 = vlaneseq
    %v6876 = vshrl.u32 %v6875, 7
    %v6877 = vsub.s32 0, %v6876
    %v6878 = vrot.slane %v6873, %v6877
    %v6881 = vsel %vm238, %v6865, 0
    %v6884 = vsel %vm238, %v6866, 0
    %6886 = vmatprep.subr.mxu0 0.0
    %6887 = vmatpush1.msra.mxu0 %v6868
    %6888 = vmatprep.subr.mxu0 0.0
    %6889 = vmatpush1.msra.mxu0 %v6869
    %6890 = vmatprep.subr.mxu0 0.0
    %6891 = vmatpush1.msra.mxu0 %v6870
    %6892 = vmatprep.subr.mxu0 0.0
    %6893 = vmatpush1.msra.mxu0 %v6871
    %6894 = vmatprep.subr.mxu0 0.0
    %6895 = vmatpush1.msra.mxu0 0.0
    %6896 = vmatprep.subr.mxu0 0.0
    %6897 = vmatpush1.msra.mxu0 0.0
    %6898 = vmatprep.subr.mxu0 0.0
    %6899 = vmatpush1.msra.mxu0 0.0
    %6900 = vmatprep.subr.mxu0 0.0
    %6901 = vmatpush1.msra.mxu0 0.0
    %6902 = vmatprep.subr.mxu0 0.0
    %6903 = vmatpush1.msra.mxu0 0.0
    %6904 = vmatprep.subr.mxu0 0.0
    %6905 = vmatpush1.msra.mxu0 0.0
    %6906 = vmatprep.subr.mxu0 0.0
    %6907 = vmatpush1.msra.mxu0 0.0
    %6908 = vmatprep.subr.mxu0 0.0
    %6909 = vmatpush1.msra.mxu0 0.0
    %6910 = vmatprep.subr.mxu0 0.0
    %6911 = vmatpush1.msra.mxu0 0.0
    %6912 = vmatprep.subr.mxu0 0.0
    %6913 = vmatpush1.msra.mxu0 0.0
    %6914 = vmatprep.subr.mxu0 0.0
    %6915 = vmatpush1.msra.mxu0 0.0
    %6916 = vmatprep.subr.mxu0 0.0
    %6917 = vmatpush1.msra.mxu0 0.0
    %6918 = vmatprep.subr.mxu0 0.0
    %6919 = vmatpush1.msra.mxu0 0.0
    %6920 = vmatprep.subr.mxu0 0.0
    %6921 = vmatpush1.msra.mxu0 0.0
    %6922 = vmatprep.subr.mxu0 0.0
    %6923 = vmatpush1.msra.mxu0 0.0
    %6924 = vmatprep.subr.mxu0 0.0
    %6925 = vmatpush1.msra.mxu0 0.0
    %6926 = vmatprep.subr.mxu0 0.0
    %6927 = vmatpush1.msra.mxu0 0.0
    %6928 = vmatprep.subr.mxu0 0.0
    %6929 = vmatpush1.msra.mxu0 0.0
    %6930 = vmatprep.subr.mxu0 0.0
    %6931 = vmatpush1.msra.mxu0 0.0
    %6932 = vmatprep.subr.mxu0 0.0
    %6933 = vmatpush1.msra.mxu0 0.0
    %6934 = vmatprep.subr.mxu0 0.0
    %6935 = vmatpush1.msra.mxu0 0.0
    %6936 = vmatprep.subr.mxu0 0.0
    %6937 = vmatpush1.msra.mxu0 0.0
    %6938 = vmatprep.subr.mxu0 0.0
    %6939 = vmatpush1.msra.mxu0 0.0
    %6940 = vmatprep.subr.mxu0 0.0
    %6941 = vmatpush1.msra.mxu0 0.0
    %6942 = vmatprep.subr.mxu0 0.0
    %6943 = vmatpush1.msra.mxu0 0.0
    %6944 = vmatprep.subr.mxu0 0.0
    %6945 = vmatpush1.msra.mxu0 0.0
    %6946 = vmatprep.subr.mxu0 0.0
    %6947 = vmatpush1.msra.mxu0 0.0
    %6948 = vmatprep.subr.mxu0 0.0
    %6949 = vmatpush1.msra.mxu0 0.0
    %6950 = vmatprep.mubr.f32.mxu0 0.0
    %6951 = vmatmul.mubr.f32.gmra.mrb[0].mxu0 %v6881
    %v6952 = vpop.f32.mrb[0].mxu0
    %v6953 = vadd.f32 %v6878, %v6952
    %v6954 = vpop.f32.mrb[0].mxu0
    %6955 = vmatprep.mubr.f32.mxu0 0.0
    %6956 = vmatmul.mubr.f32.gmra.mrb[0].mxu0 %v6884
    %v6957 = vpop.f32.mrb[0].mxu0
    %v6958 = vadd.f32 %v6878, %v6957
    %v6959 = vpop.f32.mrb[0].mxu0
    %6960 = vdwg.mxu0
    %v6961 = vadd.f32 %v5367, %v6953
    %v6962 = vadd.f32 %v5368, %v6958
    %s6963 = scalar_lea.vmem [#allocation11], 1
    %v6964 = vld [vmem:[%s6963] sm:$0x1]
    %s6965 = scalar_lea.vmem [#allocation13], 1
    %v6966 = vld [vmem:[%s6965] sm:$0x1]
    %v6967 = vsel %vm238, %v6961, 0.0
    %6968 = vadd.xlane.f32.xlu0 %v6967
    %v6969 = vpop.xlane.xlu0 %6968
    %v6970 = vsel %vm238, %v6962, 0.0
    %6971 = vadd.xlane.f32.xlu0 %v6970
    %v6972 = vpop.xlane.xlu0 %6971
    %v6973 = vmul.f32 %v6969, %v1881
    %v6974 = vmul.f32 %v6972, %v1881
    %v6975 = vsub.f32 %v6961, %v6973
    %v6976 = vsub.f32 %v6962, %v6974
    %v6977 = vmul.f32 %v6975, %v6975
    %v6978 = vmul.f32 %v6976, %v6976
    %v6979 = vsel %vm238, %v6977, 0.0
    %6980 = vadd.xlane.f32.xlu0 %v6979
    %v6981 = vpop.xlane.xlu0 %6980
    %v6982 = vsel %vm238, %v6978, 0.0
    %6983 = vadd.xlane.f32.xlu0 %v6982
    %v6984 = vpop.xlane.xlu0 %6983
    %v6985 = vmul.f32 %v6981, %v1881
    %v6986 = vmul.f32 %v6984, %v1881
    %v6987 = vadd.f32 %v6985, 1e-05
    %v6988 = vadd.f32 %v6986, 1e-05
    %v6989 = vrsqrt.pop %v6987
    %v6990 = vrsqrt.pop %v6988
    %v6991 = vmul.f32 %v6975, %v6989
    %v6992 = vmul.f32 %v6976, %v6990
    %v6994 = vlaneseq
    %v6995 = vshrl.u32 %v6994, 7
    %v6996 = vsub.s32 0, %v6995
    %v6997 = vrot.slane %v6964, %v6996
    %v6999 = vmul.f32 %v6991, %v6997
    %v7000 = vmul.f32 %v6992, %v6997
    %v7002 = vlaneseq
    %v7003 = vshrl.u32 %v7002, 7
    %v7004 = vsub.s32 0, %v7003
    %v7005 = vrot.slane %v6966, %v7004
    %v7007 = vadd.f32 %v6999, %v7005
    %v7008 = vadd.f32 %v7000, %v7005
    %s7009 = scalar_lea.vmem [#allocation17], 32
    %v7010 = vld [vmem:[%s7009] sm:$0xff]
    %v7011 = vld [vmem:[%s7009 + $0x8] sm:$0xff]
    %v7012 = vld [vmem:[%s7009 + $0x10] sm:$0xff]
    %v7013 = vld [vmem:[%s7009 + $0x18] sm:$0xff]
    %s7014 = scalar_lea.vmem [#allocation19], 1
    %v7015 = vld [vmem:[%s7014] sm:$0x1]
    %v7017 = vlaneseq
    %v7018 = vshrl.u32 %v7017, 7
    %v7019 = vsub.s32 0, %v7018
    %v7020 = vrot.slane %v7015, %v7019
    %v7023 = vsel %vm238, %v7007, 0
    %v7026 = vsel %vm238, %v7008, 0
    %7028 = vmatprep.subr.mxu0 0.0
    %7029 = vmatpush1.msra.mxu0 %v7010
    %7030 = vmatprep.subr.mxu0 0.0
    %7031 = vmatpush1.msra.mxu0 %v7011
    %7032 = vmatprep.subr.mxu0 0.0
    %7033 = vmatpush1.msra.mxu0 %v7012
    %7034 = vmatprep.subr.mxu0 0.0
    %7035 = vmatpush1.msra.mxu0 %v7013
    %7036 = vmatprep.subr.mxu0 0.0
    %7037 = vmatpush1.msra.mxu0 0.0
    %7038 = vmatprep.subr.mxu0 0.0
    %7039 = vmatpush1.msra.mxu0 0.0
    %7040 = vmatprep.subr.mxu0 0.0
    %7041 = vmatpush1.msra.mxu0 0.0
    %7042 = vmatprep.subr.mxu0 0.0
    %7043 = vmatpush1.msra.mxu0 0.0
    %7044 = vmatprep.subr.mxu0 0.0
    %7045 = vmatpush1.msra.mxu0 0.0
    %7046 = vmatprep.subr.mxu0 0.0
    %7047 = vmatpush1.msra.mxu0 0.0
    %7048 = vmatprep.subr.mxu0 0.0
    %7049 = vmatpush1.msra.mxu0 0.0
    %7050 = vmatprep.subr.mxu0 0.0
    %7051 = vmatpush1.msra.mxu0 0.0
    %7052 = vmatprep.subr.mxu0 0.0
    %7053 = vmatpush1.msra.mxu0 0.0
    %7054 = vmatprep.subr.mxu0 0.0
    %7055 = vmatpush1.msra.mxu0 0.0
    %7056 = vmatprep.subr.mxu0 0.0
    %7057 = vmatpush1.msra.mxu0 0.0
    %7058 = vmatprep.subr.mxu0 0.0
    %7059 = vmatpush1.msra.mxu0 0.0
    %7060 = vmatprep.subr.mxu0 0.0
    %7061 = vmatpush1.msra.mxu0 0.0
    %7062 = vmatprep.subr.mxu0 0.0
    %7063 = vmatpush1.msra.mxu0 0.0
    %7064 = vmatprep.subr.mxu0 0.0
    %7065 = vmatpush1.msra.mxu0 0.0
    %7066 = vmatprep.subr.mxu0 0.0
    %7067 = vmatpush1.msra.mxu0 0.0
    %7068 = vmatprep.subr.mxu0 0.0
    %7069 = vmatpush1.msra.mxu0 0.0
    %7070 = vmatprep.subr.mxu0 0.0
    %7071 = vmatpush1.msra.mxu0 0.0
    %7072 = vmatprep.subr.mxu0 0.0
    %7073 = vmatpush1.msra.mxu0 0.0
    %7074 = vmatprep.subr.mxu0 0.0
    %7075 = vmatpush1.msra.mxu0 0.0
    %7076 = vmatprep.subr.mxu0 0.0
    %7077 = vmatpush1.msra.mxu0 0.0
    %7078 = vmatprep.subr.mxu0 0.0
    %7079 = vmatpush1.msra.mxu0 0.0
    %7080 = vmatprep.subr.mxu0 0.0
    %7081 = vmatpush1.msra.mxu0 0.0
    %7082 = vmatprep.subr.mxu0 0.0
    %7083 = vmatpush1.msra.mxu0 0.0
    %7084 = vmatprep.subr.mxu0 0.0
    %7085 = vmatpush1.msra.mxu0 0.0
    %7086 = vmatprep.subr.mxu0 0.0
    %7087 = vmatpush1.msra.mxu0 0.0
    %7088 = vmatprep.subr.mxu0 0.0
    %7089 = vmatpush1.msra.mxu0 0.0
    %7090 = vmatprep.subr.mxu0 0.0
    %7091 = vmatpush1.msra.mxu0 0.0
    %7092 = vmatprep.mubr.f32.mxu0 0.0
    %7093 = vmatmul.mubr.f32.gmra.mrb[0].mxu0 %v7023
    %v7094 = vpop.f32.mrb[0].mxu0
    %v7095 = vadd.f32 %v7020, %v7094
    %v7096 = vpop.f32.mrb[0].mxu0
    %7097 = vmatprep.mubr.f32.mxu0 0.0
    %7098 = vmatmul.mubr.f32.gmra.mrb[0].mxu0 %v7026
    %v7099 = vpop.f32.mrb[0].mxu0
    %v7100 = vadd.f32 %v7020, %v7099
    %v7101 = vpop.f32.mrb[0].mxu0
    %7102 = vdwg.mxu0
    %v7103 = vmax.f32 %v7095, 0.0
    %v7104 = vmax.f32 %v7100, 0.0
    %s7105 = scalar_lea.vmem %s20, 64
    %v7106 = vld [vmem:[%s7105] sm:$0xff]
    %v7107 = vld [vmem:[%s7105 + $0x8] sm:$0xff]
    %v7108 = vld [vmem:[%s7105 + $0x10] sm:$0xff]
    %v7109 = vld [vmem:[%s7105 + $0x18] sm:$0xff]
    %v7110 = vld [vmem:[%s7105 + $0x20] sm:$0xff]
    %v7111 = vld [vmem:[%s7105 + $0x28] sm:$0xff]
    %v7112 = vld [vmem:[%s7105 + $0x30] sm:$0xff]
    %v7113 = vld [vmem:[%s7105 + $0x38] sm:$0xff]
    %s7114 = scalar_lea.vmem %s21, 1
    %v7115 = vld [vmem:[%s7114] sm:$0x1]
    %v7117 = vlaneseq
    %v7118 = vshrl.u32 %v7117, 7
    %v7119 = vsub.s32 0, %v7118
    %v7120 = vrot.slane %v7115, %v7119
    %v7123 = vsel %vm3657, %v7103, 0
    %v7126 = vsel %vm3657, %v7104, 0
    %7128 = vmatprep.subr.mxu0 0.0
    %7129 = vmatpush1.msra.mxu0 %v7106
    %7130 = vmatprep.subr.mxu0 0.0
    %7131 = vmatpush1.msra.mxu0 %v7107
    %7132 = vmatprep.subr.mxu0 0.0
    %7133 = vmatpush1.msra.mxu0 %v7108
    %7134 = vmatprep.subr.mxu0 0.0
    %7135 = vmatpush1.msra.mxu0 %v7109
    %7136 = vmatprep.subr.mxu0 0.0
    %7137 = vmatpush1.msra.mxu0 %v7110
    %7138 = vmatprep.subr.mxu0 0.0
    %7139 = vmatpush1.msra.mxu0 %v7111
    %7140 = vmatprep.subr.mxu0 0.0
    %7141 = vmatpush1.msra.mxu0 %v7112
    %7142 = vmatprep.subr.mxu0 0.0
    %7143 = vmatpush1.msra.mxu0 %v7113
    %7144 = vmatprep.subr.mxu0 0.0
    %7145 = vmatpush1.msra.mxu0 0.0
    %7146 = vmatprep.subr.mxu0 0.0
    %7147 = vmatpush1.msra.mxu0 0.0
    %7148 = vmatprep.subr.mxu0 0.0
    %7149 = vmatpush1.msra.mxu0 0.0
    %7150 = vmatprep.subr.mxu0 0.0
    %7151 = vmatpush1.msra.mxu0 0.0
    %7152 = vmatprep.subr.mxu0 0.0
    %7153 = vmatpush1.msra.mxu0 0.0
    %7154 = vmatprep.subr.mxu0 0.0
    %7155 = vmatpush1.msra.mxu0 0.0
    %7156 = vmatprep.subr.mxu0 0.0
    %7157 = vmatpush1.msra.mxu0 0.0
    %7158 = vmatprep.subr.mxu0 0.0
    %7159 = vmatpush1.msra.mxu0 0.0
    %7160 = vmatprep.subr.mxu0 0.0
    %7161 = vmatpush1.msra.mxu0 0.0
    %7162 = vmatprep.subr.mxu0 0.0
    %7163 = vmatpush1.msra.mxu0 0.0
    %7164 = vmatprep.subr.mxu0 0.0
    %7165 = vmatpush1.msra.mxu0 0.0
    %7166 = vmatprep.subr.mxu0 0.0
    %7167 = vmatpush1.msra.mxu0 0.0
    %7168 = vmatprep.subr.mxu0 0.0
    %7169 = vmatpush1.msra.mxu0 0.0
    %7170 = vmatprep.subr.mxu0 0.0
    %7171 = vmatpush1.msra.mxu0 0.0
    %7172 = vmatprep.subr.mxu0 0.0
    %7173 = vmatpush1.msra.mxu0 0.0
    %7174 = vmatprep.subr.mxu0 0.0
    %7175 = vmatpush1.msra.mxu0 0.0
    %7176 = vmatprep.subr.mxu0 0.0
    %7177 = vmatpush1.msra.mxu0 0.0
    %7178 = vmatprep.subr.mxu0 0.0
    %7179 = vmatpush1.msra.mxu0 0.0
    %7180 = vmatprep.subr.mxu0 0.0
    %7181 = vmatpush1.msra.mxu0 0.0
    %7182 = vmatprep.subr.mxu0 0.0
    %7183 = vmatpush1.msra.mxu0 0.0
    %7184 = vmatprep.subr.mxu0 0.0
    %7185 = vmatpush1.msra.mxu0 0.0
    %7186 = vmatprep.subr.mxu0 0.0
    %7187 = vmatpush1.msra.mxu0 0.0
    %7188 = vmatprep.subr.mxu0 0.0
    %7189 = vmatpush1.msra.mxu0 0.0
    %7190 = vmatprep.subr.mxu0 0.0
    %7191 = vmatpush1.msra.mxu0 0.0
    %7192 = vmatprep.mubr.f32.mxu0 0.0
    %7193 = vmatmul.mubr.f32.gmra.mrb[0].mxu0 %v7123
    %v7194 = vpop.f32.mrb[0].mxu0
    %v7195 = vadd.f32 %v7120, %v7194
    %v7196 = vpop.f32.mrb[0].mxu0
    %7197 = vmatprep.mubr.f32.mxu0 0.0
    %7198 = vmatmul.mubr.f32.gmra.mrb[0].mxu0 %v7126
    %v7199 = vpop.f32.mrb[0].mxu0
    %v7200 = vadd.f32 %v7120, %v7199
    %v7201 = vpop.f32.mrb[0].mxu0
    %7202 = vdwg.mxu0
    %v7203 = vadd.f32 %v7007, %v7195
    %v7204 = vadd.f32 %v7008, %v7200
    %s7205 = scalar_lea.vmem [#allocation14], 1
    %v7206 = vld [vmem:[%s7205] sm:$0x1]
    %s7207 = scalar_lea.vmem [#allocation16], 1
    %v7208 = vld [vmem:[%s7207] sm:$0x1]
    %v7209 = vsel %vm238, %v7203, 0.0
    %7210 = vadd.xlane.f32.xlu0 %v7209
    %v7211 = vpop.xlane.xlu0 %7210
    %v7212 = vsel %vm238, %v7204, 0.0
    %7213 = vadd.xlane.f32.xlu0 %v7212
    %v7214 = vpop.xlane.xlu0 %7213
    %v7215 = vmul.f32 %v7211, %v1881
    %v7216 = vmul.f32 %v7214, %v1881
    %v7217 = vsub.f32 %v7203, %v7215
    %v7218 = vsub.f32 %v7204, %v7216
    %v7219 = vmul.f32 %v7217, %v7217
    %v7220 = vmul.f32 %v7218, %v7218
    %v7221 = vsel %vm238, %v7219, 0.0
    %7222 = vadd.xlane.f32.xlu0 %v7221
    %v7223 = vpop.xlane.xlu0 %7222
    %v7224 = vsel %vm238, %v7220, 0.0
    %7225 = vadd.xlane.f32.xlu0 %v7224
    %v7226 = vpop.xlane.xlu0 %7225
    %v7227 = vmul.f32 %v7223, %v1881
    %v7228 = vmul.f32 %v7226, %v1881
    %v7229 = vadd.f32 %v7227, 1e-05
    %v7230 = vadd.f32 %v7228, 1e-05
    %v7231 = vrsqrt.pop %v7229
    %v7232 = vrsqrt.pop %v7230
    %v7233 = vmul.f32 %v7217, %v7231
    %v7234 = vmul.f32 %v7218, %v7232
    %v7236 = vlaneseq
    %v7237 = vshrl.u32 %v7236, 7
    %v7238 = vsub.s32 0, %v7237
    %v7239 = vrot.slane %v7206, %v7238
    %v7241 = vmul.f32 %v7233, %v7239
    %v7242 = vmul.f32 %v7234, %v7239
    %v7244 = vlaneseq
    %v7245 = vshrl.u32 %v7244, 7
    %v7246 = vsub.s32 0, %v7245
    %v7247 = vrot.slane %v7208, %v7246
    %v7249 = vadd.f32 %v7241, %v7247
    %v7250 = vadd.f32 %v7242, %v7247
    %7251 = vst.msk [vmem:[#allocation20] sm:$0xff] %vm238, %v7249
    %7252 = vst.msk [vmem:[#allocation20 + $0x8] sm:$0xff] %vm238, %v7250
    // Predicated region
    $region134: #{tpu_custom_call.1} parent=1 // pred_check
      _
    $region135: #{tpu_custom_call.1} parent=1 // pred_check_branch
      %7254 = sbr.rel (0) target = $region137
    $region136: #{tpu_custom_call.1} parent=1 // pred_region
      %s7256 = ssub.s32 256, 256
      %7257 = vsyncadd [#allocation4], %s7256
      %s7258 = sshll.u32 [#allocation20], 4
      %s7259 = int_to_ptr.vmem [resolvable:$true] %s7258
      %7264 = dma.vmem_to_hbm [thread:$0]  %s7259, 256, %s22, [#allocation4], 128, 128, 8
    $region137: #{tpu_custom_call.1} parent=1 // pred_fallthru
      _
    // Predicated region
    $region138: #{tpu_custom_call.1} parent=1 // pred_check
      _
    $region139: #{tpu_custom_call.1} parent=1 // pred_check_branch
      %7266 = sbr.rel (0) target = $region141
    $region140: #{tpu_custom_call.1} parent=1 // pred_region
      %7267 = dma.done [#allocation4], 256
    $region141: #{tpu_custom_call.1} parent=1 // pred_fallthru
      _
    %7268 = vsyncpa [#allocation3], 1
    %7269 = vsyncpa [#allocation6], 1
    %7270 = vsyncpa [#allocation9], 1
    %7271 = vsyncpa [#allocation12], 1
    %7272 = vsyncpa [#allocation15], 1
    %7273 = vsyncpa [#allocation18], 1
    %7274 = vsyncpa [#allocation4], 1

</llo_original>
